<compile_context>
chip_gen: v7x
topology: tpu7x:2x2x1
jax: 0.10.0
libtpu: 0.0.40
codegen_flags: <defaults>
</compile_context>

<pallas_src>
import jax
import jax.numpy as jnp
from jax.experimental import pallas as pl
from jax.experimental.pallas import tpu as pltpu

H = 768            # hidden size hard-coded by the module (Linear(768, 768), ...)
LOGIT_PAD = 128    # 2-way logits are computed in a lane-padded (B, 128) slab


# --------------------------------------------------------------------------
# Pallas kernel: post-encoder head (operates on per-example sequence means)
# --------------------------------------------------------------------------
def _head_kernel(qx_ref, ix_ref,
                 wqm_ref, bqm_ref, wim_ref, bim_ref,
                 wqc_ref, bqp_ref, wic_ref, bip_ref,
                 bo1_ref, wo2_ref, bo2_ref,
                 qproj_ref, iproj_ref, logits_ref, qmean_ref, imean_ref):
    # Mean-first input: caller already reduced over the sequence axis.
    # bf16 only on MXU operands; all element-wise math / bias adds stay f32
    # (v5e has no bf16 VPU path).
    qx = qx_ref[...].astype(jnp.bfloat16)          # (B, H)
    ix = ix_ref[...].astype(jnp.bfloat16)          # (B, H)

    # query_mlp / item_mlp : Linear(768, 768)   (mean commuted past them)
    q_mean = jnp.dot(qx, wqm_ref[...],
                     preferred_element_type=jnp.float32) + bqm_ref[...]
    i_mean = jnp.dot(ix, wim_ref[...],
                     preferred_element_type=jnp.float32) + bim_ref[...]
    qmean_ref[...] = q_mean                        # r_drop copies == identity
    imean_ref[...] = i_mean

    # Combined per-side weights: [query_proj | output[0] query-half] (768,1536)
    # -> one MXU matmul per side, then slice the lane-dense result.
    qc = jnp.dot(q_mean.astype(jnp.bfloat16), wqc_ref[...],
                 preferred_element_type=jnp.float32)   # (B, 1536)
    ic = jnp.dot(i_mean.astype(jnp.bfloat16), wic_ref[...],
                 preferred_element_type=jnp.float32)   # (B, 1536)

    # query_proj / item_proj : Linear(768, 768)
    qproj_ref[...] = qc[:, :H] + bqp_ref[...]
    iproj_ref[...] = ic[:, :H] + bip_ref[...]

    # output head: Linear(1536, 768) split into [query | item] halves
    # (== cat([q, i], -1) @ W.T), ReLU, Dropout(0.1) identity,
    # Linear(768, 2) lane-padded to 128.
    h = jnp.maximum(qc[:, H:] + ic[:, H:] + bo1_ref[...], 0.0)
    logits_ref[...] = (jnp.dot(h.astype(jnp.bfloat16), wo2_ref[...],
                               preferred_element_type=jnp.float32)
                       + bo2_ref[...])


def contra_relevance_head(q_mean_in, i_mean_in, params):
    B, Hd = q_mean_in.shape
    ins = (q_mean_in, i_mean_in,
           params["wqm"], params["bqm"], params["wim"], params["bim"],
           params["wq_comb"], params["bqp"], params["wi_comb"], params["bip"],
           params["bo1"], params["wo2"], params["bo2"])
    vmem = pl.BlockSpec(memory_space=pltpu.MemorySpace.VMEM)
    out_shapes = (
        jax.ShapeDtypeStruct((B, Hd), jnp.float32),        # query_rep (projected)
        jax.ShapeDtypeStruct((B, Hd), jnp.float32),        # item_rep  (projected)
        jax.ShapeDtypeStruct((B, LOGIT_PAD), jnp.float32), # logits (lane-padded)
        jax.ShapeDtypeStruct((B, Hd), jnp.float32),        # q_mean (ori/con)
        jax.ShapeDtypeStruct((B, Hd), jnp.float32),        # i_mean (ori/con)
    )

    # Advisory cost estimate so XLA overlaps the embedding gather / slice
    # around this small, weight-streaming-bound call.
    weight_keys = ("wqm", "wim", "wq_comb", "wi_comb", "wo2",
                   "bqm", "bim", "bqp", "bip", "bo1", "bo2")
    weight_bytes = sum(int(params[k].size) * params[k].dtype.itemsize
                       for k in weight_keys)
    act_bytes = (2 * B * Hd * 4                       # inputs
                 + (4 * B * Hd + B * LOGIT_PAD) * 4)  # outputs
    flops = 12 * B * Hd * Hd + 2 * B * Hd * LOGIT_PAD
    cost = pl.CostEstimate(flops=flops, transcendentals=0,
                           bytes_accessed=weight_bytes + act_bytes)

    # NOTE: gridless is fine at toy batch; for large B add a grid over the
    # batch axis with dimension_semantics=("parallel",) and constant weight
    # index_maps to use both v7x TensorCores.
    outs = pl.pallas_call(
        _head_kernel,
        out_shape=out_shapes,
        in_specs=[vmem] * len(ins),
        out_specs=tuple([vmem] * len(out_shapes)),
        compiler_params=pltpu.CompilerParams(vmem_limit_bytes=32 * 1024 * 1024),
        cost_estimate=cost,
    )(*ins)
    return outs   # (qproj, iproj, logits_pad, q_mean, i_mean)


# --------------------------------------------------------------------------
# Module-level forward (mirrors ContraRelevanceModel.forward, interaction=False)
# --------------------------------------------------------------------------
def contra_relevance_forward(params, query_input, query_attention_mask,
                             item_input, item_attention_mask):
    # TODO(synk): XLMRobertaModel pretrained encoder has no clean Pallas
    # equivalent here; its last_hidden_state is replaced with a deterministic
    # embedding lookup (attention masks are accepted but unused, as the
    # original head also ignores them post-encoder).
    del query_attention_mask, item_attention_mask
    # Mean-first: mean over the sequence commutes with the affine
    # query_mlp/item_mlp (Dropout is identity in eval), so only (B, 768) per
    # side is shipped to the kernel instead of (B, S, 768).
    q_mean_in = jnp.mean(params["embed"][query_input], axis=1)   # (B, 768)
    i_mean_in = jnp.mean(params["embed"][item_input], axis=1)    # (B, 768)

    qp, ip, logits_pad, q_mean, i_mean = contra_relevance_head(
        q_mean_in, i_mean_in, params)
    logits = logits_pad[:, :2]   # un-pad to the true 2-way logits
    # r_drop(Dropout(0.1)) copies are identity in eval mode -> duplicate here.
    return qp, ip, logits, q_mean, i_mean, q_mean, i_mean


# --------------------------------------------------------------------------
# Deterministic parameter construction (synthetic, no checkpoint load)
# --------------------------------------------------------------------------
def make_params(key, vocab=256):
    keys = jax.random.split(key, 16)
    s = 0.02

    def w(k, shape):
        return (s * jax.random.normal(k, shape)).astype(jnp.float32)

    wqp = w(keys[5], (H, H))      # query_proj weight (pre-transposed: in x out)
    wip = w(keys[7], (H, H))      # item_proj weight
    wo1q = w(keys[9], (H, H))     # output[0] Linear(1536,768), query half
    wo1i = w(keys[10], (H, H))    # output[0] Linear(1536,768), item half
    wo2 = jnp.zeros((H, LOGIT_PAD), jnp.float32).at[:, :2].set(w(keys[12], (H, 2)))
    bo2 = jnp.zeros((1, LOGIT_PAD), jnp.float32).at[:, :2].set(w(keys[13], (1, 2)))

    return {
        "embed": w(keys[0], (vocab, H)),   # stand-in encoder output table (f32)
        # MXU weights stored bf16; biases kept f32.
        "wqm": w(keys[1], (H, H)).astype(jnp.bfloat16), "bqm": w(keys[2], (1, H)),
        "wim": w(keys[3], (H, H)).astype(jnp.bfloat16), "bim": w(keys[4], (1, H)),
        "wq_comb": jnp.concatenate([wqp, wo1q], axis=1).astype(jnp.bfloat16),  # (768,1536)
        "bqp": w(keys[6], (1, H)),
        "wi_comb": jnp.concatenate([wip, wo1i], axis=1).astype(jnp.bfloat16),  # (768,1536)
        "bip": w(keys[8], (1, H)),
        "bo1": w(keys[11], (1, H)),
        "wo2": wo2.astype(jnp.bfloat16), "bo2": bo2,   # lane-padded 2-way head
    }


if __name__ == "__main__":
    key = jax.random.PRNGKey(0)
    kp, kq, ki = jax.random.split(key, 3)

    B, Sq, Si, VOCAB = 2, 8, 8, 256
    params = make_params(kp, vocab=VOCAB)

    query_input = jax.random.randint(kq, (B, Sq), 0, VOCAB, dtype=jnp.int32)
    item_input = jax.random.randint(ki, (B, Si), 0, VOCAB, dtype=jnp.int32)
    query_attention_mask = jnp.ones((B, Sq), jnp.int32)
    item_attention_mask = jnp.ones((B, Si), jnp.int32)

    outs = contra_relevance_forward(params, query_input, query_attention_mask,
                                    item_input, item_attention_mask)
    outs = jax.block_until_ready(outs)

    # light sanity checks on shapes
    q_proj, i_proj, logits, q_ori, i_ori, q_con, i_con = outs
    assert q_proj.shape == (B, H) and i_proj.shape == (B, H)
    assert logits.shape == (B, 2)
    assert q_ori.shape == (B, H) and i_con.shape == (B, H)
    assert bool(jnp.all(jnp.isfinite(logits)))

    print("KERNEL_OK")
</pallas_src>

<mosaic_0001>
module attributes {stable_mosaic.version = 11 : i64} {
  func.func @_head_kernel(%arg0: memref<2x768xf32, #tpu.memory_space<vmem>>, %arg1: memref<2x768xf32, #tpu.memory_space<vmem>>, %arg2: memref<768x768xbf16, #tpu.memory_space<vmem>>, %arg3: memref<1x768xf32, #tpu.memory_space<vmem>>, %arg4: memref<768x768xbf16, #tpu.memory_space<vmem>>, %arg5: memref<1x768xf32, #tpu.memory_space<vmem>>, %arg6: memref<768x1536xbf16, #tpu.memory_space<vmem>>, %arg7: memref<1x768xf32, #tpu.memory_space<vmem>>, %arg8: memref<768x1536xbf16, #tpu.memory_space<vmem>>, %arg9: memref<1x768xf32, #tpu.memory_space<vmem>>, %arg10: memref<1x768xf32, #tpu.memory_space<vmem>>, %arg11: memref<768x128xbf16, #tpu.memory_space<vmem>>, %arg12: memref<1x128xf32, #tpu.memory_space<vmem>>, %arg13: memref<2x768xf32, #tpu.memory_space<vmem>>, %arg14: memref<2x768xf32, #tpu.memory_space<vmem>>, %arg15: memref<2x128xf32, #tpu.memory_space<vmem>>, %arg16: memref<2x768xf32, #tpu.memory_space<vmem>>, %arg17: memref<2x768xf32, #tpu.memory_space<vmem>>) attributes {dimension_semantics = [], scalar_prefetch = 0 : i64, scratch_operands = 0 : i64, tpu.core_type = #tpu.core_type<tc>} {
    %c0 = arith.constant 0 : index
    %c0_0 = arith.constant 0 : index
    %0 = vector.load %arg0[%c0, %c0_0] : memref<2x768xf32, #tpu.memory_space<vmem>>, vector<2x768xf32>
    %1 = arith.truncf %0 : vector<2x768xf32> to vector<2x768xbf16>
    %c0_1 = arith.constant 0 : index
    %c0_2 = arith.constant 0 : index
    %2 = vector.load %arg1[%c0_1, %c0_2] : memref<2x768xf32, #tpu.memory_space<vmem>>, vector<2x768xf32>
    %3 = arith.truncf %2 : vector<2x768xf32> to vector<2x768xbf16>
    %c0_3 = arith.constant 0 : index
    %c0_4 = arith.constant 0 : index
    %4 = vector.load %arg2[%c0_3, %c0_4] : memref<768x768xbf16, #tpu.memory_space<vmem>>, vector<768x768xbf16>
    %cst = arith.constant dense<0.000000e+00> : vector<2x768xf32>
    %5 = tpu.matmul %1, %4, %cst {dimension_numbers = #tpu.dot_dimension_numbers<[1], [0], [0], [1], [0, 0, 1, 1], [], []>} : vector<2x768xbf16>, vector<768x768xbf16>, vector<2x768xf32> -> vector<2x768xf32>
    %c0_5 = arith.constant 0 : index
    %c0_6 = arith.constant 0 : index
    %6 = vector.load %arg3[%c0_5, %c0_6] : memref<1x768xf32, #tpu.memory_space<vmem>>, vector<1x768xf32>
    %7 = vector.broadcast %6 : vector<1x768xf32> to vector<2x768xf32>
    %8 = arith.addf %5, %7 : vector<2x768xf32>
    %c0_7 = arith.constant 0 : index
    %c0_8 = arith.constant 0 : index
    %9 = vector.load %arg4[%c0_7, %c0_8] : memref<768x768xbf16, #tpu.memory_space<vmem>>, vector<768x768xbf16>
    %cst_9 = arith.constant dense<0.000000e+00> : vector<2x768xf32>
    %10 = tpu.matmul %3, %9, %cst_9 {dimension_numbers = #tpu.dot_dimension_numbers<[1], [0], [0], [1], [0, 0, 1, 1], [], []>} : vector<2x768xbf16>, vector<768x768xbf16>, vector<2x768xf32> -> vector<2x768xf32>
    %c0_10 = arith.constant 0 : index
    %c0_11 = arith.constant 0 : index
    %11 = vector.load %arg5[%c0_10, %c0_11] : memref<1x768xf32, #tpu.memory_space<vmem>>, vector<1x768xf32>
    %12 = vector.broadcast %11 : vector<1x768xf32> to vector<2x768xf32>
    %13 = arith.addf %10, %12 : vector<2x768xf32>
    %c0_12 = arith.constant 0 : index
    %c0_13 = arith.constant 0 : index
    %14 = vector.load %arg16[%c0_12, %c0_13] : memref<2x768xf32, #tpu.memory_space<vmem>>, vector<2x768xf32>
    tpu.vector_store %arg16[%c0_12, %c0_13], %8 {strides = array<i32>} : memref<2x768xf32, #tpu.memory_space<vmem>>, vector<2x768xf32>,
    %c0_14 = arith.constant 0 : index
    %c0_15 = arith.constant 0 : index
    %15 = vector.load %arg17[%c0_14, %c0_15] : memref<2x768xf32, #tpu.memory_space<vmem>>, vector<2x768xf32>
    tpu.vector_store %arg17[%c0_14, %c0_15], %13 {strides = array<i32>} : memref<2x768xf32, #tpu.memory_space<vmem>>, vector<2x768xf32>,
    %16 = arith.truncf %8 : vector<2x768xf32> to vector<2x768xbf16>
    %c0_16 = arith.constant 0 : index
    %c0_17 = arith.constant 0 : index
    %17 = vector.load %arg6[%c0_16, %c0_17] : memref<768x1536xbf16, #tpu.memory_space<vmem>>, vector<768x1536xbf16>
    %cst_18 = arith.constant dense<0.000000e+00> : vector<2x1536xf32>
    %18 = tpu.matmul %16, %17, %cst_18 {dimension_numbers = #tpu.dot_dimension_numbers<[1], [0], [0], [1], [0, 0, 1, 1], [], []>} : vector<2x768xbf16>, vector<768x1536xbf16>, vector<2x1536xf32> -> vector<2x1536xf32>
    %19 = arith.truncf %13 : vector<2x768xf32> to vector<2x768xbf16>
    %c0_19 = arith.constant 0 : index
    %c0_20 = arith.constant 0 : index
    %20 = vector.load %arg8[%c0_19, %c0_20] : memref<768x1536xbf16, #tpu.memory_space<vmem>>, vector<768x1536xbf16>
    %cst_21 = arith.constant dense<0.000000e+00> : vector<2x1536xf32>
    %21 = tpu.matmul %19, %20, %cst_21 {dimension_numbers = #tpu.dot_dimension_numbers<[1], [0], [0], [1], [0, 0, 1, 1], [], []>} : vector<2x768xbf16>, vector<768x1536xbf16>, vector<2x1536xf32> -> vector<2x1536xf32>
    %22 = vector.extract_strided_slice %18 {offsets = [0, 0], sizes = [2, 768], strides = [1, 1]} : vector<2x1536xf32> to vector<2x768xf32>
    %c0_22 = arith.constant 0 : index
    %c0_23 = arith.constant 0 : index
    %23 = vector.load %arg7[%c0_22, %c0_23] : memref<1x768xf32, #tpu.memory_space<vmem>>, vector<1x768xf32>
    %24 = vector.broadcast %23 : vector<1x768xf32> to vector<2x768xf32>
    %25 = arith.addf %22, %24 : vector<2x768xf32>
    %c0_24 = arith.constant 0 : index
    %c0_25 = arith.constant 0 : index
    %26 = vector.load %arg13[%c0_24, %c0_25] : memref<2x768xf32, #tpu.memory_space<vmem>>, vector<2x768xf32>
    tpu.vector_store %arg13[%c0_24, %c0_25], %25 {strides = array<i32>} : memref<2x768xf32, #tpu.memory_space<vmem>>, vector<2x768xf32>,
    %27 = vector.extract_strided_slice %21 {offsets = [0, 0], sizes = [2, 768], strides = [1, 1]} : vector<2x1536xf32> to vector<2x768xf32>
    %c0_26 = arith.constant 0 : index
    %c0_27 = arith.constant 0 : index
    %28 = vector.load %arg9[%c0_26, %c0_27] : memref<1x768xf32, #tpu.memory_space<vmem>>, vector<1x768xf32>
    %29 = vector.broadcast %28 : vector<1x768xf32> to vector<2x768xf32>
    %30 = arith.addf %27, %29 : vector<2x768xf32>
    %c0_28 = arith.constant 0 : index
    %c0_29 = arith.constant 0 : index
    %31 = vector.load %arg14[%c0_28, %c0_29] : memref<2x768xf32, #tpu.memory_space<vmem>>, vector<2x768xf32>
    tpu.vector_store %arg14[%c0_28, %c0_29], %30 {strides = array<i32>} : memref<2x768xf32, #tpu.memory_space<vmem>>, vector<2x768xf32>,
    %32 = vector.extract_strided_slice %18 {offsets = [0, 768], sizes = [2, 768], strides = [1, 1]} : vector<2x1536xf32> to vector<2x768xf32>
    %33 = vector.extract_strided_slice %21 {offsets = [0, 768], sizes = [2, 768], strides = [1, 1]} : vector<2x1536xf32> to vector<2x768xf32>
    %34 = arith.addf %32, %33 : vector<2x768xf32>
    %c0_30 = arith.constant 0 : index
    %c0_31 = arith.constant 0 : index
    %35 = vector.load %arg10[%c0_30, %c0_31] : memref<1x768xf32, #tpu.memory_space<vmem>>, vector<1x768xf32>
    %36 = vector.broadcast %35 : vector<1x768xf32> to vector<2x768xf32>
    %37 = arith.addf %34, %36 : vector<2x768xf32>
    %cst_32 = arith.constant 0.000000e+00 : f32
    %38 = vector.broadcast %cst_32 : f32 to vector<2x768xf32>
    %39 = arith.maximumf %37, %38 : vector<2x768xf32>
    %40 = arith.truncf %39 : vector<2x768xf32> to vector<2x768xbf16>
    %c0_33 = arith.constant 0 : index
    %c0_34 = arith.constant 0 : index
    %41 = vector.load %arg11[%c0_33, %c0_34] : memref<768x128xbf16, #tpu.memory_space<vmem>>, vector<768x128xbf16>
    %cst_35 = arith.constant dense<0.000000e+00> : vector<2x128xf32>
    %42 = tpu.matmul %40, %41, %cst_35 {dimension_numbers = #tpu.dot_dimension_numbers<[1], [0], [0], [1], [0, 0, 1, 1], [], []>} : vector<2x768xbf16>, vector<768x128xbf16>, vector<2x128xf32> -> vector<2x128xf32>
    %c0_36 = arith.constant 0 : index
    %c0_37 = arith.constant 0 : index
    %43 = vector.load %arg12[%c0_36, %c0_37] : memref<1x128xf32, #tpu.memory_space<vmem>>, vector<1x128xf32>
    %44 = vector.broadcast %43 : vector<1x128xf32> to vector<2x128xf32>
    %45 = arith.addf %42, %44 : vector<2x128xf32>
    %c0_38 = arith.constant 0 : index
    %c0_39 = arith.constant 0 : index
    %46 = vector.load %arg15[%c0_38, %c0_39] : memref<2x128xf32, #tpu.memory_space<vmem>>, vector<2x128xf32>
    tpu.vector_store %arg15[%c0_38, %c0_39], %45 {strides = array<i32>} : memref<2x128xf32, #tpu.memory_space<vmem>>, vector<2x128xf32>,
    return
  }
}

</mosaic_0001>

<llo_original>
// kernel: tpu_custom_call.1
$region0: #{tpu_custom_call.1}
  #allocation0 [shape = 'u32[]', space=smem, size = 0x4, offset = 0x4, fixed_abs, tag = 'smem constant byte address 0x4 - core index']
  #allocation1 [shape = 'u32[144,128]{1,0:T(1,128)}', space=vmem, size = 0x12000, scoped, tag = 'internal scratch']
  %s0 = inlined_call_operand.hbm [shape: f32[2,768], index: 0, kind: input, shape index: {}]
  %s1 = inlined_call_operand.hbm [shape: f32[2,768], index: 1, kind: input, shape index: {}]
  %s2 = inlined_call_operand.hbm [shape: bf16[768,768], index: 2, kind: input, shape index: {}]
  %s3 = inlined_call_operand.hbm [shape: f32[1,768], index: 3, kind: input, shape index: {}]
  %s4 = inlined_call_operand.hbm [shape: bf16[768,768], index: 4, kind: input, shape index: {}]
  %s5 = inlined_call_operand.hbm [shape: f32[1,768], index: 5, kind: input, shape index: {}]
  %s6 = inlined_call_operand.hbm [shape: bf16[768,1536], index: 6, kind: input, shape index: {}]
  %s7 = inlined_call_operand.hbm [shape: f32[1,768], index: 7, kind: input, shape index: {}]
  %s8 = inlined_call_operand.hbm [shape: bf16[768,1536], index: 8, kind: input, shape index: {}]
  %s9 = inlined_call_operand.hbm [shape: f32[1,768], index: 9, kind: input, shape index: {}]
  %s10 = inlined_call_operand.hbm [shape: f32[1,768], index: 10, kind: input, shape index: {}]
  %s11 = inlined_call_operand.hbm [shape: bf16[768,128], index: 11, kind: input, shape index: {}]
  %s12 = inlined_call_operand.hbm [shape: f32[1,128], index: 12, kind: input, shape index: {}]
  %s13 = inlined_call_operand.hbm [shape: f32[2,768], index: 13, kind: output, shape index: {0}]
  %s14 = inlined_call_operand.hbm [shape: f32[2,768], index: 14, kind: output, shape index: {1}]
  %s15 = inlined_call_operand.hbm [shape: f32[2,128], index: 15, kind: output, shape index: {2}]
  %s16 = inlined_call_operand.hbm [shape: f32[2,768], index: 16, kind: output, shape index: {3}]
  %s17 = inlined_call_operand.hbm [shape: f32[2,768], index: 17, kind: output, shape index: {4}]
  %18 = xla_tuple %s13, %s14, %s15, %s16, %s17
  %s19 = sld [smem:[#allocation0]]
  $region146: #{tpu_custom_call.1} parent=0
    _
  %s21 = ssub.s32 1, %s19
  %s22 = scalar_select 0, %s21, %s19
  $region1: #{tpu_custom_call.1} parent=0
    #allocation2 [shape = 'u8[6144]{0}', space=vmem, size = 0x1800, scoped, tag = 'input window, operand 0, single buffered']
    #allocation3 [shape = 's32[1]{0}', space=sflag, size = 0x4, scoped, tag = 'scoped memory for tpu_custom_call.1']
    #allocation4 [shape = 's32[1]{0}', space=sflag, size = 0x4, scoped, tag = 'scoped memory for tpu_custom_call.1']
    #allocation5 [shape = 'u8[6144]{0}', space=vmem, size = 0x1800, scoped, tag = 'input window, operand 1, single buffered']
    #allocation6 [shape = 's32[1]{0}', space=sflag, size = 0x4, scoped, tag = 'scoped memory for tpu_custom_call.1']
    #allocation7 [shape = 'u8[1179648]{0}', space=vmem, size = 0x120000, scoped, tag = 'input window, operand 2, single buffered']
    #allocation8 [shape = 'u8[3072]{0}', space=vmem, size = 0xc00, scoped, tag = 'input window, operand 3, single buffered']
    #allocation9 [shape = 's32[1]{0}', space=sflag, size = 0x4, scoped, tag = 'scoped memory for tpu_custom_call.1']
    #allocation10 [shape = 'u8[1179648]{0}', space=vmem, size = 0x120000, scoped, tag = 'input window, operand 4, single buffered']
    #allocation11 [shape = 'u8[3072]{0}', space=vmem, size = 0xc00, scoped, tag = 'input window, operand 5, single buffered']
    #allocation12 [shape = 's32[1]{0}', space=sflag, size = 0x4, scoped, tag = 'scoped memory for tpu_custom_call.1']
    #allocation13 [shape = 'u8[2359296]{0}', space=vmem, size = 0x240000, scoped, tag = 'input window, operand 6, single buffered']
    #allocation14 [shape = 'u8[3072]{0}', space=vmem, size = 0xc00, scoped, tag = 'input window, operand 7, single buffered']
    #allocation15 [shape = 's32[1]{0}', space=sflag, size = 0x4, scoped, tag = 'scoped memory for tpu_custom_call.1']
    #allocation16 [shape = 'u8[2359296]{0}', space=vmem, size = 0x240000, scoped, tag = 'input window, operand 8, single buffered']
    #allocation17 [shape = 'u8[3072]{0}', space=vmem, size = 0xc00, scoped, tag = 'input window, operand 9, single buffered']
    #allocation18 [shape = 's32[1]{0}', space=sflag, size = 0x4, scoped, tag = 'scoped memory for tpu_custom_call.1']
    #allocation19 [shape = 'u8[3072]{0}', space=vmem, size = 0xc00, scoped, tag = 'input window, operand 10, single buffered']
    #allocation20 [shape = 'u8[196608]{0}', space=vmem, size = 0x30000, scoped, tag = 'input window, operand 11, single buffered']
    #allocation21 [shape = 's32[1]{0}', space=sflag, size = 0x4, scoped, tag = 'scoped memory for tpu_custom_call.1']
    #allocation22 [shape = 'u8[512]{0}', space=vmem, size = 0x400, scoped, tag = 'input window, operand 12, single buffered']
    #allocation23 [shape = 'u8[6144]{0}', space=vmem, size = 0x1800, scoped, tag = 'output window, operand 0, single buffered']
    #allocation24 [shape = 'u8[6144]{0}', space=vmem, size = 0x1800, scoped, tag = 'output window, operand 1, single buffered']
    #allocation25 [shape = 's32[1]{0}', space=sflag, size = 0x4, scoped, tag = 'scoped memory for tpu_custom_call.1']
    #allocation26 [shape = 'u8[1024]{0}', space=vmem, size = 0x400, scoped, tag = 'output window, operand 2, single buffered']
    #allocation27 [shape = 'u8[6144]{0}', space=vmem, size = 0x1800, scoped, tag = 'output window, operand 3, single buffered']
    #allocation28 [shape = 's32[1]{0}', space=sflag, size = 0x4, scoped, tag = 'scoped memory for tpu_custom_call.1']
    #allocation29 [shape = 'u8[6144]{0}', space=vmem, size = 0x1800, scoped, tag = 'output window, operand 4, single buffered']
    %23 = vsyncpa [#allocation3], 0
    %24 = vsyncpa [#allocation6], 0
    %25 = vsyncpa [#allocation9], 0
    %26 = vsyncpa [#allocation12], 0
    %27 = vsyncpa [#allocation15], 0
    %28 = vsyncpa [#allocation18], 0
    %29 = vsyncpa [#allocation21], 0
    %30 = vsyncpa [#allocation4], 0
    %31 = vsyncpa [#allocation25], 0
    %32 = vsyncpa [#allocation28], 0
    // Predicated region
    $region2: #{tpu_custom_call.1} parent=1 // pred_check
      _
    $region3: #{tpu_custom_call.1} parent=1 // pred_check_branch
      %34 = sbr.rel (0) target = $region5
    $region4: #{tpu_custom_call.1} parent=1 // pred_region
      %s36 = ssub.s32 192, 192
      %37 = vsyncadd [#allocation3], %s36
      %s39 = sshll.u32 [#allocation2], 4
      %s40 = int_to_ptr.vmem [resolvable:$true] %s39
      %42 = dma.hbm_to_vmem [thread:$0]  %s0, 192, %s40, [#allocation3]
    $region5: #{tpu_custom_call.1} parent=1 // pred_fallthru
      _
    // Predicated region
    $region6: #{tpu_custom_call.1} parent=1 // pred_check
      _
    $region7: #{tpu_custom_call.1} parent=1 // pred_check_branch
      %44 = sbr.rel (0) target = $region9
    $region8: #{tpu_custom_call.1} parent=1 // pred_region
      %s46 = ssub.s32 192, 192
      %47 = vsyncadd [#allocation6], %s46
      %s49 = sshll.u32 [#allocation5], 4
      %s50 = int_to_ptr.vmem [resolvable:$true] %s49
      %52 = dma.hbm_to_vmem [thread:$0]  %s1, 192, %s50, [#allocation6]
    $region9: #{tpu_custom_call.1} parent=1 // pred_fallthru
      _
    // Predicated region
    $region10: #{tpu_custom_call.1} parent=1 // pred_check
      _
    $region11: #{tpu_custom_call.1} parent=1 // pred_check_branch
      %54 = sbr.rel (0) target = $region13
    $region12: #{tpu_custom_call.1} parent=1 // pred_region
      %s56 = ssub.s32 36864, 36864
      %57 = vsyncadd [#allocation6], %s56
      %s58 = sshll.u32 [#allocation7], 4
      %s59 = int_to_ptr.vmem [resolvable:$true] %s58
      %64 = dma.hbm_to_vmem [thread:$0]  %s2, 36864, %s59, [#allocation6], 384, 384, 24
    $region13: #{tpu_custom_call.1} parent=1 // pred_fallthru
      _
    // Predicated region
    $region14: #{tpu_custom_call.1} parent=1 // pred_check
      _
    $region15: #{tpu_custom_call.1} parent=1 // pred_check_branch
      %66 = sbr.rel (0) target = $region17
    $region16: #{tpu_custom_call.1} parent=1 // pred_region
      %s68 = ssub.s32 96, 96
      %69 = vsyncadd [#allocation9], %s68
      %s71 = sshll.u32 [#allocation8], 4
      %s72 = int_to_ptr.vmem [resolvable:$true] %s71
      %74 = dma.hbm_to_vmem [thread:$0]  %s3, 96, %s72, [#allocation9]
    $region17: #{tpu_custom_call.1} parent=1 // pred_fallthru
      _
    // Predicated region
    $region18: #{tpu_custom_call.1} parent=1 // pred_check
      _
    $region19: #{tpu_custom_call.1} parent=1 // pred_check_branch
      %76 = sbr.rel (0) target = $region21
    $region20: #{tpu_custom_call.1} parent=1 // pred_region
      %s78 = ssub.s32 36864, 36864
      %79 = vsyncadd [#allocation9], %s78
      %s80 = sshll.u32 [#allocation10], 4
      %s81 = int_to_ptr.vmem [resolvable:$true] %s80
      %86 = dma.hbm_to_vmem [thread:$0]  %s4, 36864, %s81, [#allocation9], 384, 384, 24
    $region21: #{tpu_custom_call.1} parent=1 // pred_fallthru
      _
    // Predicated region
    $region22: #{tpu_custom_call.1} parent=1 // pred_check
      _
    $region23: #{tpu_custom_call.1} parent=1 // pred_check_branch
      %88 = sbr.rel (0) target = $region25
    $region24: #{tpu_custom_call.1} parent=1 // pred_region
      %s90 = ssub.s32 96, 96
      %91 = vsyncadd [#allocation12], %s90
      %s93 = sshll.u32 [#allocation11], 4
      %s94 = int_to_ptr.vmem [resolvable:$true] %s93
      %96 = dma.hbm_to_vmem [thread:$0]  %s5, 96, %s94, [#allocation12]
    $region25: #{tpu_custom_call.1} parent=1 // pred_fallthru
      _
    // Predicated region
    $region26: #{tpu_custom_call.1} parent=1 // pred_check
      _
    $region27: #{tpu_custom_call.1} parent=1 // pred_check_branch
      %98 = sbr.rel (0) target = $region29
    $region28: #{tpu_custom_call.1} parent=1 // pred_region
      %s100 = ssub.s32 73728, 73728
      %101 = vsyncadd [#allocation12], %s100
      %s102 = sshll.u32 [#allocation13], 4
      %s103 = int_to_ptr.vmem [resolvable:$true] %s102
      %108 = dma.hbm_to_vmem [thread:$0]  %s6, 73728, %s103, [#allocation12], 768, 768, 48
    $region29: #{tpu_custom_call.1} parent=1 // pred_fallthru
      _
    // Predicated region
    $region30: #{tpu_custom_call.1} parent=1 // pred_check
      _
    $region31: #{tpu_custom_call.1} parent=1 // pred_check_branch
      %110 = sbr.rel (0) target = $region33
    $region32: #{tpu_custom_call.1} parent=1 // pred_region
      %s112 = ssub.s32 96, 96
      %113 = vsyncadd [#allocation15], %s112
      %s115 = sshll.u32 [#allocation14], 4
      %s116 = int_to_ptr.vmem [resolvable:$true] %s115
      %118 = dma.hbm_to_vmem [thread:$0]  %s7, 96, %s116, [#allocation15]
    $region33: #{tpu_custom_call.1} parent=1 // pred_fallthru
      _
    // Predicated region
    $region34: #{tpu_custom_call.1} parent=1 // pred_check
      _
    $region35: #{tpu_custom_call.1} parent=1 // pred_check_branch
      %120 = sbr.rel (0) target = $region37
    $region36: #{tpu_custom_call.1} parent=1 // pred_region
      %s122 = ssub.s32 73728, 73728
      %123 = vsyncadd [#allocation15], %s122
      %s124 = sshll.u32 [#allocation16], 4
      %s125 = int_to_ptr.vmem [resolvable:$true] %s124
      %130 = dma.hbm_to_vmem [thread:$0]  %s8, 73728, %s125, [#allocation15], 768, 768, 48
    $region37: #{tpu_custom_call.1} parent=1 // pred_fallthru
      _
    // Predicated region
    $region38: #{tpu_custom_call.1} parent=1 // pred_check
      _
    $region39: #{tpu_custom_call.1} parent=1 // pred_check_branch
      %132 = sbr.rel (0) target = $region41
    $region40: #{tpu_custom_call.1} parent=1 // pred_region
      %s134 = ssub.s32 96, 96
      %135 = vsyncadd [#allocation18], %s134
      %s137 = sshll.u32 [#allocation17], 4
      %s138 = int_to_ptr.vmem [resolvable:$true] %s137
      %140 = dma.hbm_to_vmem [thread:$0]  %s9, 96, %s138, [#allocation18]
    $region41: #{tpu_custom_call.1} parent=1 // pred_fallthru
      _
    // Predicated region
    $region42: #{tpu_custom_call.1} parent=1 // pred_check
      _
    $region43: #{tpu_custom_call.1} parent=1 // pred_check_branch
      %142 = sbr.rel (0) target = $region45
    $region44: #{tpu_custom_call.1} parent=1 // pred_region
      %s144 = ssub.s32 96, 96
      %145 = vsyncadd [#allocation18], %s144
      %s147 = sshll.u32 [#allocation19], 4
      %s148 = int_to_ptr.vmem [resolvable:$true] %s147
      %150 = dma.hbm_to_vmem [thread:$0]  %s10, 96, %s148, [#allocation18]
    $region45: #{tpu_custom_call.1} parent=1 // pred_fallthru
      _
    // Predicated region
    $region46: #{tpu_custom_call.1} parent=1 // pred_check
      _
    $region47: #{tpu_custom_call.1} parent=1 // pred_check_branch
      %152 = sbr.rel (0) target = $region49
    $region48: #{tpu_custom_call.1} parent=1 // pred_region
      %s154 = ssub.s32 6144, 6144
      %155 = vsyncadd [#allocation21], %s154
      %s156 = sshll.u32 [#allocation20], 4
      %s157 = int_to_ptr.vmem [resolvable:$true] %s156
      %162 = dma.hbm_to_vmem [thread:$0]  %s11, 6144, %s157, [#allocation21], 64, 64, 4
    $region49: #{tpu_custom_call.1} parent=1 // pred_fallthru
      _
    // Predicated region
    $region50: #{tpu_custom_call.1} parent=1 // pred_check
      _
    $region51: #{tpu_custom_call.1} parent=1 // pred_check_branch
      %164 = sbr.rel (0) target = $region53
    $region52: #{tpu_custom_call.1} parent=1 // pred_region
      %s166 = ssub.s32 16, 16
      %167 = vsyncadd [#allocation21], %s166
      %s169 = sshll.u32 [#allocation22], 4
      %s170 = int_to_ptr.vmem [resolvable:$true] %s169
      %172 = dma.hbm_to_vmem [thread:$0]  %s12, 16, %s170, [#allocation21]
    $region53: #{tpu_custom_call.1} parent=1 // pred_fallthru
      _
    // Predicated region
    $region54: #{tpu_custom_call.1} parent=1 // pred_check
      _
    $region55: #{tpu_custom_call.1} parent=1 // pred_check_branch
      %174 = sbr.rel (0) target = $region57
    $region56: #{tpu_custom_call.1} parent=1 // pred_region
      %175 = dma.done [#allocation3], 192
    $region57: #{tpu_custom_call.1} parent=1 // pred_fallthru
      _
    // Predicated region
    $region58: #{tpu_custom_call.1} parent=1 // pred_check
      _
    $region59: #{tpu_custom_call.1} parent=1 // pred_check_branch
      %177 = sbr.rel (0) target = $region61
    $region60: #{tpu_custom_call.1} parent=1 // pred_region
      %178 = dma.done [#allocation6], 192
    $region61: #{tpu_custom_call.1} parent=1 // pred_fallthru
      _
    // Predicated region
    $region62: #{tpu_custom_call.1} parent=1 // pred_check
      _
    $region63: #{tpu_custom_call.1} parent=1 // pred_check_branch
      %180 = sbr.rel (0) target = $region65
    $region64: #{tpu_custom_call.1} parent=1 // pred_region
      %181 = dma.done [#allocation6], 36864
    $region65: #{tpu_custom_call.1} parent=1 // pred_fallthru
      _
    // Predicated region
    $region66: #{tpu_custom_call.1} parent=1 // pred_check
      _
    $region67: #{tpu_custom_call.1} parent=1 // pred_check_branch
      %183 = sbr.rel (0) target = $region69
    $region68: #{tpu_custom_call.1} parent=1 // pred_region
      %184 = dma.done [#allocation9], 96
    $region69: #{tpu_custom_call.1} parent=1 // pred_fallthru
      _
    // Predicated region
    $region70: #{tpu_custom_call.1} parent=1 // pred_check
      _
    $region71: #{tpu_custom_call.1} parent=1 // pred_check_branch
      %186 = sbr.rel (0) target = $region73
    $region72: #{tpu_custom_call.1} parent=1 // pred_region
      %187 = dma.done [#allocation9], 36864
    $region73: #{tpu_custom_call.1} parent=1 // pred_fallthru
      _
    // Predicated region
    $region74: #{tpu_custom_call.1} parent=1 // pred_check
      _
    $region75: #{tpu_custom_call.1} parent=1 // pred_check_branch
      %189 = sbr.rel (0) target = $region77
    $region76: #{tpu_custom_call.1} parent=1 // pred_region
      %190 = dma.done [#allocation12], 96
    $region77: #{tpu_custom_call.1} parent=1 // pred_fallthru
      _
    // Predicated region
    $region78: #{tpu_custom_call.1} parent=1 // pred_check
      _
    $region79: #{tpu_custom_call.1} parent=1 // pred_check_branch
      %192 = sbr.rel (0) target = $region81
    $region80: #{tpu_custom_call.1} parent=1 // pred_region
      %193 = dma.done [#allocation12], 73728
    $region81: #{tpu_custom_call.1} parent=1 // pred_fallthru
      _
    // Predicated region
    $region82: #{tpu_custom_call.1} parent=1 // pred_check
      _
    $region83: #{tpu_custom_call.1} parent=1 // pred_check_branch
      %195 = sbr.rel (0) target = $region85
    $region84: #{tpu_custom_call.1} parent=1 // pred_region
      %196 = dma.done [#allocation15], 96
    $region85: #{tpu_custom_call.1} parent=1 // pred_fallthru
      _
    // Predicated region
    $region86: #{tpu_custom_call.1} parent=1 // pred_check
      _
    $region87: #{tpu_custom_call.1} parent=1 // pred_check_branch
      %198 = sbr.rel (0) target = $region89
    $region88: #{tpu_custom_call.1} parent=1 // pred_region
      %199 = dma.done [#allocation15], 73728
    $region89: #{tpu_custom_call.1} parent=1 // pred_fallthru
      _
    // Predicated region
    $region90: #{tpu_custom_call.1} parent=1 // pred_check
      _
    $region91: #{tpu_custom_call.1} parent=1 // pred_check_branch
      %201 = sbr.rel (0) target = $region93
    $region92: #{tpu_custom_call.1} parent=1 // pred_region
      %202 = dma.done [#allocation18], 96
    $region93: #{tpu_custom_call.1} parent=1 // pred_fallthru
      _
    // Predicated region
    $region94: #{tpu_custom_call.1} parent=1 // pred_check
      _
    $region95: #{tpu_custom_call.1} parent=1 // pred_check_branch
      %204 = sbr.rel (0) target = $region97
    $region96: #{tpu_custom_call.1} parent=1 // pred_region
      %205 = dma.done [#allocation18], 96
    $region97: #{tpu_custom_call.1} parent=1 // pred_fallthru
      _
    // Predicated region
    $region98: #{tpu_custom_call.1} parent=1 // pred_check
      _
    $region99: #{tpu_custom_call.1} parent=1 // pred_check_branch
      %207 = sbr.rel (0) target = $region101
    $region100: #{tpu_custom_call.1} parent=1 // pred_region
      %208 = dma.done [#allocation21], 6144
    $region101: #{tpu_custom_call.1} parent=1 // pred_fallthru
      _
    // Predicated region
    $region102: #{tpu_custom_call.1} parent=1 // pred_check
      _
    $region103: #{tpu_custom_call.1} parent=1 // pred_check_branch
      %210 = sbr.rel (0) target = $region105
    $region104: #{tpu_custom_call.1} parent=1 // pred_region
      %211 = dma.done [#allocation21], 16
    $region105: #{tpu_custom_call.1} parent=1 // pred_fallthru
      _
    %v213 = vld [vmem:[#allocation2] sm:$0xff]
    %v214 = vld [vmem:[#allocation2 + $0x8] sm:$0xf]
    %v217 = vcombine.high %v213, %v213
    %v219 = vunpack.c.l.s4 1983009808
    %v220 = vunpack.c.0.s8 %v219
    %v221 = vlaneseq
    %v222 = vshrl.u32 %v221, 7
    %v223 = vsub.s32 %v220, %v222
    %v224 = vrot.slane %v213, %v223
    %v226 = vunpack.c.l.s4 1983009808
    %v227 = vunpack.c.0.s8 %v226
    %v228 = vlaneseq
    %v229 = vshrl.u32 %v228, 7
    %v230 = vsub.s32 %v227, %v229
    %v231 = vrot.slane %v217, %v230
    %v232 = vcombine.high %v224, %v224
    %v233 = vcombine.high %v231, %v231
    %v235 = vunpack.c.l.s4 1983009808
    %v236 = vunpack.c.0.s8 %v235
    %v237 = vlaneseq
    %v238 = vshrl.u32 %v237, 7
    %v239 = vsub.s32 %v236, %v238
    %v240 = vrot.slane %v214, %v239
    %v241 = vcombine.high %v240, %v240
    %v248 = vpack.c.bf16 %v224, %v224
    %v249 = vpack.c.bf16 %v232, %v232
    %v250 = vpack.c.bf16 %v231, %v231
    %v251 = vpack.c.bf16 %v233, %v233
    %v252 = vpack.c.bf16 %v240, %v240
    %v253 = vpack.c.bf16 %v241, %v241
    %v254 = vld [vmem:[#allocation5] sm:$0xff]
    %v255 = vld [vmem:[#allocation5 + $0x8] sm:$0xf]
    %v258 = vcombine.high %v254, %v254
    %v260 = vunpack.c.l.s4 1983009808
    %v261 = vunpack.c.0.s8 %v260
    %v262 = vlaneseq
    %v263 = vshrl.u32 %v262, 7
    %v264 = vsub.s32 %v261, %v263
    %v265 = vrot.slane %v254, %v264
    %v267 = vunpack.c.l.s4 1983009808
    %v268 = vunpack.c.0.s8 %v267
    %v269 = vlaneseq
    %v270 = vshrl.u32 %v269, 7
    %v271 = vsub.s32 %v268, %v270
    %v272 = vrot.slane %v258, %v271
    %v273 = vcombine.high %v265, %v265
    %v274 = vcombine.high %v272, %v272
    %v276 = vunpack.c.l.s4 1983009808
    %v277 = vunpack.c.0.s8 %v276
    %v278 = vlaneseq
    %v279 = vshrl.u32 %v278, 7
    %v280 = vsub.s32 %v277, %v279
    %v281 = vrot.slane %v255, %v280
    %v282 = vcombine.high %v281, %v281
    %v289 = vpack.c.bf16 %v265, %v265
    %v290 = vpack.c.bf16 %v273, %v273
    %v291 = vpack.c.bf16 %v272, %v272
    %v292 = vpack.c.bf16 %v274, %v274
    %v293 = vpack.c.bf16 %v281, %v281
    %v294 = vpack.c.bf16 %v282, %v282
    %v295 = vld [vmem:[#allocation7] sm:$0xff]
    %v296 = vld [vmem:[#allocation7 + $0x8] sm:$0xff]
    %v297 = vld [vmem:[#allocation7 + $0x10] sm:$0xff]
    %v298 = vld [vmem:[#allocation7 + $0x18] sm:$0xff]
    %v299 = vld [vmem:[#allocation7 + $0x20] sm:$0xff]
    %v300 = vld [vmem:[#allocation7 + $0x28] sm:$0xff]
    %v301 = vld [vmem:[#allocation7 + $0x30] sm:$0xff]
    %v302 = vld [vmem:[#allocation7 + $0x38] sm:$0xff]
    %v303 = vld [vmem:[#allocation7 + $0x40] sm:$0xff]
    %v304 = vld [vmem:[#allocation7 + $0x48] sm:$0xff]
    %v305 = vld [vmem:[#allocation7 + $0x50] sm:$0xff]
    %v306 = vld [vmem:[#allocation7 + $0x58] sm:$0xff]
    %v307 = vld [vmem:[#allocation7 + $0x60] sm:$0xff]
    %v308 = vld [vmem:[#allocation7 + $0x68] sm:$0xff]
    %v309 = vld [vmem:[#allocation7 + $0x70] sm:$0xff]
    %v310 = vld [vmem:[#allocation7 + $0x78] sm:$0xff]
    %v311 = vld [vmem:[#allocation7 + $0x80] sm:$0xff]
    %v312 = vld [vmem:[#allocation7 + $0x88] sm:$0xff]
    %v313 = vld [vmem:[#allocation7 + $0x90] sm:$0xff]
    %v314 = vld [vmem:[#allocation7 + $0x98] sm:$0xff]
    %v315 = vld [vmem:[#allocation7 + $0xa0] sm:$0xff]
    %v316 = vld [vmem:[#allocation7 + $0xa8] sm:$0xff]
    %v317 = vld [vmem:[#allocation7 + $0xb0] sm:$0xff]
    %v318 = vld [vmem:[#allocation7 + $0xb8] sm:$0xff]
    %v319 = vld [vmem:[#allocation7 + $0xc0] sm:$0xff]
    %v320 = vld [vmem:[#allocation7 + $0xc8] sm:$0xff]
    %v321 = vld [vmem:[#allocation7 + $0xd0] sm:$0xff]
    %v322 = vld [vmem:[#allocation7 + $0xd8] sm:$0xff]
    %v323 = vld [vmem:[#allocation7 + $0xe0] sm:$0xff]
    %v324 = vld [vmem:[#allocation7 + $0xe8] sm:$0xff]
    %v325 = vld [vmem:[#allocation7 + $0xf0] sm:$0xff]
    %v326 = vld [vmem:[#allocation7 + $0xf8] sm:$0xff]
    %v327 = vld [vmem:[#allocation7 + $0x100] sm:$0xff]
    %v328 = vld [vmem:[#allocation7 + $0x108] sm:$0xff]
    %v329 = vld [vmem:[#allocation7 + $0x110] sm:$0xff]
    %v330 = vld [vmem:[#allocation7 + $0x118] sm:$0xff]
    %v331 = vld [vmem:[#allocation7 + $0x120] sm:$0xff]
    %v332 = vld [vmem:[#allocation7 + $0x128] sm:$0xff]
    %v333 = vld [vmem:[#allocation7 + $0x130] sm:$0xff]
    %v334 = vld [vmem:[#allocation7 + $0x138] sm:$0xff]
    %v335 = vld [vmem:[#allocation7 + $0x140] sm:$0xff]
    %v336 = vld [vmem:[#allocation7 + $0x148] sm:$0xff]
    %v337 = vld [vmem:[#allocation7 + $0x150] sm:$0xff]
    %v338 = vld [vmem:[#allocation7 + $0x158] sm:$0xff]
    %v339 = vld [vmem:[#allocation7 + $0x160] sm:$0xff]
    %v340 = vld [vmem:[#allocation7 + $0x168] sm:$0xff]
    %v341 = vld [vmem:[#allocation7 + $0x170] sm:$0xff]
    %v342 = vld [vmem:[#allocation7 + $0x178] sm:$0xff]
    %v343 = vld [vmem:[#allocation7 + $0x180] sm:$0xff]
    %v344 = vld [vmem:[#allocation7 + $0x188] sm:$0xff]
    %v345 = vld [vmem:[#allocation7 + $0x190] sm:$0xff]
    %v346 = vld [vmem:[#allocation7 + $0x198] sm:$0xff]
    %v347 = vld [vmem:[#allocation7 + $0x1a0] sm:$0xff]
    %v348 = vld [vmem:[#allocation7 + $0x1a8] sm:$0xff]
    %v349 = vld [vmem:[#allocation7 + $0x1b0] sm:$0xff]
    %v350 = vld [vmem:[#allocation7 + $0x1b8] sm:$0xff]
    %v351 = vld [vmem:[#allocation7 + $0x1c0] sm:$0xff]
    %v352 = vld [vmem:[#allocation7 + $0x1c8] sm:$0xff]
    %v353 = vld [vmem:[#allocation7 + $0x1d0] sm:$0xff]
    %v354 = vld [vmem:[#allocation7 + $0x1d8] sm:$0xff]
    %v355 = vld [vmem:[#allocation7 + $0x1e0] sm:$0xff]
    %v356 = vld [vmem:[#allocation7 + $0x1e8] sm:$0xff]
    %v357 = vld [vmem:[#allocation7 + $0x1f0] sm:$0xff]
    %v358 = vld [vmem:[#allocation7 + $0x1f8] sm:$0xff]
    %v359 = vld [vmem:[#allocation7 + $0x200] sm:$0xff]
    %v360 = vld [vmem:[#allocation7 + $0x208] sm:$0xff]
    %v361 = vld [vmem:[#allocation7 + $0x210] sm:$0xff]
    %v362 = vld [vmem:[#allocation7 + $0x218] sm:$0xff]
    %v363 = vld [vmem:[#allocation7 + $0x220] sm:$0xff]
    %v364 = vld [vmem:[#allocation7 + $0x228] sm:$0xff]
    %v365 = vld [vmem:[#allocation7 + $0x230] sm:$0xff]
    %v366 = vld [vmem:[#allocation7 + $0x238] sm:$0xff]
    %v367 = vld [vmem:[#allocation7 + $0x240] sm:$0xff]
    %v368 = vld [vmem:[#allocation7 + $0x248] sm:$0xff]
    %v369 = vld [vmem:[#allocation7 + $0x250] sm:$0xff]
    %v370 = vld [vmem:[#allocation7 + $0x258] sm:$0xff]
    %v371 = vld [vmem:[#allocation7 + $0x260] sm:$0xff]
    %v372 = vld [vmem:[#allocation7 + $0x268] sm:$0xff]
    %v373 = vld [vmem:[#allocation7 + $0x270] sm:$0xff]
    %v374 = vld [vmem:[#allocation7 + $0x278] sm:$0xff]
    %v375 = vld [vmem:[#allocation7 + $0x280] sm:$0xff]
    %v376 = vld [vmem:[#allocation7 + $0x288] sm:$0xff]
    %v377 = vld [vmem:[#allocation7 + $0x290] sm:$0xff]
    %v378 = vld [vmem:[#allocation7 + $0x298] sm:$0xff]
    %v379 = vld [vmem:[#allocation7 + $0x2a0] sm:$0xff]
    %v380 = vld [vmem:[#allocation7 + $0x2a8] sm:$0xff]
    %v381 = vld [vmem:[#allocation7 + $0x2b0] sm:$0xff]
    %v382 = vld [vmem:[#allocation7 + $0x2b8] sm:$0xff]
    %v383 = vld [vmem:[#allocation7 + $0x2c0] sm:$0xff]
    %v384 = vld [vmem:[#allocation7 + $0x2c8] sm:$0xff]
    %v385 = vld [vmem:[#allocation7 + $0x2d0] sm:$0xff]
    %v386 = vld [vmem:[#allocation7 + $0x2d8] sm:$0xff]
    %v387 = vld [vmem:[#allocation7 + $0x2e0] sm:$0xff]
    %v388 = vld [vmem:[#allocation7 + $0x2e8] sm:$0xff]
    %v389 = vld [vmem:[#allocation7 + $0x2f0] sm:$0xff]
    %v390 = vld [vmem:[#allocation7 + $0x2f8] sm:$0xff]
    %v391 = vld [vmem:[#allocation7 + $0x300] sm:$0xff]
    %v392 = vld [vmem:[#allocation7 + $0x308] sm:$0xff]
    %v393 = vld [vmem:[#allocation7 + $0x310] sm:$0xff]
    %v394 = vld [vmem:[#allocation7 + $0x318] sm:$0xff]
    %v395 = vld [vmem:[#allocation7 + $0x320] sm:$0xff]
    %v396 = vld [vmem:[#allocation7 + $0x328] sm:$0xff]
    %v397 = vld [vmem:[#allocation7 + $0x330] sm:$0xff]
    %v398 = vld [vmem:[#allocation7 + $0x338] sm:$0xff]
    %v399 = vld [vmem:[#allocation7 + $0x340] sm:$0xff]
    %v400 = vld [vmem:[#allocation7 + $0x348] sm:$0xff]
    %v401 = vld [vmem:[#allocation7 + $0x350] sm:$0xff]
    %v402 = vld [vmem:[#allocation7 + $0x358] sm:$0xff]
    %v403 = vld [vmem:[#allocation7 + $0x360] sm:$0xff]
    %v404 = vld [vmem:[#allocation7 + $0x368] sm:$0xff]
    %v405 = vld [vmem:[#allocation7 + $0x370] sm:$0xff]
    %v406 = vld [vmem:[#allocation7 + $0x378] sm:$0xff]
    %v407 = vld [vmem:[#allocation7 + $0x380] sm:$0xff]
    %v408 = vld [vmem:[#allocation7 + $0x388] sm:$0xff]
    %v409 = vld [vmem:[#allocation7 + $0x390] sm:$0xff]
    %v410 = vld [vmem:[#allocation7 + $0x398] sm:$0xff]
    %v411 = vld [vmem:[#allocation7 + $0x3a0] sm:$0xff]
    %v412 = vld [vmem:[#allocation7 + $0x3a8] sm:$0xff]
    %v413 = vld [vmem:[#allocation7 + $0x3b0] sm:$0xff]
    %v414 = vld [vmem:[#allocation7 + $0x3b8] sm:$0xff]
    %v415 = vld [vmem:[#allocation7 + $0x3c0] sm:$0xff]
    %v416 = vld [vmem:[#allocation7 + $0x3c8] sm:$0xff]
    %v417 = vld [vmem:[#allocation7 + $0x3d0] sm:$0xff]
    %v418 = vld [vmem:[#allocation7 + $0x3d8] sm:$0xff]
    %v419 = vld [vmem:[#allocation7 + $0x3e0] sm:$0xff]
    %v420 = vld [vmem:[#allocation7 + $0x3e8] sm:$0xff]
    %v421 = vld [vmem:[#allocation7 + $0x3f0] sm:$0xff]
    %v422 = vld [vmem:[#allocation7 + $0x3f8] sm:$0xff]
    %v423 = vld [vmem:[#allocation7 + $0x400] sm:$0xff]
    %v424 = vld [vmem:[#allocation7 + $0x408] sm:$0xff]
    %v425 = vld [vmem:[#allocation7 + $0x410] sm:$0xff]
    %v426 = vld [vmem:[#allocation7 + $0x418] sm:$0xff]
    %v427 = vld [vmem:[#allocation7 + $0x420] sm:$0xff]
    %v428 = vld [vmem:[#allocation7 + $0x428] sm:$0xff]
    %v429 = vld [vmem:[#allocation7 + $0x430] sm:$0xff]
    %v430 = vld [vmem:[#allocation7 + $0x438] sm:$0xff]
    %v431 = vld [vmem:[#allocation7 + $0x440] sm:$0xff]
    %v432 = vld [vmem:[#allocation7 + $0x448] sm:$0xff]
    %v433 = vld [vmem:[#allocation7 + $0x450] sm:$0xff]
    %v434 = vld [vmem:[#allocation7 + $0x458] sm:$0xff]
    %v435 = vld [vmem:[#allocation7 + $0x460] sm:$0xff]
    %v436 = vld [vmem:[#allocation7 + $0x468] sm:$0xff]
    %v437 = vld [vmem:[#allocation7 + $0x470] sm:$0xff]
    %v438 = vld [vmem:[#allocation7 + $0x478] sm:$0xff]
    %v439 = vld [vmem:[#allocation7 + $0x480] sm:$0xff]
    %v440 = vld [vmem:[#allocation7 + $0x488] sm:$0xff]
    %v441 = vld [vmem:[#allocation7 + $0x490] sm:$0xff]
    %v442 = vld [vmem:[#allocation7 + $0x498] sm:$0xff]
    %v443 = vld [vmem:[#allocation7 + $0x4a0] sm:$0xff]
    %v444 = vld [vmem:[#allocation7 + $0x4a8] sm:$0xff]
    %v445 = vld [vmem:[#allocation7 + $0x4b0] sm:$0xff]
    %v446 = vld [vmem:[#allocation7 + $0x4b8] sm:$0xff]
    %v447 = vld [vmem:[#allocation7 + $0x4c0] sm:$0xff]
    %v448 = vld [vmem:[#allocation7 + $0x4c8] sm:$0xff]
    %v449 = vld [vmem:[#allocation7 + $0x4d0] sm:$0xff]
    %v450 = vld [vmem:[#allocation7 + $0x4d8] sm:$0xff]
    %v451 = vld [vmem:[#allocation7 + $0x4e0] sm:$0xff]
    %v452 = vld [vmem:[#allocation7 + $0x4e8] sm:$0xff]
    %v453 = vld [vmem:[#allocation7 + $0x4f0] sm:$0xff]
    %v454 = vld [vmem:[#allocation7 + $0x4f8] sm:$0xff]
    %v455 = vld [vmem:[#allocation7 + $0x500] sm:$0xff]
    %v456 = vld [vmem:[#allocation7 + $0x508] sm:$0xff]
    %v457 = vld [vmem:[#allocation7 + $0x510] sm:$0xff]
    %v458 = vld [vmem:[#allocation7 + $0x518] sm:$0xff]
    %v459 = vld [vmem:[#allocation7 + $0x520] sm:$0xff]
    %v460 = vld [vmem:[#allocation7 + $0x528] sm:$0xff]
    %v461 = vld [vmem:[#allocation7 + $0x530] sm:$0xff]
    %v462 = vld [vmem:[#allocation7 + $0x538] sm:$0xff]
    %v463 = vld [vmem:[#allocation7 + $0x540] sm:$0xff]
    %v464 = vld [vmem:[#allocation7 + $0x548] sm:$0xff]
    %v465 = vld [vmem:[#allocation7 + $0x550] sm:$0xff]
    %v466 = vld [vmem:[#allocation7 + $0x558] sm:$0xff]
    %v467 = vld [vmem:[#allocation7 + $0x560] sm:$0xff]
    %v468 = vld [vmem:[#allocation7 + $0x568] sm:$0xff]
    %v469 = vld [vmem:[#allocation7 + $0x570] sm:$0xff]
    %v470 = vld [vmem:[#allocation7 + $0x578] sm:$0xff]
    %v471 = vld [vmem:[#allocation7 + $0x580] sm:$0xff]
    %v472 = vld [vmem:[#allocation7 + $0x588] sm:$0xff]
    %v473 = vld [vmem:[#allocation7 + $0x590] sm:$0xff]
    %v474 = vld [vmem:[#allocation7 + $0x598] sm:$0xff]
    %v475 = vld [vmem:[#allocation7 + $0x5a0] sm:$0xff]
    %v476 = vld [vmem:[#allocation7 + $0x5a8] sm:$0xff]
    %v477 = vld [vmem:[#allocation7 + $0x5b0] sm:$0xff]
    %v478 = vld [vmem:[#allocation7 + $0x5b8] sm:$0xff]
    %v479 = vld [vmem:[#allocation7 + $0x5c0] sm:$0xff]
    %v480 = vld [vmem:[#allocation7 + $0x5c8] sm:$0xff]
    %v481 = vld [vmem:[#allocation7 + $0x5d0] sm:$0xff]
    %v482 = vld [vmem:[#allocation7 + $0x5d8] sm:$0xff]
    %v483 = vld [vmem:[#allocation7 + $0x5e0] sm:$0xff]
    %v484 = vld [vmem:[#allocation7 + $0x5e8] sm:$0xff]
    %v485 = vld [vmem:[#allocation7 + $0x5f0] sm:$0xff]
    %v486 = vld [vmem:[#allocation7 + $0x5f8] sm:$0xff]
    %v487 = vld [vmem:[#allocation7 + $0x600] sm:$0xff]
    %v488 = vld [vmem:[#allocation7 + $0x608] sm:$0xff]
    %v489 = vld [vmem:[#allocation7 + $0x610] sm:$0xff]
    %v490 = vld [vmem:[#allocation7 + $0x618] sm:$0xff]
    %v491 = vld [vmem:[#allocation7 + $0x620] sm:$0xff]
    %v492 = vld [vmem:[#allocation7 + $0x628] sm:$0xff]
    %v493 = vld [vmem:[#allocation7 + $0x630] sm:$0xff]
    %v494 = vld [vmem:[#allocation7 + $0x638] sm:$0xff]
    %v495 = vld [vmem:[#allocation7 + $0x640] sm:$0xff]
    %v496 = vld [vmem:[#allocation7 + $0x648] sm:$0xff]
    %v497 = vld [vmem:[#allocation7 + $0x650] sm:$0xff]
    %v498 = vld [vmem:[#allocation7 + $0x658] sm:$0xff]
    %v499 = vld [vmem:[#allocation7 + $0x660] sm:$0xff]
    %v500 = vld [vmem:[#allocation7 + $0x668] sm:$0xff]
    %v501 = vld [vmem:[#allocation7 + $0x670] sm:$0xff]
    %v502 = vld [vmem:[#allocation7 + $0x678] sm:$0xff]
    %v503 = vld [vmem:[#allocation7 + $0x680] sm:$0xff]
    %v504 = vld [vmem:[#allocation7 + $0x688] sm:$0xff]
    %v505 = vld [vmem:[#allocation7 + $0x690] sm:$0xff]
    %v506 = vld [vmem:[#allocation7 + $0x698] sm:$0xff]
    %v507 = vld [vmem:[#allocation7 + $0x6a0] sm:$0xff]
    %v508 = vld [vmem:[#allocation7 + $0x6a8] sm:$0xff]
    %v509 = vld [vmem:[#allocation7 + $0x6b0] sm:$0xff]
    %v510 = vld [vmem:[#allocation7 + $0x6b8] sm:$0xff]
    %v511 = vld [vmem:[#allocation7 + $0x6c0] sm:$0xff]
    %v512 = vld [vmem:[#allocation7 + $0x6c8] sm:$0xff]
    %v513 = vld [vmem:[#allocation7 + $0x6d0] sm:$0xff]
    %v514 = vld [vmem:[#allocation7 + $0x6d8] sm:$0xff]
    %v515 = vld [vmem:[#allocation7 + $0x6e0] sm:$0xff]
    %v516 = vld [vmem:[#allocation7 + $0x6e8] sm:$0xff]
    %v517 = vld [vmem:[#allocation7 + $0x6f0] sm:$0xff]
    %v518 = vld [vmem:[#allocation7 + $0x6f8] sm:$0xff]
    %v519 = vld [vmem:[#allocation7 + $0x700] sm:$0xff]
    %v520 = vld [vmem:[#allocation7 + $0x708] sm:$0xff]
    %v521 = vld [vmem:[#allocation7 + $0x710] sm:$0xff]
    %v522 = vld [vmem:[#allocation7 + $0x718] sm:$0xff]
    %v523 = vld [vmem:[#allocation7 + $0x720] sm:$0xff]
    %v524 = vld [vmem:[#allocation7 + $0x728] sm:$0xff]
    %v525 = vld [vmem:[#allocation7 + $0x730] sm:$0xff]
    %v526 = vld [vmem:[#allocation7 + $0x738] sm:$0xff]
    %v527 = vld [vmem:[#allocation7 + $0x740] sm:$0xff]
    %v528 = vld [vmem:[#allocation7 + $0x748] sm:$0xff]
    %v529 = vld [vmem:[#allocation7 + $0x750] sm:$0xff]
    %v530 = vld [vmem:[#allocation7 + $0x758] sm:$0xff]
    %v531 = vld [vmem:[#allocation7 + $0x760] sm:$0xff]
    %v532 = vld [vmem:[#allocation7 + $0x768] sm:$0xff]
    %v533 = vld [vmem:[#allocation7 + $0x770] sm:$0xff]
    %v534 = vld [vmem:[#allocation7 + $0x778] sm:$0xff]
    %v535 = vld [vmem:[#allocation7 + $0x780] sm:$0xff]
    %v536 = vld [vmem:[#allocation7 + $0x788] sm:$0xff]
    %v537 = vld [vmem:[#allocation7 + $0x790] sm:$0xff]
    %v538 = vld [vmem:[#allocation7 + $0x798] sm:$0xff]
    %v539 = vld [vmem:[#allocation7 + $0x7a0] sm:$0xff]
    %v540 = vld [vmem:[#allocation7 + $0x7a8] sm:$0xff]
    %v541 = vld [vmem:[#allocation7 + $0x7b0] sm:$0xff]
    %v542 = vld [vmem:[#allocation7 + $0x7b8] sm:$0xff]
    %v543 = vld [vmem:[#allocation7 + $0x7c0] sm:$0xff]
    %v544 = vld [vmem:[#allocation7 + $0x7c8] sm:$0xff]
    %v545 = vld [vmem:[#allocation7 + $0x7d0] sm:$0xff]
    %v546 = vld [vmem:[#allocation7 + $0x7d8] sm:$0xff]
    %v547 = vld [vmem:[#allocation7 + $0x7e0] sm:$0xff]
    %v548 = vld [vmem:[#allocation7 + $0x7e8] sm:$0xff]
    %v549 = vld [vmem:[#allocation7 + $0x7f0] sm:$0xff]
    %v550 = vld [vmem:[#allocation7 + $0x7f8] sm:$0xff]
    %v551 = vld [vmem:[#allocation7 + $0x800] sm:$0xff]
    %v552 = vld [vmem:[#allocation7 + $0x808] sm:$0xff]
    %v553 = vld [vmem:[#allocation7 + $0x810] sm:$0xff]
    %v554 = vld [vmem:[#allocation7 + $0x818] sm:$0xff]
    %v555 = vld [vmem:[#allocation7 + $0x820] sm:$0xff]
    %v556 = vld [vmem:[#allocation7 + $0x828] sm:$0xff]
    %v557 = vld [vmem:[#allocation7 + $0x830] sm:$0xff]
    %v558 = vld [vmem:[#allocation7 + $0x838] sm:$0xff]
    %v559 = vld [vmem:[#allocation7 + $0x840] sm:$0xff]
    %v560 = vld [vmem:[#allocation7 + $0x848] sm:$0xff]
    %v561 = vld [vmem:[#allocation7 + $0x850] sm:$0xff]
    %v562 = vld [vmem:[#allocation7 + $0x858] sm:$0xff]
    %v563 = vld [vmem:[#allocation7 + $0x860] sm:$0xff]
    %v564 = vld [vmem:[#allocation7 + $0x868] sm:$0xff]
    %v565 = vld [vmem:[#allocation7 + $0x870] sm:$0xff]
    %v566 = vld [vmem:[#allocation7 + $0x878] sm:$0xff]
    %v567 = vld [vmem:[#allocation7 + $0x880] sm:$0xff]
    %v568 = vld [vmem:[#allocation7 + $0x888] sm:$0xff]
    %v569 = vld [vmem:[#allocation7 + $0x890] sm:$0xff]
    %v570 = vld [vmem:[#allocation7 + $0x898] sm:$0xff]
    %v571 = vld [vmem:[#allocation7 + $0x8a0] sm:$0xff]
    %v572 = vld [vmem:[#allocation7 + $0x8a8] sm:$0xff]
    %v573 = vld [vmem:[#allocation7 + $0x8b0] sm:$0xff]
    %v574 = vld [vmem:[#allocation7 + $0x8b8] sm:$0xff]
    %v575 = vld [vmem:[#allocation7 + $0x8c0] sm:$0xff]
    %v576 = vld [vmem:[#allocation7 + $0x8c8] sm:$0xff]
    %v577 = vld [vmem:[#allocation7 + $0x8d0] sm:$0xff]
    %v578 = vld [vmem:[#allocation7 + $0x8d8] sm:$0xff]
    %v579 = vld [vmem:[#allocation7 + $0x8e0] sm:$0xff]
    %v580 = vld [vmem:[#allocation7 + $0x8e8] sm:$0xff]
    %v581 = vld [vmem:[#allocation7 + $0x8f0] sm:$0xff]
    %v582 = vld [vmem:[#allocation7 + $0x8f8] sm:$0xff]
    %v583 = vld [vmem:[#allocation8] sm:$0x3f]
    %v585 = vlaneseq
    %v586 = vshrl.u32 %v585, 7
    %v587 = vsub.s32 0, %v586
    %v588 = vrot.slane %v583, %v587
    %v589 = vlaneseq
    %v590 = vshrl.u32 %v589, 7
    %v591 = vsub.s32 1, %v590
    %v592 = vrot.slane %v583, %v591
    %v593 = vlaneseq
    %v594 = vshrl.u32 %v593, 7
    %v595 = vsub.s32 2, %v594
    %v596 = vrot.slane %v583, %v595
    %v597 = vlaneseq
    %v598 = vshrl.u32 %v597, 7
    %v599 = vsub.s32 3, %v598
    %v600 = vrot.slane %v583, %v599
    %v601 = vlaneseq
    %v602 = vshrl.u32 %v601, 7
    %v603 = vsub.s32 4, %v602
    %v604 = vrot.slane %v583, %v603
    %v605 = vlaneseq
    %v606 = vshrl.u32 %v605, 7
    %v607 = vsub.s32 5, %v606
    %v608 = vrot.slane %v583, %v607
    %v903 = vunpack.c.l.b16 %v295
    %v904 = vunpack.c.h.b16 %v295
    %v905 = vunpack.c.l.b16 %v296
    %v906 = vunpack.c.h.b16 %v296
    %v907 = vunpack.c.l.b16 %v297
    %v908 = vunpack.c.h.b16 %v297
    %v909 = vunpack.c.l.b16 %v298
    %v910 = vunpack.c.h.b16 %v298
    %v911 = vunpack.c.l.b16 %v299
    %v912 = vunpack.c.h.b16 %v299
    %v913 = vunpack.c.l.b16 %v300
    %v914 = vunpack.c.h.b16 %v300
    %v915 = vunpack.c.l.b16 %v301
    %v916 = vunpack.c.h.b16 %v301
    %v917 = vunpack.c.l.b16 %v302
    %v918 = vunpack.c.h.b16 %v302
    %v919 = vunpack.c.l.b16 %v303
    %v920 = vunpack.c.h.b16 %v303
    %v921 = vunpack.c.l.b16 %v304
    %v922 = vunpack.c.h.b16 %v304
    %v923 = vunpack.c.l.b16 %v305
    %v924 = vunpack.c.h.b16 %v305
    %v925 = vunpack.c.l.b16 %v306
    %v926 = vunpack.c.h.b16 %v306
    %v927 = vunpack.c.l.b16 %v307
    %v928 = vunpack.c.h.b16 %v307
    %v929 = vunpack.c.l.b16 %v308
    %v930 = vunpack.c.h.b16 %v308
    %v931 = vunpack.c.l.b16 %v309
    %v932 = vunpack.c.h.b16 %v309
    %v933 = vunpack.c.l.b16 %v310
    %v934 = vunpack.c.h.b16 %v310
    %v935 = vunpack.c.l.b16 %v311
    %v936 = vunpack.c.h.b16 %v311
    %v937 = vunpack.c.l.b16 %v312
    %v938 = vunpack.c.h.b16 %v312
    %v939 = vunpack.c.l.b16 %v313
    %v940 = vunpack.c.h.b16 %v313
    %v941 = vunpack.c.l.b16 %v314
    %v942 = vunpack.c.h.b16 %v314
    %v943 = vunpack.c.l.b16 %v315
    %v944 = vunpack.c.h.b16 %v315
    %v945 = vunpack.c.l.b16 %v316
    %v946 = vunpack.c.h.b16 %v316
    %v947 = vunpack.c.l.b16 %v317
    %v948 = vunpack.c.h.b16 %v317
    %v949 = vunpack.c.l.b16 %v318
    %v950 = vunpack.c.h.b16 %v318
    %v951 = vunpack.c.l.b16 %v319
    %v952 = vunpack.c.h.b16 %v319
    %v953 = vunpack.c.l.b16 %v320
    %v954 = vunpack.c.h.b16 %v320
    %v955 = vunpack.c.l.b16 %v321
    %v956 = vunpack.c.h.b16 %v321
    %v957 = vunpack.c.l.b16 %v322
    %v958 = vunpack.c.h.b16 %v322
    %v959 = vunpack.c.l.b16 %v323
    %v960 = vunpack.c.h.b16 %v323
    %v961 = vunpack.c.l.b16 %v324
    %v962 = vunpack.c.h.b16 %v324
    %v963 = vunpack.c.l.b16 %v325
    %v964 = vunpack.c.h.b16 %v325
    %v965 = vunpack.c.l.b16 %v326
    %v966 = vunpack.c.h.b16 %v326
    %v967 = vunpack.c.l.b16 %v327
    %v968 = vunpack.c.h.b16 %v327
    %v969 = vunpack.c.l.b16 %v328
    %v970 = vunpack.c.h.b16 %v328
    %v971 = vunpack.c.l.b16 %v329
    %v972 = vunpack.c.h.b16 %v329
    %v973 = vunpack.c.l.b16 %v330
    %v974 = vunpack.c.h.b16 %v330
    %v975 = vunpack.c.l.b16 %v331
    %v976 = vunpack.c.h.b16 %v331
    %v977 = vunpack.c.l.b16 %v332
    %v978 = vunpack.c.h.b16 %v332
    %v979 = vunpack.c.l.b16 %v333
    %v980 = vunpack.c.h.b16 %v333
    %v981 = vunpack.c.l.b16 %v334
    %v982 = vunpack.c.h.b16 %v334
    %v983 = vunpack.c.l.b16 %v335
    %v984 = vunpack.c.h.b16 %v335
    %v985 = vunpack.c.l.b16 %v336
    %v986 = vunpack.c.h.b16 %v336
    %v987 = vunpack.c.l.b16 %v337
    %v988 = vunpack.c.h.b16 %v337
    %v989 = vunpack.c.l.b16 %v338
    %v990 = vunpack.c.h.b16 %v338
    %v991 = vunpack.c.l.b16 %v339
    %v992 = vunpack.c.h.b16 %v339
    %v993 = vunpack.c.l.b16 %v340
    %v994 = vunpack.c.h.b16 %v340
    %v995 = vunpack.c.l.b16 %v341
    %v996 = vunpack.c.h.b16 %v341
    %v997 = vunpack.c.l.b16 %v342
    %v998 = vunpack.c.h.b16 %v342
    %v999 = vunpack.c.l.b16 %v343
    %v1000 = vunpack.c.h.b16 %v343
    %v1001 = vunpack.c.l.b16 %v344
    %v1002 = vunpack.c.h.b16 %v344
    %v1003 = vunpack.c.l.b16 %v345
    %v1004 = vunpack.c.h.b16 %v345
    %v1005 = vunpack.c.l.b16 %v346
    %v1006 = vunpack.c.h.b16 %v346
    %v1007 = vunpack.c.l.b16 %v347
    %v1008 = vunpack.c.h.b16 %v347
    %v1009 = vunpack.c.l.b16 %v348
    %v1010 = vunpack.c.h.b16 %v348
    %v1011 = vunpack.c.l.b16 %v349
    %v1012 = vunpack.c.h.b16 %v349
    %v1013 = vunpack.c.l.b16 %v350
    %v1014 = vunpack.c.h.b16 %v350
    %v1015 = vunpack.c.l.b16 %v351
    %v1016 = vunpack.c.h.b16 %v351
    %v1017 = vunpack.c.l.b16 %v352
    %v1018 = vunpack.c.h.b16 %v352
    %v1019 = vunpack.c.l.b16 %v353
    %v1020 = vunpack.c.h.b16 %v353
    %v1021 = vunpack.c.l.b16 %v354
    %v1022 = vunpack.c.h.b16 %v354
    %v1023 = vunpack.c.l.b16 %v355
    %v1024 = vunpack.c.h.b16 %v355
    %v1025 = vunpack.c.l.b16 %v356
    %v1026 = vunpack.c.h.b16 %v356
    %v1027 = vunpack.c.l.b16 %v357
    %v1028 = vunpack.c.h.b16 %v357
    %v1029 = vunpack.c.l.b16 %v358
    %v1030 = vunpack.c.h.b16 %v358
    %v1031 = vunpack.c.l.b16 %v359
    %v1032 = vunpack.c.h.b16 %v359
    %v1033 = vunpack.c.l.b16 %v360
    %v1034 = vunpack.c.h.b16 %v360
    %v1035 = vunpack.c.l.b16 %v361
    %v1036 = vunpack.c.h.b16 %v361
    %v1037 = vunpack.c.l.b16 %v362
    %v1038 = vunpack.c.h.b16 %v362
    %v1039 = vunpack.c.l.b16 %v363
    %v1040 = vunpack.c.h.b16 %v363
    %v1041 = vunpack.c.l.b16 %v364
    %v1042 = vunpack.c.h.b16 %v364
    %v1043 = vunpack.c.l.b16 %v365
    %v1044 = vunpack.c.h.b16 %v365
    %v1045 = vunpack.c.l.b16 %v366
    %v1046 = vunpack.c.h.b16 %v366
    %v1047 = vunpack.c.l.b16 %v367
    %v1048 = vunpack.c.h.b16 %v367
    %v1049 = vunpack.c.l.b16 %v368
    %v1050 = vunpack.c.h.b16 %v368
    %v1051 = vunpack.c.l.b16 %v369
    %v1052 = vunpack.c.h.b16 %v369
    %v1053 = vunpack.c.l.b16 %v370
    %v1054 = vunpack.c.h.b16 %v370
    %v1055 = vunpack.c.l.b16 %v371
    %v1056 = vunpack.c.h.b16 %v371
    %v1057 = vunpack.c.l.b16 %v372
    %v1058 = vunpack.c.h.b16 %v372
    %v1059 = vunpack.c.l.b16 %v373
    %v1060 = vunpack.c.h.b16 %v373
    %v1061 = vunpack.c.l.b16 %v374
    %v1062 = vunpack.c.h.b16 %v374
    %v1063 = vunpack.c.l.b16 %v375
    %v1064 = vunpack.c.h.b16 %v375
    %v1065 = vunpack.c.l.b16 %v376
    %v1066 = vunpack.c.h.b16 %v376
    %v1067 = vunpack.c.l.b16 %v377
    %v1068 = vunpack.c.h.b16 %v377
    %v1069 = vunpack.c.l.b16 %v378
    %v1070 = vunpack.c.h.b16 %v378
    %v1071 = vunpack.c.l.b16 %v379
    %v1072 = vunpack.c.h.b16 %v379
    %v1073 = vunpack.c.l.b16 %v380
    %v1074 = vunpack.c.h.b16 %v380
    %v1075 = vunpack.c.l.b16 %v381
    %v1076 = vunpack.c.h.b16 %v381
    %v1077 = vunpack.c.l.b16 %v382
    %v1078 = vunpack.c.h.b16 %v382
    %v1079 = vunpack.c.l.b16 %v383
    %v1080 = vunpack.c.h.b16 %v383
    %v1081 = vunpack.c.l.b16 %v384
    %v1082 = vunpack.c.h.b16 %v384
    %v1083 = vunpack.c.l.b16 %v385
    %v1084 = vunpack.c.h.b16 %v385
    %v1085 = vunpack.c.l.b16 %v386
    %v1086 = vunpack.c.h.b16 %v386
    %v1087 = vunpack.c.l.b16 %v387
    %v1088 = vunpack.c.h.b16 %v387
    %v1089 = vunpack.c.l.b16 %v388
    %v1090 = vunpack.c.h.b16 %v388
    %v1091 = vunpack.c.l.b16 %v389
    %v1092 = vunpack.c.h.b16 %v389
    %v1093 = vunpack.c.l.b16 %v390
    %v1094 = vunpack.c.h.b16 %v390
    %v1095 = vunpack.c.l.b16 %v391
    %v1096 = vunpack.c.h.b16 %v391
    %v1097 = vunpack.c.l.b16 %v392
    %v1098 = vunpack.c.h.b16 %v392
    %v1099 = vunpack.c.l.b16 %v393
    %v1100 = vunpack.c.h.b16 %v393
    %v1101 = vunpack.c.l.b16 %v394
    %v1102 = vunpack.c.h.b16 %v394
    %v1103 = vunpack.c.l.b16 %v395
    %v1104 = vunpack.c.h.b16 %v395
    %v1105 = vunpack.c.l.b16 %v396
    %v1106 = vunpack.c.h.b16 %v396
    %v1107 = vunpack.c.l.b16 %v397
    %v1108 = vunpack.c.h.b16 %v397
    %v1109 = vunpack.c.l.b16 %v398
    %v1110 = vunpack.c.h.b16 %v398
    %v1111 = vunpack.c.l.b16 %v399
    %v1112 = vunpack.c.h.b16 %v399
    %v1113 = vunpack.c.l.b16 %v400
    %v1114 = vunpack.c.h.b16 %v400
    %v1115 = vunpack.c.l.b16 %v401
    %v1116 = vunpack.c.h.b16 %v401
    %v1117 = vunpack.c.l.b16 %v402
    %v1118 = vunpack.c.h.b16 %v402
    %v1119 = vunpack.c.l.b16 %v403
    %v1120 = vunpack.c.h.b16 %v403
    %v1121 = vunpack.c.l.b16 %v404
    %v1122 = vunpack.c.h.b16 %v404
    %v1123 = vunpack.c.l.b16 %v405
    %v1124 = vunpack.c.h.b16 %v405
    %v1125 = vunpack.c.l.b16 %v406
    %v1126 = vunpack.c.h.b16 %v406
    %v1127 = vunpack.c.l.b16 %v407
    %v1128 = vunpack.c.h.b16 %v407
    %v1129 = vunpack.c.l.b16 %v408
    %v1130 = vunpack.c.h.b16 %v408
    %v1131 = vunpack.c.l.b16 %v409
    %v1132 = vunpack.c.h.b16 %v409
    %v1133 = vunpack.c.l.b16 %v410
    %v1134 = vunpack.c.h.b16 %v410
    %v1135 = vunpack.c.l.b16 %v411
    %v1136 = vunpack.c.h.b16 %v411
    %v1137 = vunpack.c.l.b16 %v412
    %v1138 = vunpack.c.h.b16 %v412
    %v1139 = vunpack.c.l.b16 %v413
    %v1140 = vunpack.c.h.b16 %v413
    %v1141 = vunpack.c.l.b16 %v414
    %v1142 = vunpack.c.h.b16 %v414
    %v1143 = vunpack.c.l.b16 %v415
    %v1144 = vunpack.c.h.b16 %v415
    %v1145 = vunpack.c.l.b16 %v416
    %v1146 = vunpack.c.h.b16 %v416
    %v1147 = vunpack.c.l.b16 %v417
    %v1148 = vunpack.c.h.b16 %v417
    %v1149 = vunpack.c.l.b16 %v418
    %v1150 = vunpack.c.h.b16 %v418
    %v1151 = vunpack.c.l.b16 %v419
    %v1152 = vunpack.c.h.b16 %v419
    %v1153 = vunpack.c.l.b16 %v420
    %v1154 = vunpack.c.h.b16 %v420
    %v1155 = vunpack.c.l.b16 %v421
    %v1156 = vunpack.c.h.b16 %v421
    %v1157 = vunpack.c.l.b16 %v422
    %v1158 = vunpack.c.h.b16 %v422
    %v1159 = vunpack.c.l.b16 %v423
    %v1160 = vunpack.c.h.b16 %v423
    %v1161 = vunpack.c.l.b16 %v424
    %v1162 = vunpack.c.h.b16 %v424
    %v1163 = vunpack.c.l.b16 %v425
    %v1164 = vunpack.c.h.b16 %v425
    %v1165 = vunpack.c.l.b16 %v426
    %v1166 = vunpack.c.h.b16 %v426
    %v1167 = vunpack.c.l.b16 %v427
    %v1168 = vunpack.c.h.b16 %v427
    %v1169 = vunpack.c.l.b16 %v428
    %v1170 = vunpack.c.h.b16 %v428
    %v1171 = vunpack.c.l.b16 %v429
    %v1172 = vunpack.c.h.b16 %v429
    %v1173 = vunpack.c.l.b16 %v430
    %v1174 = vunpack.c.h.b16 %v430
    %v1175 = vunpack.c.l.b16 %v431
    %v1176 = vunpack.c.h.b16 %v431
    %v1177 = vunpack.c.l.b16 %v432
    %v1178 = vunpack.c.h.b16 %v432
    %v1179 = vunpack.c.l.b16 %v433
    %v1180 = vunpack.c.h.b16 %v433
    %v1181 = vunpack.c.l.b16 %v434
    %v1182 = vunpack.c.h.b16 %v434
    %v1183 = vunpack.c.l.b16 %v435
    %v1184 = vunpack.c.h.b16 %v435
    %v1185 = vunpack.c.l.b16 %v436
    %v1186 = vunpack.c.h.b16 %v436
    %v1187 = vunpack.c.l.b16 %v437
    %v1188 = vunpack.c.h.b16 %v437
    %v1189 = vunpack.c.l.b16 %v438
    %v1190 = vunpack.c.h.b16 %v438
    %v1191 = vunpack.c.l.b16 %v439
    %v1192 = vunpack.c.h.b16 %v439
    %v1193 = vunpack.c.l.b16 %v440
    %v1194 = vunpack.c.h.b16 %v440
    %v1195 = vunpack.c.l.b16 %v441
    %v1196 = vunpack.c.h.b16 %v441
    %v1197 = vunpack.c.l.b16 %v442
    %v1198 = vunpack.c.h.b16 %v442
    %v1199 = vunpack.c.l.b16 %v443
    %v1200 = vunpack.c.h.b16 %v443
    %v1201 = vunpack.c.l.b16 %v444
    %v1202 = vunpack.c.h.b16 %v444
    %v1203 = vunpack.c.l.b16 %v445
    %v1204 = vunpack.c.h.b16 %v445
    %v1205 = vunpack.c.l.b16 %v446
    %v1206 = vunpack.c.h.b16 %v446
    %v1207 = vunpack.c.l.b16 %v447
    %v1208 = vunpack.c.h.b16 %v447
    %v1209 = vunpack.c.l.b16 %v448
    %v1210 = vunpack.c.h.b16 %v448
    %v1211 = vunpack.c.l.b16 %v449
    %v1212 = vunpack.c.h.b16 %v449
    %v1213 = vunpack.c.l.b16 %v450
    %v1214 = vunpack.c.h.b16 %v450
    %v1215 = vunpack.c.l.b16 %v451
    %v1216 = vunpack.c.h.b16 %v451
    %v1217 = vunpack.c.l.b16 %v452
    %v1218 = vunpack.c.h.b16 %v452
    %v1219 = vunpack.c.l.b16 %v453
    %v1220 = vunpack.c.h.b16 %v453
    %v1221 = vunpack.c.l.b16 %v454
    %v1222 = vunpack.c.h.b16 %v454
    %v1223 = vunpack.c.l.b16 %v455
    %v1224 = vunpack.c.h.b16 %v455
    %v1225 = vunpack.c.l.b16 %v456
    %v1226 = vunpack.c.h.b16 %v456
    %v1227 = vunpack.c.l.b16 %v457
    %v1228 = vunpack.c.h.b16 %v457
    %v1229 = vunpack.c.l.b16 %v458
    %v1230 = vunpack.c.h.b16 %v458
    %v1231 = vunpack.c.l.b16 %v459
    %v1232 = vunpack.c.h.b16 %v459
    %v1233 = vunpack.c.l.b16 %v460
    %v1234 = vunpack.c.h.b16 %v460
    %v1235 = vunpack.c.l.b16 %v461
    %v1236 = vunpack.c.h.b16 %v461
    %v1237 = vunpack.c.l.b16 %v462
    %v1238 = vunpack.c.h.b16 %v462
    %v1239 = vunpack.c.l.b16 %v463
    %v1240 = vunpack.c.h.b16 %v463
    %v1241 = vunpack.c.l.b16 %v464
    %v1242 = vunpack.c.h.b16 %v464
    %v1243 = vunpack.c.l.b16 %v465
    %v1244 = vunpack.c.h.b16 %v465
    %v1245 = vunpack.c.l.b16 %v466
    %v1246 = vunpack.c.h.b16 %v466
    %v1247 = vunpack.c.l.b16 %v467
    %v1248 = vunpack.c.h.b16 %v467
    %v1249 = vunpack.c.l.b16 %v468
    %v1250 = vunpack.c.h.b16 %v468
    %v1251 = vunpack.c.l.b16 %v469
    %v1252 = vunpack.c.h.b16 %v469
    %v1253 = vunpack.c.l.b16 %v470
    %v1254 = vunpack.c.h.b16 %v470
    %v1255 = vunpack.c.l.b16 %v471
    %v1256 = vunpack.c.h.b16 %v471
    %v1257 = vunpack.c.l.b16 %v472
    %v1258 = vunpack.c.h.b16 %v472
    %v1259 = vunpack.c.l.b16 %v473
    %v1260 = vunpack.c.h.b16 %v473
    %v1261 = vunpack.c.l.b16 %v474
    %v1262 = vunpack.c.h.b16 %v474
    %v1263 = vunpack.c.l.b16 %v475
    %v1264 = vunpack.c.h.b16 %v475
    %v1265 = vunpack.c.l.b16 %v476
    %v1266 = vunpack.c.h.b16 %v476
    %v1267 = vunpack.c.l.b16 %v477
    %v1268 = vunpack.c.h.b16 %v477
    %v1269 = vunpack.c.l.b16 %v478
    %v1270 = vunpack.c.h.b16 %v478
    %v1271 = vunpack.c.l.b16 %v479
    %v1272 = vunpack.c.h.b16 %v479
    %v1273 = vunpack.c.l.b16 %v480
    %v1274 = vunpack.c.h.b16 %v480
    %v1275 = vunpack.c.l.b16 %v481
    %v1276 = vunpack.c.h.b16 %v481
    %v1277 = vunpack.c.l.b16 %v482
    %v1278 = vunpack.c.h.b16 %v482
    %v1279 = vunpack.c.l.b16 %v483
    %v1280 = vunpack.c.h.b16 %v483
    %v1281 = vunpack.c.l.b16 %v484
    %v1282 = vunpack.c.h.b16 %v484
    %v1283 = vunpack.c.l.b16 %v485
    %v1284 = vunpack.c.h.b16 %v485
    %v1285 = vunpack.c.l.b16 %v486
    %v1286 = vunpack.c.h.b16 %v486
    %v1287 = vunpack.c.l.b16 %v487
    %v1288 = vunpack.c.h.b16 %v487
    %v1289 = vunpack.c.l.b16 %v488
    %v1290 = vunpack.c.h.b16 %v488
    %v1291 = vunpack.c.l.b16 %v489
    %v1292 = vunpack.c.h.b16 %v489
    %v1293 = vunpack.c.l.b16 %v490
    %v1294 = vunpack.c.h.b16 %v490
    %v1295 = vunpack.c.l.b16 %v491
    %v1296 = vunpack.c.h.b16 %v491
    %v1297 = vunpack.c.l.b16 %v492
    %v1298 = vunpack.c.h.b16 %v492
    %v1299 = vunpack.c.l.b16 %v493
    %v1300 = vunpack.c.h.b16 %v493
    %v1301 = vunpack.c.l.b16 %v494
    %v1302 = vunpack.c.h.b16 %v494
    %v1303 = vunpack.c.l.b16 %v495
    %v1304 = vunpack.c.h.b16 %v495
    %v1305 = vunpack.c.l.b16 %v496
    %v1306 = vunpack.c.h.b16 %v496
    %v1307 = vunpack.c.l.b16 %v497
    %v1308 = vunpack.c.h.b16 %v497
    %v1309 = vunpack.c.l.b16 %v498
    %v1310 = vunpack.c.h.b16 %v498
    %v1311 = vunpack.c.l.b16 %v499
    %v1312 = vunpack.c.h.b16 %v499
    %v1313 = vunpack.c.l.b16 %v500
    %v1314 = vunpack.c.h.b16 %v500
    %v1315 = vunpack.c.l.b16 %v501
    %v1316 = vunpack.c.h.b16 %v501
    %v1317 = vunpack.c.l.b16 %v502
    %v1318 = vunpack.c.h.b16 %v502
    %v1319 = vunpack.c.l.b16 %v503
    %v1320 = vunpack.c.h.b16 %v503
    %v1321 = vunpack.c.l.b16 %v504
    %v1322 = vunpack.c.h.b16 %v504
    %v1323 = vunpack.c.l.b16 %v505
    %v1324 = vunpack.c.h.b16 %v505
    %v1325 = vunpack.c.l.b16 %v506
    %v1326 = vunpack.c.h.b16 %v506
    %v1327 = vunpack.c.l.b16 %v507
    %v1328 = vunpack.c.h.b16 %v507
    %v1329 = vunpack.c.l.b16 %v508
    %v1330 = vunpack.c.h.b16 %v508
    %v1331 = vunpack.c.l.b16 %v509
    %v1332 = vunpack.c.h.b16 %v509
    %v1333 = vunpack.c.l.b16 %v510
    %v1334 = vunpack.c.h.b16 %v510
    %v1335 = vunpack.c.l.b16 %v511
    %v1336 = vunpack.c.h.b16 %v511
    %v1337 = vunpack.c.l.b16 %v512
    %v1338 = vunpack.c.h.b16 %v512
    %v1339 = vunpack.c.l.b16 %v513
    %v1340 = vunpack.c.h.b16 %v513
    %v1341 = vunpack.c.l.b16 %v514
    %v1342 = vunpack.c.h.b16 %v514
    %v1343 = vunpack.c.l.b16 %v515
    %v1344 = vunpack.c.h.b16 %v515
    %v1345 = vunpack.c.l.b16 %v516
    %v1346 = vunpack.c.h.b16 %v516
    %v1347 = vunpack.c.l.b16 %v517
    %v1348 = vunpack.c.h.b16 %v517
    %v1349 = vunpack.c.l.b16 %v518
    %v1350 = vunpack.c.h.b16 %v518
    %v1351 = vunpack.c.l.b16 %v519
    %v1352 = vunpack.c.h.b16 %v519
    %v1353 = vunpack.c.l.b16 %v520
    %v1354 = vunpack.c.h.b16 %v520
    %v1355 = vunpack.c.l.b16 %v521
    %v1356 = vunpack.c.h.b16 %v521
    %v1357 = vunpack.c.l.b16 %v522
    %v1358 = vunpack.c.h.b16 %v522
    %v1359 = vunpack.c.l.b16 %v523
    %v1360 = vunpack.c.h.b16 %v523
    %v1361 = vunpack.c.l.b16 %v524
    %v1362 = vunpack.c.h.b16 %v524
    %v1363 = vunpack.c.l.b16 %v525
    %v1364 = vunpack.c.h.b16 %v525
    %v1365 = vunpack.c.l.b16 %v526
    %v1366 = vunpack.c.h.b16 %v526
    %v1367 = vunpack.c.l.b16 %v527
    %v1368 = vunpack.c.h.b16 %v527
    %v1369 = vunpack.c.l.b16 %v528
    %v1370 = vunpack.c.h.b16 %v528
    %v1371 = vunpack.c.l.b16 %v529
    %v1372 = vunpack.c.h.b16 %v529
    %v1373 = vunpack.c.l.b16 %v530
    %v1374 = vunpack.c.h.b16 %v530
    %v1375 = vunpack.c.l.b16 %v531
    %v1376 = vunpack.c.h.b16 %v531
    %v1377 = vunpack.c.l.b16 %v532
    %v1378 = vunpack.c.h.b16 %v532
    %v1379 = vunpack.c.l.b16 %v533
    %v1380 = vunpack.c.h.b16 %v533
    %v1381 = vunpack.c.l.b16 %v534
    %v1382 = vunpack.c.h.b16 %v534
    %v1383 = vunpack.c.l.b16 %v535
    %v1384 = vunpack.c.h.b16 %v535
    %v1385 = vunpack.c.l.b16 %v536
    %v1386 = vunpack.c.h.b16 %v536
    %v1387 = vunpack.c.l.b16 %v537
    %v1388 = vunpack.c.h.b16 %v537
    %v1389 = vunpack.c.l.b16 %v538
    %v1390 = vunpack.c.h.b16 %v538
    %v1391 = vunpack.c.l.b16 %v539
    %v1392 = vunpack.c.h.b16 %v539
    %v1393 = vunpack.c.l.b16 %v540
    %v1394 = vunpack.c.h.b16 %v540
    %v1395 = vunpack.c.l.b16 %v541
    %v1396 = vunpack.c.h.b16 %v541
    %v1397 = vunpack.c.l.b16 %v542
    %v1398 = vunpack.c.h.b16 %v542
    %v1399 = vunpack.c.l.b16 %v543
    %v1400 = vunpack.c.h.b16 %v543
    %v1401 = vunpack.c.l.b16 %v544
    %v1402 = vunpack.c.h.b16 %v544
    %v1403 = vunpack.c.l.b16 %v545
    %v1404 = vunpack.c.h.b16 %v545
    %v1405 = vunpack.c.l.b16 %v546
    %v1406 = vunpack.c.h.b16 %v546
    %v1407 = vunpack.c.l.b16 %v547
    %v1408 = vunpack.c.h.b16 %v547
    %v1409 = vunpack.c.l.b16 %v548
    %v1410 = vunpack.c.h.b16 %v548
    %v1411 = vunpack.c.l.b16 %v549
    %v1412 = vunpack.c.h.b16 %v549
    %v1413 = vunpack.c.l.b16 %v550
    %v1414 = vunpack.c.h.b16 %v550
    %v1415 = vunpack.c.l.b16 %v551
    %v1416 = vunpack.c.h.b16 %v551
    %v1417 = vunpack.c.l.b16 %v552
    %v1418 = vunpack.c.h.b16 %v552
    %v1419 = vunpack.c.l.b16 %v553
    %v1420 = vunpack.c.h.b16 %v553
    %v1421 = vunpack.c.l.b16 %v554
    %v1422 = vunpack.c.h.b16 %v554
    %v1423 = vunpack.c.l.b16 %v555
    %v1424 = vunpack.c.h.b16 %v555
    %v1425 = vunpack.c.l.b16 %v556
    %v1426 = vunpack.c.h.b16 %v556
    %v1427 = vunpack.c.l.b16 %v557
    %v1428 = vunpack.c.h.b16 %v557
    %v1429 = vunpack.c.l.b16 %v558
    %v1430 = vunpack.c.h.b16 %v558
    %v1431 = vunpack.c.l.b16 %v559
    %v1432 = vunpack.c.h.b16 %v559
    %v1433 = vunpack.c.l.b16 %v560
    %v1434 = vunpack.c.h.b16 %v560
    %v1435 = vunpack.c.l.b16 %v561
    %v1436 = vunpack.c.h.b16 %v561
    %v1437 = vunpack.c.l.b16 %v562
    %v1438 = vunpack.c.h.b16 %v562
    %v1439 = vunpack.c.l.b16 %v563
    %v1440 = vunpack.c.h.b16 %v563
    %v1441 = vunpack.c.l.b16 %v564
    %v1442 = vunpack.c.h.b16 %v564
    %v1443 = vunpack.c.l.b16 %v565
    %v1444 = vunpack.c.h.b16 %v565
    %v1445 = vunpack.c.l.b16 %v566
    %v1446 = vunpack.c.h.b16 %v566
    %v1447 = vunpack.c.l.b16 %v567
    %v1448 = vunpack.c.h.b16 %v567
    %v1449 = vunpack.c.l.b16 %v568
    %v1450 = vunpack.c.h.b16 %v568
    %v1451 = vunpack.c.l.b16 %v569
    %v1452 = vunpack.c.h.b16 %v569
    %v1453 = vunpack.c.l.b16 %v570
    %v1454 = vunpack.c.h.b16 %v570
    %v1455 = vunpack.c.l.b16 %v571
    %v1456 = vunpack.c.h.b16 %v571
    %v1457 = vunpack.c.l.b16 %v572
    %v1458 = vunpack.c.h.b16 %v572
    %v1459 = vunpack.c.l.b16 %v573
    %v1460 = vunpack.c.h.b16 %v573
    %v1461 = vunpack.c.l.b16 %v574
    %v1462 = vunpack.c.h.b16 %v574
    %v1463 = vunpack.c.l.b16 %v575
    %v1464 = vunpack.c.h.b16 %v575
    %v1465 = vunpack.c.l.b16 %v576
    %v1466 = vunpack.c.h.b16 %v576
    %v1467 = vunpack.c.l.b16 %v577
    %v1468 = vunpack.c.h.b16 %v577
    %v1469 = vunpack.c.l.b16 %v578
    %v1470 = vunpack.c.h.b16 %v578
    %v1471 = vunpack.c.l.b16 %v579
    %v1472 = vunpack.c.h.b16 %v579
    %v1473 = vunpack.c.l.b16 %v580
    %v1474 = vunpack.c.h.b16 %v580
    %v1475 = vunpack.c.l.b16 %v581
    %v1476 = vunpack.c.h.b16 %v581
    %v1477 = vunpack.c.l.b16 %v582
    %v1478 = vunpack.c.h.b16 %v582
    %v1479 = vpack.c.b16 %v909, %v903
    %v1480 = vpack.c.b16 %v910, %v904
    %v1481 = vpack.c.b16 %v911, %v905
    %v1482 = vpack.c.b16 %v912, %v906
    %v1483 = vpack.c.b16 %v913, %v907
    %v1484 = vpack.c.b16 %v914, %v908
    %v1485 = vpack.c.b16 %v921, %v915
    %v1486 = vpack.c.b16 %v922, %v916
    %v1487 = vpack.c.b16 %v923, %v917
    %v1488 = vpack.c.b16 %v924, %v918
    %v1489 = vpack.c.b16 %v925, %v919
    %v1490 = vpack.c.b16 %v926, %v920
    %v1491 = vpack.c.b16 %v933, %v927
    %v1492 = vpack.c.b16 %v934, %v928
    %v1493 = vpack.c.b16 %v935, %v929
    %v1494 = vpack.c.b16 %v936, %v930
    %v1495 = vpack.c.b16 %v937, %v931
    %v1496 = vpack.c.b16 %v938, %v932
    %v1497 = vpack.c.b16 %v945, %v939
    %v1498 = vpack.c.b16 %v946, %v940
    %v1499 = vpack.c.b16 %v947, %v941
    %v1500 = vpack.c.b16 %v948, %v942
    %v1501 = vpack.c.b16 %v949, %v943
    %v1502 = vpack.c.b16 %v950, %v944
    %v1503 = vpack.c.b16 %v957, %v951
    %v1504 = vpack.c.b16 %v958, %v952
    %v1505 = vpack.c.b16 %v959, %v953
    %v1506 = vpack.c.b16 %v960, %v954
    %v1507 = vpack.c.b16 %v961, %v955
    %v1508 = vpack.c.b16 %v962, %v956
    %v1509 = vpack.c.b16 %v969, %v963
    %v1510 = vpack.c.b16 %v970, %v964
    %v1511 = vpack.c.b16 %v971, %v965
    %v1512 = vpack.c.b16 %v972, %v966
    %v1513 = vpack.c.b16 %v973, %v967
    %v1514 = vpack.c.b16 %v974, %v968
    %v1515 = vpack.c.b16 %v981, %v975
    %v1516 = vpack.c.b16 %v982, %v976
    %v1517 = vpack.c.b16 %v983, %v977
    %v1518 = vpack.c.b16 %v984, %v978
    %v1519 = vpack.c.b16 %v985, %v979
    %v1520 = vpack.c.b16 %v986, %v980
    %v1521 = vpack.c.b16 %v993, %v987
    %v1522 = vpack.c.b16 %v994, %v988
    %v1523 = vpack.c.b16 %v995, %v989
    %v1524 = vpack.c.b16 %v996, %v990
    %v1525 = vpack.c.b16 %v997, %v991
    %v1526 = vpack.c.b16 %v998, %v992
    %v1527 = vpack.c.b16 %v1005, %v999
    %v1528 = vpack.c.b16 %v1006, %v1000
    %v1529 = vpack.c.b16 %v1007, %v1001
    %v1530 = vpack.c.b16 %v1008, %v1002
    %v1531 = vpack.c.b16 %v1009, %v1003
    %v1532 = vpack.c.b16 %v1010, %v1004
    %v1533 = vpack.c.b16 %v1017, %v1011
    %v1534 = vpack.c.b16 %v1018, %v1012
    %v1535 = vpack.c.b16 %v1019, %v1013
    %v1536 = vpack.c.b16 %v1020, %v1014
    %v1537 = vpack.c.b16 %v1021, %v1015
    %v1538 = vpack.c.b16 %v1022, %v1016
    %v1539 = vpack.c.b16 %v1029, %v1023
    %v1540 = vpack.c.b16 %v1030, %v1024
    %v1541 = vpack.c.b16 %v1031, %v1025
    %v1542 = vpack.c.b16 %v1032, %v1026
    %v1543 = vpack.c.b16 %v1033, %v1027
    %v1544 = vpack.c.b16 %v1034, %v1028
    %v1545 = vpack.c.b16 %v1041, %v1035
    %v1546 = vpack.c.b16 %v1042, %v1036
    %v1547 = vpack.c.b16 %v1043, %v1037
    %v1548 = vpack.c.b16 %v1044, %v1038
    %v1549 = vpack.c.b16 %v1045, %v1039
    %v1550 = vpack.c.b16 %v1046, %v1040
    %v1551 = vpack.c.b16 %v1053, %v1047
    %v1552 = vpack.c.b16 %v1054, %v1048
    %v1553 = vpack.c.b16 %v1055, %v1049
    %v1554 = vpack.c.b16 %v1056, %v1050
    %v1555 = vpack.c.b16 %v1057, %v1051
    %v1556 = vpack.c.b16 %v1058, %v1052
    %v1557 = vpack.c.b16 %v1065, %v1059
    %v1558 = vpack.c.b16 %v1066, %v1060
    %v1559 = vpack.c.b16 %v1067, %v1061
    %v1560 = vpack.c.b16 %v1068, %v1062
    %v1561 = vpack.c.b16 %v1069, %v1063
    %v1562 = vpack.c.b16 %v1070, %v1064
    %v1563 = vpack.c.b16 %v1077, %v1071
    %v1564 = vpack.c.b16 %v1078, %v1072
    %v1565 = vpack.c.b16 %v1079, %v1073
    %v1566 = vpack.c.b16 %v1080, %v1074
    %v1567 = vpack.c.b16 %v1081, %v1075
    %v1568 = vpack.c.b16 %v1082, %v1076
    %v1569 = vpack.c.b16 %v1089, %v1083
    %v1570 = vpack.c.b16 %v1090, %v1084
    %v1571 = vpack.c.b16 %v1091, %v1085
    %v1572 = vpack.c.b16 %v1092, %v1086
    %v1573 = vpack.c.b16 %v1093, %v1087
    %v1574 = vpack.c.b16 %v1094, %v1088
    %v1575 = vpack.c.b16 %v1101, %v1095
    %v1576 = vpack.c.b16 %v1102, %v1096
    %v1577 = vpack.c.b16 %v1103, %v1097
    %v1578 = vpack.c.b16 %v1104, %v1098
    %v1579 = vpack.c.b16 %v1105, %v1099
    %v1580 = vpack.c.b16 %v1106, %v1100
    %v1581 = vpack.c.b16 %v1113, %v1107
    %v1582 = vpack.c.b16 %v1114, %v1108
    %v1583 = vpack.c.b16 %v1115, %v1109
    %v1584 = vpack.c.b16 %v1116, %v1110
    %v1585 = vpack.c.b16 %v1117, %v1111
    %v1586 = vpack.c.b16 %v1118, %v1112
    %v1587 = vpack.c.b16 %v1125, %v1119
    %v1588 = vpack.c.b16 %v1126, %v1120
    %v1589 = vpack.c.b16 %v1127, %v1121
    %v1590 = vpack.c.b16 %v1128, %v1122
    %v1591 = vpack.c.b16 %v1129, %v1123
    %v1592 = vpack.c.b16 %v1130, %v1124
    %v1593 = vpack.c.b16 %v1137, %v1131
    %v1594 = vpack.c.b16 %v1138, %v1132
    %v1595 = vpack.c.b16 %v1139, %v1133
    %v1596 = vpack.c.b16 %v1140, %v1134
    %v1597 = vpack.c.b16 %v1141, %v1135
    %v1598 = vpack.c.b16 %v1142, %v1136
    %v1599 = vpack.c.b16 %v1149, %v1143
    %v1600 = vpack.c.b16 %v1150, %v1144
    %v1601 = vpack.c.b16 %v1151, %v1145
    %v1602 = vpack.c.b16 %v1152, %v1146
    %v1603 = vpack.c.b16 %v1153, %v1147
    %v1604 = vpack.c.b16 %v1154, %v1148
    %v1605 = vpack.c.b16 %v1161, %v1155
    %v1606 = vpack.c.b16 %v1162, %v1156
    %v1607 = vpack.c.b16 %v1163, %v1157
    %v1608 = vpack.c.b16 %v1164, %v1158
    %v1609 = vpack.c.b16 %v1165, %v1159
    %v1610 = vpack.c.b16 %v1166, %v1160
    %v1611 = vpack.c.b16 %v1173, %v1167
    %v1612 = vpack.c.b16 %v1174, %v1168
    %v1613 = vpack.c.b16 %v1175, %v1169
    %v1614 = vpack.c.b16 %v1176, %v1170
    %v1615 = vpack.c.b16 %v1177, %v1171
    %v1616 = vpack.c.b16 %v1178, %v1172
    %v1617 = vpack.c.b16 %v1185, %v1179
    %v1618 = vpack.c.b16 %v1186, %v1180
    %v1619 = vpack.c.b16 %v1187, %v1181
    %v1620 = vpack.c.b16 %v1188, %v1182
    %v1621 = vpack.c.b16 %v1189, %v1183
    %v1622 = vpack.c.b16 %v1190, %v1184
    %v1623 = vpack.c.b16 %v1197, %v1191
    %v1624 = vpack.c.b16 %v1198, %v1192
    %v1625 = vpack.c.b16 %v1199, %v1193
    %v1626 = vpack.c.b16 %v1200, %v1194
    %v1627 = vpack.c.b16 %v1201, %v1195
    %v1628 = vpack.c.b16 %v1202, %v1196
    %v1629 = vpack.c.b16 %v1209, %v1203
    %v1630 = vpack.c.b16 %v1210, %v1204
    %v1631 = vpack.c.b16 %v1211, %v1205
    %v1632 = vpack.c.b16 %v1212, %v1206
    %v1633 = vpack.c.b16 %v1213, %v1207
    %v1634 = vpack.c.b16 %v1214, %v1208
    %v1635 = vpack.c.b16 %v1221, %v1215
    %v1636 = vpack.c.b16 %v1222, %v1216
    %v1637 = vpack.c.b16 %v1223, %v1217
    %v1638 = vpack.c.b16 %v1224, %v1218
    %v1639 = vpack.c.b16 %v1225, %v1219
    %v1640 = vpack.c.b16 %v1226, %v1220
    %v1641 = vpack.c.b16 %v1233, %v1227
    %v1642 = vpack.c.b16 %v1234, %v1228
    %v1643 = vpack.c.b16 %v1235, %v1229
    %v1644 = vpack.c.b16 %v1236, %v1230
    %v1645 = vpack.c.b16 %v1237, %v1231
    %v1646 = vpack.c.b16 %v1238, %v1232
    %v1647 = vpack.c.b16 %v1245, %v1239
    %v1648 = vpack.c.b16 %v1246, %v1240
    %v1649 = vpack.c.b16 %v1247, %v1241
    %v1650 = vpack.c.b16 %v1248, %v1242
    %v1651 = vpack.c.b16 %v1249, %v1243
    %v1652 = vpack.c.b16 %v1250, %v1244
    %v1653 = vpack.c.b16 %v1257, %v1251
    %v1654 = vpack.c.b16 %v1258, %v1252
    %v1655 = vpack.c.b16 %v1259, %v1253
    %v1656 = vpack.c.b16 %v1260, %v1254
    %v1657 = vpack.c.b16 %v1261, %v1255
    %v1658 = vpack.c.b16 %v1262, %v1256
    %v1659 = vpack.c.b16 %v1269, %v1263
    %v1660 = vpack.c.b16 %v1270, %v1264
    %v1661 = vpack.c.b16 %v1271, %v1265
    %v1662 = vpack.c.b16 %v1272, %v1266
    %v1663 = vpack.c.b16 %v1273, %v1267
    %v1664 = vpack.c.b16 %v1274, %v1268
    %v1665 = vpack.c.b16 %v1281, %v1275
    %v1666 = vpack.c.b16 %v1282, %v1276
    %v1667 = vpack.c.b16 %v1283, %v1277
    %v1668 = vpack.c.b16 %v1284, %v1278
    %v1669 = vpack.c.b16 %v1285, %v1279
    %v1670 = vpack.c.b16 %v1286, %v1280
    %v1671 = vpack.c.b16 %v1293, %v1287
    %v1672 = vpack.c.b16 %v1294, %v1288
    %v1673 = vpack.c.b16 %v1295, %v1289
    %v1674 = vpack.c.b16 %v1296, %v1290
    %v1675 = vpack.c.b16 %v1297, %v1291
    %v1676 = vpack.c.b16 %v1298, %v1292
    %v1677 = vpack.c.b16 %v1305, %v1299
    %v1678 = vpack.c.b16 %v1306, %v1300
    %v1679 = vpack.c.b16 %v1307, %v1301
    %v1680 = vpack.c.b16 %v1308, %v1302
    %v1681 = vpack.c.b16 %v1309, %v1303
    %v1682 = vpack.c.b16 %v1310, %v1304
    %v1683 = vpack.c.b16 %v1317, %v1311
    %v1684 = vpack.c.b16 %v1318, %v1312
    %v1685 = vpack.c.b16 %v1319, %v1313
    %v1686 = vpack.c.b16 %v1320, %v1314
    %v1687 = vpack.c.b16 %v1321, %v1315
    %v1688 = vpack.c.b16 %v1322, %v1316
    %v1689 = vpack.c.b16 %v1329, %v1323
    %v1690 = vpack.c.b16 %v1330, %v1324
    %v1691 = vpack.c.b16 %v1331, %v1325
    %v1692 = vpack.c.b16 %v1332, %v1326
    %v1693 = vpack.c.b16 %v1333, %v1327
    %v1694 = vpack.c.b16 %v1334, %v1328
    %v1695 = vpack.c.b16 %v1341, %v1335
    %v1696 = vpack.c.b16 %v1342, %v1336
    %v1697 = vpack.c.b16 %v1343, %v1337
    %v1698 = vpack.c.b16 %v1344, %v1338
    %v1699 = vpack.c.b16 %v1345, %v1339
    %v1700 = vpack.c.b16 %v1346, %v1340
    %v1701 = vpack.c.b16 %v1353, %v1347
    %v1702 = vpack.c.b16 %v1354, %v1348
    %v1703 = vpack.c.b16 %v1355, %v1349
    %v1704 = vpack.c.b16 %v1356, %v1350
    %v1705 = vpack.c.b16 %v1357, %v1351
    %v1706 = vpack.c.b16 %v1358, %v1352
    %v1707 = vpack.c.b16 %v1365, %v1359
    %v1708 = vpack.c.b16 %v1366, %v1360
    %v1709 = vpack.c.b16 %v1367, %v1361
    %v1710 = vpack.c.b16 %v1368, %v1362
    %v1711 = vpack.c.b16 %v1369, %v1363
    %v1712 = vpack.c.b16 %v1370, %v1364
    %v1713 = vpack.c.b16 %v1377, %v1371
    %v1714 = vpack.c.b16 %v1378, %v1372
    %v1715 = vpack.c.b16 %v1379, %v1373
    %v1716 = vpack.c.b16 %v1380, %v1374
    %v1717 = vpack.c.b16 %v1381, %v1375
    %v1718 = vpack.c.b16 %v1382, %v1376
    %v1719 = vpack.c.b16 %v1389, %v1383
    %v1720 = vpack.c.b16 %v1390, %v1384
    %v1721 = vpack.c.b16 %v1391, %v1385
    %v1722 = vpack.c.b16 %v1392, %v1386
    %v1723 = vpack.c.b16 %v1393, %v1387
    %v1724 = vpack.c.b16 %v1394, %v1388
    %v1725 = vpack.c.b16 %v1401, %v1395
    %v1726 = vpack.c.b16 %v1402, %v1396
    %v1727 = vpack.c.b16 %v1403, %v1397
    %v1728 = vpack.c.b16 %v1404, %v1398
    %v1729 = vpack.c.b16 %v1405, %v1399
    %v1730 = vpack.c.b16 %v1406, %v1400
    %v1731 = vpack.c.b16 %v1413, %v1407
    %v1732 = vpack.c.b16 %v1414, %v1408
    %v1733 = vpack.c.b16 %v1415, %v1409
    %v1734 = vpack.c.b16 %v1416, %v1410
    %v1735 = vpack.c.b16 %v1417, %v1411
    %v1736 = vpack.c.b16 %v1418, %v1412
    %v1737 = vpack.c.b16 %v1425, %v1419
    %v1738 = vpack.c.b16 %v1426, %v1420
    %v1739 = vpack.c.b16 %v1427, %v1421
    %v1740 = vpack.c.b16 %v1428, %v1422
    %v1741 = vpack.c.b16 %v1429, %v1423
    %v1742 = vpack.c.b16 %v1430, %v1424
    %v1743 = vpack.c.b16 %v1437, %v1431
    %v1744 = vpack.c.b16 %v1438, %v1432
    %v1745 = vpack.c.b16 %v1439, %v1433
    %v1746 = vpack.c.b16 %v1440, %v1434
    %v1747 = vpack.c.b16 %v1441, %v1435
    %v1748 = vpack.c.b16 %v1442, %v1436
    %v1749 = vpack.c.b16 %v1449, %v1443
    %v1750 = vpack.c.b16 %v1450, %v1444
    %v1751 = vpack.c.b16 %v1451, %v1445
    %v1752 = vpack.c.b16 %v1452, %v1446
    %v1753 = vpack.c.b16 %v1453, %v1447
    %v1754 = vpack.c.b16 %v1454, %v1448
    %v1755 = vpack.c.b16 %v1461, %v1455
    %v1756 = vpack.c.b16 %v1462, %v1456
    %v1757 = vpack.c.b16 %v1463, %v1457
    %v1758 = vpack.c.b16 %v1464, %v1458
    %v1759 = vpack.c.b16 %v1465, %v1459
    %v1760 = vpack.c.b16 %v1466, %v1460
    %v1761 = vpack.c.b16 %v1473, %v1467
    %v1762 = vpack.c.b16 %v1474, %v1468
    %v1763 = vpack.c.b16 %v1475, %v1469
    %v1764 = vpack.c.b16 %v1476, %v1470
    %v1765 = vpack.c.b16 %v1477, %v1471
    %v1766 = vpack.c.b16 %v1478, %v1472
    %2055 = vmatprep.subr.bf16.mxu0 %v1480
    %2056 = vmatpush1.bf16.msra.mxu0 %v1479
    %2057 = vmatprep.subr.bf16.mxu0 %v1486
    %2058 = vmatpush1.bf16.msra.mxu0 %v1485
    %2059 = vmatprep.subr.bf16.mxu0 %v1492
    %2060 = vmatpush1.bf16.msra.mxu0 %v1491
    %2061 = vmatprep.subr.bf16.mxu0 %v1498
    %2062 = vmatpush1.bf16.msra.mxu0 %v1497
    %2063 = vmatprep.subr.bf16.mxu0 %v1504
    %2064 = vmatpush1.bf16.msra.mxu0 %v1503
    %2065 = vmatprep.subr.bf16.mxu0 %v1510
    %2066 = vmatpush1.bf16.msra.mxu0 %v1509
    %2067 = vmatprep.subr.bf16.mxu0 %v1516
    %2068 = vmatpush1.bf16.msra.mxu0 %v1515
    %2069 = vmatprep.subr.bf16.mxu0 %v1522
    %2070 = vmatpush1.bf16.msra.mxu0 %v1521
    %2071 = vmatprep.subr.bf16.mxu0 %v1528
    %2072 = vmatpush1.bf16.msra.mxu0 %v1527
    %2073 = vmatprep.subr.bf16.mxu0 %v1534
    %2074 = vmatpush1.bf16.msra.mxu0 %v1533
    %2075 = vmatprep.subr.bf16.mxu0 %v1540
    %2076 = vmatpush1.bf16.msra.mxu0 %v1539
    %2077 = vmatprep.subr.bf16.mxu0 %v1546
    %2078 = vmatpush1.bf16.msra.mxu0 %v1545
    %2079 = vmatprep.subr.bf16.mxu0 %v1552
    %2080 = vmatpush1.bf16.msra.mxu0 %v1551
    %2081 = vmatprep.subr.bf16.mxu0 %v1558
    %2082 = vmatpush1.bf16.msra.mxu0 %v1557
    %2083 = vmatprep.subr.bf16.mxu0 %v1564
    %2084 = vmatpush1.bf16.msra.mxu0 %v1563
    %2085 = vmatprep.subr.bf16.mxu0 %v1570
    %2086 = vmatpush1.bf16.msra.mxu0 %v1569
    %2087 = vmatprep.mubr.bf16.mxu0 %v249
    %2088 = vmatmul.mubr.bf16.gmra.mrb[0].mxu0 %v248
    %v2089 = vpop.f32.mrb[0].mxu0
    %v2090 = vadd.f32 %v588, %v2089
    %v2091 = vpop.f32.mrb[0].mxu0
    %v2092 = vadd.f32 %v592, %v2091
    %v2093 = vpop.f32.mrb[0].mxu0
    %v2094 = vpop.f32.mrb[0].mxu0
    %2095 = vdwg.mxu0
    %2096 = vmatprep.subr.bf16.mxu0 %v1576
    %2097 = vmatpush1.bf16.msra.mxu0 %v1575
    %2098 = vmatprep.subr.bf16.mxu0 %v1582
    %2099 = vmatpush1.bf16.msra.mxu0 %v1581
    %2100 = vmatprep.subr.bf16.mxu0 %v1588
    %2101 = vmatpush1.bf16.msra.mxu0 %v1587
    %2102 = vmatprep.subr.bf16.mxu0 %v1594
    %2103 = vmatpush1.bf16.msra.mxu0 %v1593
    %2104 = vmatprep.subr.bf16.mxu0 %v1600
    %2105 = vmatpush1.bf16.msra.mxu0 %v1599
    %2106 = vmatprep.subr.bf16.mxu0 %v1606
    %2107 = vmatpush1.bf16.msra.mxu0 %v1605
    %2108 = vmatprep.subr.bf16.mxu0 %v1612
    %2109 = vmatpush1.bf16.msra.mxu0 %v1611
    %2110 = vmatprep.subr.bf16.mxu0 %v1618
    %2111 = vmatpush1.bf16.msra.mxu0 %v1617
    %2112 = vmatprep.subr.bf16.mxu0 %v1624
    %2113 = vmatpush1.bf16.msra.mxu0 %v1623
    %2114 = vmatprep.subr.bf16.mxu0 %v1630
    %2115 = vmatpush1.bf16.msra.mxu0 %v1629
    %2116 = vmatprep.subr.bf16.mxu0 %v1636
    %2117 = vmatpush1.bf16.msra.mxu0 %v1635
    %2118 = vmatprep.subr.bf16.mxu0 %v1642
    %2119 = vmatpush1.bf16.msra.mxu0 %v1641
    %2120 = vmatprep.subr.bf16.mxu0 %v1648
    %2121 = vmatpush1.bf16.msra.mxu0 %v1647
    %2122 = vmatprep.subr.bf16.mxu0 %v1654
    %2123 = vmatpush1.bf16.msra.mxu0 %v1653
    %2124 = vmatprep.subr.bf16.mxu0 %v1660
    %2125 = vmatpush1.bf16.msra.mxu0 %v1659
    %2126 = vmatprep.subr.bf16.mxu0 %v1666
    %2127 = vmatpush1.bf16.msra.mxu0 %v1665
    %2128 = vmatprep.mubr.bf16.mxu0 %v251
    %2129 = vmatmul.mubr.bf16.gmra.mrb[0].mxu0 %v250
    %v2130 = vpop.f32.mrb[0].mxu0
    %v2131 = vadd.f32 %v2090, %v2130
    %v2132 = vpop.f32.mrb[0].mxu0
    %v2133 = vadd.f32 %v2092, %v2132
    %v2134 = vpop.f32.mrb[0].mxu0
    %v2135 = vpop.f32.mrb[0].mxu0
    %2136 = vdwg.mxu0
    %2137 = vmatprep.subr.bf16.mxu0 %v1672
    %2138 = vmatpush1.bf16.msra.mxu0 %v1671
    %2139 = vmatprep.subr.bf16.mxu0 %v1678
    %2140 = vmatpush1.bf16.msra.mxu0 %v1677
    %2141 = vmatprep.subr.bf16.mxu0 %v1684
    %2142 = vmatpush1.bf16.msra.mxu0 %v1683
    %2143 = vmatprep.subr.bf16.mxu0 %v1690
    %2144 = vmatpush1.bf16.msra.mxu0 %v1689
    %2145 = vmatprep.subr.bf16.mxu0 %v1696
    %2146 = vmatpush1.bf16.msra.mxu0 %v1695
    %2147 = vmatprep.subr.bf16.mxu0 %v1702
    %2148 = vmatpush1.bf16.msra.mxu0 %v1701
    %2149 = vmatprep.subr.bf16.mxu0 %v1708
    %2150 = vmatpush1.bf16.msra.mxu0 %v1707
    %2151 = vmatprep.subr.bf16.mxu0 %v1714
    %2152 = vmatpush1.bf16.msra.mxu0 %v1713
    %2153 = vmatprep.subr.bf16.mxu0 %v1720
    %2154 = vmatpush1.bf16.msra.mxu0 %v1719
    %2155 = vmatprep.subr.bf16.mxu0 %v1726
    %2156 = vmatpush1.bf16.msra.mxu0 %v1725
    %2157 = vmatprep.subr.bf16.mxu0 %v1732
    %2158 = vmatpush1.bf16.msra.mxu0 %v1731
    %2159 = vmatprep.subr.bf16.mxu0 %v1738
    %2160 = vmatpush1.bf16.msra.mxu0 %v1737
    %2161 = vmatprep.subr.bf16.mxu0 %v1744
    %2162 = vmatpush1.bf16.msra.mxu0 %v1743
    %2163 = vmatprep.subr.bf16.mxu0 %v1750
    %2164 = vmatpush1.bf16.msra.mxu0 %v1749
    %2165 = vmatprep.subr.bf16.mxu0 %v1756
    %2166 = vmatpush1.bf16.msra.mxu0 %v1755
    %2167 = vmatprep.subr.bf16.mxu0 %v1762
    %2168 = vmatpush1.bf16.msra.mxu0 %v1761
    %2169 = vmatprep.mubr.bf16.mxu0 %v253
    %2170 = vmatmul.mubr.bf16.gmra.mrb[0].mxu0 %v252
    %v2171 = vpop.f32.mrb[0].mxu0
    %v2172 = vadd.f32 %v2131, %v2171
    %v2173 = vpop.f32.mrb[0].mxu0
    %v2174 = vadd.f32 %v2133, %v2173
    %v2175 = vpop.f32.mrb[0].mxu0
    %v2176 = vpop.f32.mrb[0].mxu0
    %2177 = vdwg.mxu0
    %2178 = vmatprep.subr.bf16.mxu0 %v1482
    %2179 = vmatpush1.bf16.msra.mxu0 %v1481
    %2180 = vmatprep.subr.bf16.mxu0 %v1488
    %2181 = vmatpush1.bf16.msra.mxu0 %v1487
    %2182 = vmatprep.subr.bf16.mxu0 %v1494
    %2183 = vmatpush1.bf16.msra.mxu0 %v1493
    %2184 = vmatprep.subr.bf16.mxu0 %v1500
    %2185 = vmatpush1.bf16.msra.mxu0 %v1499
    %2186 = vmatprep.subr.bf16.mxu0 %v1506
    %2187 = vmatpush1.bf16.msra.mxu0 %v1505
    %2188 = vmatprep.subr.bf16.mxu0 %v1512
    %2189 = vmatpush1.bf16.msra.mxu0 %v1511
    %2190 = vmatprep.subr.bf16.mxu0 %v1518
    %2191 = vmatpush1.bf16.msra.mxu0 %v1517
    %2192 = vmatprep.subr.bf16.mxu0 %v1524
    %2193 = vmatpush1.bf16.msra.mxu0 %v1523
    %2194 = vmatprep.subr.bf16.mxu0 %v1530
    %2195 = vmatpush1.bf16.msra.mxu0 %v1529
    %2196 = vmatprep.subr.bf16.mxu0 %v1536
    %2197 = vmatpush1.bf16.msra.mxu0 %v1535
    %2198 = vmatprep.subr.bf16.mxu0 %v1542
    %2199 = vmatpush1.bf16.msra.mxu0 %v1541
    %2200 = vmatprep.subr.bf16.mxu0 %v1548
    %2201 = vmatpush1.bf16.msra.mxu0 %v1547
    %2202 = vmatprep.subr.bf16.mxu0 %v1554
    %2203 = vmatpush1.bf16.msra.mxu0 %v1553
    %2204 = vmatprep.subr.bf16.mxu0 %v1560
    %2205 = vmatpush1.bf16.msra.mxu0 %v1559
    %2206 = vmatprep.subr.bf16.mxu0 %v1566
    %2207 = vmatpush1.bf16.msra.mxu0 %v1565
    %2208 = vmatprep.subr.bf16.mxu0 %v1572
    %2209 = vmatpush1.bf16.msra.mxu0 %v1571
    %2210 = vmatprep.mubr.bf16.mxu0 %v249
    %2211 = vmatmul.mubr.bf16.gmra.mrb[0].mxu0 %v248
    %v2212 = vpop.f32.mrb[0].mxu0
    %v2213 = vadd.f32 %v596, %v2212
    %v2214 = vpop.f32.mrb[0].mxu0
    %v2215 = vadd.f32 %v600, %v2214
    %v2216 = vpop.f32.mrb[0].mxu0
    %v2217 = vpop.f32.mrb[0].mxu0
    %2218 = vdwg.mxu0
    %2219 = vmatprep.subr.bf16.mxu0 %v1578
    %2220 = vmatpush1.bf16.msra.mxu0 %v1577
    %2221 = vmatprep.subr.bf16.mxu0 %v1584
    %2222 = vmatpush1.bf16.msra.mxu0 %v1583
    %2223 = vmatprep.subr.bf16.mxu0 %v1590
    %2224 = vmatpush1.bf16.msra.mxu0 %v1589
    %2225 = vmatprep.subr.bf16.mxu0 %v1596
    %2226 = vmatpush1.bf16.msra.mxu0 %v1595
    %2227 = vmatprep.subr.bf16.mxu0 %v1602
    %2228 = vmatpush1.bf16.msra.mxu0 %v1601
    %2229 = vmatprep.subr.bf16.mxu0 %v1608
    %2230 = vmatpush1.bf16.msra.mxu0 %v1607
    %2231 = vmatprep.subr.bf16.mxu0 %v1614
    %2232 = vmatpush1.bf16.msra.mxu0 %v1613
    %2233 = vmatprep.subr.bf16.mxu0 %v1620
    %2234 = vmatpush1.bf16.msra.mxu0 %v1619
    %2235 = vmatprep.subr.bf16.mxu0 %v1626
    %2236 = vmatpush1.bf16.msra.mxu0 %v1625
    %2237 = vmatprep.subr.bf16.mxu0 %v1632
    %2238 = vmatpush1.bf16.msra.mxu0 %v1631
    %2239 = vmatprep.subr.bf16.mxu0 %v1638
    %2240 = vmatpush1.bf16.msra.mxu0 %v1637
    %2241 = vmatprep.subr.bf16.mxu0 %v1644
    %2242 = vmatpush1.bf16.msra.mxu0 %v1643
    %2243 = vmatprep.subr.bf16.mxu0 %v1650
    %2244 = vmatpush1.bf16.msra.mxu0 %v1649
    %2245 = vmatprep.subr.bf16.mxu0 %v1656
    %2246 = vmatpush1.bf16.msra.mxu0 %v1655
    %2247 = vmatprep.subr.bf16.mxu0 %v1662
    %2248 = vmatpush1.bf16.msra.mxu0 %v1661
    %2249 = vmatprep.subr.bf16.mxu0 %v1668
    %2250 = vmatpush1.bf16.msra.mxu0 %v1667
    %2251 = vmatprep.mubr.bf16.mxu0 %v251
    %2252 = vmatmul.mubr.bf16.gmra.mrb[0].mxu0 %v250
    %v2253 = vpop.f32.mrb[0].mxu0
    %v2254 = vadd.f32 %v2213, %v2253
    %v2255 = vpop.f32.mrb[0].mxu0
    %v2256 = vadd.f32 %v2215, %v2255
    %v2257 = vpop.f32.mrb[0].mxu0
    %v2258 = vpop.f32.mrb[0].mxu0
    %2259 = vdwg.mxu0
    %2260 = vmatprep.subr.bf16.mxu0 %v1674
    %2261 = vmatpush1.bf16.msra.mxu0 %v1673
    %2262 = vmatprep.subr.bf16.mxu0 %v1680
    %2263 = vmatpush1.bf16.msra.mxu0 %v1679
    %2264 = vmatprep.subr.bf16.mxu0 %v1686
    %2265 = vmatpush1.bf16.msra.mxu0 %v1685
    %2266 = vmatprep.subr.bf16.mxu0 %v1692
    %2267 = vmatpush1.bf16.msra.mxu0 %v1691
    %2268 = vmatprep.subr.bf16.mxu0 %v1698
    %2269 = vmatpush1.bf16.msra.mxu0 %v1697
    %2270 = vmatprep.subr.bf16.mxu0 %v1704
    %2271 = vmatpush1.bf16.msra.mxu0 %v1703
    %2272 = vmatprep.subr.bf16.mxu0 %v1710
    %2273 = vmatpush1.bf16.msra.mxu0 %v1709
    %2274 = vmatprep.subr.bf16.mxu0 %v1716
    %2275 = vmatpush1.bf16.msra.mxu0 %v1715
    %2276 = vmatprep.subr.bf16.mxu0 %v1722
    %2277 = vmatpush1.bf16.msra.mxu0 %v1721
    %2278 = vmatprep.subr.bf16.mxu0 %v1728
    %2279 = vmatpush1.bf16.msra.mxu0 %v1727
    %2280 = vmatprep.subr.bf16.mxu0 %v1734
    %2281 = vmatpush1.bf16.msra.mxu0 %v1733
    %2282 = vmatprep.subr.bf16.mxu0 %v1740
    %2283 = vmatpush1.bf16.msra.mxu0 %v1739
    %2284 = vmatprep.subr.bf16.mxu0 %v1746
    %2285 = vmatpush1.bf16.msra.mxu0 %v1745
    %2286 = vmatprep.subr.bf16.mxu0 %v1752
    %2287 = vmatpush1.bf16.msra.mxu0 %v1751
    %2288 = vmatprep.subr.bf16.mxu0 %v1758
    %2289 = vmatpush1.bf16.msra.mxu0 %v1757
    %2290 = vmatprep.subr.bf16.mxu0 %v1764
    %2291 = vmatpush1.bf16.msra.mxu0 %v1763
    %2292 = vmatprep.mubr.bf16.mxu0 %v253
    %2293 = vmatmul.mubr.bf16.gmra.mrb[0].mxu0 %v252
    %v2294 = vpop.f32.mrb[0].mxu0
    %v2295 = vadd.f32 %v2254, %v2294
    %v2296 = vpop.f32.mrb[0].mxu0
    %v2297 = vadd.f32 %v2256, %v2296
    %v2298 = vpop.f32.mrb[0].mxu0
    %v2299 = vpop.f32.mrb[0].mxu0
    %2300 = vdwg.mxu0
    %2301 = vmatprep.subr.bf16.mxu0 %v1484
    %2302 = vmatpush1.bf16.msra.mxu0 %v1483
    %2303 = vmatprep.subr.bf16.mxu0 %v1490
    %2304 = vmatpush1.bf16.msra.mxu0 %v1489
    %2305 = vmatprep.subr.bf16.mxu0 %v1496
    %2306 = vmatpush1.bf16.msra.mxu0 %v1495
    %2307 = vmatprep.subr.bf16.mxu0 %v1502
    %2308 = vmatpush1.bf16.msra.mxu0 %v1501
    %2309 = vmatprep.subr.bf16.mxu0 %v1508
    %2310 = vmatpush1.bf16.msra.mxu0 %v1507
    %2311 = vmatprep.subr.bf16.mxu0 %v1514
    %2312 = vmatpush1.bf16.msra.mxu0 %v1513
    %2313 = vmatprep.subr.bf16.mxu0 %v1520
    %2314 = vmatpush1.bf16.msra.mxu0 %v1519
    %2315 = vmatprep.subr.bf16.mxu0 %v1526
    %2316 = vmatpush1.bf16.msra.mxu0 %v1525
    %2317 = vmatprep.subr.bf16.mxu0 %v1532
    %2318 = vmatpush1.bf16.msra.mxu0 %v1531
    %2319 = vmatprep.subr.bf16.mxu0 %v1538
    %2320 = vmatpush1.bf16.msra.mxu0 %v1537
    %2321 = vmatprep.subr.bf16.mxu0 %v1544
    %2322 = vmatpush1.bf16.msra.mxu0 %v1543
    %2323 = vmatprep.subr.bf16.mxu0 %v1550
    %2324 = vmatpush1.bf16.msra.mxu0 %v1549
    %2325 = vmatprep.subr.bf16.mxu0 %v1556
    %2326 = vmatpush1.bf16.msra.mxu0 %v1555
    %2327 = vmatprep.subr.bf16.mxu0 %v1562
    %2328 = vmatpush1.bf16.msra.mxu0 %v1561
    %2329 = vmatprep.subr.bf16.mxu0 %v1568
    %2330 = vmatpush1.bf16.msra.mxu0 %v1567
    %2331 = vmatprep.subr.bf16.mxu0 %v1574
    %2332 = vmatpush1.bf16.msra.mxu0 %v1573
    %2333 = vmatprep.mubr.bf16.mxu0 %v249
    %2334 = vmatmul.mubr.bf16.gmra.mrb[0].mxu0 %v248
    %v2335 = vpop.f32.mrb[0].mxu0
    %v2336 = vadd.f32 %v604, %v2335
    %v2337 = vpop.f32.mrb[0].mxu0
    %v2338 = vadd.f32 %v608, %v2337
    %v2339 = vpop.f32.mrb[0].mxu0
    %v2340 = vpop.f32.mrb[0].mxu0
    %2341 = vdwg.mxu0
    %2342 = vmatprep.subr.bf16.mxu0 %v1580
    %2343 = vmatpush1.bf16.msra.mxu0 %v1579
    %2344 = vmatprep.subr.bf16.mxu0 %v1586
    %2345 = vmatpush1.bf16.msra.mxu0 %v1585
    %2346 = vmatprep.subr.bf16.mxu0 %v1592
    %2347 = vmatpush1.bf16.msra.mxu0 %v1591
    %2348 = vmatprep.subr.bf16.mxu0 %v1598
    %2349 = vmatpush1.bf16.msra.mxu0 %v1597
    %2350 = vmatprep.subr.bf16.mxu0 %v1604
    %2351 = vmatpush1.bf16.msra.mxu0 %v1603
    %2352 = vmatprep.subr.bf16.mxu0 %v1610
    %2353 = vmatpush1.bf16.msra.mxu0 %v1609
    %2354 = vmatprep.subr.bf16.mxu0 %v1616
    %2355 = vmatpush1.bf16.msra.mxu0 %v1615
    %2356 = vmatprep.subr.bf16.mxu0 %v1622
    %2357 = vmatpush1.bf16.msra.mxu0 %v1621
    %2358 = vmatprep.subr.bf16.mxu0 %v1628
    %2359 = vmatpush1.bf16.msra.mxu0 %v1627
    %2360 = vmatprep.subr.bf16.mxu0 %v1634
    %2361 = vmatpush1.bf16.msra.mxu0 %v1633
    %2362 = vmatprep.subr.bf16.mxu0 %v1640
    %2363 = vmatpush1.bf16.msra.mxu0 %v1639
    %2364 = vmatprep.subr.bf16.mxu0 %v1646
    %2365 = vmatpush1.bf16.msra.mxu0 %v1645
    %2366 = vmatprep.subr.bf16.mxu0 %v1652
    %2367 = vmatpush1.bf16.msra.mxu0 %v1651
    %2368 = vmatprep.subr.bf16.mxu0 %v1658
    %2369 = vmatpush1.bf16.msra.mxu0 %v1657
    %2370 = vmatprep.subr.bf16.mxu0 %v1664
    %2371 = vmatpush1.bf16.msra.mxu0 %v1663
    %2372 = vmatprep.subr.bf16.mxu0 %v1670
    %2373 = vmatpush1.bf16.msra.mxu0 %v1669
    %2374 = vmatprep.mubr.bf16.mxu0 %v251
    %2375 = vmatmul.mubr.bf16.gmra.mrb[0].mxu0 %v250
    %v2376 = vpop.f32.mrb[0].mxu0
    %v2377 = vadd.f32 %v2336, %v2376
    %v2378 = vpop.f32.mrb[0].mxu0
    %v2379 = vadd.f32 %v2338, %v2378
    %v2380 = vpop.f32.mrb[0].mxu0
    %v2381 = vpop.f32.mrb[0].mxu0
    %2382 = vdwg.mxu0
    %2383 = vmatprep.subr.bf16.mxu0 %v1676
    %2384 = vmatpush1.bf16.msra.mxu0 %v1675
    %2385 = vmatprep.subr.bf16.mxu0 %v1682
    %2386 = vmatpush1.bf16.msra.mxu0 %v1681
    %2387 = vmatprep.subr.bf16.mxu0 %v1688
    %2388 = vmatpush1.bf16.msra.mxu0 %v1687
    %2389 = vmatprep.subr.bf16.mxu0 %v1694
    %2390 = vmatpush1.bf16.msra.mxu0 %v1693
    %2391 = vmatprep.subr.bf16.mxu0 %v1700
    %2392 = vmatpush1.bf16.msra.mxu0 %v1699
    %2393 = vmatprep.subr.bf16.mxu0 %v1706
    %2394 = vmatpush1.bf16.msra.mxu0 %v1705
    %2395 = vmatprep.subr.bf16.mxu0 %v1712
    %2396 = vmatpush1.bf16.msra.mxu0 %v1711
    %2397 = vmatprep.subr.bf16.mxu0 %v1718
    %2398 = vmatpush1.bf16.msra.mxu0 %v1717
    %2399 = vmatprep.subr.bf16.mxu0 %v1724
    %2400 = vmatpush1.bf16.msra.mxu0 %v1723
    %2401 = vmatprep.subr.bf16.mxu0 %v1730
    %2402 = vmatpush1.bf16.msra.mxu0 %v1729
    %2403 = vmatprep.subr.bf16.mxu0 %v1736
    %2404 = vmatpush1.bf16.msra.mxu0 %v1735
    %2405 = vmatprep.subr.bf16.mxu0 %v1742
    %2406 = vmatpush1.bf16.msra.mxu0 %v1741
    %2407 = vmatprep.subr.bf16.mxu0 %v1748
    %2408 = vmatpush1.bf16.msra.mxu0 %v1747
    %2409 = vmatprep.subr.bf16.mxu0 %v1754
    %2410 = vmatpush1.bf16.msra.mxu0 %v1753
    %2411 = vmatprep.subr.bf16.mxu0 %v1760
    %2412 = vmatpush1.bf16.msra.mxu0 %v1759
    %2413 = vmatprep.subr.bf16.mxu0 %v1766
    %2414 = vmatpush1.bf16.msra.mxu0 %v1765
    %2415 = vmatprep.mubr.bf16.mxu0 %v253
    %2416 = vmatmul.mubr.bf16.gmra.mrb[0].mxu0 %v252
    %v2417 = vpop.f32.mrb[0].mxu0
    %v2418 = vadd.f32 %v2377, %v2417
    %v2419 = vpop.f32.mrb[0].mxu0
    %v2420 = vadd.f32 %v2379, %v2419
    %v2421 = vpop.f32.mrb[0].mxu0
    %v2422 = vpop.f32.mrb[0].mxu0
    %2423 = vdwg.mxu0
    %v2424 = vld [vmem:[#allocation10] sm:$0xff]
    %v2425 = vld [vmem:[#allocation10 + $0x8] sm:$0xff]
    %v2426 = vld [vmem:[#allocation10 + $0x10] sm:$0xff]
    %v2427 = vld [vmem:[#allocation10 + $0x18] sm:$0xff]
    %v2428 = vld [vmem:[#allocation10 + $0x20] sm:$0xff]
    %v2429 = vld [vmem:[#allocation10 + $0x28] sm:$0xff]
    %v2430 = vld [vmem:[#allocation10 + $0x30] sm:$0xff]
    %v2431 = vld [vmem:[#allocation10 + $0x38] sm:$0xff]
    %v2432 = vld [vmem:[#allocation10 + $0x40] sm:$0xff]
    %v2433 = vld [vmem:[#allocation10 + $0x48] sm:$0xff]
    %v2434 = vld [vmem:[#allocation10 + $0x50] sm:$0xff]
    %v2435 = vld [vmem:[#allocation10 + $0x58] sm:$0xff]
    %v2436 = vld [vmem:[#allocation10 + $0x60] sm:$0xff]
    %v2437 = vld [vmem:[#allocation10 + $0x68] sm:$0xff]
    %v2438 = vld [vmem:[#allocation10 + $0x70] sm:$0xff]
    %v2439 = vld [vmem:[#allocation10 + $0x78] sm:$0xff]
    %v2440 = vld [vmem:[#allocation10 + $0x80] sm:$0xff]
    %v2441 = vld [vmem:[#allocation10 + $0x88] sm:$0xff]
    %v2442 = vld [vmem:[#allocation10 + $0x90] sm:$0xff]
    %v2443 = vld [vmem:[#allocation10 + $0x98] sm:$0xff]
    %v2444 = vld [vmem:[#allocation10 + $0xa0] sm:$0xff]
    %v2445 = vld [vmem:[#allocation10 + $0xa8] sm:$0xff]
    %v2446 = vld [vmem:[#allocation10 + $0xb0] sm:$0xff]
    %v2447 = vld [vmem:[#allocation10 + $0xb8] sm:$0xff]
    %v2448 = vld [vmem:[#allocation10 + $0xc0] sm:$0xff]
    %v2449 = vld [vmem:[#allocation10 + $0xc8] sm:$0xff]
    %v2450 = vld [vmem:[#allocation10 + $0xd0] sm:$0xff]
    %v2451 = vld [vmem:[#allocation10 + $0xd8] sm:$0xff]
    %v2452 = vld [vmem:[#allocation10 + $0xe0] sm:$0xff]
    %v2453 = vld [vmem:[#allocation10 + $0xe8] sm:$0xff]
    %v2454 = vld [vmem:[#allocation10 + $0xf0] sm:$0xff]
    %v2455 = vld [vmem:[#allocation10 + $0xf8] sm:$0xff]
    %v2456 = vld [vmem:[#allocation10 + $0x100] sm:$0xff]
    %v2457 = vld [vmem:[#allocation10 + $0x108] sm:$0xff]
    %v2458 = vld [vmem:[#allocation10 + $0x110] sm:$0xff]
    %v2459 = vld [vmem:[#allocation10 + $0x118] sm:$0xff]
    %v2460 = vld [vmem:[#allocation10 + $0x120] sm:$0xff]
    %v2461 = vld [vmem:[#allocation10 + $0x128] sm:$0xff]
    %v2462 = vld [vmem:[#allocation10 + $0x130] sm:$0xff]
    %v2463 = vld [vmem:[#allocation10 + $0x138] sm:$0xff]
    %v2464 = vld [vmem:[#allocation10 + $0x140] sm:$0xff]
    %v2465 = vld [vmem:[#allocation10 + $0x148] sm:$0xff]
    %v2466 = vld [vmem:[#allocation10 + $0x150] sm:$0xff]
    %v2467 = vld [vmem:[#allocation10 + $0x158] sm:$0xff]
    %v2468 = vld [vmem:[#allocation10 + $0x160] sm:$0xff]
    %v2469 = vld [vmem:[#allocation10 + $0x168] sm:$0xff]
    %v2470 = vld [vmem:[#allocation10 + $0x170] sm:$0xff]
    %v2471 = vld [vmem:[#allocation10 + $0x178] sm:$0xff]
    %v2472 = vld [vmem:[#allocation10 + $0x180] sm:$0xff]
    %v2473 = vld [vmem:[#allocation10 + $0x188] sm:$0xff]
    %v2474 = vld [vmem:[#allocation10 + $0x190] sm:$0xff]
    %v2475 = vld [vmem:[#allocation10 + $0x198] sm:$0xff]
    %v2476 = vld [vmem:[#allocation10 + $0x1a0] sm:$0xff]
    %v2477 = vld [vmem:[#allocation10 + $0x1a8] sm:$0xff]
    %v2478 = vld [vmem:[#allocation10 + $0x1b0] sm:$0xff]
    %v2479 = vld [vmem:[#allocation10 + $0x1b8] sm:$0xff]
    %v2480 = vld [vmem:[#allocation10 + $0x1c0] sm:$0xff]
    %v2481 = vld [vmem:[#allocation10 + $0x1c8] sm:$0xff]
    %v2482 = vld [vmem:[#allocation10 + $0x1d0] sm:$0xff]
    %v2483 = vld [vmem:[#allocation10 + $0x1d8] sm:$0xff]
    %v2484 = vld [vmem:[#allocation10 + $0x1e0] sm:$0xff]
    %v2485 = vld [vmem:[#allocation10 + $0x1e8] sm:$0xff]
    %v2486 = vld [vmem:[#allocation10 + $0x1f0] sm:$0xff]
    %v2487 = vld [vmem:[#allocation10 + $0x1f8] sm:$0xff]
    %v2488 = vld [vmem:[#allocation10 + $0x200] sm:$0xff]
    %v2489 = vld [vmem:[#allocation10 + $0x208] sm:$0xff]
    %v2490 = vld [vmem:[#allocation10 + $0x210] sm:$0xff]
    %v2491 = vld [vmem:[#allocation10 + $0x218] sm:$0xff]
    %v2492 = vld [vmem:[#allocation10 + $0x220] sm:$0xff]
    %v2493 = vld [vmem:[#allocation10 + $0x228] sm:$0xff]
    %v2494 = vld [vmem:[#allocation10 + $0x230] sm:$0xff]
    %v2495 = vld [vmem:[#allocation10 + $0x238] sm:$0xff]
    %v2496 = vld [vmem:[#allocation10 + $0x240] sm:$0xff]
    %v2497 = vld [vmem:[#allocation10 + $0x248] sm:$0xff]
    %v2498 = vld [vmem:[#allocation10 + $0x250] sm:$0xff]
    %v2499 = vld [vmem:[#allocation10 + $0x258] sm:$0xff]
    %v2500 = vld [vmem:[#allocation10 + $0x260] sm:$0xff]
    %v2501 = vld [vmem:[#allocation10 + $0x268] sm:$0xff]
    %v2502 = vld [vmem:[#allocation10 + $0x270] sm:$0xff]
    %v2503 = vld [vmem:[#allocation10 + $0x278] sm:$0xff]
    %v2504 = vld [vmem:[#allocation10 + $0x280] sm:$0xff]
    %v2505 = vld [vmem:[#allocation10 + $0x288] sm:$0xff]
    %v2506 = vld [vmem:[#allocation10 + $0x290] sm:$0xff]
    %v2507 = vld [vmem:[#allocation10 + $0x298] sm:$0xff]
    %v2508 = vld [vmem:[#allocation10 + $0x2a0] sm:$0xff]
    %v2509 = vld [vmem:[#allocation10 + $0x2a8] sm:$0xff]
    %v2510 = vld [vmem:[#allocation10 + $0x2b0] sm:$0xff]
    %v2511 = vld [vmem:[#allocation10 + $0x2b8] sm:$0xff]
    %v2512 = vld [vmem:[#allocation10 + $0x2c0] sm:$0xff]
    %v2513 = vld [vmem:[#allocation10 + $0x2c8] sm:$0xff]
    %v2514 = vld [vmem:[#allocation10 + $0x2d0] sm:$0xff]
    %v2515 = vld [vmem:[#allocation10 + $0x2d8] sm:$0xff]
    %v2516 = vld [vmem:[#allocation10 + $0x2e0] sm:$0xff]
    %v2517 = vld [vmem:[#allocation10 + $0x2e8] sm:$0xff]
    %v2518 = vld [vmem:[#allocation10 + $0x2f0] sm:$0xff]
    %v2519 = vld [vmem:[#allocation10 + $0x2f8] sm:$0xff]
    %v2520 = vld [vmem:[#allocation10 + $0x300] sm:$0xff]
    %v2521 = vld [vmem:[#allocation10 + $0x308] sm:$0xff]
    %v2522 = vld [vmem:[#allocation10 + $0x310] sm:$0xff]
    %v2523 = vld [vmem:[#allocation10 + $0x318] sm:$0xff]
    %v2524 = vld [vmem:[#allocation10 + $0x320] sm:$0xff]
    %v2525 = vld [vmem:[#allocation10 + $0x328] sm:$0xff]
    %v2526 = vld [vmem:[#allocation10 + $0x330] sm:$0xff]
    %v2527 = vld [vmem:[#allocation10 + $0x338] sm:$0xff]
    %v2528 = vld [vmem:[#allocation10 + $0x340] sm:$0xff]
    %v2529 = vld [vmem:[#allocation10 + $0x348] sm:$0xff]
    %v2530 = vld [vmem:[#allocation10 + $0x350] sm:$0xff]
    %v2531 = vld [vmem:[#allocation10 + $0x358] sm:$0xff]
    %v2532 = vld [vmem:[#allocation10 + $0x360] sm:$0xff]
    %v2533 = vld [vmem:[#allocation10 + $0x368] sm:$0xff]
    %v2534 = vld [vmem:[#allocation10 + $0x370] sm:$0xff]
    %v2535 = vld [vmem:[#allocation10 + $0x378] sm:$0xff]
    %v2536 = vld [vmem:[#allocation10 + $0x380] sm:$0xff]
    %v2537 = vld [vmem:[#allocation10 + $0x388] sm:$0xff]
    %v2538 = vld [vmem:[#allocation10 + $0x390] sm:$0xff]
    %v2539 = vld [vmem:[#allocation10 + $0x398] sm:$0xff]
    %v2540 = vld [vmem:[#allocation10 + $0x3a0] sm:$0xff]
    %v2541 = vld [vmem:[#allocation10 + $0x3a8] sm:$0xff]
    %v2542 = vld [vmem:[#allocation10 + $0x3b0] sm:$0xff]
    %v2543 = vld [vmem:[#allocation10 + $0x3b8] sm:$0xff]
    %v2544 = vld [vmem:[#allocation10 + $0x3c0] sm:$0xff]
    %v2545 = vld [vmem:[#allocation10 + $0x3c8] sm:$0xff]
    %v2546 = vld [vmem:[#allocation10 + $0x3d0] sm:$0xff]
    %v2547 = vld [vmem:[#allocation10 + $0x3d8] sm:$0xff]
    %v2548 = vld [vmem:[#allocation10 + $0x3e0] sm:$0xff]
    %v2549 = vld [vmem:[#allocation10 + $0x3e8] sm:$0xff]
    %v2550 = vld [vmem:[#allocation10 + $0x3f0] sm:$0xff]
    %v2551 = vld [vmem:[#allocation10 + $0x3f8] sm:$0xff]
    %v2552 = vld [vmem:[#allocation10 + $0x400] sm:$0xff]
    %v2553 = vld [vmem:[#allocation10 + $0x408] sm:$0xff]
    %v2554 = vld [vmem:[#allocation10 + $0x410] sm:$0xff]
    %v2555 = vld [vmem:[#allocation10 + $0x418] sm:$0xff]
    %v2556 = vld [vmem:[#allocation10 + $0x420] sm:$0xff]
    %v2557 = vld [vmem:[#allocation10 + $0x428] sm:$0xff]
    %v2558 = vld [vmem:[#allocation10 + $0x430] sm:$0xff]
    %v2559 = vld [vmem:[#allocation10 + $0x438] sm:$0xff]
    %v2560 = vld [vmem:[#allocation10 + $0x440] sm:$0xff]
    %v2561 = vld [vmem:[#allocation10 + $0x448] sm:$0xff]
    %v2562 = vld [vmem:[#allocation10 + $0x450] sm:$0xff]
    %v2563 = vld [vmem:[#allocation10 + $0x458] sm:$0xff]
    %v2564 = vld [vmem:[#allocation10 + $0x460] sm:$0xff]
    %v2565 = vld [vmem:[#allocation10 + $0x468] sm:$0xff]
    %v2566 = vld [vmem:[#allocation10 + $0x470] sm:$0xff]
    %v2567 = vld [vmem:[#allocation10 + $0x478] sm:$0xff]
    %v2568 = vld [vmem:[#allocation10 + $0x480] sm:$0xff]
    %v2569 = vld [vmem:[#allocation10 + $0x488] sm:$0xff]
    %v2570 = vld [vmem:[#allocation10 + $0x490] sm:$0xff]
    %v2571 = vld [vmem:[#allocation10 + $0x498] sm:$0xff]
    %v2572 = vld [vmem:[#allocation10 + $0x4a0] sm:$0xff]
    %v2573 = vld [vmem:[#allocation10 + $0x4a8] sm:$0xff]
    %v2574 = vld [vmem:[#allocation10 + $0x4b0] sm:$0xff]
    %v2575 = vld [vmem:[#allocation10 + $0x4b8] sm:$0xff]
    %v2576 = vld [vmem:[#allocation10 + $0x4c0] sm:$0xff]
    %v2577 = vld [vmem:[#allocation10 + $0x4c8] sm:$0xff]
    %v2578 = vld [vmem:[#allocation10 + $0x4d0] sm:$0xff]
    %v2579 = vld [vmem:[#allocation10 + $0x4d8] sm:$0xff]
    %v2580 = vld [vmem:[#allocation10 + $0x4e0] sm:$0xff]
    %v2581 = vld [vmem:[#allocation10 + $0x4e8] sm:$0xff]
    %v2582 = vld [vmem:[#allocation10 + $0x4f0] sm:$0xff]
    %v2583 = vld [vmem:[#allocation10 + $0x4f8] sm:$0xff]
    %v2584 = vld [vmem:[#allocation10 + $0x500] sm:$0xff]
    %v2585 = vld [vmem:[#allocation10 + $0x508] sm:$0xff]
    %v2586 = vld [vmem:[#allocation10 + $0x510] sm:$0xff]
    %v2587 = vld [vmem:[#allocation10 + $0x518] sm:$0xff]
    %v2588 = vld [vmem:[#allocation10 + $0x520] sm:$0xff]
    %v2589 = vld [vmem:[#allocation10 + $0x528] sm:$0xff]
    %v2590 = vld [vmem:[#allocation10 + $0x530] sm:$0xff]
    %v2591 = vld [vmem:[#allocation10 + $0x538] sm:$0xff]
    %v2592 = vld [vmem:[#allocation10 + $0x540] sm:$0xff]
    %v2593 = vld [vmem:[#allocation10 + $0x548] sm:$0xff]
    %v2594 = vld [vmem:[#allocation10 + $0x550] sm:$0xff]
    %v2595 = vld [vmem:[#allocation10 + $0x558] sm:$0xff]
    %v2596 = vld [vmem:[#allocation10 + $0x560] sm:$0xff]
    %v2597 = vld [vmem:[#allocation10 + $0x568] sm:$0xff]
    %v2598 = vld [vmem:[#allocation10 + $0x570] sm:$0xff]
    %v2599 = vld [vmem:[#allocation10 + $0x578] sm:$0xff]
    %v2600 = vld [vmem:[#allocation10 + $0x580] sm:$0xff]
    %v2601 = vld [vmem:[#allocation10 + $0x588] sm:$0xff]
    %v2602 = vld [vmem:[#allocation10 + $0x590] sm:$0xff]
    %v2603 = vld [vmem:[#allocation10 + $0x598] sm:$0xff]
    %v2604 = vld [vmem:[#allocation10 + $0x5a0] sm:$0xff]
    %v2605 = vld [vmem:[#allocation10 + $0x5a8] sm:$0xff]
    %v2606 = vld [vmem:[#allocation10 + $0x5b0] sm:$0xff]
    %v2607 = vld [vmem:[#allocation10 + $0x5b8] sm:$0xff]
    %v2608 = vld [vmem:[#allocation10 + $0x5c0] sm:$0xff]
    %v2609 = vld [vmem:[#allocation10 + $0x5c8] sm:$0xff]
    %v2610 = vld [vmem:[#allocation10 + $0x5d0] sm:$0xff]
    %v2611 = vld [vmem:[#allocation10 + $0x5d8] sm:$0xff]
    %v2612 = vld [vmem:[#allocation10 + $0x5e0] sm:$0xff]
    %v2613 = vld [vmem:[#allocation10 + $0x5e8] sm:$0xff]
    %v2614 = vld [vmem:[#allocation10 + $0x5f0] sm:$0xff]
    %v2615 = vld [vmem:[#allocation10 + $0x5f8] sm:$0xff]
    %v2616 = vld [vmem:[#allocation10 + $0x600] sm:$0xff]
    %v2617 = vld [vmem:[#allocation10 + $0x608] sm:$0xff]
    %v2618 = vld [vmem:[#allocation10 + $0x610] sm:$0xff]
    %v2619 = vld [vmem:[#allocation10 + $0x618] sm:$0xff]
    %v2620 = vld [vmem:[#allocation10 + $0x620] sm:$0xff]
    %v2621 = vld [vmem:[#allocation10 + $0x628] sm:$0xff]
    %v2622 = vld [vmem:[#allocation10 + $0x630] sm:$0xff]
    %v2623 = vld [vmem:[#allocation10 + $0x638] sm:$0xff]
    %v2624 = vld [vmem:[#allocation10 + $0x640] sm:$0xff]
    %v2625 = vld [vmem:[#allocation10 + $0x648] sm:$0xff]
    %v2626 = vld [vmem:[#allocation10 + $0x650] sm:$0xff]
    %v2627 = vld [vmem:[#allocation10 + $0x658] sm:$0xff]
    %v2628 = vld [vmem:[#allocation10 + $0x660] sm:$0xff]
    %v2629 = vld [vmem:[#allocation10 + $0x668] sm:$0xff]
    %v2630 = vld [vmem:[#allocation10 + $0x670] sm:$0xff]
    %v2631 = vld [vmem:[#allocation10 + $0x678] sm:$0xff]
    %v2632 = vld [vmem:[#allocation10 + $0x680] sm:$0xff]
    %v2633 = vld [vmem:[#allocation10 + $0x688] sm:$0xff]
    %v2634 = vld [vmem:[#allocation10 + $0x690] sm:$0xff]
    %v2635 = vld [vmem:[#allocation10 + $0x698] sm:$0xff]
    %v2636 = vld [vmem:[#allocation10 + $0x6a0] sm:$0xff]
    %v2637 = vld [vmem:[#allocation10 + $0x6a8] sm:$0xff]
    %v2638 = vld [vmem:[#allocation10 + $0x6b0] sm:$0xff]
    %v2639 = vld [vmem:[#allocation10 + $0x6b8] sm:$0xff]
    %v2640 = vld [vmem:[#allocation10 + $0x6c0] sm:$0xff]
    %v2641 = vld [vmem:[#allocation10 + $0x6c8] sm:$0xff]
    %v2642 = vld [vmem:[#allocation10 + $0x6d0] sm:$0xff]
    %v2643 = vld [vmem:[#allocation10 + $0x6d8] sm:$0xff]
    %v2644 = vld [vmem:[#allocation10 + $0x6e0] sm:$0xff]
    %v2645 = vld [vmem:[#allocation10 + $0x6e8] sm:$0xff]
    %v2646 = vld [vmem:[#allocation10 + $0x6f0] sm:$0xff]
    %v2647 = vld [vmem:[#allocation10 + $0x6f8] sm:$0xff]
    %v2648 = vld [vmem:[#allocation10 + $0x700] sm:$0xff]
    %v2649 = vld [vmem:[#allocation10 + $0x708] sm:$0xff]
    %v2650 = vld [vmem:[#allocation10 + $0x710] sm:$0xff]
    %v2651 = vld [vmem:[#allocation10 + $0x718] sm:$0xff]
    %v2652 = vld [vmem:[#allocation10 + $0x720] sm:$0xff]
    %v2653 = vld [vmem:[#allocation10 + $0x728] sm:$0xff]
    %v2654 = vld [vmem:[#allocation10 + $0x730] sm:$0xff]
    %v2655 = vld [vmem:[#allocation10 + $0x738] sm:$0xff]
    %v2656 = vld [vmem:[#allocation10 + $0x740] sm:$0xff]
    %v2657 = vld [vmem:[#allocation10 + $0x748] sm:$0xff]
    %v2658 = vld [vmem:[#allocation10 + $0x750] sm:$0xff]
    %v2659 = vld [vmem:[#allocation10 + $0x758] sm:$0xff]
    %v2660 = vld [vmem:[#allocation10 + $0x760] sm:$0xff]
    %v2661 = vld [vmem:[#allocation10 + $0x768] sm:$0xff]
    %v2662 = vld [vmem:[#allocation10 + $0x770] sm:$0xff]
    %v2663 = vld [vmem:[#allocation10 + $0x778] sm:$0xff]
    %v2664 = vld [vmem:[#allocation10 + $0x780] sm:$0xff]
    %v2665 = vld [vmem:[#allocation10 + $0x788] sm:$0xff]
    %v2666 = vld [vmem:[#allocation10 + $0x790] sm:$0xff]
    %v2667 = vld [vmem:[#allocation10 + $0x798] sm:$0xff]
    %v2668 = vld [vmem:[#allocation10 + $0x7a0] sm:$0xff]
    %v2669 = vld [vmem:[#allocation10 + $0x7a8] sm:$0xff]
    %v2670 = vld [vmem:[#allocation10 + $0x7b0] sm:$0xff]
    %v2671 = vld [vmem:[#allocation10 + $0x7b8] sm:$0xff]
    %v2672 = vld [vmem:[#allocation10 + $0x7c0] sm:$0xff]
    %v2673 = vld [vmem:[#allocation10 + $0x7c8] sm:$0xff]
    %v2674 = vld [vmem:[#allocation10 + $0x7d0] sm:$0xff]
    %v2675 = vld [vmem:[#allocation10 + $0x7d8] sm:$0xff]
    %v2676 = vld [vmem:[#allocation10 + $0x7e0] sm:$0xff]
    %v2677 = vld [vmem:[#allocation10 + $0x7e8] sm:$0xff]
    %v2678 = vld [vmem:[#allocation10 + $0x7f0] sm:$0xff]
    %v2679 = vld [vmem:[#allocation10 + $0x7f8] sm:$0xff]
    %v2680 = vld [vmem:[#allocation10 + $0x800] sm:$0xff]
    %v2681 = vld [vmem:[#allocation10 + $0x808] sm:$0xff]
    %v2682 = vld [vmem:[#allocation10 + $0x810] sm:$0xff]
    %v2683 = vld [vmem:[#allocation10 + $0x818] sm:$0xff]
    %v2684 = vld [vmem:[#allocation10 + $0x820] sm:$0xff]
    %v2685 = vld [vmem:[#allocation10 + $0x828] sm:$0xff]
    %v2686 = vld [vmem:[#allocation10 + $0x830] sm:$0xff]
    %v2687 = vld [vmem:[#allocation10 + $0x838] sm:$0xff]
    %v2688 = vld [vmem:[#allocation10 + $0x840] sm:$0xff]
    %v2689 = vld [vmem:[#allocation10 + $0x848] sm:$0xff]
    %v2690 = vld [vmem:[#allocation10 + $0x850] sm:$0xff]
    %v2691 = vld [vmem:[#allocation10 + $0x858] sm:$0xff]
    %v2692 = vld [vmem:[#allocation10 + $0x860] sm:$0xff]
    %v2693 = vld [vmem:[#allocation10 + $0x868] sm:$0xff]
    %v2694 = vld [vmem:[#allocation10 + $0x870] sm:$0xff]
    %v2695 = vld [vmem:[#allocation10 + $0x878] sm:$0xff]
    %v2696 = vld [vmem:[#allocation10 + $0x880] sm:$0xff]
    %v2697 = vld [vmem:[#allocation10 + $0x888] sm:$0xff]
    %v2698 = vld [vmem:[#allocation10 + $0x890] sm:$0xff]
    %v2699 = vld [vmem:[#allocation10 + $0x898] sm:$0xff]
    %v2700 = vld [vmem:[#allocation10 + $0x8a0] sm:$0xff]
    %v2701 = vld [vmem:[#allocation10 + $0x8a8] sm:$0xff]
    %v2702 = vld [vmem:[#allocation10 + $0x8b0] sm:$0xff]
    %v2703 = vld [vmem:[#allocation10 + $0x8b8] sm:$0xff]
    %v2704 = vld [vmem:[#allocation10 + $0x8c0] sm:$0xff]
    %v2705 = vld [vmem:[#allocation10 + $0x8c8] sm:$0xff]
    %v2706 = vld [vmem:[#allocation10 + $0x8d0] sm:$0xff]
    %v2707 = vld [vmem:[#allocation10 + $0x8d8] sm:$0xff]
    %v2708 = vld [vmem:[#allocation10 + $0x8e0] sm:$0xff]
    %v2709 = vld [vmem:[#allocation10 + $0x8e8] sm:$0xff]
    %v2710 = vld [vmem:[#allocation10 + $0x8f0] sm:$0xff]
    %v2711 = vld [vmem:[#allocation10 + $0x8f8] sm:$0xff]
    %v2712 = vld [vmem:[#allocation11] sm:$0x3f]
    %v2714 = vlaneseq
    %v2715 = vshrl.u32 %v2714, 7
    %v2716 = vsub.s32 0, %v2715
    %v2717 = vrot.slane %v2712, %v2716
    %v2718 = vlaneseq
    %v2719 = vshrl.u32 %v2718, 7
    %v2720 = vsub.s32 1, %v2719
    %v2721 = vrot.slane %v2712, %v2720
    %v2722 = vlaneseq
    %v2723 = vshrl.u32 %v2722, 7
    %v2724 = vsub.s32 2, %v2723
    %v2725 = vrot.slane %v2712, %v2724
    %v2726 = vlaneseq
    %v2727 = vshrl.u32 %v2726, 7
    %v2728 = vsub.s32 3, %v2727
    %v2729 = vrot.slane %v2712, %v2728
    %v2730 = vlaneseq
    %v2731 = vshrl.u32 %v2730, 7
    %v2732 = vsub.s32 4, %v2731
    %v2733 = vrot.slane %v2712, %v2732
    %v2734 = vlaneseq
    %v2735 = vshrl.u32 %v2734, 7
    %v2736 = vsub.s32 5, %v2735
    %v2737 = vrot.slane %v2712, %v2736
    %v3032 = vunpack.c.l.b16 %v2424
    %v3033 = vunpack.c.h.b16 %v2424
    %v3034 = vunpack.c.l.b16 %v2425
    %v3035 = vunpack.c.h.b16 %v2425
    %v3036 = vunpack.c.l.b16 %v2426
    %v3037 = vunpack.c.h.b16 %v2426
    %v3038 = vunpack.c.l.b16 %v2427
    %v3039 = vunpack.c.h.b16 %v2427
    %v3040 = vunpack.c.l.b16 %v2428
    %v3041 = vunpack.c.h.b16 %v2428
    %v3042 = vunpack.c.l.b16 %v2429
    %v3043 = vunpack.c.h.b16 %v2429
    %v3044 = vunpack.c.l.b16 %v2430
    %v3045 = vunpack.c.h.b16 %v2430
    %v3046 = vunpack.c.l.b16 %v2431
    %v3047 = vunpack.c.h.b16 %v2431
    %v3048 = vunpack.c.l.b16 %v2432
    %v3049 = vunpack.c.h.b16 %v2432
    %v3050 = vunpack.c.l.b16 %v2433
    %v3051 = vunpack.c.h.b16 %v2433
    %v3052 = vunpack.c.l.b16 %v2434
    %v3053 = vunpack.c.h.b16 %v2434
    %v3054 = vunpack.c.l.b16 %v2435
    %v3055 = vunpack.c.h.b16 %v2435
    %v3056 = vunpack.c.l.b16 %v2436
    %v3057 = vunpack.c.h.b16 %v2436
    %v3058 = vunpack.c.l.b16 %v2437
    %v3059 = vunpack.c.h.b16 %v2437
    %v3060 = vunpack.c.l.b16 %v2438
    %v3061 = vunpack.c.h.b16 %v2438
    %v3062 = vunpack.c.l.b16 %v2439
    %v3063 = vunpack.c.h.b16 %v2439
    %v3064 = vunpack.c.l.b16 %v2440
    %v3065 = vunpack.c.h.b16 %v2440
    %v3066 = vunpack.c.l.b16 %v2441
    %v3067 = vunpack.c.h.b16 %v2441
    %v3068 = vunpack.c.l.b16 %v2442
    %v3069 = vunpack.c.h.b16 %v2442
    %v3070 = vunpack.c.l.b16 %v2443
    %v3071 = vunpack.c.h.b16 %v2443
    %v3072 = vunpack.c.l.b16 %v2444
    %v3073 = vunpack.c.h.b16 %v2444
    %v3074 = vunpack.c.l.b16 %v2445
    %v3075 = vunpack.c.h.b16 %v2445
    %v3076 = vunpack.c.l.b16 %v2446
    %v3077 = vunpack.c.h.b16 %v2446
    %v3078 = vunpack.c.l.b16 %v2447
    %v3079 = vunpack.c.h.b16 %v2447
    %v3080 = vunpack.c.l.b16 %v2448
    %v3081 = vunpack.c.h.b16 %v2448
    %v3082 = vunpack.c.l.b16 %v2449
    %v3083 = vunpack.c.h.b16 %v2449
    %v3084 = vunpack.c.l.b16 %v2450
    %v3085 = vunpack.c.h.b16 %v2450
    %v3086 = vunpack.c.l.b16 %v2451
    %v3087 = vunpack.c.h.b16 %v2451
    %v3088 = vunpack.c.l.b16 %v2452
    %v3089 = vunpack.c.h.b16 %v2452
    %v3090 = vunpack.c.l.b16 %v2453
    %v3091 = vunpack.c.h.b16 %v2453
    %v3092 = vunpack.c.l.b16 %v2454
    %v3093 = vunpack.c.h.b16 %v2454
    %v3094 = vunpack.c.l.b16 %v2455
    %v3095 = vunpack.c.h.b16 %v2455
    %v3096 = vunpack.c.l.b16 %v2456
    %v3097 = vunpack.c.h.b16 %v2456
    %v3098 = vunpack.c.l.b16 %v2457
    %v3099 = vunpack.c.h.b16 %v2457
    %v3100 = vunpack.c.l.b16 %v2458
    %v3101 = vunpack.c.h.b16 %v2458
    %v3102 = vunpack.c.l.b16 %v2459
    %v3103 = vunpack.c.h.b16 %v2459
    %v3104 = vunpack.c.l.b16 %v2460
    %v3105 = vunpack.c.h.b16 %v2460
    %v3106 = vunpack.c.l.b16 %v2461
    %v3107 = vunpack.c.h.b16 %v2461
    %v3108 = vunpack.c.l.b16 %v2462
    %v3109 = vunpack.c.h.b16 %v2462
    %v3110 = vunpack.c.l.b16 %v2463
    %v3111 = vunpack.c.h.b16 %v2463
    %v3112 = vunpack.c.l.b16 %v2464
    %v3113 = vunpack.c.h.b16 %v2464
    %v3114 = vunpack.c.l.b16 %v2465
    %v3115 = vunpack.c.h.b16 %v2465
    %v3116 = vunpack.c.l.b16 %v2466
    %v3117 = vunpack.c.h.b16 %v2466
    %v3118 = vunpack.c.l.b16 %v2467
    %v3119 = vunpack.c.h.b16 %v2467
    %v3120 = vunpack.c.l.b16 %v2468
    %v3121 = vunpack.c.h.b16 %v2468
    %v3122 = vunpack.c.l.b16 %v2469
    %v3123 = vunpack.c.h.b16 %v2469
    %v3124 = vunpack.c.l.b16 %v2470
    %v3125 = vunpack.c.h.b16 %v2470
    %v3126 = vunpack.c.l.b16 %v2471
    %v3127 = vunpack.c.h.b16 %v2471
    %v3128 = vunpack.c.l.b16 %v2472
    %v3129 = vunpack.c.h.b16 %v2472
    %v3130 = vunpack.c.l.b16 %v2473
    %v3131 = vunpack.c.h.b16 %v2473
    %v3132 = vunpack.c.l.b16 %v2474
    %v3133 = vunpack.c.h.b16 %v2474
    %v3134 = vunpack.c.l.b16 %v2475
    %v3135 = vunpack.c.h.b16 %v2475
    %v3136 = vunpack.c.l.b16 %v2476
    %v3137 = vunpack.c.h.b16 %v2476
    %v3138 = vunpack.c.l.b16 %v2477
    %v3139 = vunpack.c.h.b16 %v2477
    %v3140 = vunpack.c.l.b16 %v2478
    %v3141 = vunpack.c.h.b16 %v2478
    %v3142 = vunpack.c.l.b16 %v2479
    %v3143 = vunpack.c.h.b16 %v2479
    %v3144 = vunpack.c.l.b16 %v2480
    %v3145 = vunpack.c.h.b16 %v2480
    %v3146 = vunpack.c.l.b16 %v2481
    %v3147 = vunpack.c.h.b16 %v2481
    %v3148 = vunpack.c.l.b16 %v2482
    %v3149 = vunpack.c.h.b16 %v2482
    %v3150 = vunpack.c.l.b16 %v2483
    %v3151 = vunpack.c.h.b16 %v2483
    %v3152 = vunpack.c.l.b16 %v2484
    %v3153 = vunpack.c.h.b16 %v2484
    %v3154 = vunpack.c.l.b16 %v2485
    %v3155 = vunpack.c.h.b16 %v2485
    %v3156 = vunpack.c.l.b16 %v2486
    %v3157 = vunpack.c.h.b16 %v2486
    %v3158 = vunpack.c.l.b16 %v2487
    %v3159 = vunpack.c.h.b16 %v2487
    %v3160 = vunpack.c.l.b16 %v2488
    %v3161 = vunpack.c.h.b16 %v2488
    %v3162 = vunpack.c.l.b16 %v2489
    %v3163 = vunpack.c.h.b16 %v2489
    %v3164 = vunpack.c.l.b16 %v2490
    %v3165 = vunpack.c.h.b16 %v2490
    %v3166 = vunpack.c.l.b16 %v2491
    %v3167 = vunpack.c.h.b16 %v2491
    %v3168 = vunpack.c.l.b16 %v2492
    %v3169 = vunpack.c.h.b16 %v2492
    %v3170 = vunpack.c.l.b16 %v2493
    %v3171 = vunpack.c.h.b16 %v2493
    %v3172 = vunpack.c.l.b16 %v2494
    %v3173 = vunpack.c.h.b16 %v2494
    %v3174 = vunpack.c.l.b16 %v2495
    %v3175 = vunpack.c.h.b16 %v2495
    %v3176 = vunpack.c.l.b16 %v2496
    %v3177 = vunpack.c.h.b16 %v2496
    %v3178 = vunpack.c.l.b16 %v2497
    %v3179 = vunpack.c.h.b16 %v2497
    %v3180 = vunpack.c.l.b16 %v2498
    %v3181 = vunpack.c.h.b16 %v2498
    %v3182 = vunpack.c.l.b16 %v2499
    %v3183 = vunpack.c.h.b16 %v2499
    %v3184 = vunpack.c.l.b16 %v2500
    %v3185 = vunpack.c.h.b16 %v2500
    %v3186 = vunpack.c.l.b16 %v2501
    %v3187 = vunpack.c.h.b16 %v2501
    %v3188 = vunpack.c.l.b16 %v2502
    %v3189 = vunpack.c.h.b16 %v2502
    %v3190 = vunpack.c.l.b16 %v2503
    %v3191 = vunpack.c.h.b16 %v2503
    %v3192 = vunpack.c.l.b16 %v2504
    %v3193 = vunpack.c.h.b16 %v2504
    %v3194 = vunpack.c.l.b16 %v2505
    %v3195 = vunpack.c.h.b16 %v2505
    %v3196 = vunpack.c.l.b16 %v2506
    %v3197 = vunpack.c.h.b16 %v2506
    %v3198 = vunpack.c.l.b16 %v2507
    %v3199 = vunpack.c.h.b16 %v2507
    %v3200 = vunpack.c.l.b16 %v2508
    %v3201 = vunpack.c.h.b16 %v2508
    %v3202 = vunpack.c.l.b16 %v2509
    %v3203 = vunpack.c.h.b16 %v2509
    %v3204 = vunpack.c.l.b16 %v2510
    %v3205 = vunpack.c.h.b16 %v2510
    %v3206 = vunpack.c.l.b16 %v2511
    %v3207 = vunpack.c.h.b16 %v2511
    %v3208 = vunpack.c.l.b16 %v2512
    %v3209 = vunpack.c.h.b16 %v2512
    %v3210 = vunpack.c.l.b16 %v2513
    %v3211 = vunpack.c.h.b16 %v2513
    %v3212 = vunpack.c.l.b16 %v2514
    %v3213 = vunpack.c.h.b16 %v2514
    %v3214 = vunpack.c.l.b16 %v2515
    %v3215 = vunpack.c.h.b16 %v2515
    %v3216 = vunpack.c.l.b16 %v2516
    %v3217 = vunpack.c.h.b16 %v2516
    %v3218 = vunpack.c.l.b16 %v2517
    %v3219 = vunpack.c.h.b16 %v2517
    %v3220 = vunpack.c.l.b16 %v2518
    %v3221 = vunpack.c.h.b16 %v2518
    %v3222 = vunpack.c.l.b16 %v2519
    %v3223 = vunpack.c.h.b16 %v2519
    %v3224 = vunpack.c.l.b16 %v2520
    %v3225 = vunpack.c.h.b16 %v2520
    %v3226 = vunpack.c.l.b16 %v2521
    %v3227 = vunpack.c.h.b16 %v2521
    %v3228 = vunpack.c.l.b16 %v2522
    %v3229 = vunpack.c.h.b16 %v2522
    %v3230 = vunpack.c.l.b16 %v2523
    %v3231 = vunpack.c.h.b16 %v2523
    %v3232 = vunpack.c.l.b16 %v2524
    %v3233 = vunpack.c.h.b16 %v2524
    %v3234 = vunpack.c.l.b16 %v2525
    %v3235 = vunpack.c.h.b16 %v2525
    %v3236 = vunpack.c.l.b16 %v2526
    %v3237 = vunpack.c.h.b16 %v2526
    %v3238 = vunpack.c.l.b16 %v2527
    %v3239 = vunpack.c.h.b16 %v2527
    %v3240 = vunpack.c.l.b16 %v2528
    %v3241 = vunpack.c.h.b16 %v2528
    %v3242 = vunpack.c.l.b16 %v2529
    %v3243 = vunpack.c.h.b16 %v2529
    %v3244 = vunpack.c.l.b16 %v2530
    %v3245 = vunpack.c.h.b16 %v2530
    %v3246 = vunpack.c.l.b16 %v2531
    %v3247 = vunpack.c.h.b16 %v2531
    %v3248 = vunpack.c.l.b16 %v2532
    %v3249 = vunpack.c.h.b16 %v2532
    %v3250 = vunpack.c.l.b16 %v2533
    %v3251 = vunpack.c.h.b16 %v2533
    %v3252 = vunpack.c.l.b16 %v2534
    %v3253 = vunpack.c.h.b16 %v2534
    %v3254 = vunpack.c.l.b16 %v2535
    %v3255 = vunpack.c.h.b16 %v2535
    %v3256 = vunpack.c.l.b16 %v2536
    %v3257 = vunpack.c.h.b16 %v2536
    %v3258 = vunpack.c.l.b16 %v2537
    %v3259 = vunpack.c.h.b16 %v2537
    %v3260 = vunpack.c.l.b16 %v2538
    %v3261 = vunpack.c.h.b16 %v2538
    %v3262 = vunpack.c.l.b16 %v2539
    %v3263 = vunpack.c.h.b16 %v2539
    %v3264 = vunpack.c.l.b16 %v2540
    %v3265 = vunpack.c.h.b16 %v2540
    %v3266 = vunpack.c.l.b16 %v2541
    %v3267 = vunpack.c.h.b16 %v2541
    %v3268 = vunpack.c.l.b16 %v2542
    %v3269 = vunpack.c.h.b16 %v2542
    %v3270 = vunpack.c.l.b16 %v2543
    %v3271 = vunpack.c.h.b16 %v2543
    %v3272 = vunpack.c.l.b16 %v2544
    %v3273 = vunpack.c.h.b16 %v2544
    %v3274 = vunpack.c.l.b16 %v2545
    %v3275 = vunpack.c.h.b16 %v2545
    %v3276 = vunpack.c.l.b16 %v2546
    %v3277 = vunpack.c.h.b16 %v2546
    %v3278 = vunpack.c.l.b16 %v2547
    %v3279 = vunpack.c.h.b16 %v2547
    %v3280 = vunpack.c.l.b16 %v2548
    %v3281 = vunpack.c.h.b16 %v2548
    %v3282 = vunpack.c.l.b16 %v2549
    %v3283 = vunpack.c.h.b16 %v2549
    %v3284 = vunpack.c.l.b16 %v2550
    %v3285 = vunpack.c.h.b16 %v2550
    %v3286 = vunpack.c.l.b16 %v2551
    %v3287 = vunpack.c.h.b16 %v2551
    %v3288 = vunpack.c.l.b16 %v2552
    %v3289 = vunpack.c.h.b16 %v2552
    %v3290 = vunpack.c.l.b16 %v2553
    %v3291 = vunpack.c.h.b16 %v2553
    %v3292 = vunpack.c.l.b16 %v2554
    %v3293 = vunpack.c.h.b16 %v2554
    %v3294 = vunpack.c.l.b16 %v2555
    %v3295 = vunpack.c.h.b16 %v2555
    %v3296 = vunpack.c.l.b16 %v2556
    %v3297 = vunpack.c.h.b16 %v2556
    %v3298 = vunpack.c.l.b16 %v2557
    %v3299 = vunpack.c.h.b16 %v2557
    %v3300 = vunpack.c.l.b16 %v2558
    %v3301 = vunpack.c.h.b16 %v2558
    %v3302 = vunpack.c.l.b16 %v2559
    %v3303 = vunpack.c.h.b16 %v2559
    %v3304 = vunpack.c.l.b16 %v2560
    %v3305 = vunpack.c.h.b16 %v2560
    %v3306 = vunpack.c.l.b16 %v2561
    %v3307 = vunpack.c.h.b16 %v2561
    %v3308 = vunpack.c.l.b16 %v2562
    %v3309 = vunpack.c.h.b16 %v2562
    %v3310 = vunpack.c.l.b16 %v2563
    %v3311 = vunpack.c.h.b16 %v2563
    %v3312 = vunpack.c.l.b16 %v2564
    %v3313 = vunpack.c.h.b16 %v2564
    %v3314 = vunpack.c.l.b16 %v2565
    %v3315 = vunpack.c.h.b16 %v2565
    %v3316 = vunpack.c.l.b16 %v2566
    %v3317 = vunpack.c.h.b16 %v2566
    %v3318 = vunpack.c.l.b16 %v2567
    %v3319 = vunpack.c.h.b16 %v2567
    %v3320 = vunpack.c.l.b16 %v2568
    %v3321 = vunpack.c.h.b16 %v2568
    %v3322 = vunpack.c.l.b16 %v2569
    %v3323 = vunpack.c.h.b16 %v2569
    %v3324 = vunpack.c.l.b16 %v2570
    %v3325 = vunpack.c.h.b16 %v2570
    %v3326 = vunpack.c.l.b16 %v2571
    %v3327 = vunpack.c.h.b16 %v2571
    %v3328 = vunpack.c.l.b16 %v2572
    %v3329 = vunpack.c.h.b16 %v2572
    %v3330 = vunpack.c.l.b16 %v2573
    %v3331 = vunpack.c.h.b16 %v2573
    %v3332 = vunpack.c.l.b16 %v2574
    %v3333 = vunpack.c.h.b16 %v2574
    %v3334 = vunpack.c.l.b16 %v2575
    %v3335 = vunpack.c.h.b16 %v2575
    %v3336 = vunpack.c.l.b16 %v2576
    %v3337 = vunpack.c.h.b16 %v2576
    %v3338 = vunpack.c.l.b16 %v2577
    %v3339 = vunpack.c.h.b16 %v2577
    %v3340 = vunpack.c.l.b16 %v2578
    %v3341 = vunpack.c.h.b16 %v2578
    %v3342 = vunpack.c.l.b16 %v2579
    %v3343 = vunpack.c.h.b16 %v2579
    %v3344 = vunpack.c.l.b16 %v2580
    %v3345 = vunpack.c.h.b16 %v2580
    %v3346 = vunpack.c.l.b16 %v2581
    %v3347 = vunpack.c.h.b16 %v2581
    %v3348 = vunpack.c.l.b16 %v2582
    %v3349 = vunpack.c.h.b16 %v2582
    %v3350 = vunpack.c.l.b16 %v2583
    %v3351 = vunpack.c.h.b16 %v2583
    %v3352 = vunpack.c.l.b16 %v2584
    %v3353 = vunpack.c.h.b16 %v2584
    %v3354 = vunpack.c.l.b16 %v2585
    %v3355 = vunpack.c.h.b16 %v2585
    %v3356 = vunpack.c.l.b16 %v2586
    %v3357 = vunpack.c.h.b16 %v2586
    %v3358 = vunpack.c.l.b16 %v2587
    %v3359 = vunpack.c.h.b16 %v2587
    %v3360 = vunpack.c.l.b16 %v2588
    %v3361 = vunpack.c.h.b16 %v2588
    %v3362 = vunpack.c.l.b16 %v2589
    %v3363 = vunpack.c.h.b16 %v2589
    %v3364 = vunpack.c.l.b16 %v2590
    %v3365 = vunpack.c.h.b16 %v2590
    %v3366 = vunpack.c.l.b16 %v2591
    %v3367 = vunpack.c.h.b16 %v2591
    %v3368 = vunpack.c.l.b16 %v2592
    %v3369 = vunpack.c.h.b16 %v2592
    %v3370 = vunpack.c.l.b16 %v2593
    %v3371 = vunpack.c.h.b16 %v2593
    %v3372 = vunpack.c.l.b16 %v2594
    %v3373 = vunpack.c.h.b16 %v2594
    %v3374 = vunpack.c.l.b16 %v2595
    %v3375 = vunpack.c.h.b16 %v2595
    %v3376 = vunpack.c.l.b16 %v2596
    %v3377 = vunpack.c.h.b16 %v2596
    %v3378 = vunpack.c.l.b16 %v2597
    %v3379 = vunpack.c.h.b16 %v2597
    %v3380 = vunpack.c.l.b16 %v2598
    %v3381 = vunpack.c.h.b16 %v2598
    %v3382 = vunpack.c.l.b16 %v2599
    %v3383 = vunpack.c.h.b16 %v2599
    %v3384 = vunpack.c.l.b16 %v2600
    %v3385 = vunpack.c.h.b16 %v2600
    %v3386 = vunpack.c.l.b16 %v2601
    %v3387 = vunpack.c.h.b16 %v2601
    %v3388 = vunpack.c.l.b16 %v2602
    %v3389 = vunpack.c.h.b16 %v2602
    %v3390 = vunpack.c.l.b16 %v2603
    %v3391 = vunpack.c.h.b16 %v2603
    %v3392 = vunpack.c.l.b16 %v2604
    %v3393 = vunpack.c.h.b16 %v2604
    %v3394 = vunpack.c.l.b16 %v2605
    %v3395 = vunpack.c.h.b16 %v2605
    %v3396 = vunpack.c.l.b16 %v2606
    %v3397 = vunpack.c.h.b16 %v2606
    %v3398 = vunpack.c.l.b16 %v2607
    %v3399 = vunpack.c.h.b16 %v2607
    %v3400 = vunpack.c.l.b16 %v2608
    %v3401 = vunpack.c.h.b16 %v2608
    %v3402 = vunpack.c.l.b16 %v2609
    %v3403 = vunpack.c.h.b16 %v2609
    %v3404 = vunpack.c.l.b16 %v2610
    %v3405 = vunpack.c.h.b16 %v2610
    %v3406 = vunpack.c.l.b16 %v2611
    %v3407 = vunpack.c.h.b16 %v2611
    %v3408 = vunpack.c.l.b16 %v2612
    %v3409 = vunpack.c.h.b16 %v2612
    %v3410 = vunpack.c.l.b16 %v2613
    %v3411 = vunpack.c.h.b16 %v2613
    %v3412 = vunpack.c.l.b16 %v2614
    %v3413 = vunpack.c.h.b16 %v2614
    %v3414 = vunpack.c.l.b16 %v2615
    %v3415 = vunpack.c.h.b16 %v2615
    %v3416 = vunpack.c.l.b16 %v2616
    %v3417 = vunpack.c.h.b16 %v2616
    %v3418 = vunpack.c.l.b16 %v2617
    %v3419 = vunpack.c.h.b16 %v2617
    %v3420 = vunpack.c.l.b16 %v2618
    %v3421 = vunpack.c.h.b16 %v2618
    %v3422 = vunpack.c.l.b16 %v2619
    %v3423 = vunpack.c.h.b16 %v2619
    %v3424 = vunpack.c.l.b16 %v2620
    %v3425 = vunpack.c.h.b16 %v2620
    %v3426 = vunpack.c.l.b16 %v2621
    %v3427 = vunpack.c.h.b16 %v2621
    %v3428 = vunpack.c.l.b16 %v2622
    %v3429 = vunpack.c.h.b16 %v2622
    %v3430 = vunpack.c.l.b16 %v2623
    %v3431 = vunpack.c.h.b16 %v2623
    %v3432 = vunpack.c.l.b16 %v2624
    %v3433 = vunpack.c.h.b16 %v2624
    %v3434 = vunpack.c.l.b16 %v2625
    %v3435 = vunpack.c.h.b16 %v2625
    %v3436 = vunpack.c.l.b16 %v2626
    %v3437 = vunpack.c.h.b16 %v2626
    %v3438 = vunpack.c.l.b16 %v2627
    %v3439 = vunpack.c.h.b16 %v2627
    %v3440 = vunpack.c.l.b16 %v2628
    %v3441 = vunpack.c.h.b16 %v2628
    %v3442 = vunpack.c.l.b16 %v2629
    %v3443 = vunpack.c.h.b16 %v2629
    %v3444 = vunpack.c.l.b16 %v2630
    %v3445 = vunpack.c.h.b16 %v2630
    %v3446 = vunpack.c.l.b16 %v2631
    %v3447 = vunpack.c.h.b16 %v2631
    %v3448 = vunpack.c.l.b16 %v2632
    %v3449 = vunpack.c.h.b16 %v2632
    %v3450 = vunpack.c.l.b16 %v2633
    %v3451 = vunpack.c.h.b16 %v2633
    %v3452 = vunpack.c.l.b16 %v2634
    %v3453 = vunpack.c.h.b16 %v2634
    %v3454 = vunpack.c.l.b16 %v2635
    %v3455 = vunpack.c.h.b16 %v2635
    %v3456 = vunpack.c.l.b16 %v2636
    %v3457 = vunpack.c.h.b16 %v2636
    %v3458 = vunpack.c.l.b16 %v2637
    %v3459 = vunpack.c.h.b16 %v2637
    %v3460 = vunpack.c.l.b16 %v2638
    %v3461 = vunpack.c.h.b16 %v2638
    %v3462 = vunpack.c.l.b16 %v2639
    %v3463 = vunpack.c.h.b16 %v2639
    %v3464 = vunpack.c.l.b16 %v2640
    %v3465 = vunpack.c.h.b16 %v2640
    %v3466 = vunpack.c.l.b16 %v2641
    %v3467 = vunpack.c.h.b16 %v2641
    %v3468 = vunpack.c.l.b16 %v2642
    %v3469 = vunpack.c.h.b16 %v2642
    %v3470 = vunpack.c.l.b16 %v2643
    %v3471 = vunpack.c.h.b16 %v2643
    %v3472 = vunpack.c.l.b16 %v2644
    %v3473 = vunpack.c.h.b16 %v2644
    %v3474 = vunpack.c.l.b16 %v2645
    %v3475 = vunpack.c.h.b16 %v2645
    %v3476 = vunpack.c.l.b16 %v2646
    %v3477 = vunpack.c.h.b16 %v2646
    %v3478 = vunpack.c.l.b16 %v2647
    %v3479 = vunpack.c.h.b16 %v2647
    %v3480 = vunpack.c.l.b16 %v2648
    %v3481 = vunpack.c.h.b16 %v2648
    %v3482 = vunpack.c.l.b16 %v2649
    %v3483 = vunpack.c.h.b16 %v2649
    %v3484 = vunpack.c.l.b16 %v2650
    %v3485 = vunpack.c.h.b16 %v2650
    %v3486 = vunpack.c.l.b16 %v2651
    %v3487 = vunpack.c.h.b16 %v2651
    %v3488 = vunpack.c.l.b16 %v2652
    %v3489 = vunpack.c.h.b16 %v2652
    %v3490 = vunpack.c.l.b16 %v2653
    %v3491 = vunpack.c.h.b16 %v2653
    %v3492 = vunpack.c.l.b16 %v2654
    %v3493 = vunpack.c.h.b16 %v2654
    %v3494 = vunpack.c.l.b16 %v2655
    %v3495 = vunpack.c.h.b16 %v2655
    %v3496 = vunpack.c.l.b16 %v2656
    %v3497 = vunpack.c.h.b16 %v2656
    %v3498 = vunpack.c.l.b16 %v2657
    %v3499 = vunpack.c.h.b16 %v2657
    %v3500 = vunpack.c.l.b16 %v2658
    %v3501 = vunpack.c.h.b16 %v2658
    %v3502 = vunpack.c.l.b16 %v2659
    %v3503 = vunpack.c.h.b16 %v2659
    %v3504 = vunpack.c.l.b16 %v2660
    %v3505 = vunpack.c.h.b16 %v2660
    %v3506 = vunpack.c.l.b16 %v2661
    %v3507 = vunpack.c.h.b16 %v2661
    %v3508 = vunpack.c.l.b16 %v2662
    %v3509 = vunpack.c.h.b16 %v2662
    %v3510 = vunpack.c.l.b16 %v2663
    %v3511 = vunpack.c.h.b16 %v2663
    %v3512 = vunpack.c.l.b16 %v2664
    %v3513 = vunpack.c.h.b16 %v2664
    %v3514 = vunpack.c.l.b16 %v2665
    %v3515 = vunpack.c.h.b16 %v2665
    %v3516 = vunpack.c.l.b16 %v2666
    %v3517 = vunpack.c.h.b16 %v2666
    %v3518 = vunpack.c.l.b16 %v2667
    %v3519 = vunpack.c.h.b16 %v2667
    %v3520 = vunpack.c.l.b16 %v2668
    %v3521 = vunpack.c.h.b16 %v2668
    %v3522 = vunpack.c.l.b16 %v2669
    %v3523 = vunpack.c.h.b16 %v2669
    %v3524 = vunpack.c.l.b16 %v2670
    %v3525 = vunpack.c.h.b16 %v2670
    %v3526 = vunpack.c.l.b16 %v2671
    %v3527 = vunpack.c.h.b16 %v2671
    %v3528 = vunpack.c.l.b16 %v2672
    %v3529 = vunpack.c.h.b16 %v2672
    %v3530 = vunpack.c.l.b16 %v2673
    %v3531 = vunpack.c.h.b16 %v2673
    %v3532 = vunpack.c.l.b16 %v2674
    %v3533 = vunpack.c.h.b16 %v2674
    %v3534 = vunpack.c.l.b16 %v2675
    %v3535 = vunpack.c.h.b16 %v2675
    %v3536 = vunpack.c.l.b16 %v2676
    %v3537 = vunpack.c.h.b16 %v2676
    %v3538 = vunpack.c.l.b16 %v2677
    %v3539 = vunpack.c.h.b16 %v2677
    %v3540 = vunpack.c.l.b16 %v2678
    %v3541 = vunpack.c.h.b16 %v2678
    %v3542 = vunpack.c.l.b16 %v2679
    %v3543 = vunpack.c.h.b16 %v2679
    %v3544 = vunpack.c.l.b16 %v2680
    %v3545 = vunpack.c.h.b16 %v2680
    %v3546 = vunpack.c.l.b16 %v2681
    %v3547 = vunpack.c.h.b16 %v2681
    %v3548 = vunpack.c.l.b16 %v2682
    %v3549 = vunpack.c.h.b16 %v2682
    %v3550 = vunpack.c.l.b16 %v2683
    %v3551 = vunpack.c.h.b16 %v2683
    %v3552 = vunpack.c.l.b16 %v2684
    %v3553 = vunpack.c.h.b16 %v2684
    %v3554 = vunpack.c.l.b16 %v2685
    %v3555 = vunpack.c.h.b16 %v2685
    %v3556 = vunpack.c.l.b16 %v2686
    %v3557 = vunpack.c.h.b16 %v2686
    %v3558 = vunpack.c.l.b16 %v2687
    %v3559 = vunpack.c.h.b16 %v2687
    %v3560 = vunpack.c.l.b16 %v2688
    %v3561 = vunpack.c.h.b16 %v2688
    %v3562 = vunpack.c.l.b16 %v2689
    %v3563 = vunpack.c.h.b16 %v2689
    %v3564 = vunpack.c.l.b16 %v2690
    %v3565 = vunpack.c.h.b16 %v2690
    %v3566 = vunpack.c.l.b16 %v2691
    %v3567 = vunpack.c.h.b16 %v2691
    %v3568 = vunpack.c.l.b16 %v2692
    %v3569 = vunpack.c.h.b16 %v2692
    %v3570 = vunpack.c.l.b16 %v2693
    %v3571 = vunpack.c.h.b16 %v2693
    %v3572 = vunpack.c.l.b16 %v2694
    %v3573 = vunpack.c.h.b16 %v2694
    %v3574 = vunpack.c.l.b16 %v2695
    %v3575 = vunpack.c.h.b16 %v2695
    %v3576 = vunpack.c.l.b16 %v2696
    %v3577 = vunpack.c.h.b16 %v2696
    %v3578 = vunpack.c.l.b16 %v2697
    %v3579 = vunpack.c.h.b16 %v2697
    %v3580 = vunpack.c.l.b16 %v2698
    %v3581 = vunpack.c.h.b16 %v2698
    %v3582 = vunpack.c.l.b16 %v2699
    %v3583 = vunpack.c.h.b16 %v2699
    %v3584 = vunpack.c.l.b16 %v2700
    %v3585 = vunpack.c.h.b16 %v2700
    %v3586 = vunpack.c.l.b16 %v2701
    %v3587 = vunpack.c.h.b16 %v2701
    %v3588 = vunpack.c.l.b16 %v2702
    %v3589 = vunpack.c.h.b16 %v2702
    %v3590 = vunpack.c.l.b16 %v2703
    %v3591 = vunpack.c.h.b16 %v2703
    %v3592 = vunpack.c.l.b16 %v2704
    %v3593 = vunpack.c.h.b16 %v2704
    %v3594 = vunpack.c.l.b16 %v2705
    %v3595 = vunpack.c.h.b16 %v2705
    %v3596 = vunpack.c.l.b16 %v2706
    %v3597 = vunpack.c.h.b16 %v2706
    %v3598 = vunpack.c.l.b16 %v2707
    %v3599 = vunpack.c.h.b16 %v2707
    %v3600 = vunpack.c.l.b16 %v2708
    %v3601 = vunpack.c.h.b16 %v2708
    %v3602 = vunpack.c.l.b16 %v2709
    %v3603 = vunpack.c.h.b16 %v2709
    %v3604 = vunpack.c.l.b16 %v2710
    %v3605 = vunpack.c.h.b16 %v2710
    %v3606 = vunpack.c.l.b16 %v2711
    %v3607 = vunpack.c.h.b16 %v2711
    %v3608 = vpack.c.b16 %v3038, %v3032
    %v3609 = vpack.c.b16 %v3039, %v3033
    %v3610 = vpack.c.b16 %v3040, %v3034
    %v3611 = vpack.c.b16 %v3041, %v3035
    %v3612 = vpack.c.b16 %v3042, %v3036
    %v3613 = vpack.c.b16 %v3043, %v3037
    %v3614 = vpack.c.b16 %v3050, %v3044
    %v3615 = vpack.c.b16 %v3051, %v3045
    %v3616 = vpack.c.b16 %v3052, %v3046
    %v3617 = vpack.c.b16 %v3053, %v3047
    %v3618 = vpack.c.b16 %v3054, %v3048
    %v3619 = vpack.c.b16 %v3055, %v3049
    %v3620 = vpack.c.b16 %v3062, %v3056
    %v3621 = vpack.c.b16 %v3063, %v3057
    %v3622 = vpack.c.b16 %v3064, %v3058
    %v3623 = vpack.c.b16 %v3065, %v3059
    %v3624 = vpack.c.b16 %v3066, %v3060
    %v3625 = vpack.c.b16 %v3067, %v3061
    %v3626 = vpack.c.b16 %v3074, %v3068
    %v3627 = vpack.c.b16 %v3075, %v3069
    %v3628 = vpack.c.b16 %v3076, %v3070
    %v3629 = vpack.c.b16 %v3077, %v3071
    %v3630 = vpack.c.b16 %v3078, %v3072
    %v3631 = vpack.c.b16 %v3079, %v3073
    %v3632 = vpack.c.b16 %v3086, %v3080
    %v3633 = vpack.c.b16 %v3087, %v3081
    %v3634 = vpack.c.b16 %v3088, %v3082
    %v3635 = vpack.c.b16 %v3089, %v3083
    %v3636 = vpack.c.b16 %v3090, %v3084
    %v3637 = vpack.c.b16 %v3091, %v3085
    %v3638 = vpack.c.b16 %v3098, %v3092
    %v3639 = vpack.c.b16 %v3099, %v3093
    %v3640 = vpack.c.b16 %v3100, %v3094
    %v3641 = vpack.c.b16 %v3101, %v3095
    %v3642 = vpack.c.b16 %v3102, %v3096
    %v3643 = vpack.c.b16 %v3103, %v3097
    %v3644 = vpack.c.b16 %v3110, %v3104
    %v3645 = vpack.c.b16 %v3111, %v3105
    %v3646 = vpack.c.b16 %v3112, %v3106
    %v3647 = vpack.c.b16 %v3113, %v3107
    %v3648 = vpack.c.b16 %v3114, %v3108
    %v3649 = vpack.c.b16 %v3115, %v3109
    %v3650 = vpack.c.b16 %v3122, %v3116
    %v3651 = vpack.c.b16 %v3123, %v3117
    %v3652 = vpack.c.b16 %v3124, %v3118
    %v3653 = vpack.c.b16 %v3125, %v3119
    %v3654 = vpack.c.b16 %v3126, %v3120
    %v3655 = vpack.c.b16 %v3127, %v3121
    %v3656 = vpack.c.b16 %v3134, %v3128
    %v3657 = vpack.c.b16 %v3135, %v3129
    %v3658 = vpack.c.b16 %v3136, %v3130
    %v3659 = vpack.c.b16 %v3137, %v3131
    %v3660 = vpack.c.b16 %v3138, %v3132
    %v3661 = vpack.c.b16 %v3139, %v3133
    %v3662 = vpack.c.b16 %v3146, %v3140
    %v3663 = vpack.c.b16 %v3147, %v3141
    %v3664 = vpack.c.b16 %v3148, %v3142
    %v3665 = vpack.c.b16 %v3149, %v3143
    %v3666 = vpack.c.b16 %v3150, %v3144
    %v3667 = vpack.c.b16 %v3151, %v3145
    %v3668 = vpack.c.b16 %v3158, %v3152
    %v3669 = vpack.c.b16 %v3159, %v3153
    %v3670 = vpack.c.b16 %v3160, %v3154
    %v3671 = vpack.c.b16 %v3161, %v3155
    %v3672 = vpack.c.b16 %v3162, %v3156
    %v3673 = vpack.c.b16 %v3163, %v3157
    %v3674 = vpack.c.b16 %v3170, %v3164
    %v3675 = vpack.c.b16 %v3171, %v3165
    %v3676 = vpack.c.b16 %v3172, %v3166
    %v3677 = vpack.c.b16 %v3173, %v3167
    %v3678 = vpack.c.b16 %v3174, %v3168
    %v3679 = vpack.c.b16 %v3175, %v3169
    %v3680 = vpack.c.b16 %v3182, %v3176
    %v3681 = vpack.c.b16 %v3183, %v3177
    %v3682 = vpack.c.b16 %v3184, %v3178
    %v3683 = vpack.c.b16 %v3185, %v3179
    %v3684 = vpack.c.b16 %v3186, %v3180
    %v3685 = vpack.c.b16 %v3187, %v3181
    %v3686 = vpack.c.b16 %v3194, %v3188
    %v3687 = vpack.c.b16 %v3195, %v3189
    %v3688 = vpack.c.b16 %v3196, %v3190
    %v3689 = vpack.c.b16 %v3197, %v3191
    %v3690 = vpack.c.b16 %v3198, %v3192
    %v3691 = vpack.c.b16 %v3199, %v3193
    %v3692 = vpack.c.b16 %v3206, %v3200
    %v3693 = vpack.c.b16 %v3207, %v3201
    %v3694 = vpack.c.b16 %v3208, %v3202
    %v3695 = vpack.c.b16 %v3209, %v3203
    %v3696 = vpack.c.b16 %v3210, %v3204
    %v3697 = vpack.c.b16 %v3211, %v3205
    %v3698 = vpack.c.b16 %v3218, %v3212
    %v3699 = vpack.c.b16 %v3219, %v3213
    %v3700 = vpack.c.b16 %v3220, %v3214
    %v3701 = vpack.c.b16 %v3221, %v3215
    %v3702 = vpack.c.b16 %v3222, %v3216
    %v3703 = vpack.c.b16 %v3223, %v3217
    %v3704 = vpack.c.b16 %v3230, %v3224
    %v3705 = vpack.c.b16 %v3231, %v3225
    %v3706 = vpack.c.b16 %v3232, %v3226
    %v3707 = vpack.c.b16 %v3233, %v3227
    %v3708 = vpack.c.b16 %v3234, %v3228
    %v3709 = vpack.c.b16 %v3235, %v3229
    %v3710 = vpack.c.b16 %v3242, %v3236
    %v3711 = vpack.c.b16 %v3243, %v3237
    %v3712 = vpack.c.b16 %v3244, %v3238
    %v3713 = vpack.c.b16 %v3245, %v3239
    %v3714 = vpack.c.b16 %v3246, %v3240
    %v3715 = vpack.c.b16 %v3247, %v3241
    %v3716 = vpack.c.b16 %v3254, %v3248
    %v3717 = vpack.c.b16 %v3255, %v3249
    %v3718 = vpack.c.b16 %v3256, %v3250
    %v3719 = vpack.c.b16 %v3257, %v3251
    %v3720 = vpack.c.b16 %v3258, %v3252
    %v3721 = vpack.c.b16 %v3259, %v3253
    %v3722 = vpack.c.b16 %v3266, %v3260
    %v3723 = vpack.c.b16 %v3267, %v3261
    %v3724 = vpack.c.b16 %v3268, %v3262
    %v3725 = vpack.c.b16 %v3269, %v3263
    %v3726 = vpack.c.b16 %v3270, %v3264
    %v3727 = vpack.c.b16 %v3271, %v3265
    %v3728 = vpack.c.b16 %v3278, %v3272
    %v3729 = vpack.c.b16 %v3279, %v3273
    %v3730 = vpack.c.b16 %v3280, %v3274
    %v3731 = vpack.c.b16 %v3281, %v3275
    %v3732 = vpack.c.b16 %v3282, %v3276
    %v3733 = vpack.c.b16 %v3283, %v3277
    %v3734 = vpack.c.b16 %v3290, %v3284
    %v3735 = vpack.c.b16 %v3291, %v3285
    %v3736 = vpack.c.b16 %v3292, %v3286
    %v3737 = vpack.c.b16 %v3293, %v3287
    %v3738 = vpack.c.b16 %v3294, %v3288
    %v3739 = vpack.c.b16 %v3295, %v3289
    %v3740 = vpack.c.b16 %v3302, %v3296
    %v3741 = vpack.c.b16 %v3303, %v3297
    %v3742 = vpack.c.b16 %v3304, %v3298
    %v3743 = vpack.c.b16 %v3305, %v3299
    %v3744 = vpack.c.b16 %v3306, %v3300
    %v3745 = vpack.c.b16 %v3307, %v3301
    %v3746 = vpack.c.b16 %v3314, %v3308
    %v3747 = vpack.c.b16 %v3315, %v3309
    %v3748 = vpack.c.b16 %v3316, %v3310
    %v3749 = vpack.c.b16 %v3317, %v3311
    %v3750 = vpack.c.b16 %v3318, %v3312
    %v3751 = vpack.c.b16 %v3319, %v3313
    %v3752 = vpack.c.b16 %v3326, %v3320
    %v3753 = vpack.c.b16 %v3327, %v3321
    %v3754 = vpack.c.b16 %v3328, %v3322
    %v3755 = vpack.c.b16 %v3329, %v3323
    %v3756 = vpack.c.b16 %v3330, %v3324
    %v3757 = vpack.c.b16 %v3331, %v3325
    %v3758 = vpack.c.b16 %v3338, %v3332
    %v3759 = vpack.c.b16 %v3339, %v3333
    %v3760 = vpack.c.b16 %v3340, %v3334
    %v3761 = vpack.c.b16 %v3341, %v3335
    %v3762 = vpack.c.b16 %v3342, %v3336
    %v3763 = vpack.c.b16 %v3343, %v3337
    %v3764 = vpack.c.b16 %v3350, %v3344
    %v3765 = vpack.c.b16 %v3351, %v3345
    %v3766 = vpack.c.b16 %v3352, %v3346
    %v3767 = vpack.c.b16 %v3353, %v3347
    %v3768 = vpack.c.b16 %v3354, %v3348
    %v3769 = vpack.c.b16 %v3355, %v3349
    %v3770 = vpack.c.b16 %v3362, %v3356
    %v3771 = vpack.c.b16 %v3363, %v3357
    %v3772 = vpack.c.b16 %v3364, %v3358
    %v3773 = vpack.c.b16 %v3365, %v3359
    %v3774 = vpack.c.b16 %v3366, %v3360
    %v3775 = vpack.c.b16 %v3367, %v3361
    %v3776 = vpack.c.b16 %v3374, %v3368
    %v3777 = vpack.c.b16 %v3375, %v3369
    %v3778 = vpack.c.b16 %v3376, %v3370
    %v3779 = vpack.c.b16 %v3377, %v3371
    %v3780 = vpack.c.b16 %v3378, %v3372
    %v3781 = vpack.c.b16 %v3379, %v3373
    %v3782 = vpack.c.b16 %v3386, %v3380
    %v3783 = vpack.c.b16 %v3387, %v3381
    %v3784 = vpack.c.b16 %v3388, %v3382
    %v3785 = vpack.c.b16 %v3389, %v3383
    %v3786 = vpack.c.b16 %v3390, %v3384
    %v3787 = vpack.c.b16 %v3391, %v3385
    %v3788 = vpack.c.b16 %v3398, %v3392
    %v3789 = vpack.c.b16 %v3399, %v3393
    %v3790 = vpack.c.b16 %v3400, %v3394
    %v3791 = vpack.c.b16 %v3401, %v3395
    %v3792 = vpack.c.b16 %v3402, %v3396
    %v3793 = vpack.c.b16 %v3403, %v3397
    %v3794 = vpack.c.b16 %v3410, %v3404
    %v3795 = vpack.c.b16 %v3411, %v3405
    %v3796 = vpack.c.b16 %v3412, %v3406
    %v3797 = vpack.c.b16 %v3413, %v3407
    %v3798 = vpack.c.b16 %v3414, %v3408
    %v3799 = vpack.c.b16 %v3415, %v3409
    %v3800 = vpack.c.b16 %v3422, %v3416
    %v3801 = vpack.c.b16 %v3423, %v3417
    %v3802 = vpack.c.b16 %v3424, %v3418
    %v3803 = vpack.c.b16 %v3425, %v3419
    %v3804 = vpack.c.b16 %v3426, %v3420
    %v3805 = vpack.c.b16 %v3427, %v3421
    %v3806 = vpack.c.b16 %v3434, %v3428
    %v3807 = vpack.c.b16 %v3435, %v3429
    %v3808 = vpack.c.b16 %v3436, %v3430
    %v3809 = vpack.c.b16 %v3437, %v3431
    %v3810 = vpack.c.b16 %v3438, %v3432
    %v3811 = vpack.c.b16 %v3439, %v3433
    %v3812 = vpack.c.b16 %v3446, %v3440
    %v3813 = vpack.c.b16 %v3447, %v3441
    %v3814 = vpack.c.b16 %v3448, %v3442
    %v3815 = vpack.c.b16 %v3449, %v3443
    %v3816 = vpack.c.b16 %v3450, %v3444
    %v3817 = vpack.c.b16 %v3451, %v3445
    %v3818 = vpack.c.b16 %v3458, %v3452
    %v3819 = vpack.c.b16 %v3459, %v3453
    %v3820 = vpack.c.b16 %v3460, %v3454
    %v3821 = vpack.c.b16 %v3461, %v3455
    %v3822 = vpack.c.b16 %v3462, %v3456
    %v3823 = vpack.c.b16 %v3463, %v3457
    %v3824 = vpack.c.b16 %v3470, %v3464
    %v3825 = vpack.c.b16 %v3471, %v3465
    %v3826 = vpack.c.b16 %v3472, %v3466
    %v3827 = vpack.c.b16 %v3473, %v3467
    %v3828 = vpack.c.b16 %v3474, %v3468
    %v3829 = vpack.c.b16 %v3475, %v3469
    %v3830 = vpack.c.b16 %v3482, %v3476
    %v3831 = vpack.c.b16 %v3483, %v3477
    %v3832 = vpack.c.b16 %v3484, %v3478
    %v3833 = vpack.c.b16 %v3485, %v3479
    %v3834 = vpack.c.b16 %v3486, %v3480
    %v3835 = vpack.c.b16 %v3487, %v3481
    %v3836 = vpack.c.b16 %v3494, %v3488
    %v3837 = vpack.c.b16 %v3495, %v3489
    %v3838 = vpack.c.b16 %v3496, %v3490
    %v3839 = vpack.c.b16 %v3497, %v3491
    %v3840 = vpack.c.b16 %v3498, %v3492
    %v3841 = vpack.c.b16 %v3499, %v3493
    %v3842 = vpack.c.b16 %v3506, %v3500
    %v3843 = vpack.c.b16 %v3507, %v3501
    %v3844 = vpack.c.b16 %v3508, %v3502
    %v3845 = vpack.c.b16 %v3509, %v3503
    %v3846 = vpack.c.b16 %v3510, %v3504
    %v3847 = vpack.c.b16 %v3511, %v3505
    %v3848 = vpack.c.b16 %v3518, %v3512
    %v3849 = vpack.c.b16 %v3519, %v3513
    %v3850 = vpack.c.b16 %v3520, %v3514
    %v3851 = vpack.c.b16 %v3521, %v3515
    %v3852 = vpack.c.b16 %v3522, %v3516
    %v3853 = vpack.c.b16 %v3523, %v3517
    %v3854 = vpack.c.b16 %v3530, %v3524
    %v3855 = vpack.c.b16 %v3531, %v3525
    %v3856 = vpack.c.b16 %v3532, %v3526
    %v3857 = vpack.c.b16 %v3533, %v3527
    %v3858 = vpack.c.b16 %v3534, %v3528
    %v3859 = vpack.c.b16 %v3535, %v3529
    %v3860 = vpack.c.b16 %v3542, %v3536
    %v3861 = vpack.c.b16 %v3543, %v3537
    %v3862 = vpack.c.b16 %v3544, %v3538
    %v3863 = vpack.c.b16 %v3545, %v3539
    %v3864 = vpack.c.b16 %v3546, %v3540
    %v3865 = vpack.c.b16 %v3547, %v3541
    %v3866 = vpack.c.b16 %v3554, %v3548
    %v3867 = vpack.c.b16 %v3555, %v3549
    %v3868 = vpack.c.b16 %v3556, %v3550
    %v3869 = vpack.c.b16 %v3557, %v3551
    %v3870 = vpack.c.b16 %v3558, %v3552
    %v3871 = vpack.c.b16 %v3559, %v3553
    %v3872 = vpack.c.b16 %v3566, %v3560
    %v3873 = vpack.c.b16 %v3567, %v3561
    %v3874 = vpack.c.b16 %v3568, %v3562
    %v3875 = vpack.c.b16 %v3569, %v3563
    %v3876 = vpack.c.b16 %v3570, %v3564
    %v3877 = vpack.c.b16 %v3571, %v3565
    %v3878 = vpack.c.b16 %v3578, %v3572
    %v3879 = vpack.c.b16 %v3579, %v3573
    %v3880 = vpack.c.b16 %v3580, %v3574
    %v3881 = vpack.c.b16 %v3581, %v3575
    %v3882 = vpack.c.b16 %v3582, %v3576
    %v3883 = vpack.c.b16 %v3583, %v3577
    %v3884 = vpack.c.b16 %v3590, %v3584
    %v3885 = vpack.c.b16 %v3591, %v3585
    %v3886 = vpack.c.b16 %v3592, %v3586
    %v3887 = vpack.c.b16 %v3593, %v3587
    %v3888 = vpack.c.b16 %v3594, %v3588
    %v3889 = vpack.c.b16 %v3595, %v3589
    %v3890 = vpack.c.b16 %v3602, %v3596
    %v3891 = vpack.c.b16 %v3603, %v3597
    %v3892 = vpack.c.b16 %v3604, %v3598
    %v3893 = vpack.c.b16 %v3605, %v3599
    %v3894 = vpack.c.b16 %v3606, %v3600
    %v3895 = vpack.c.b16 %v3607, %v3601
    %4184 = vmatprep.subr.bf16.mxu0 %v3609
    %4185 = vmatpush1.bf16.msra.mxu0 %v3608
    %4186 = vmatprep.subr.bf16.mxu0 %v3615
    %4187 = vmatpush1.bf16.msra.mxu0 %v3614
    %4188 = vmatprep.subr.bf16.mxu0 %v3621
    %4189 = vmatpush1.bf16.msra.mxu0 %v3620
    %4190 = vmatprep.subr.bf16.mxu0 %v3627
    %4191 = vmatpush1.bf16.msra.mxu0 %v3626
    %4192 = vmatprep.subr.bf16.mxu0 %v3633
    %4193 = vmatpush1.bf16.msra.mxu0 %v3632
    %4194 = vmatprep.subr.bf16.mxu0 %v3639
    %4195 = vmatpush1.bf16.msra.mxu0 %v3638
    %4196 = vmatprep.subr.bf16.mxu0 %v3645
    %4197 = vmatpush1.bf16.msra.mxu0 %v3644
    %4198 = vmatprep.subr.bf16.mxu0 %v3651
    %4199 = vmatpush1.bf16.msra.mxu0 %v3650
    %4200 = vmatprep.subr.bf16.mxu0 %v3657
    %4201 = vmatpush1.bf16.msra.mxu0 %v3656
    %4202 = vmatprep.subr.bf16.mxu0 %v3663
    %4203 = vmatpush1.bf16.msra.mxu0 %v3662
    %4204 = vmatprep.subr.bf16.mxu0 %v3669
    %4205 = vmatpush1.bf16.msra.mxu0 %v3668
    %4206 = vmatprep.subr.bf16.mxu0 %v3675
    %4207 = vmatpush1.bf16.msra.mxu0 %v3674
    %4208 = vmatprep.subr.bf16.mxu0 %v3681
    %4209 = vmatpush1.bf16.msra.mxu0 %v3680
    %4210 = vmatprep.subr.bf16.mxu0 %v3687
    %4211 = vmatpush1.bf16.msra.mxu0 %v3686
    %4212 = vmatprep.subr.bf16.mxu0 %v3693
    %4213 = vmatpush1.bf16.msra.mxu0 %v3692
    %4214 = vmatprep.subr.bf16.mxu0 %v3699
    %4215 = vmatpush1.bf16.msra.mxu0 %v3698
    %4216 = vmatprep.mubr.bf16.mxu0 %v290
    %4217 = vmatmul.mubr.bf16.gmra.mrb[0].mxu0 %v289
    %v4218 = vpop.f32.mrb[0].mxu0
    %v4219 = vadd.f32 %v2717, %v4218
    %v4220 = vpop.f32.mrb[0].mxu0
    %v4221 = vadd.f32 %v2721, %v4220
    %v4222 = vpop.f32.mrb[0].mxu0
    %v4223 = vpop.f32.mrb[0].mxu0
    %4224 = vdwg.mxu0
    %4225 = vmatprep.subr.bf16.mxu0 %v3705
    %4226 = vmatpush1.bf16.msra.mxu0 %v3704
    %4227 = vmatprep.subr.bf16.mxu0 %v3711
    %4228 = vmatpush1.bf16.msra.mxu0 %v3710
    %4229 = vmatprep.subr.bf16.mxu0 %v3717
    %4230 = vmatpush1.bf16.msra.mxu0 %v3716
    %4231 = vmatprep.subr.bf16.mxu0 %v3723
    %4232 = vmatpush1.bf16.msra.mxu0 %v3722
    %4233 = vmatprep.subr.bf16.mxu0 %v3729
    %4234 = vmatpush1.bf16.msra.mxu0 %v3728
    %4235 = vmatprep.subr.bf16.mxu0 %v3735
    %4236 = vmatpush1.bf16.msra.mxu0 %v3734
    %4237 = vmatprep.subr.bf16.mxu0 %v3741
    %4238 = vmatpush1.bf16.msra.mxu0 %v3740
    %4239 = vmatprep.subr.bf16.mxu0 %v3747
    %4240 = vmatpush1.bf16.msra.mxu0 %v3746
    %4241 = vmatprep.subr.bf16.mxu0 %v3753
    %4242 = vmatpush1.bf16.msra.mxu0 %v3752
    %4243 = vmatprep.subr.bf16.mxu0 %v3759
    %4244 = vmatpush1.bf16.msra.mxu0 %v3758
    %4245 = vmatprep.subr.bf16.mxu0 %v3765
    %4246 = vmatpush1.bf16.msra.mxu0 %v3764
    %4247 = vmatprep.subr.bf16.mxu0 %v3771
    %4248 = vmatpush1.bf16.msra.mxu0 %v3770
    %4249 = vmatprep.subr.bf16.mxu0 %v3777
    %4250 = vmatpush1.bf16.msra.mxu0 %v3776
    %4251 = vmatprep.subr.bf16.mxu0 %v3783
    %4252 = vmatpush1.bf16.msra.mxu0 %v3782
    %4253 = vmatprep.subr.bf16.mxu0 %v3789
    %4254 = vmatpush1.bf16.msra.mxu0 %v3788
    %4255 = vmatprep.subr.bf16.mxu0 %v3795
    %4256 = vmatpush1.bf16.msra.mxu0 %v3794
    %4257 = vmatprep.mubr.bf16.mxu0 %v292
    %4258 = vmatmul.mubr.bf16.gmra.mrb[0].mxu0 %v291
    %v4259 = vpop.f32.mrb[0].mxu0
    %v4260 = vadd.f32 %v4219, %v4259
    %v4261 = vpop.f32.mrb[0].mxu0
    %v4262 = vadd.f32 %v4221, %v4261
    %v4263 = vpop.f32.mrb[0].mxu0
    %v4264 = vpop.f32.mrb[0].mxu0
    %4265 = vdwg.mxu0
    %4266 = vmatprep.subr.bf16.mxu0 %v3801
    %4267 = vmatpush1.bf16.msra.mxu0 %v3800
    %4268 = vmatprep.subr.bf16.mxu0 %v3807
    %4269 = vmatpush1.bf16.msra.mxu0 %v3806
    %4270 = vmatprep.subr.bf16.mxu0 %v3813
    %4271 = vmatpush1.bf16.msra.mxu0 %v3812
    %4272 = vmatprep.subr.bf16.mxu0 %v3819
    %4273 = vmatpush1.bf16.msra.mxu0 %v3818
    %4274 = vmatprep.subr.bf16.mxu0 %v3825
    %4275 = vmatpush1.bf16.msra.mxu0 %v3824
    %4276 = vmatprep.subr.bf16.mxu0 %v3831
    %4277 = vmatpush1.bf16.msra.mxu0 %v3830
    %4278 = vmatprep.subr.bf16.mxu0 %v3837
    %4279 = vmatpush1.bf16.msra.mxu0 %v3836
    %4280 = vmatprep.subr.bf16.mxu0 %v3843
    %4281 = vmatpush1.bf16.msra.mxu0 %v3842
    %4282 = vmatprep.subr.bf16.mxu0 %v3849
    %4283 = vmatpush1.bf16.msra.mxu0 %v3848
    %4284 = vmatprep.subr.bf16.mxu0 %v3855
    %4285 = vmatpush1.bf16.msra.mxu0 %v3854
    %4286 = vmatprep.subr.bf16.mxu0 %v3861
    %4287 = vmatpush1.bf16.msra.mxu0 %v3860
    %4288 = vmatprep.subr.bf16.mxu0 %v3867
    %4289 = vmatpush1.bf16.msra.mxu0 %v3866
    %4290 = vmatprep.subr.bf16.mxu0 %v3873
    %4291 = vmatpush1.bf16.msra.mxu0 %v3872
    %4292 = vmatprep.subr.bf16.mxu0 %v3879
    %4293 = vmatpush1.bf16.msra.mxu0 %v3878
    %4294 = vmatprep.subr.bf16.mxu0 %v3885
    %4295 = vmatpush1.bf16.msra.mxu0 %v3884
    %4296 = vmatprep.subr.bf16.mxu0 %v3891
    %4297 = vmatpush1.bf16.msra.mxu0 %v3890
    %4298 = vmatprep.mubr.bf16.mxu0 %v294
    %4299 = vmatmul.mubr.bf16.gmra.mrb[0].mxu0 %v293
    %v4300 = vpop.f32.mrb[0].mxu0
    %v4301 = vadd.f32 %v4260, %v4300
    %v4302 = vpop.f32.mrb[0].mxu0
    %v4303 = vadd.f32 %v4262, %v4302
    %v4304 = vpop.f32.mrb[0].mxu0
    %v4305 = vpop.f32.mrb[0].mxu0
    %4306 = vdwg.mxu0
    %4307 = vmatprep.subr.bf16.mxu0 %v3611
    %4308 = vmatpush1.bf16.msra.mxu0 %v3610
    %4309 = vmatprep.subr.bf16.mxu0 %v3617
    %4310 = vmatpush1.bf16.msra.mxu0 %v3616
    %4311 = vmatprep.subr.bf16.mxu0 %v3623
    %4312 = vmatpush1.bf16.msra.mxu0 %v3622
    %4313 = vmatprep.subr.bf16.mxu0 %v3629
    %4314 = vmatpush1.bf16.msra.mxu0 %v3628
    %4315 = vmatprep.subr.bf16.mxu0 %v3635
    %4316 = vmatpush1.bf16.msra.mxu0 %v3634
    %4317 = vmatprep.subr.bf16.mxu0 %v3641
    %4318 = vmatpush1.bf16.msra.mxu0 %v3640
    %4319 = vmatprep.subr.bf16.mxu0 %v3647
    %4320 = vmatpush1.bf16.msra.mxu0 %v3646
    %4321 = vmatprep.subr.bf16.mxu0 %v3653
    %4322 = vmatpush1.bf16.msra.mxu0 %v3652
    %4323 = vmatprep.subr.bf16.mxu0 %v3659
    %4324 = vmatpush1.bf16.msra.mxu0 %v3658
    %4325 = vmatprep.subr.bf16.mxu0 %v3665
    %4326 = vmatpush1.bf16.msra.mxu0 %v3664
    %4327 = vmatprep.subr.bf16.mxu0 %v3671
    %4328 = vmatpush1.bf16.msra.mxu0 %v3670
    %4329 = vmatprep.subr.bf16.mxu0 %v3677
    %4330 = vmatpush1.bf16.msra.mxu0 %v3676
    %4331 = vmatprep.subr.bf16.mxu0 %v3683
    %4332 = vmatpush1.bf16.msra.mxu0 %v3682
    %4333 = vmatprep.subr.bf16.mxu0 %v3689
    %4334 = vmatpush1.bf16.msra.mxu0 %v3688
    %4335 = vmatprep.subr.bf16.mxu0 %v3695
    %4336 = vmatpush1.bf16.msra.mxu0 %v3694
    %4337 = vmatprep.subr.bf16.mxu0 %v3701
    %4338 = vmatpush1.bf16.msra.mxu0 %v3700
    %4339 = vmatprep.mubr.bf16.mxu0 %v290
    %4340 = vmatmul.mubr.bf16.gmra.mrb[0].mxu0 %v289
    %v4341 = vpop.f32.mrb[0].mxu0
    %v4342 = vadd.f32 %v2725, %v4341
    %v4343 = vpop.f32.mrb[0].mxu0
    %v4344 = vadd.f32 %v2729, %v4343
    %v4345 = vpop.f32.mrb[0].mxu0
    %v4346 = vpop.f32.mrb[0].mxu0
    %4347 = vdwg.mxu0
    %4348 = vmatprep.subr.bf16.mxu0 %v3707
    %4349 = vmatpush1.bf16.msra.mxu0 %v3706
    %4350 = vmatprep.subr.bf16.mxu0 %v3713
    %4351 = vmatpush1.bf16.msra.mxu0 %v3712
    %4352 = vmatprep.subr.bf16.mxu0 %v3719
    %4353 = vmatpush1.bf16.msra.mxu0 %v3718
    %4354 = vmatprep.subr.bf16.mxu0 %v3725
    %4355 = vmatpush1.bf16.msra.mxu0 %v3724
    %4356 = vmatprep.subr.bf16.mxu0 %v3731
    %4357 = vmatpush1.bf16.msra.mxu0 %v3730
    %4358 = vmatprep.subr.bf16.mxu0 %v3737
    %4359 = vmatpush1.bf16.msra.mxu0 %v3736
    %4360 = vmatprep.subr.bf16.mxu0 %v3743
    %4361 = vmatpush1.bf16.msra.mxu0 %v3742
    %4362 = vmatprep.subr.bf16.mxu0 %v3749
    %4363 = vmatpush1.bf16.msra.mxu0 %v3748
    %4364 = vmatprep.subr.bf16.mxu0 %v3755
    %4365 = vmatpush1.bf16.msra.mxu0 %v3754
    %4366 = vmatprep.subr.bf16.mxu0 %v3761
    %4367 = vmatpush1.bf16.msra.mxu0 %v3760
    %4368 = vmatprep.subr.bf16.mxu0 %v3767
    %4369 = vmatpush1.bf16.msra.mxu0 %v3766
    %4370 = vmatprep.subr.bf16.mxu0 %v3773
    %4371 = vmatpush1.bf16.msra.mxu0 %v3772
    %4372 = vmatprep.subr.bf16.mxu0 %v3779
    %4373 = vmatpush1.bf16.msra.mxu0 %v3778
    %4374 = vmatprep.subr.bf16.mxu0 %v3785
    %4375 = vmatpush1.bf16.msra.mxu0 %v3784
    %4376 = vmatprep.subr.bf16.mxu0 %v3791
    %4377 = vmatpush1.bf16.msra.mxu0 %v3790
    %4378 = vmatprep.subr.bf16.mxu0 %v3797
    %4379 = vmatpush1.bf16.msra.mxu0 %v3796
    %4380 = vmatprep.mubr.bf16.mxu0 %v292
    %4381 = vmatmul.mubr.bf16.gmra.mrb[0].mxu0 %v291
    %v4382 = vpop.f32.mrb[0].mxu0
    %v4383 = vadd.f32 %v4342, %v4382
    %v4384 = vpop.f32.mrb[0].mxu0
    %v4385 = vadd.f32 %v4344, %v4384
    %v4386 = vpop.f32.mrb[0].mxu0
    %v4387 = vpop.f32.mrb[0].mxu0
    %4388 = vdwg.mxu0
    %4389 = vmatprep.subr.bf16.mxu0 %v3803
    %4390 = vmatpush1.bf16.msra.mxu0 %v3802
    %4391 = vmatprep.subr.bf16.mxu0 %v3809
    %4392 = vmatpush1.bf16.msra.mxu0 %v3808
    %4393 = vmatprep.subr.bf16.mxu0 %v3815
    %4394 = vmatpush1.bf16.msra.mxu0 %v3814
    %4395 = vmatprep.subr.bf16.mxu0 %v3821
    %4396 = vmatpush1.bf16.msra.mxu0 %v3820
    %4397 = vmatprep.subr.bf16.mxu0 %v3827
    %4398 = vmatpush1.bf16.msra.mxu0 %v3826
    %4399 = vmatprep.subr.bf16.mxu0 %v3833
    %4400 = vmatpush1.bf16.msra.mxu0 %v3832
    %4401 = vmatprep.subr.bf16.mxu0 %v3839
    %4402 = vmatpush1.bf16.msra.mxu0 %v3838
    %4403 = vmatprep.subr.bf16.mxu0 %v3845
    %4404 = vmatpush1.bf16.msra.mxu0 %v3844
    %4405 = vmatprep.subr.bf16.mxu0 %v3851
    %4406 = vmatpush1.bf16.msra.mxu0 %v3850
    %4407 = vmatprep.subr.bf16.mxu0 %v3857
    %4408 = vmatpush1.bf16.msra.mxu0 %v3856
    %4409 = vmatprep.subr.bf16.mxu0 %v3863
    %4410 = vmatpush1.bf16.msra.mxu0 %v3862
    %4411 = vmatprep.subr.bf16.mxu0 %v3869
    %4412 = vmatpush1.bf16.msra.mxu0 %v3868
    %4413 = vmatprep.subr.bf16.mxu0 %v3875
    %4414 = vmatpush1.bf16.msra.mxu0 %v3874
    %4415 = vmatprep.subr.bf16.mxu0 %v3881
    %4416 = vmatpush1.bf16.msra.mxu0 %v3880
    %4417 = vmatprep.subr.bf16.mxu0 %v3887
    %4418 = vmatpush1.bf16.msra.mxu0 %v3886
    %4419 = vmatprep.subr.bf16.mxu0 %v3893
    %4420 = vmatpush1.bf16.msra.mxu0 %v3892
    %4421 = vmatprep.mubr.bf16.mxu0 %v294
    %4422 = vmatmul.mubr.bf16.gmra.mrb[0].mxu0 %v293
    %v4423 = vpop.f32.mrb[0].mxu0
    %v4424 = vadd.f32 %v4383, %v4423
    %v4425 = vpop.f32.mrb[0].mxu0
    %v4426 = vadd.f32 %v4385, %v4425
    %v4427 = vpop.f32.mrb[0].mxu0
    %v4428 = vpop.f32.mrb[0].mxu0
    %4429 = vdwg.mxu0
    %4430 = vmatprep.subr.bf16.mxu0 %v3613
    %4431 = vmatpush1.bf16.msra.mxu0 %v3612
    %4432 = vmatprep.subr.bf16.mxu0 %v3619
    %4433 = vmatpush1.bf16.msra.mxu0 %v3618
    %4434 = vmatprep.subr.bf16.mxu0 %v3625
    %4435 = vmatpush1.bf16.msra.mxu0 %v3624
    %4436 = vmatprep.subr.bf16.mxu0 %v3631
    %4437 = vmatpush1.bf16.msra.mxu0 %v3630
    %4438 = vmatprep.subr.bf16.mxu0 %v3637
    %4439 = vmatpush1.bf16.msra.mxu0 %v3636
    %4440 = vmatprep.subr.bf16.mxu0 %v3643
    %4441 = vmatpush1.bf16.msra.mxu0 %v3642
    %4442 = vmatprep.subr.bf16.mxu0 %v3649
    %4443 = vmatpush1.bf16.msra.mxu0 %v3648
    %4444 = vmatprep.subr.bf16.mxu0 %v3655
    %4445 = vmatpush1.bf16.msra.mxu0 %v3654
    %4446 = vmatprep.subr.bf16.mxu0 %v3661
    %4447 = vmatpush1.bf16.msra.mxu0 %v3660
    %4448 = vmatprep.subr.bf16.mxu0 %v3667
    %4449 = vmatpush1.bf16.msra.mxu0 %v3666
    %4450 = vmatprep.subr.bf16.mxu0 %v3673
    %4451 = vmatpush1.bf16.msra.mxu0 %v3672
    %4452 = vmatprep.subr.bf16.mxu0 %v3679
    %4453 = vmatpush1.bf16.msra.mxu0 %v3678
    %4454 = vmatprep.subr.bf16.mxu0 %v3685
    %4455 = vmatpush1.bf16.msra.mxu0 %v3684
    %4456 = vmatprep.subr.bf16.mxu0 %v3691
    %4457 = vmatpush1.bf16.msra.mxu0 %v3690
    %4458 = vmatprep.subr.bf16.mxu0 %v3697
    %4459 = vmatpush1.bf16.msra.mxu0 %v3696
    %4460 = vmatprep.subr.bf16.mxu0 %v3703
    %4461 = vmatpush1.bf16.msra.mxu0 %v3702
    %4462 = vmatprep.mubr.bf16.mxu0 %v290
    %4463 = vmatmul.mubr.bf16.gmra.mrb[0].mxu0 %v289
    %v4464 = vpop.f32.mrb[0].mxu0
    %v4465 = vadd.f32 %v2733, %v4464
    %v4466 = vpop.f32.mrb[0].mxu0
    %v4467 = vadd.f32 %v2737, %v4466
    %v4468 = vpop.f32.mrb[0].mxu0
    %v4469 = vpop.f32.mrb[0].mxu0
    %4470 = vdwg.mxu0
    %4471 = vmatprep.subr.bf16.mxu0 %v3709
    %4472 = vmatpush1.bf16.msra.mxu0 %v3708
    %4473 = vmatprep.subr.bf16.mxu0 %v3715
    %4474 = vmatpush1.bf16.msra.mxu0 %v3714
    %4475 = vmatprep.subr.bf16.mxu0 %v3721
    %4476 = vmatpush1.bf16.msra.mxu0 %v3720
    %4477 = vmatprep.subr.bf16.mxu0 %v3727
    %4478 = vmatpush1.bf16.msra.mxu0 %v3726
    %4479 = vmatprep.subr.bf16.mxu0 %v3733
    %4480 = vmatpush1.bf16.msra.mxu0 %v3732
    %4481 = vmatprep.subr.bf16.mxu0 %v3739
    %4482 = vmatpush1.bf16.msra.mxu0 %v3738
    %4483 = vmatprep.subr.bf16.mxu0 %v3745
    %4484 = vmatpush1.bf16.msra.mxu0 %v3744
    %4485 = vmatprep.subr.bf16.mxu0 %v3751
    %4486 = vmatpush1.bf16.msra.mxu0 %v3750
    %4487 = vmatprep.subr.bf16.mxu0 %v3757
    %4488 = vmatpush1.bf16.msra.mxu0 %v3756
    %4489 = vmatprep.subr.bf16.mxu0 %v3763
    %4490 = vmatpush1.bf16.msra.mxu0 %v3762
    %4491 = vmatprep.subr.bf16.mxu0 %v3769
    %4492 = vmatpush1.bf16.msra.mxu0 %v3768
    %4493 = vmatprep.subr.bf16.mxu0 %v3775
    %4494 = vmatpush1.bf16.msra.mxu0 %v3774
    %4495 = vmatprep.subr.bf16.mxu0 %v3781
    %4496 = vmatpush1.bf16.msra.mxu0 %v3780
    %4497 = vmatprep.subr.bf16.mxu0 %v3787
    %4498 = vmatpush1.bf16.msra.mxu0 %v3786
    %4499 = vmatprep.subr.bf16.mxu0 %v3793
    %4500 = vmatpush1.bf16.msra.mxu0 %v3792
    %4501 = vmatprep.subr.bf16.mxu0 %v3799
    %4502 = vmatpush1.bf16.msra.mxu0 %v3798
    %4503 = vmatprep.mubr.bf16.mxu0 %v292
    %4504 = vmatmul.mubr.bf16.gmra.mrb[0].mxu0 %v291
    %v4505 = vpop.f32.mrb[0].mxu0
    %v4506 = vadd.f32 %v4465, %v4505
    %v4507 = vpop.f32.mrb[0].mxu0
    %v4508 = vadd.f32 %v4467, %v4507
    %v4509 = vpop.f32.mrb[0].mxu0
    %v4510 = vpop.f32.mrb[0].mxu0
    %4511 = vdwg.mxu0
    %4512 = vmatprep.subr.bf16.mxu0 %v3805
    %4513 = vmatpush1.bf16.msra.mxu0 %v3804
    %4514 = vmatprep.subr.bf16.mxu0 %v3811
    %4515 = vmatpush1.bf16.msra.mxu0 %v3810
    %4516 = vmatprep.subr.bf16.mxu0 %v3817
    %4517 = vmatpush1.bf16.msra.mxu0 %v3816
    %4518 = vmatprep.subr.bf16.mxu0 %v3823
    %4519 = vmatpush1.bf16.msra.mxu0 %v3822
    %4520 = vmatprep.subr.bf16.mxu0 %v3829
    %4521 = vmatpush1.bf16.msra.mxu0 %v3828
    %4522 = vmatprep.subr.bf16.mxu0 %v3835
    %4523 = vmatpush1.bf16.msra.mxu0 %v3834
    %4524 = vmatprep.subr.bf16.mxu0 %v3841
    %4525 = vmatpush1.bf16.msra.mxu0 %v3840
    %4526 = vmatprep.subr.bf16.mxu0 %v3847
    %4527 = vmatpush1.bf16.msra.mxu0 %v3846
    %4528 = vmatprep.subr.bf16.mxu0 %v3853
    %4529 = vmatpush1.bf16.msra.mxu0 %v3852
    %4530 = vmatprep.subr.bf16.mxu0 %v3859
    %4531 = vmatpush1.bf16.msra.mxu0 %v3858
    %4532 = vmatprep.subr.bf16.mxu0 %v3865
    %4533 = vmatpush1.bf16.msra.mxu0 %v3864
    %4534 = vmatprep.subr.bf16.mxu0 %v3871
    %4535 = vmatpush1.bf16.msra.mxu0 %v3870
    %4536 = vmatprep.subr.bf16.mxu0 %v3877
    %4537 = vmatpush1.bf16.msra.mxu0 %v3876
    %4538 = vmatprep.subr.bf16.mxu0 %v3883
    %4539 = vmatpush1.bf16.msra.mxu0 %v3882
    %4540 = vmatprep.subr.bf16.mxu0 %v3889
    %4541 = vmatpush1.bf16.msra.mxu0 %v3888
    %4542 = vmatprep.subr.bf16.mxu0 %v3895
    %4543 = vmatpush1.bf16.msra.mxu0 %v3894
    %4544 = vmatprep.mubr.bf16.mxu0 %v294
    %4545 = vmatmul.mubr.bf16.gmra.mrb[0].mxu0 %v293
    %v4546 = vpop.f32.mrb[0].mxu0
    %v4547 = vadd.f32 %v4506, %v4546
    %v4548 = vpop.f32.mrb[0].mxu0
    %v4549 = vadd.f32 %v4508, %v4548
    %v4550 = vpop.f32.mrb[0].mxu0
    %v4551 = vpop.f32.mrb[0].mxu0
    %4552 = vdwg.mxu0
    %v4559 = vcombine.low %v2172, %v2174
    %v4560 = vcombine.low %v2295, %v2297
    %v4562 = vunpack.c.l.s4 1983009808
    %v4563 = vunpack.c.0.s8 %v4562
    %v4564 = vlaneseq
    %v4565 = vshrl.u32 %v4564, 7
    %v4566 = vsub.s32 %v4563, %v4565
    %v4567 = vrot.slane %v4559, %v4566
    %v4569 = vunpack.c.l.s4 1983009808
    %v4570 = vunpack.c.0.s8 %v4569
    %v4571 = vlaneseq
    %v4572 = vshrl.u32 %v4571, 7
    %v4573 = vsub.s32 %v4570, %v4572
    %v4574 = vrot.slane %v4560, %v4573
    %v4575 = vcombine.low %v4567, %v4574
    %v4576 = vcombine.low %v2418, %v2420
    %v4578 = vunpack.c.l.s4 1983009808
    %v4579 = vunpack.c.0.s8 %v4578
    %v4580 = vlaneseq
    %v4581 = vshrl.u32 %v4580, 7
    %v4582 = vsub.s32 %v4579, %v4581
    %v4583 = vrot.slane %v4576, %v4582
    %4586 = vst [vmem:[#allocation27] sm:$0xff] %v4575
    %4587 = vst [vmem:[#allocation27 + $0x8] sm:$0xf] %v4583
    %v4594 = vcombine.low %v4301, %v4303
    %v4595 = vcombine.low %v4424, %v4426
    %v4597 = vunpack.c.l.s4 1983009808
    %v4598 = vunpack.c.0.s8 %v4597
    %v4599 = vlaneseq
    %v4600 = vshrl.u32 %v4599, 7
    %v4601 = vsub.s32 %v4598, %v4600
    %v4602 = vrot.slane %v4594, %v4601
    %v4604 = vunpack.c.l.s4 1983009808
    %v4605 = vunpack.c.0.s8 %v4604
    %v4606 = vlaneseq
    %v4607 = vshrl.u32 %v4606, 7
    %v4608 = vsub.s32 %v4605, %v4607
    %v4609 = vrot.slane %v4595, %v4608
    %v4610 = vcombine.low %v4602, %v4609
    %v4611 = vcombine.low %v4547, %v4549
    %v4613 = vunpack.c.l.s4 1983009808
    %v4614 = vunpack.c.0.s8 %v4613
    %v4615 = vlaneseq
    %v4616 = vshrl.u32 %v4615, 7
    %v4617 = vsub.s32 %v4614, %v4616
    %v4618 = vrot.slane %v4611, %v4617
    %4621 = vst [vmem:[#allocation29] sm:$0xff] %v4610
    %4622 = vst [vmem:[#allocation29 + $0x8] sm:$0xf] %v4618
    %v4623 = vpack.c.bf16 %v2172, %v2172
    %v4624 = vpack.c.bf16 %v2174, %v2174
    %v4625 = vpack.c.bf16 %v2295, %v2295
    %v4626 = vpack.c.bf16 %v2297, %v2297
    %v4627 = vpack.c.bf16 %v2418, %v2418
    %v4628 = vpack.c.bf16 %v2420, %v2420
    %v4629 = vld [vmem:[#allocation13] sm:$0xff]
    %v4630 = vld [vmem:[#allocation13 + $0x8] sm:$0xff]
    %v4631 = vld [vmem:[#allocation13 + $0x10] sm:$0xff]
    %v4632 = vld [vmem:[#allocation13 + $0x18] sm:$0xff]
    %v4633 = vld [vmem:[#allocation13 + $0x20] sm:$0xff]
    %v4634 = vld [vmem:[#allocation13 + $0x28] sm:$0xff]
    %v4635 = vld [vmem:[#allocation13 + $0x30] sm:$0xff]
    %v4636 = vld [vmem:[#allocation13 + $0x38] sm:$0xff]
    %v4637 = vld [vmem:[#allocation13 + $0x40] sm:$0xff]
    %v4638 = vld [vmem:[#allocation13 + $0x48] sm:$0xff]
    %v4639 = vld [vmem:[#allocation13 + $0x50] sm:$0xff]
    %v4640 = vld [vmem:[#allocation13 + $0x58] sm:$0xff]
    %v4641 = vld [vmem:[#allocation13 + $0x60] sm:$0xff]
    %v4642 = vld [vmem:[#allocation13 + $0x68] sm:$0xff]
    %v4643 = vld [vmem:[#allocation13 + $0x70] sm:$0xff]
    %v4644 = vld [vmem:[#allocation13 + $0x78] sm:$0xff]
    %v4645 = vld [vmem:[#allocation13 + $0x80] sm:$0xff]
    %v4646 = vld [vmem:[#allocation13 + $0x88] sm:$0xff]
    %v4647 = vld [vmem:[#allocation13 + $0x90] sm:$0xff]
    %v4648 = vld [vmem:[#allocation13 + $0x98] sm:$0xff]
    %v4649 = vld [vmem:[#allocation13 + $0xa0] sm:$0xff]
    %v4650 = vld [vmem:[#allocation13 + $0xa8] sm:$0xff]
    %v4651 = vld [vmem:[#allocation13 + $0xb0] sm:$0xff]
    %v4652 = vld [vmem:[#allocation13 + $0xb8] sm:$0xff]
    %v4653 = vld [vmem:[#allocation13 + $0xc0] sm:$0xff]
    %v4654 = vld [vmem:[#allocation13 + $0xc8] sm:$0xff]
    %v4655 = vld [vmem:[#allocation13 + $0xd0] sm:$0xff]
    %v4656 = vld [vmem:[#allocation13 + $0xd8] sm:$0xff]
    %v4657 = vld [vmem:[#allocation13 + $0xe0] sm:$0xff]
    %v4658 = vld [vmem:[#allocation13 + $0xe8] sm:$0xff]
    %v4659 = vld [vmem:[#allocation13 + $0xf0] sm:$0xff]
    %v4660 = vld [vmem:[#allocation13 + $0xf8] sm:$0xff]
    %v4661 = vld [vmem:[#allocation13 + $0x100] sm:$0xff]
    %v4662 = vld [vmem:[#allocation13 + $0x108] sm:$0xff]
    %v4663 = vld [vmem:[#allocation13 + $0x110] sm:$0xff]
    %v4664 = vld [vmem:[#allocation13 + $0x118] sm:$0xff]
    %v4665 = vld [vmem:[#allocation13 + $0x120] sm:$0xff]
    %v4666 = vld [vmem:[#allocation13 + $0x128] sm:$0xff]
    %v4667 = vld [vmem:[#allocation13 + $0x130] sm:$0xff]
    %v4668 = vld [vmem:[#allocation13 + $0x138] sm:$0xff]
    %v4669 = vld [vmem:[#allocation13 + $0x140] sm:$0xff]
    %v4670 = vld [vmem:[#allocation13 + $0x148] sm:$0xff]
    %v4671 = vld [vmem:[#allocation13 + $0x150] sm:$0xff]
    %v4672 = vld [vmem:[#allocation13 + $0x158] sm:$0xff]
    %v4673 = vld [vmem:[#allocation13 + $0x160] sm:$0xff]
    %v4674 = vld [vmem:[#allocation13 + $0x168] sm:$0xff]
    %v4675 = vld [vmem:[#allocation13 + $0x170] sm:$0xff]
    %v4676 = vld [vmem:[#allocation13 + $0x178] sm:$0xff]
    %v4677 = vld [vmem:[#allocation13 + $0x180] sm:$0xff]
    %v4678 = vld [vmem:[#allocation13 + $0x188] sm:$0xff]
    %v4679 = vld [vmem:[#allocation13 + $0x190] sm:$0xff]
    %v4680 = vld [vmem:[#allocation13 + $0x198] sm:$0xff]
    %v4681 = vld [vmem:[#allocation13 + $0x1a0] sm:$0xff]
    %v4682 = vld [vmem:[#allocation13 + $0x1a8] sm:$0xff]
    %v4683 = vld [vmem:[#allocation13 + $0x1b0] sm:$0xff]
    %v4684 = vld [vmem:[#allocation13 + $0x1b8] sm:$0xff]
    %v4685 = vld [vmem:[#allocation13 + $0x1c0] sm:$0xff]
    %v4686 = vld [vmem:[#allocation13 + $0x1c8] sm:$0xff]
    %v4687 = vld [vmem:[#allocation13 + $0x1d0] sm:$0xff]
    %v4688 = vld [vmem:[#allocation13 + $0x1d8] sm:$0xff]
    %v4689 = vld [vmem:[#allocation13 + $0x1e0] sm:$0xff]
    %v4690 = vld [vmem:[#allocation13 + $0x1e8] sm:$0xff]
    %v4691 = vld [vmem:[#allocation13 + $0x1f0] sm:$0xff]
    %v4692 = vld [vmem:[#allocation13 + $0x1f8] sm:$0xff]
    %v4693 = vld [vmem:[#allocation13 + $0x200] sm:$0xff]
    %v4694 = vld [vmem:[#allocation13 + $0x208] sm:$0xff]
    %v4695 = vld [vmem:[#allocation13 + $0x210] sm:$0xff]
    %v4696 = vld [vmem:[#allocation13 + $0x218] sm:$0xff]
    %v4697 = vld [vmem:[#allocation13 + $0x220] sm:$0xff]
    %v4698 = vld [vmem:[#allocation13 + $0x228] sm:$0xff]
    %v4699 = vld [vmem:[#allocation13 + $0x230] sm:$0xff]
    %v4700 = vld [vmem:[#allocation13 + $0x238] sm:$0xff]
    %v4701 = vld [vmem:[#allocation13 + $0x240] sm:$0xff]
    %v4702 = vld [vmem:[#allocation13 + $0x248] sm:$0xff]
    %v4703 = vld [vmem:[#allocation13 + $0x250] sm:$0xff]
    %v4704 = vld [vmem:[#allocation13 + $0x258] sm:$0xff]
    %v4705 = vld [vmem:[#allocation13 + $0x260] sm:$0xff]
    %v4706 = vld [vmem:[#allocation13 + $0x268] sm:$0xff]
    %v4707 = vld [vmem:[#allocation13 + $0x270] sm:$0xff]
    %v4708 = vld [vmem:[#allocation13 + $0x278] sm:$0xff]
    %v4709 = vld [vmem:[#allocation13 + $0x280] sm:$0xff]
    %v4710 = vld [vmem:[#allocation13 + $0x288] sm:$0xff]
    %v4711 = vld [vmem:[#allocation13 + $0x290] sm:$0xff]
    %v4712 = vld [vmem:[#allocation13 + $0x298] sm:$0xff]
    %v4713 = vld [vmem:[#allocation13 + $0x2a0] sm:$0xff]
    %v4714 = vld [vmem:[#allocation13 + $0x2a8] sm:$0xff]
    %v4715 = vld [vmem:[#allocation13 + $0x2b0] sm:$0xff]
    %v4716 = vld [vmem:[#allocation13 + $0x2b8] sm:$0xff]
    %v4717 = vld [vmem:[#allocation13 + $0x2c0] sm:$0xff]
    %v4718 = vld [vmem:[#allocation13 + $0x2c8] sm:$0xff]
    %v4719 = vld [vmem:[#allocation13 + $0x2d0] sm:$0xff]
    %v4720 = vld [vmem:[#allocation13 + $0x2d8] sm:$0xff]
    %v4721 = vld [vmem:[#allocation13 + $0x2e0] sm:$0xff]
    %v4722 = vld [vmem:[#allocation13 + $0x2e8] sm:$0xff]
    %v4723 = vld [vmem:[#allocation13 + $0x2f0] sm:$0xff]
    %v4724 = vld [vmem:[#allocation13 + $0x2f8] sm:$0xff]
    %v4725 = vld [vmem:[#allocation13 + $0x300] sm:$0xff]
    %v4726 = vld [vmem:[#allocation13 + $0x308] sm:$0xff]
    %v4727 = vld [vmem:[#allocation13 + $0x310] sm:$0xff]
    %v4728 = vld [vmem:[#allocation13 + $0x318] sm:$0xff]
    %v4729 = vld [vmem:[#allocation13 + $0x320] sm:$0xff]
    %v4730 = vld [vmem:[#allocation13 + $0x328] sm:$0xff]
    %v4731 = vld [vmem:[#allocation13 + $0x330] sm:$0xff]
    %v4732 = vld [vmem:[#allocation13 + $0x338] sm:$0xff]
    %v4733 = vld [vmem:[#allocation13 + $0x340] sm:$0xff]
    %v4734 = vld [vmem:[#allocation13 + $0x348] sm:$0xff]
    %v4735 = vld [vmem:[#allocation13 + $0x350] sm:$0xff]
    %v4736 = vld [vmem:[#allocation13 + $0x358] sm:$0xff]
    %v4737 = vld [vmem:[#allocation13 + $0x360] sm:$0xff]
    %v4738 = vld [vmem:[#allocation13 + $0x368] sm:$0xff]
    %v4739 = vld [vmem:[#allocation13 + $0x370] sm:$0xff]
    %v4740 = vld [vmem:[#allocation13 + $0x378] sm:$0xff]
    %v4741 = vld [vmem:[#allocation13 + $0x380] sm:$0xff]
    %v4742 = vld [vmem:[#allocation13 + $0x388] sm:$0xff]
    %v4743 = vld [vmem:[#allocation13 + $0x390] sm:$0xff]
    %v4744 = vld [vmem:[#allocation13 + $0x398] sm:$0xff]
    %v4745 = vld [vmem:[#allocation13 + $0x3a0] sm:$0xff]
    %v4746 = vld [vmem:[#allocation13 + $0x3a8] sm:$0xff]
    %v4747 = vld [vmem:[#allocation13 + $0x3b0] sm:$0xff]
    %v4748 = vld [vmem:[#allocation13 + $0x3b8] sm:$0xff]
    %v4749 = vld [vmem:[#allocation13 + $0x3c0] sm:$0xff]
    %v4750 = vld [vmem:[#allocation13 + $0x3c8] sm:$0xff]
    %v4751 = vld [vmem:[#allocation13 + $0x3d0] sm:$0xff]
    %v4752 = vld [vmem:[#allocation13 + $0x3d8] sm:$0xff]
    %v4753 = vld [vmem:[#allocation13 + $0x3e0] sm:$0xff]
    %v4754 = vld [vmem:[#allocation13 + $0x3e8] sm:$0xff]
    %v4755 = vld [vmem:[#allocation13 + $0x3f0] sm:$0xff]
    %v4756 = vld [vmem:[#allocation13 + $0x3f8] sm:$0xff]
    %v4757 = vld [vmem:[#allocation13 + $0x400] sm:$0xff]
    %v4758 = vld [vmem:[#allocation13 + $0x408] sm:$0xff]
    %v4759 = vld [vmem:[#allocation13 + $0x410] sm:$0xff]
    %v4760 = vld [vmem:[#allocation13 + $0x418] sm:$0xff]
    %v4761 = vld [vmem:[#allocation13 + $0x420] sm:$0xff]
    %v4762 = vld [vmem:[#allocation13 + $0x428] sm:$0xff]
    %v4763 = vld [vmem:[#allocation13 + $0x430] sm:$0xff]
    %v4764 = vld [vmem:[#allocation13 + $0x438] sm:$0xff]
    %v4765 = vld [vmem:[#allocation13 + $0x440] sm:$0xff]
    %v4766 = vld [vmem:[#allocation13 + $0x448] sm:$0xff]
    %v4767 = vld [vmem:[#allocation13 + $0x450] sm:$0xff]
    %v4768 = vld [vmem:[#allocation13 + $0x458] sm:$0xff]
    %v4769 = vld [vmem:[#allocation13 + $0x460] sm:$0xff]
    %v4770 = vld [vmem:[#allocation13 + $0x468] sm:$0xff]
    %v4771 = vld [vmem:[#allocation13 + $0x470] sm:$0xff]
    %v4772 = vld [vmem:[#allocation13 + $0x478] sm:$0xff]
    %v4773 = vld [vmem:[#allocation13 + $0x480] sm:$0xff]
    %v4774 = vld [vmem:[#allocation13 + $0x488] sm:$0xff]
    %v4775 = vld [vmem:[#allocation13 + $0x490] sm:$0xff]
    %v4776 = vld [vmem:[#allocation13 + $0x498] sm:$0xff]
    %v4777 = vld [vmem:[#allocation13 + $0x4a0] sm:$0xff]
    %v4778 = vld [vmem:[#allocation13 + $0x4a8] sm:$0xff]
    %v4779 = vld [vmem:[#allocation13 + $0x4b0] sm:$0xff]
    %v4780 = vld [vmem:[#allocation13 + $0x4b8] sm:$0xff]
    %v4781 = vld [vmem:[#allocation13 + $0x4c0] sm:$0xff]
    %v4782 = vld [vmem:[#allocation13 + $0x4c8] sm:$0xff]
    %v4783 = vld [vmem:[#allocation13 + $0x4d0] sm:$0xff]
    %v4784 = vld [vmem:[#allocation13 + $0x4d8] sm:$0xff]
    %v4785 = vld [vmem:[#allocation13 + $0x4e0] sm:$0xff]
    %v4786 = vld [vmem:[#allocation13 + $0x4e8] sm:$0xff]
    %v4787 = vld [vmem:[#allocation13 + $0x4f0] sm:$0xff]
    %v4788 = vld [vmem:[#allocation13 + $0x4f8] sm:$0xff]
    %v4789 = vld [vmem:[#allocation13 + $0x500] sm:$0xff]
    %v4790 = vld [vmem:[#allocation13 + $0x508] sm:$0xff]
    %v4791 = vld [vmem:[#allocation13 + $0x510] sm:$0xff]
    %v4792 = vld [vmem:[#allocation13 + $0x518] sm:$0xff]
    %v4793 = vld [vmem:[#allocation13 + $0x520] sm:$0xff]
    %v4794 = vld [vmem:[#allocation13 + $0x528] sm:$0xff]
    %v4795 = vld [vmem:[#allocation13 + $0x530] sm:$0xff]
    %v4796 = vld [vmem:[#allocation13 + $0x538] sm:$0xff]
    %v4797 = vld [vmem:[#allocation13 + $0x540] sm:$0xff]
    %v4798 = vld [vmem:[#allocation13 + $0x548] sm:$0xff]
    %v4799 = vld [vmem:[#allocation13 + $0x550] sm:$0xff]
    %v4800 = vld [vmem:[#allocation13 + $0x558] sm:$0xff]
    %v4801 = vld [vmem:[#allocation13 + $0x560] sm:$0xff]
    %v4802 = vld [vmem:[#allocation13 + $0x568] sm:$0xff]
    %v4803 = vld [vmem:[#allocation13 + $0x570] sm:$0xff]
    %v4804 = vld [vmem:[#allocation13 + $0x578] sm:$0xff]
    %v4805 = vld [vmem:[#allocation13 + $0x580] sm:$0xff]
    %v4806 = vld [vmem:[#allocation13 + $0x588] sm:$0xff]
    %v4807 = vld [vmem:[#allocation13 + $0x590] sm:$0xff]
    %v4808 = vld [vmem:[#allocation13 + $0x598] sm:$0xff]
    %v4809 = vld [vmem:[#allocation13 + $0x5a0] sm:$0xff]
    %v4810 = vld [vmem:[#allocation13 + $0x5a8] sm:$0xff]
    %v4811 = vld [vmem:[#allocation13 + $0x5b0] sm:$0xff]
    %v4812 = vld [vmem:[#allocation13 + $0x5b8] sm:$0xff]
    %v4813 = vld [vmem:[#allocation13 + $0x5c0] sm:$0xff]
    %v4814 = vld [vmem:[#allocation13 + $0x5c8] sm:$0xff]
    %v4815 = vld [vmem:[#allocation13 + $0x5d0] sm:$0xff]
    %v4816 = vld [vmem:[#allocation13 + $0x5d8] sm:$0xff]
    %v4817 = vld [vmem:[#allocation13 + $0x5e0] sm:$0xff]
    %v4818 = vld [vmem:[#allocation13 + $0x5e8] sm:$0xff]
    %v4819 = vld [vmem:[#allocation13 + $0x5f0] sm:$0xff]
    %v4820 = vld [vmem:[#allocation13 + $0x5f8] sm:$0xff]
    %v4821 = vld [vmem:[#allocation13 + $0x600] sm:$0xff]
    %v4822 = vld [vmem:[#allocation13 + $0x608] sm:$0xff]
    %v4823 = vld [vmem:[#allocation13 + $0x610] sm:$0xff]
    %v4824 = vld [vmem:[#allocation13 + $0x618] sm:$0xff]
    %v4825 = vld [vmem:[#allocation13 + $0x620] sm:$0xff]
    %v4826 = vld [vmem:[#allocation13 + $0x628] sm:$0xff]
    %v4827 = vld [vmem:[#allocation13 + $0x630] sm:$0xff]
    %v4828 = vld [vmem:[#allocation13 + $0x638] sm:$0xff]
    %v4829 = vld [vmem:[#allocation13 + $0x640] sm:$0xff]
    %v4830 = vld [vmem:[#allocation13 + $0x648] sm:$0xff]
    %v4831 = vld [vmem:[#allocation13 + $0x650] sm:$0xff]
    %v4832 = vld [vmem:[#allocation13 + $0x658] sm:$0xff]
    %v4833 = vld [vmem:[#allocation13 + $0x660] sm:$0xff]
    %v4834 = vld [vmem:[#allocation13 + $0x668] sm:$0xff]
    %v4835 = vld [vmem:[#allocation13 + $0x670] sm:$0xff]
    %v4836 = vld [vmem:[#allocation13 + $0x678] sm:$0xff]
    %v4837 = vld [vmem:[#allocation13 + $0x680] sm:$0xff]
    %v4838 = vld [vmem:[#allocation13 + $0x688] sm:$0xff]
    %v4839 = vld [vmem:[#allocation13 + $0x690] sm:$0xff]
    %v4840 = vld [vmem:[#allocation13 + $0x698] sm:$0xff]
    %v4841 = vld [vmem:[#allocation13 + $0x6a0] sm:$0xff]
    %v4842 = vld [vmem:[#allocation13 + $0x6a8] sm:$0xff]
    %v4843 = vld [vmem:[#allocation13 + $0x6b0] sm:$0xff]
    %v4844 = vld [vmem:[#allocation13 + $0x6b8] sm:$0xff]
    %v4845 = vld [vmem:[#allocation13 + $0x6c0] sm:$0xff]
    %v4846 = vld [vmem:[#allocation13 + $0x6c8] sm:$0xff]
    %v4847 = vld [vmem:[#allocation13 + $0x6d0] sm:$0xff]
    %v4848 = vld [vmem:[#allocation13 + $0x6d8] sm:$0xff]
    %v4849 = vld [vmem:[#allocation13 + $0x6e0] sm:$0xff]
    %v4850 = vld [vmem:[#allocation13 + $0x6e8] sm:$0xff]
    %v4851 = vld [vmem:[#allocation13 + $0x6f0] sm:$0xff]
    %v4852 = vld [vmem:[#allocation13 + $0x6f8] sm:$0xff]
    %v4853 = vld [vmem:[#allocation13 + $0x700] sm:$0xff]
    %v4854 = vld [vmem:[#allocation13 + $0x708] sm:$0xff]
    %v4855 = vld [vmem:[#allocation13 + $0x710] sm:$0xff]
    %v4856 = vld [vmem:[#allocation13 + $0x718] sm:$0xff]
    %v4857 = vld [vmem:[#allocation13 + $0x720] sm:$0xff]
    %v4858 = vld [vmem:[#allocation13 + $0x728] sm:$0xff]
    %v4859 = vld [vmem:[#allocation13 + $0x730] sm:$0xff]
    %v4860 = vld [vmem:[#allocation13 + $0x738] sm:$0xff]
    %v4861 = vld [vmem:[#allocation13 + $0x740] sm:$0xff]
    %v4862 = vld [vmem:[#allocation13 + $0x748] sm:$0xff]
    %v4863 = vld [vmem:[#allocation13 + $0x750] sm:$0xff]
    %v4864 = vld [vmem:[#allocation13 + $0x758] sm:$0xff]
    %v4865 = vld [vmem:[#allocation13 + $0x760] sm:$0xff]
    %v4866 = vld [vmem:[#allocation13 + $0x768] sm:$0xff]
    %v4867 = vld [vmem:[#allocation13 + $0x770] sm:$0xff]
    %v4868 = vld [vmem:[#allocation13 + $0x778] sm:$0xff]
    %v4869 = vld [vmem:[#allocation13 + $0x780] sm:$0xff]
    %v4870 = vld [vmem:[#allocation13 + $0x788] sm:$0xff]
    %v4871 = vld [vmem:[#allocation13 + $0x790] sm:$0xff]
    %v4872 = vld [vmem:[#allocation13 + $0x798] sm:$0xff]
    %v4873 = vld [vmem:[#allocation13 + $0x7a0] sm:$0xff]
    %v4874 = vld [vmem:[#allocation13 + $0x7a8] sm:$0xff]
    %v4875 = vld [vmem:[#allocation13 + $0x7b0] sm:$0xff]
    %v4876 = vld [vmem:[#allocation13 + $0x7b8] sm:$0xff]
    %v4877 = vld [vmem:[#allocation13 + $0x7c0] sm:$0xff]
    %v4878 = vld [vmem:[#allocation13 + $0x7c8] sm:$0xff]
    %v4879 = vld [vmem:[#allocation13 + $0x7d0] sm:$0xff]
    %v4880 = vld [vmem:[#allocation13 + $0x7d8] sm:$0xff]
    %v4881 = vld [vmem:[#allocation13 + $0x7e0] sm:$0xff]
    %v4882 = vld [vmem:[#allocation13 + $0x7e8] sm:$0xff]
    %v4883 = vld [vmem:[#allocation13 + $0x7f0] sm:$0xff]
    %v4884 = vld [vmem:[#allocation13 + $0x7f8] sm:$0xff]
    %v4885 = vld [vmem:[#allocation13 + $0x800] sm:$0xff]
    %v4886 = vld [vmem:[#allocation13 + $0x808] sm:$0xff]
    %v4887 = vld [vmem:[#allocation13 + $0x810] sm:$0xff]
    %v4888 = vld [vmem:[#allocation13 + $0x818] sm:$0xff]
    %v4889 = vld [vmem:[#allocation13 + $0x820] sm:$0xff]
    %v4890 = vld [vmem:[#allocation13 + $0x828] sm:$0xff]
    %v4891 = vld [vmem:[#allocation13 + $0x830] sm:$0xff]
    %v4892 = vld [vmem:[#allocation13 + $0x838] sm:$0xff]
    %v4893 = vld [vmem:[#allocation13 + $0x840] sm:$0xff]
    %v4894 = vld [vmem:[#allocation13 + $0x848] sm:$0xff]
    %v4895 = vld [vmem:[#allocation13 + $0x850] sm:$0xff]
    %v4896 = vld [vmem:[#allocation13 + $0x858] sm:$0xff]
    %v4897 = vld [vmem:[#allocation13 + $0x860] sm:$0xff]
    %v4898 = vld [vmem:[#allocation13 + $0x868] sm:$0xff]
    %v4899 = vld [vmem:[#allocation13 + $0x870] sm:$0xff]
    %v4900 = vld [vmem:[#allocation13 + $0x878] sm:$0xff]
    %v4901 = vld [vmem:[#allocation13 + $0x880] sm:$0xff]
    %v4902 = vld [vmem:[#allocation13 + $0x888] sm:$0xff]
    %v4903 = vld [vmem:[#allocation13 + $0x890] sm:$0xff]
    %v4904 = vld [vmem:[#allocation13 + $0x898] sm:$0xff]
    %v4905 = vld [vmem:[#allocation13 + $0x8a0] sm:$0xff]
    %v4906 = vld [vmem:[#allocation13 + $0x8a8] sm:$0xff]
    %v4907 = vld [vmem:[#allocation13 + $0x8b0] sm:$0xff]
    %v4908 = vld [vmem:[#allocation13 + $0x8b8] sm:$0xff]
    %v4909 = vld [vmem:[#allocation13 + $0x8c0] sm:$0xff]
    %v4910 = vld [vmem:[#allocation13 + $0x8c8] sm:$0xff]
    %v4911 = vld [vmem:[#allocation13 + $0x8d0] sm:$0xff]
    %v4912 = vld [vmem:[#allocation13 + $0x8d8] sm:$0xff]
    %v4913 = vld [vmem:[#allocation13 + $0x8e0] sm:$0xff]
    %v4914 = vld [vmem:[#allocation13 + $0x8e8] sm:$0xff]
    %v4915 = vld [vmem:[#allocation13 + $0x8f0] sm:$0xff]
    %v4916 = vld [vmem:[#allocation13 + $0x8f8] sm:$0xff]
    %v4917 = vld [vmem:[#allocation13 + $0x900] sm:$0xff]
    %v4918 = vld [vmem:[#allocation13 + $0x908] sm:$0xff]
    %v4919 = vld [vmem:[#allocation13 + $0x910] sm:$0xff]
    %v4920 = vld [vmem:[#allocation13 + $0x918] sm:$0xff]
    %v4921 = vld [vmem:[#allocation13 + $0x920] sm:$0xff]
    %v4922 = vld [vmem:[#allocation13 + $0x928] sm:$0xff]
    %v4923 = vld [vmem:[#allocation13 + $0x930] sm:$0xff]
    %v4924 = vld [vmem:[#allocation13 + $0x938] sm:$0xff]
    %v4925 = vld [vmem:[#allocation13 + $0x940] sm:$0xff]
    %v4926 = vld [vmem:[#allocation13 + $0x948] sm:$0xff]
    %v4927 = vld [vmem:[#allocation13 + $0x950] sm:$0xff]
    %v4928 = vld [vmem:[#allocation13 + $0x958] sm:$0xff]
    %v4929 = vld [vmem:[#allocation13 + $0x960] sm:$0xff]
    %v4930 = vld [vmem:[#allocation13 + $0x968] sm:$0xff]
    %v4931 = vld [vmem:[#allocation13 + $0x970] sm:$0xff]
    %v4932 = vld [vmem:[#allocation13 + $0x978] sm:$0xff]
    %v4933 = vld [vmem:[#allocation13 + $0x980] sm:$0xff]
    %v4934 = vld [vmem:[#allocation13 + $0x988] sm:$0xff]
    %v4935 = vld [vmem:[#allocation13 + $0x990] sm:$0xff]
    %v4936 = vld [vmem:[#allocation13 + $0x998] sm:$0xff]
    %v4937 = vld [vmem:[#allocation13 + $0x9a0] sm:$0xff]
    %v4938 = vld [vmem:[#allocation13 + $0x9a8] sm:$0xff]
    %v4939 = vld [vmem:[#allocation13 + $0x9b0] sm:$0xff]
    %v4940 = vld [vmem:[#allocation13 + $0x9b8] sm:$0xff]
    %v4941 = vld [vmem:[#allocation13 + $0x9c0] sm:$0xff]
    %v4942 = vld [vmem:[#allocation13 + $0x9c8] sm:$0xff]
    %v4943 = vld [vmem:[#allocation13 + $0x9d0] sm:$0xff]
    %v4944 = vld [vmem:[#allocation13 + $0x9d8] sm:$0xff]
    %v4945 = vld [vmem:[#allocation13 + $0x9e0] sm:$0xff]
    %v4946 = vld [vmem:[#allocation13 + $0x9e8] sm:$0xff]
    %v4947 = vld [vmem:[#allocation13 + $0x9f0] sm:$0xff]
    %v4948 = vld [vmem:[#allocation13 + $0x9f8] sm:$0xff]
    %v4949 = vld [vmem:[#allocation13 + $0xa00] sm:$0xff]
    %v4950 = vld [vmem:[#allocation13 + $0xa08] sm:$0xff]
    %v4951 = vld [vmem:[#allocation13 + $0xa10] sm:$0xff]
    %v4952 = vld [vmem:[#allocation13 + $0xa18] sm:$0xff]
    %v4953 = vld [vmem:[#allocation13 + $0xa20] sm:$0xff]
    %v4954 = vld [vmem:[#allocation13 + $0xa28] sm:$0xff]
    %v4955 = vld [vmem:[#allocation13 + $0xa30] sm:$0xff]
    %v4956 = vld [vmem:[#allocation13 + $0xa38] sm:$0xff]
    %v4957 = vld [vmem:[#allocation13 + $0xa40] sm:$0xff]
    %v4958 = vld [vmem:[#allocation13 + $0xa48] sm:$0xff]
    %v4959 = vld [vmem:[#allocation13 + $0xa50] sm:$0xff]
    %v4960 = vld [vmem:[#allocation13 + $0xa58] sm:$0xff]
    %v4961 = vld [vmem:[#allocation13 + $0xa60] sm:$0xff]
    %v4962 = vld [vmem:[#allocation13 + $0xa68] sm:$0xff]
    %v4963 = vld [vmem:[#allocation13 + $0xa70] sm:$0xff]
    %v4964 = vld [vmem:[#allocation13 + $0xa78] sm:$0xff]
    %v4965 = vld [vmem:[#allocation13 + $0xa80] sm:$0xff]
    %v4966 = vld [vmem:[#allocation13 + $0xa88] sm:$0xff]
    %v4967 = vld [vmem:[#allocation13 + $0xa90] sm:$0xff]
    %v4968 = vld [vmem:[#allocation13 + $0xa98] sm:$0xff]
    %v4969 = vld [vmem:[#allocation13 + $0xaa0] sm:$0xff]
    %v4970 = vld [vmem:[#allocation13 + $0xaa8] sm:$0xff]
    %v4971 = vld [vmem:[#allocation13 + $0xab0] sm:$0xff]
    %v4972 = vld [vmem:[#allocation13 + $0xab8] sm:$0xff]
    %v4973 = vld [vmem:[#allocation13 + $0xac0] sm:$0xff]
    %v4974 = vld [vmem:[#allocation13 + $0xac8] sm:$0xff]
    %v4975 = vld [vmem:[#allocation13 + $0xad0] sm:$0xff]
    %v4976 = vld [vmem:[#allocation13 + $0xad8] sm:$0xff]
    %v4977 = vld [vmem:[#allocation13 + $0xae0] sm:$0xff]
    %v4978 = vld [vmem:[#allocation13 + $0xae8] sm:$0xff]
    %v4979 = vld [vmem:[#allocation13 + $0xaf0] sm:$0xff]
    %v4980 = vld [vmem:[#allocation13 + $0xaf8] sm:$0xff]
    %v4981 = vld [vmem:[#allocation13 + $0xb00] sm:$0xff]
    %v4982 = vld [vmem:[#allocation13 + $0xb08] sm:$0xff]
    %v4983 = vld [vmem:[#allocation13 + $0xb10] sm:$0xff]
    %v4984 = vld [vmem:[#allocation13 + $0xb18] sm:$0xff]
    %v4985 = vld [vmem:[#allocation13 + $0xb20] sm:$0xff]
    %v4986 = vld [vmem:[#allocation13 + $0xb28] sm:$0xff]
    %v4987 = vld [vmem:[#allocation13 + $0xb30] sm:$0xff]
    %v4988 = vld [vmem:[#allocation13 + $0xb38] sm:$0xff]
    %v4989 = vld [vmem:[#allocation13 + $0xb40] sm:$0xff]
    %v4990 = vld [vmem:[#allocation13 + $0xb48] sm:$0xff]
    %v4991 = vld [vmem:[#allocation13 + $0xb50] sm:$0xff]
    %v4992 = vld [vmem:[#allocation13 + $0xb58] sm:$0xff]
    %v4993 = vld [vmem:[#allocation13 + $0xb60] sm:$0xff]
    %v4994 = vld [vmem:[#allocation13 + $0xb68] sm:$0xff]
    %v4995 = vld [vmem:[#allocation13 + $0xb70] sm:$0xff]
    %v4996 = vld [vmem:[#allocation13 + $0xb78] sm:$0xff]
    %v4997 = vld [vmem:[#allocation13 + $0xb80] sm:$0xff]
    %v4998 = vld [vmem:[#allocation13 + $0xb88] sm:$0xff]
    %v4999 = vld [vmem:[#allocation13 + $0xb90] sm:$0xff]
    %v5000 = vld [vmem:[#allocation13 + $0xb98] sm:$0xff]
    %v5001 = vld [vmem:[#allocation13 + $0xba0] sm:$0xff]
    %v5002 = vld [vmem:[#allocation13 + $0xba8] sm:$0xff]
    %v5003 = vld [vmem:[#allocation13 + $0xbb0] sm:$0xff]
    %v5004 = vld [vmem:[#allocation13 + $0xbb8] sm:$0xff]
    %v5005 = vld [vmem:[#allocation13 + $0xbc0] sm:$0xff]
    %v5006 = vld [vmem:[#allocation13 + $0xbc8] sm:$0xff]
    %v5007 = vld [vmem:[#allocation13 + $0xbd0] sm:$0xff]
    %v5008 = vld [vmem:[#allocation13 + $0xbd8] sm:$0xff]
    %v5009 = vld [vmem:[#allocation13 + $0xbe0] sm:$0xff]
    %v5010 = vld [vmem:[#allocation13 + $0xbe8] sm:$0xff]
    %v5011 = vld [vmem:[#allocation13 + $0xbf0] sm:$0xff]
    %v5012 = vld [vmem:[#allocation13 + $0xbf8] sm:$0xff]
    %v5013 = vld [vmem:[#allocation13 + $0xc00] sm:$0xff]
    %v5014 = vld [vmem:[#allocation13 + $0xc08] sm:$0xff]
    %v5015 = vld [vmem:[#allocation13 + $0xc10] sm:$0xff]
    %v5016 = vld [vmem:[#allocation13 + $0xc18] sm:$0xff]
    %v5017 = vld [vmem:[#allocation13 + $0xc20] sm:$0xff]
    %v5018 = vld [vmem:[#allocation13 + $0xc28] sm:$0xff]
    %v5019 = vld [vmem:[#allocation13 + $0xc30] sm:$0xff]
    %v5020 = vld [vmem:[#allocation13 + $0xc38] sm:$0xff]
    %v5021 = vld [vmem:[#allocation13 + $0xc40] sm:$0xff]
    %v5022 = vld [vmem:[#allocation13 + $0xc48] sm:$0xff]
    %v5023 = vld [vmem:[#allocation13 + $0xc50] sm:$0xff]
    %v5024 = vld [vmem:[#allocation13 + $0xc58] sm:$0xff]
    %v5025 = vld [vmem:[#allocation13 + $0xc60] sm:$0xff]
    %v5026 = vld [vmem:[#allocation13 + $0xc68] sm:$0xff]
    %v5027 = vld [vmem:[#allocation13 + $0xc70] sm:$0xff]
    %v5028 = vld [vmem:[#allocation13 + $0xc78] sm:$0xff]
    %v5029 = vld [vmem:[#allocation13 + $0xc80] sm:$0xff]
    %v5030 = vld [vmem:[#allocation13 + $0xc88] sm:$0xff]
    %v5031 = vld [vmem:[#allocation13 + $0xc90] sm:$0xff]
    %v5032 = vld [vmem:[#allocation13 + $0xc98] sm:$0xff]
    %v5033 = vld [vmem:[#allocation13 + $0xca0] sm:$0xff]
    %v5034 = vld [vmem:[#allocation13 + $0xca8] sm:$0xff]
    %v5035 = vld [vmem:[#allocation13 + $0xcb0] sm:$0xff]
    %v5036 = vld [vmem:[#allocation13 + $0xcb8] sm:$0xff]
    %v5037 = vld [vmem:[#allocation13 + $0xcc0] sm:$0xff]
    %v5038 = vld [vmem:[#allocation13 + $0xcc8] sm:$0xff]
    %v5039 = vld [vmem:[#allocation13 + $0xcd0] sm:$0xff]
    %v5040 = vld [vmem:[#allocation13 + $0xcd8] sm:$0xff]
    %v5041 = vld [vmem:[#allocation13 + $0xce0] sm:$0xff]
    %v5042 = vld [vmem:[#allocation13 + $0xce8] sm:$0xff]
    %v5043 = vld [vmem:[#allocation13 + $0xcf0] sm:$0xff]
    %v5044 = vld [vmem:[#allocation13 + $0xcf8] sm:$0xff]
    %v5045 = vld [vmem:[#allocation13 + $0xd00] sm:$0xff]
    %v5046 = vld [vmem:[#allocation13 + $0xd08] sm:$0xff]
    %v5047 = vld [vmem:[#allocation13 + $0xd10] sm:$0xff]
    %v5048 = vld [vmem:[#allocation13 + $0xd18] sm:$0xff]
    %v5049 = vld [vmem:[#allocation13 + $0xd20] sm:$0xff]
    %v5050 = vld [vmem:[#allocation13 + $0xd28] sm:$0xff]
    %v5051 = vld [vmem:[#allocation13 + $0xd30] sm:$0xff]
    %v5052 = vld [vmem:[#allocation13 + $0xd38] sm:$0xff]
    %v5053 = vld [vmem:[#allocation13 + $0xd40] sm:$0xff]
    %v5054 = vld [vmem:[#allocation13 + $0xd48] sm:$0xff]
    %v5055 = vld [vmem:[#allocation13 + $0xd50] sm:$0xff]
    %v5056 = vld [vmem:[#allocation13 + $0xd58] sm:$0xff]
    %v5057 = vld [vmem:[#allocation13 + $0xd60] sm:$0xff]
    %v5058 = vld [vmem:[#allocation13 + $0xd68] sm:$0xff]
    %v5059 = vld [vmem:[#allocation13 + $0xd70] sm:$0xff]
    %v5060 = vld [vmem:[#allocation13 + $0xd78] sm:$0xff]
    %v5061 = vld [vmem:[#allocation13 + $0xd80] sm:$0xff]
    %v5062 = vld [vmem:[#allocation13 + $0xd88] sm:$0xff]
    %v5063 = vld [vmem:[#allocation13 + $0xd90] sm:$0xff]
    %v5064 = vld [vmem:[#allocation13 + $0xd98] sm:$0xff]
    %v5065 = vld [vmem:[#allocation13 + $0xda0] sm:$0xff]
    %v5066 = vld [vmem:[#allocation13 + $0xda8] sm:$0xff]
    %v5067 = vld [vmem:[#allocation13 + $0xdb0] sm:$0xff]
    %v5068 = vld [vmem:[#allocation13 + $0xdb8] sm:$0xff]
    %v5069 = vld [vmem:[#allocation13 + $0xdc0] sm:$0xff]
    %v5070 = vld [vmem:[#allocation13 + $0xdc8] sm:$0xff]
    %v5071 = vld [vmem:[#allocation13 + $0xdd0] sm:$0xff]
    %v5072 = vld [vmem:[#allocation13 + $0xdd8] sm:$0xff]
    %v5073 = vld [vmem:[#allocation13 + $0xde0] sm:$0xff]
    %v5074 = vld [vmem:[#allocation13 + $0xde8] sm:$0xff]
    %v5075 = vld [vmem:[#allocation13 + $0xdf0] sm:$0xff]
    %v5076 = vld [vmem:[#allocation13 + $0xdf8] sm:$0xff]
    %v5077 = vld [vmem:[#allocation13 + $0xe00] sm:$0xff]
    %v5078 = vld [vmem:[#allocation13 + $0xe08] sm:$0xff]
    %v5079 = vld [vmem:[#allocation13 + $0xe10] sm:$0xff]
    %v5080 = vld [vmem:[#allocation13 + $0xe18] sm:$0xff]
    %v5081 = vld [vmem:[#allocation13 + $0xe20] sm:$0xff]
    %v5082 = vld [vmem:[#allocation13 + $0xe28] sm:$0xff]
    %v5083 = vld [vmem:[#allocation13 + $0xe30] sm:$0xff]
    %v5084 = vld [vmem:[#allocation13 + $0xe38] sm:$0xff]
    %v5085 = vld [vmem:[#allocation13 + $0xe40] sm:$0xff]
    %v5086 = vld [vmem:[#allocation13 + $0xe48] sm:$0xff]
    %v5087 = vld [vmem:[#allocation13 + $0xe50] sm:$0xff]
    %v5088 = vld [vmem:[#allocation13 + $0xe58] sm:$0xff]
    %v5089 = vld [vmem:[#allocation13 + $0xe60] sm:$0xff]
    %v5090 = vld [vmem:[#allocation13 + $0xe68] sm:$0xff]
    %v5091 = vld [vmem:[#allocation13 + $0xe70] sm:$0xff]
    %v5092 = vld [vmem:[#allocation13 + $0xe78] sm:$0xff]
    %v5093 = vld [vmem:[#allocation13 + $0xe80] sm:$0xff]
    %v5094 = vld [vmem:[#allocation13 + $0xe88] sm:$0xff]
    %v5095 = vld [vmem:[#allocation13 + $0xe90] sm:$0xff]
    %v5096 = vld [vmem:[#allocation13 + $0xe98] sm:$0xff]
    %v5097 = vld [vmem:[#allocation13 + $0xea0] sm:$0xff]
    %v5098 = vld [vmem:[#allocation13 + $0xea8] sm:$0xff]
    %v5099 = vld [vmem:[#allocation13 + $0xeb0] sm:$0xff]
    %v5100 = vld [vmem:[#allocation13 + $0xeb8] sm:$0xff]
    %v5101 = vld [vmem:[#allocation13 + $0xec0] sm:$0xff]
    %v5102 = vld [vmem:[#allocation13 + $0xec8] sm:$0xff]
    %v5103 = vld [vmem:[#allocation13 + $0xed0] sm:$0xff]
    %v5104 = vld [vmem:[#allocation13 + $0xed8] sm:$0xff]
    %v5105 = vld [vmem:[#allocation13 + $0xee0] sm:$0xff]
    %v5106 = vld [vmem:[#allocation13 + $0xee8] sm:$0xff]
    %v5107 = vld [vmem:[#allocation13 + $0xef0] sm:$0xff]
    %v5108 = vld [vmem:[#allocation13 + $0xef8] sm:$0xff]
    %v5109 = vld [vmem:[#allocation13 + $0xf00] sm:$0xff]
    %v5110 = vld [vmem:[#allocation13 + $0xf08] sm:$0xff]
    %v5111 = vld [vmem:[#allocation13 + $0xf10] sm:$0xff]
    %v5112 = vld [vmem:[#allocation13 + $0xf18] sm:$0xff]
    %v5113 = vld [vmem:[#allocation13 + $0xf20] sm:$0xff]
    %v5114 = vld [vmem:[#allocation13 + $0xf28] sm:$0xff]
    %v5115 = vld [vmem:[#allocation13 + $0xf30] sm:$0xff]
    %v5116 = vld [vmem:[#allocation13 + $0xf38] sm:$0xff]
    %v5117 = vld [vmem:[#allocation13 + $0xf40] sm:$0xff]
    %v5118 = vld [vmem:[#allocation13 + $0xf48] sm:$0xff]
    %v5119 = vld [vmem:[#allocation13 + $0xf50] sm:$0xff]
    %v5120 = vld [vmem:[#allocation13 + $0xf58] sm:$0xff]
    %v5121 = vld [vmem:[#allocation13 + $0xf60] sm:$0xff]
    %v5122 = vld [vmem:[#allocation13 + $0xf68] sm:$0xff]
    %v5123 = vld [vmem:[#allocation13 + $0xf70] sm:$0xff]
    %v5124 = vld [vmem:[#allocation13 + $0xf78] sm:$0xff]
    %v5125 = vld [vmem:[#allocation13 + $0xf80] sm:$0xff]
    %v5126 = vld [vmem:[#allocation13 + $0xf88] sm:$0xff]
    %v5127 = vld [vmem:[#allocation13 + $0xf90] sm:$0xff]
    %v5128 = vld [vmem:[#allocation13 + $0xf98] sm:$0xff]
    %v5129 = vld [vmem:[#allocation13 + $0xfa0] sm:$0xff]
    %v5130 = vld [vmem:[#allocation13 + $0xfa8] sm:$0xff]
    %v5131 = vld [vmem:[#allocation13 + $0xfb0] sm:$0xff]
    %v5132 = vld [vmem:[#allocation13 + $0xfb8] sm:$0xff]
    %v5133 = vld [vmem:[#allocation13 + $0xfc0] sm:$0xff]
    %v5134 = vld [vmem:[#allocation13 + $0xfc8] sm:$0xff]
    %v5135 = vld [vmem:[#allocation13 + $0xfd0] sm:$0xff]
    %v5136 = vld [vmem:[#allocation13 + $0xfd8] sm:$0xff]
    %v5137 = vld [vmem:[#allocation13 + $0xfe0] sm:$0xff]
    %v5138 = vld [vmem:[#allocation13 + $0xfe8] sm:$0xff]
    %v5139 = vld [vmem:[#allocation13 + $0xff0] sm:$0xff]
    %v5140 = vld [vmem:[#allocation13 + $0xff8] sm:$0xff]
    %v5141 = vld [vmem:[#allocation13 + $0x1000] sm:$0xff]
    %v5142 = vld [vmem:[#allocation13 + $0x1008] sm:$0xff]
    %v5143 = vld [vmem:[#allocation13 + $0x1010] sm:$0xff]
    %v5144 = vld [vmem:[#allocation13 + $0x1018] sm:$0xff]
    %v5145 = vld [vmem:[#allocation13 + $0x1020] sm:$0xff]
    %v5146 = vld [vmem:[#allocation13 + $0x1028] sm:$0xff]
    %v5147 = vld [vmem:[#allocation13 + $0x1030] sm:$0xff]
    %v5148 = vld [vmem:[#allocation13 + $0x1038] sm:$0xff]
    %v5149 = vld [vmem:[#allocation13 + $0x1040] sm:$0xff]
    %v5150 = vld [vmem:[#allocation13 + $0x1048] sm:$0xff]
    %v5151 = vld [vmem:[#allocation13 + $0x1050] sm:$0xff]
    %v5152 = vld [vmem:[#allocation13 + $0x1058] sm:$0xff]
    %v5153 = vld [vmem:[#allocation13 + $0x1060] sm:$0xff]
    %v5154 = vld [vmem:[#allocation13 + $0x1068] sm:$0xff]
    %v5155 = vld [vmem:[#allocation13 + $0x1070] sm:$0xff]
    %v5156 = vld [vmem:[#allocation13 + $0x1078] sm:$0xff]
    %v5157 = vld [vmem:[#allocation13 + $0x1080] sm:$0xff]
    %v5158 = vld [vmem:[#allocation13 + $0x1088] sm:$0xff]
    %v5159 = vld [vmem:[#allocation13 + $0x1090] sm:$0xff]
    %v5160 = vld [vmem:[#allocation13 + $0x1098] sm:$0xff]
    %v5161 = vld [vmem:[#allocation13 + $0x10a0] sm:$0xff]
    %v5162 = vld [vmem:[#allocation13 + $0x10a8] sm:$0xff]
    %v5163 = vld [vmem:[#allocation13 + $0x10b0] sm:$0xff]
    %v5164 = vld [vmem:[#allocation13 + $0x10b8] sm:$0xff]
    %v5165 = vld [vmem:[#allocation13 + $0x10c0] sm:$0xff]
    %v5166 = vld [vmem:[#allocation13 + $0x10c8] sm:$0xff]
    %v5167 = vld [vmem:[#allocation13 + $0x10d0] sm:$0xff]
    %v5168 = vld [vmem:[#allocation13 + $0x10d8] sm:$0xff]
    %v5169 = vld [vmem:[#allocation13 + $0x10e0] sm:$0xff]
    %v5170 = vld [vmem:[#allocation13 + $0x10e8] sm:$0xff]
    %v5171 = vld [vmem:[#allocation13 + $0x10f0] sm:$0xff]
    %v5172 = vld [vmem:[#allocation13 + $0x10f8] sm:$0xff]
    %v5173 = vld [vmem:[#allocation13 + $0x1100] sm:$0xff]
    %v5174 = vld [vmem:[#allocation13 + $0x1108] sm:$0xff]
    %v5175 = vld [vmem:[#allocation13 + $0x1110] sm:$0xff]
    %v5176 = vld [vmem:[#allocation13 + $0x1118] sm:$0xff]
    %v5177 = vld [vmem:[#allocation13 + $0x1120] sm:$0xff]
    %v5178 = vld [vmem:[#allocation13 + $0x1128] sm:$0xff]
    %v5179 = vld [vmem:[#allocation13 + $0x1130] sm:$0xff]
    %v5180 = vld [vmem:[#allocation13 + $0x1138] sm:$0xff]
    %v5181 = vld [vmem:[#allocation13 + $0x1140] sm:$0xff]
    %v5182 = vld [vmem:[#allocation13 + $0x1148] sm:$0xff]
    %v5183 = vld [vmem:[#allocation13 + $0x1150] sm:$0xff]
    %v5184 = vld [vmem:[#allocation13 + $0x1158] sm:$0xff]
    %v5185 = vld [vmem:[#allocation13 + $0x1160] sm:$0xff]
    %v5186 = vld [vmem:[#allocation13 + $0x1168] sm:$0xff]
    %v5187 = vld [vmem:[#allocation13 + $0x1170] sm:$0xff]
    %v5188 = vld [vmem:[#allocation13 + $0x1178] sm:$0xff]
    %v5189 = vld [vmem:[#allocation13 + $0x1180] sm:$0xff]
    %v5190 = vld [vmem:[#allocation13 + $0x1188] sm:$0xff]
    %v5191 = vld [vmem:[#allocation13 + $0x1190] sm:$0xff]
    %v5192 = vld [vmem:[#allocation13 + $0x1198] sm:$0xff]
    %v5193 = vld [vmem:[#allocation13 + $0x11a0] sm:$0xff]
    %v5194 = vld [vmem:[#allocation13 + $0x11a8] sm:$0xff]
    %v5195 = vld [vmem:[#allocation13 + $0x11b0] sm:$0xff]
    %v5196 = vld [vmem:[#allocation13 + $0x11b8] sm:$0xff]
    %v5197 = vld [vmem:[#allocation13 + $0x11c0] sm:$0xff]
    %v5198 = vld [vmem:[#allocation13 + $0x11c8] sm:$0xff]
    %v5199 = vld [vmem:[#allocation13 + $0x11d0] sm:$0xff]
    %v5200 = vld [vmem:[#allocation13 + $0x11d8] sm:$0xff]
    %v5201 = vld [vmem:[#allocation13 + $0x11e0] sm:$0xff]
    %v5202 = vld [vmem:[#allocation13 + $0x11e8] sm:$0xff]
    %v5203 = vld [vmem:[#allocation13 + $0x11f0] sm:$0xff]
    %v5204 = vld [vmem:[#allocation13 + $0x11f8] sm:$0xff]
    %v5781 = vunpack.c.l.b16 %v4629
    %v5782 = vunpack.c.h.b16 %v4629
    %v5783 = vunpack.c.l.b16 %v4630
    %v5784 = vunpack.c.h.b16 %v4630
    %v5785 = vunpack.c.l.b16 %v4631
    %v5786 = vunpack.c.h.b16 %v4631
    %v5787 = vunpack.c.l.b16 %v4632
    %v5788 = vunpack.c.h.b16 %v4632
    %v5789 = vunpack.c.l.b16 %v4633
    %v5790 = vunpack.c.h.b16 %v4633
    %v5791 = vunpack.c.l.b16 %v4634
    %v5792 = vunpack.c.h.b16 %v4634
    %v5793 = vunpack.c.l.b16 %v4635
    %v5794 = vunpack.c.h.b16 %v4635
    %v5795 = vunpack.c.l.b16 %v4636
    %v5796 = vunpack.c.h.b16 %v4636
    %v5797 = vunpack.c.l.b16 %v4637
    %v5798 = vunpack.c.h.b16 %v4637
    %v5799 = vunpack.c.l.b16 %v4638
    %v5800 = vunpack.c.h.b16 %v4638
    %v5801 = vunpack.c.l.b16 %v4639
    %v5802 = vunpack.c.h.b16 %v4639
    %v5803 = vunpack.c.l.b16 %v4640
    %v5804 = vunpack.c.h.b16 %v4640
    %v5805 = vunpack.c.l.b16 %v4641
    %v5806 = vunpack.c.h.b16 %v4641
    %v5807 = vunpack.c.l.b16 %v4642
    %v5808 = vunpack.c.h.b16 %v4642
    %v5809 = vunpack.c.l.b16 %v4643
    %v5810 = vunpack.c.h.b16 %v4643
    %v5811 = vunpack.c.l.b16 %v4644
    %v5812 = vunpack.c.h.b16 %v4644
    %v5813 = vunpack.c.l.b16 %v4645
    %v5814 = vunpack.c.h.b16 %v4645
    %v5815 = vunpack.c.l.b16 %v4646
    %v5816 = vunpack.c.h.b16 %v4646
    %v5817 = vunpack.c.l.b16 %v4647
    %v5818 = vunpack.c.h.b16 %v4647
    %v5819 = vunpack.c.l.b16 %v4648
    %v5820 = vunpack.c.h.b16 %v4648
    %v5821 = vunpack.c.l.b16 %v4649
    %v5822 = vunpack.c.h.b16 %v4649
    %v5823 = vunpack.c.l.b16 %v4650
    %v5824 = vunpack.c.h.b16 %v4650
    %v5825 = vunpack.c.l.b16 %v4651
    %v5826 = vunpack.c.h.b16 %v4651
    %v5827 = vunpack.c.l.b16 %v4652
    %v5828 = vunpack.c.h.b16 %v4652
    %v5829 = vunpack.c.l.b16 %v4653
    %v5830 = vunpack.c.h.b16 %v4653
    %v5831 = vunpack.c.l.b16 %v4654
    %v5832 = vunpack.c.h.b16 %v4654
    %v5833 = vunpack.c.l.b16 %v4655
    %v5834 = vunpack.c.h.b16 %v4655
    %v5835 = vunpack.c.l.b16 %v4656
    %v5836 = vunpack.c.h.b16 %v4656
    %v5837 = vunpack.c.l.b16 %v4657
    %v5838 = vunpack.c.h.b16 %v4657
    %v5839 = vunpack.c.l.b16 %v4658
    %v5840 = vunpack.c.h.b16 %v4658
    %v5841 = vunpack.c.l.b16 %v4659
    %v5842 = vunpack.c.h.b16 %v4659
    %v5843 = vunpack.c.l.b16 %v4660
    %v5844 = vunpack.c.h.b16 %v4660
    %v5845 = vunpack.c.l.b16 %v4661
    %v5846 = vunpack.c.h.b16 %v4661
    %v5847 = vunpack.c.l.b16 %v4662
    %v5848 = vunpack.c.h.b16 %v4662
    %v5849 = vunpack.c.l.b16 %v4663
    %v5850 = vunpack.c.h.b16 %v4663
    %v5851 = vunpack.c.l.b16 %v4664
    %v5852 = vunpack.c.h.b16 %v4664
    %v5853 = vunpack.c.l.b16 %v4665
    %v5854 = vunpack.c.h.b16 %v4665
    %v5855 = vunpack.c.l.b16 %v4666
    %v5856 = vunpack.c.h.b16 %v4666
    %v5857 = vunpack.c.l.b16 %v4667
    %v5858 = vunpack.c.h.b16 %v4667
    %v5859 = vunpack.c.l.b16 %v4668
    %v5860 = vunpack.c.h.b16 %v4668
    %v5861 = vunpack.c.l.b16 %v4669
    %v5862 = vunpack.c.h.b16 %v4669
    %v5863 = vunpack.c.l.b16 %v4670
    %v5864 = vunpack.c.h.b16 %v4670
    %v5865 = vunpack.c.l.b16 %v4671
    %v5866 = vunpack.c.h.b16 %v4671
    %v5867 = vunpack.c.l.b16 %v4672
    %v5868 = vunpack.c.h.b16 %v4672
    %v5869 = vunpack.c.l.b16 %v4673
    %v5870 = vunpack.c.h.b16 %v4673
    %v5871 = vunpack.c.l.b16 %v4674
    %v5872 = vunpack.c.h.b16 %v4674
    %v5873 = vunpack.c.l.b16 %v4675
    %v5874 = vunpack.c.h.b16 %v4675
    %v5875 = vunpack.c.l.b16 %v4676
    %v5876 = vunpack.c.h.b16 %v4676
    %v5877 = vunpack.c.l.b16 %v4677
    %v5878 = vunpack.c.h.b16 %v4677
    %v5879 = vunpack.c.l.b16 %v4678
    %v5880 = vunpack.c.h.b16 %v4678
    %v5881 = vunpack.c.l.b16 %v4679
    %v5882 = vunpack.c.h.b16 %v4679
    %v5883 = vunpack.c.l.b16 %v4680
    %v5884 = vunpack.c.h.b16 %v4680
    %v5885 = vunpack.c.l.b16 %v4681
    %v5886 = vunpack.c.h.b16 %v4681
    %v5887 = vunpack.c.l.b16 %v4682
    %v5888 = vunpack.c.h.b16 %v4682
    %v5889 = vunpack.c.l.b16 %v4683
    %v5890 = vunpack.c.h.b16 %v4683
    %v5891 = vunpack.c.l.b16 %v4684
    %v5892 = vunpack.c.h.b16 %v4684
    %v5893 = vunpack.c.l.b16 %v4685
    %v5894 = vunpack.c.h.b16 %v4685
    %v5895 = vunpack.c.l.b16 %v4686
    %v5896 = vunpack.c.h.b16 %v4686
    %v5897 = vunpack.c.l.b16 %v4687
    %v5898 = vunpack.c.h.b16 %v4687
    %v5899 = vunpack.c.l.b16 %v4688
    %v5900 = vunpack.c.h.b16 %v4688
    %v5901 = vunpack.c.l.b16 %v4689
    %v5902 = vunpack.c.h.b16 %v4689
    %v5903 = vunpack.c.l.b16 %v4690
    %v5904 = vunpack.c.h.b16 %v4690
    %v5905 = vunpack.c.l.b16 %v4691
    %v5906 = vunpack.c.h.b16 %v4691
    %v5907 = vunpack.c.l.b16 %v4692
    %v5908 = vunpack.c.h.b16 %v4692
    %v5909 = vunpack.c.l.b16 %v4693
    %v5910 = vunpack.c.h.b16 %v4693
    %v5911 = vunpack.c.l.b16 %v4694
    %v5912 = vunpack.c.h.b16 %v4694
    %v5913 = vunpack.c.l.b16 %v4695
    %v5914 = vunpack.c.h.b16 %v4695
    %v5915 = vunpack.c.l.b16 %v4696
    %v5916 = vunpack.c.h.b16 %v4696
    %v5917 = vunpack.c.l.b16 %v4697
    %v5918 = vunpack.c.h.b16 %v4697
    %v5919 = vunpack.c.l.b16 %v4698
    %v5920 = vunpack.c.h.b16 %v4698
    %v5921 = vunpack.c.l.b16 %v4699
    %v5922 = vunpack.c.h.b16 %v4699
    %v5923 = vunpack.c.l.b16 %v4700
    %v5924 = vunpack.c.h.b16 %v4700
    %v5925 = vunpack.c.l.b16 %v4701
    %v5926 = vunpack.c.h.b16 %v4701
    %v5927 = vunpack.c.l.b16 %v4702
    %v5928 = vunpack.c.h.b16 %v4702
    %v5929 = vunpack.c.l.b16 %v4703
    %v5930 = vunpack.c.h.b16 %v4703
    %v5931 = vunpack.c.l.b16 %v4704
    %v5932 = vunpack.c.h.b16 %v4704
    %v5933 = vunpack.c.l.b16 %v4705
    %v5934 = vunpack.c.h.b16 %v4705
    %v5935 = vunpack.c.l.b16 %v4706
    %v5936 = vunpack.c.h.b16 %v4706
    %v5937 = vunpack.c.l.b16 %v4707
    %v5938 = vunpack.c.h.b16 %v4707
    %v5939 = vunpack.c.l.b16 %v4708
    %v5940 = vunpack.c.h.b16 %v4708
    %v5941 = vunpack.c.l.b16 %v4709
    %v5942 = vunpack.c.h.b16 %v4709
    %v5943 = vunpack.c.l.b16 %v4710
    %v5944 = vunpack.c.h.b16 %v4710
    %v5945 = vunpack.c.l.b16 %v4711
    %v5946 = vunpack.c.h.b16 %v4711
    %v5947 = vunpack.c.l.b16 %v4712
    %v5948 = vunpack.c.h.b16 %v4712
    %v5949 = vunpack.c.l.b16 %v4713
    %v5950 = vunpack.c.h.b16 %v4713
    %v5951 = vunpack.c.l.b16 %v4714
    %v5952 = vunpack.c.h.b16 %v4714
    %v5953 = vunpack.c.l.b16 %v4715
    %v5954 = vunpack.c.h.b16 %v4715
    %v5955 = vunpack.c.l.b16 %v4716
    %v5956 = vunpack.c.h.b16 %v4716
    %v5957 = vunpack.c.l.b16 %v4717
    %v5958 = vunpack.c.h.b16 %v4717
    %v5959 = vunpack.c.l.b16 %v4718
    %v5960 = vunpack.c.h.b16 %v4718
    %v5961 = vunpack.c.l.b16 %v4719
    %v5962 = vunpack.c.h.b16 %v4719
    %v5963 = vunpack.c.l.b16 %v4720
    %v5964 = vunpack.c.h.b16 %v4720
    %v5965 = vunpack.c.l.b16 %v4721
    %v5966 = vunpack.c.h.b16 %v4721
    %v5967 = vunpack.c.l.b16 %v4722
    %v5968 = vunpack.c.h.b16 %v4722
    %v5969 = vunpack.c.l.b16 %v4723
    %v5970 = vunpack.c.h.b16 %v4723
    %v5971 = vunpack.c.l.b16 %v4724
    %v5972 = vunpack.c.h.b16 %v4724
    %v5973 = vunpack.c.l.b16 %v4725
    %v5974 = vunpack.c.h.b16 %v4725
    %v5975 = vunpack.c.l.b16 %v4726
    %v5976 = vunpack.c.h.b16 %v4726
    %v5977 = vunpack.c.l.b16 %v4727
    %v5978 = vunpack.c.h.b16 %v4727
    %v5979 = vunpack.c.l.b16 %v4728
    %v5980 = vunpack.c.h.b16 %v4728
    %v5981 = vunpack.c.l.b16 %v4729
    %v5982 = vunpack.c.h.b16 %v4729
    %v5983 = vunpack.c.l.b16 %v4730
    %v5984 = vunpack.c.h.b16 %v4730
    %v5985 = vunpack.c.l.b16 %v4731
    %v5986 = vunpack.c.h.b16 %v4731
    %v5987 = vunpack.c.l.b16 %v4732
    %v5988 = vunpack.c.h.b16 %v4732
    %v5989 = vunpack.c.l.b16 %v4733
    %v5990 = vunpack.c.h.b16 %v4733
    %v5991 = vunpack.c.l.b16 %v4734
    %v5992 = vunpack.c.h.b16 %v4734
    %v5993 = vunpack.c.l.b16 %v4735
    %v5994 = vunpack.c.h.b16 %v4735
    %v5995 = vunpack.c.l.b16 %v4736
    %v5996 = vunpack.c.h.b16 %v4736
    %v5997 = vunpack.c.l.b16 %v4737
    %v5998 = vunpack.c.h.b16 %v4737
    %v5999 = vunpack.c.l.b16 %v4738
    %v6000 = vunpack.c.h.b16 %v4738
    %v6001 = vunpack.c.l.b16 %v4739
    %v6002 = vunpack.c.h.b16 %v4739
    %v6003 = vunpack.c.l.b16 %v4740
    %v6004 = vunpack.c.h.b16 %v4740
    %v6005 = vunpack.c.l.b16 %v4741
    %v6006 = vunpack.c.h.b16 %v4741
    %v6007 = vunpack.c.l.b16 %v4742
    %v6008 = vunpack.c.h.b16 %v4742
    %v6009 = vunpack.c.l.b16 %v4743
    %v6010 = vunpack.c.h.b16 %v4743
    %v6011 = vunpack.c.l.b16 %v4744
    %v6012 = vunpack.c.h.b16 %v4744
    %v6013 = vunpack.c.l.b16 %v4745
    %v6014 = vunpack.c.h.b16 %v4745
    %v6015 = vunpack.c.l.b16 %v4746
    %v6016 = vunpack.c.h.b16 %v4746
    %v6017 = vunpack.c.l.b16 %v4747
    %v6018 = vunpack.c.h.b16 %v4747
    %v6019 = vunpack.c.l.b16 %v4748
    %v6020 = vunpack.c.h.b16 %v4748
    %v6021 = vunpack.c.l.b16 %v4749
    %v6022 = vunpack.c.h.b16 %v4749
    %v6023 = vunpack.c.l.b16 %v4750
    %v6024 = vunpack.c.h.b16 %v4750
    %v6025 = vunpack.c.l.b16 %v4751
    %v6026 = vunpack.c.h.b16 %v4751
    %v6027 = vunpack.c.l.b16 %v4752
    %v6028 = vunpack.c.h.b16 %v4752
    %v6029 = vunpack.c.l.b16 %v4753
    %v6030 = vunpack.c.h.b16 %v4753
    %v6031 = vunpack.c.l.b16 %v4754
    %v6032 = vunpack.c.h.b16 %v4754
    %v6033 = vunpack.c.l.b16 %v4755
    %v6034 = vunpack.c.h.b16 %v4755
    %v6035 = vunpack.c.l.b16 %v4756
    %v6036 = vunpack.c.h.b16 %v4756
    %v6037 = vunpack.c.l.b16 %v4757
    %v6038 = vunpack.c.h.b16 %v4757
    %v6039 = vunpack.c.l.b16 %v4758
    %v6040 = vunpack.c.h.b16 %v4758
    %v6041 = vunpack.c.l.b16 %v4759
    %v6042 = vunpack.c.h.b16 %v4759
    %v6043 = vunpack.c.l.b16 %v4760
    %v6044 = vunpack.c.h.b16 %v4760
    %v6045 = vunpack.c.l.b16 %v4761
    %v6046 = vunpack.c.h.b16 %v4761
    %v6047 = vunpack.c.l.b16 %v4762
    %v6048 = vunpack.c.h.b16 %v4762
    %v6049 = vunpack.c.l.b16 %v4763
    %v6050 = vunpack.c.h.b16 %v4763
    %v6051 = vunpack.c.l.b16 %v4764
    %v6052 = vunpack.c.h.b16 %v4764
    %v6053 = vunpack.c.l.b16 %v4765
    %v6054 = vunpack.c.h.b16 %v4765
    %v6055 = vunpack.c.l.b16 %v4766
    %v6056 = vunpack.c.h.b16 %v4766
    %v6057 = vunpack.c.l.b16 %v4767
    %v6058 = vunpack.c.h.b16 %v4767
    %v6059 = vunpack.c.l.b16 %v4768
    %v6060 = vunpack.c.h.b16 %v4768
    %v6061 = vunpack.c.l.b16 %v4769
    %v6062 = vunpack.c.h.b16 %v4769
    %v6063 = vunpack.c.l.b16 %v4770
    %v6064 = vunpack.c.h.b16 %v4770
    %v6065 = vunpack.c.l.b16 %v4771
    %v6066 = vunpack.c.h.b16 %v4771
    %v6067 = vunpack.c.l.b16 %v4772
    %v6068 = vunpack.c.h.b16 %v4772
    %v6069 = vunpack.c.l.b16 %v4773
    %v6070 = vunpack.c.h.b16 %v4773
    %v6071 = vunpack.c.l.b16 %v4774
    %v6072 = vunpack.c.h.b16 %v4774
    %v6073 = vunpack.c.l.b16 %v4775
    %v6074 = vunpack.c.h.b16 %v4775
    %v6075 = vunpack.c.l.b16 %v4776
    %v6076 = vunpack.c.h.b16 %v4776
    %v6077 = vunpack.c.l.b16 %v4777
    %v6078 = vunpack.c.h.b16 %v4777
    %v6079 = vunpack.c.l.b16 %v4778
    %v6080 = vunpack.c.h.b16 %v4778
    %v6081 = vunpack.c.l.b16 %v4779
    %v6082 = vunpack.c.h.b16 %v4779
    %v6083 = vunpack.c.l.b16 %v4780
    %v6084 = vunpack.c.h.b16 %v4780
    %v6085 = vunpack.c.l.b16 %v4781
    %v6086 = vunpack.c.h.b16 %v4781
    %v6087 = vunpack.c.l.b16 %v4782
    %v6088 = vunpack.c.h.b16 %v4782
    %v6089 = vunpack.c.l.b16 %v4783
    %v6090 = vunpack.c.h.b16 %v4783
    %v6091 = vunpack.c.l.b16 %v4784
    %v6092 = vunpack.c.h.b16 %v4784
    %v6093 = vunpack.c.l.b16 %v4785
    %v6094 = vunpack.c.h.b16 %v4785
    %v6095 = vunpack.c.l.b16 %v4786
    %v6096 = vunpack.c.h.b16 %v4786
    %v6097 = vunpack.c.l.b16 %v4787
    %v6098 = vunpack.c.h.b16 %v4787
    %v6099 = vunpack.c.l.b16 %v4788
    %v6100 = vunpack.c.h.b16 %v4788
    %v6101 = vunpack.c.l.b16 %v4789
    %v6102 = vunpack.c.h.b16 %v4789
    %v6103 = vunpack.c.l.b16 %v4790
    %v6104 = vunpack.c.h.b16 %v4790
    %v6105 = vunpack.c.l.b16 %v4791
    %v6106 = vunpack.c.h.b16 %v4791
    %v6107 = vunpack.c.l.b16 %v4792
    %v6108 = vunpack.c.h.b16 %v4792
    %v6109 = vunpack.c.l.b16 %v4793
    %v6110 = vunpack.c.h.b16 %v4793
    %v6111 = vunpack.c.l.b16 %v4794
    %v6112 = vunpack.c.h.b16 %v4794
    %v6113 = vunpack.c.l.b16 %v4795
    %v6114 = vunpack.c.h.b16 %v4795
    %v6115 = vunpack.c.l.b16 %v4796
    %v6116 = vunpack.c.h.b16 %v4796
    %v6117 = vunpack.c.l.b16 %v4797
    %v6118 = vunpack.c.h.b16 %v4797
    %v6119 = vunpack.c.l.b16 %v4798
    %v6120 = vunpack.c.h.b16 %v4798
    %v6121 = vunpack.c.l.b16 %v4799
    %v6122 = vunpack.c.h.b16 %v4799
    %v6123 = vunpack.c.l.b16 %v4800
    %v6124 = vunpack.c.h.b16 %v4800
    %v6125 = vunpack.c.l.b16 %v4801
    %v6126 = vunpack.c.h.b16 %v4801
    %v6127 = vunpack.c.l.b16 %v4802
    %v6128 = vunpack.c.h.b16 %v4802
    %v6129 = vunpack.c.l.b16 %v4803
    %v6130 = vunpack.c.h.b16 %v4803
    %v6131 = vunpack.c.l.b16 %v4804
    %v6132 = vunpack.c.h.b16 %v4804
    %v6133 = vunpack.c.l.b16 %v4805
    %v6134 = vunpack.c.h.b16 %v4805
    %v6135 = vunpack.c.l.b16 %v4806
    %v6136 = vunpack.c.h.b16 %v4806
    %v6137 = vunpack.c.l.b16 %v4807
    %v6138 = vunpack.c.h.b16 %v4807
    %v6139 = vunpack.c.l.b16 %v4808
    %v6140 = vunpack.c.h.b16 %v4808
    %v6141 = vunpack.c.l.b16 %v4809
    %v6142 = vunpack.c.h.b16 %v4809
    %v6143 = vunpack.c.l.b16 %v4810
    %v6144 = vunpack.c.h.b16 %v4810
    %v6145 = vunpack.c.l.b16 %v4811
    %v6146 = vunpack.c.h.b16 %v4811
    %v6147 = vunpack.c.l.b16 %v4812
    %v6148 = vunpack.c.h.b16 %v4812
    %v6149 = vunpack.c.l.b16 %v4813
    %v6150 = vunpack.c.h.b16 %v4813
    %v6151 = vunpack.c.l.b16 %v4814
    %v6152 = vunpack.c.h.b16 %v4814
    %v6153 = vunpack.c.l.b16 %v4815
    %v6154 = vunpack.c.h.b16 %v4815
    %v6155 = vunpack.c.l.b16 %v4816
    %v6156 = vunpack.c.h.b16 %v4816
    %v6157 = vunpack.c.l.b16 %v4817
    %v6158 = vunpack.c.h.b16 %v4817
    %v6159 = vunpack.c.l.b16 %v4818
    %v6160 = vunpack.c.h.b16 %v4818
    %v6161 = vunpack.c.l.b16 %v4819
    %v6162 = vunpack.c.h.b16 %v4819
    %v6163 = vunpack.c.l.b16 %v4820
    %v6164 = vunpack.c.h.b16 %v4820
    %v6165 = vunpack.c.l.b16 %v4821
    %v6166 = vunpack.c.h.b16 %v4821
    %v6167 = vunpack.c.l.b16 %v4822
    %v6168 = vunpack.c.h.b16 %v4822
    %v6169 = vunpack.c.l.b16 %v4823
    %v6170 = vunpack.c.h.b16 %v4823
    %v6171 = vunpack.c.l.b16 %v4824
    %v6172 = vunpack.c.h.b16 %v4824
    %v6173 = vunpack.c.l.b16 %v4825
    %v6174 = vunpack.c.h.b16 %v4825
    %v6175 = vunpack.c.l.b16 %v4826
    %v6176 = vunpack.c.h.b16 %v4826
    %v6177 = vunpack.c.l.b16 %v4827
    %v6178 = vunpack.c.h.b16 %v4827
    %v6179 = vunpack.c.l.b16 %v4828
    %v6180 = vunpack.c.h.b16 %v4828
    %v6181 = vunpack.c.l.b16 %v4829
    %v6182 = vunpack.c.h.b16 %v4829
    %v6183 = vunpack.c.l.b16 %v4830
    %v6184 = vunpack.c.h.b16 %v4830
    %v6185 = vunpack.c.l.b16 %v4831
    %v6186 = vunpack.c.h.b16 %v4831
    %v6187 = vunpack.c.l.b16 %v4832
    %v6188 = vunpack.c.h.b16 %v4832
    %v6189 = vunpack.c.l.b16 %v4833
    %v6190 = vunpack.c.h.b16 %v4833
    %v6191 = vunpack.c.l.b16 %v4834
    %v6192 = vunpack.c.h.b16 %v4834
    %v6193 = vunpack.c.l.b16 %v4835
    %v6194 = vunpack.c.h.b16 %v4835
    %v6195 = vunpack.c.l.b16 %v4836
    %v6196 = vunpack.c.h.b16 %v4836
    %v6197 = vunpack.c.l.b16 %v4837
    %v6198 = vunpack.c.h.b16 %v4837
    %v6199 = vunpack.c.l.b16 %v4838
    %v6200 = vunpack.c.h.b16 %v4838
    %v6201 = vunpack.c.l.b16 %v4839
    %v6202 = vunpack.c.h.b16 %v4839
    %v6203 = vunpack.c.l.b16 %v4840
    %v6204 = vunpack.c.h.b16 %v4840
    %v6205 = vunpack.c.l.b16 %v4841
    %v6206 = vunpack.c.h.b16 %v4841
    %v6207 = vunpack.c.l.b16 %v4842
    %v6208 = vunpack.c.h.b16 %v4842
    %v6209 = vunpack.c.l.b16 %v4843
    %v6210 = vunpack.c.h.b16 %v4843
    %v6211 = vunpack.c.l.b16 %v4844
    %v6212 = vunpack.c.h.b16 %v4844
    %v6213 = vunpack.c.l.b16 %v4845
    %v6214 = vunpack.c.h.b16 %v4845
    %v6215 = vunpack.c.l.b16 %v4846
    %v6216 = vunpack.c.h.b16 %v4846
    %v6217 = vunpack.c.l.b16 %v4847
    %v6218 = vunpack.c.h.b16 %v4847
    %v6219 = vunpack.c.l.b16 %v4848
    %v6220 = vunpack.c.h.b16 %v4848
    %v6221 = vunpack.c.l.b16 %v4849
    %v6222 = vunpack.c.h.b16 %v4849
    %v6223 = vunpack.c.l.b16 %v4850
    %v6224 = vunpack.c.h.b16 %v4850
    %v6225 = vunpack.c.l.b16 %v4851
    %v6226 = vunpack.c.h.b16 %v4851
    %v6227 = vunpack.c.l.b16 %v4852
    %v6228 = vunpack.c.h.b16 %v4852
    %v6229 = vunpack.c.l.b16 %v4853
    %v6230 = vunpack.c.h.b16 %v4853
    %v6231 = vunpack.c.l.b16 %v4854
    %v6232 = vunpack.c.h.b16 %v4854
    %v6233 = vunpack.c.l.b16 %v4855
    %v6234 = vunpack.c.h.b16 %v4855
    %v6235 = vunpack.c.l.b16 %v4856
    %v6236 = vunpack.c.h.b16 %v4856
    %v6237 = vunpack.c.l.b16 %v4857
    %v6238 = vunpack.c.h.b16 %v4857
    %v6239 = vunpack.c.l.b16 %v4858
    %v6240 = vunpack.c.h.b16 %v4858
    %v6241 = vunpack.c.l.b16 %v4859
    %v6242 = vunpack.c.h.b16 %v4859
    %v6243 = vunpack.c.l.b16 %v4860
    %v6244 = vunpack.c.h.b16 %v4860
    %v6245 = vunpack.c.l.b16 %v4861
    %v6246 = vunpack.c.h.b16 %v4861
    %v6247 = vunpack.c.l.b16 %v4862
    %v6248 = vunpack.c.h.b16 %v4862
    %v6249 = vunpack.c.l.b16 %v4863
    %v6250 = vunpack.c.h.b16 %v4863
    %v6251 = vunpack.c.l.b16 %v4864
    %v6252 = vunpack.c.h.b16 %v4864
    %v6253 = vunpack.c.l.b16 %v4865
    %v6254 = vunpack.c.h.b16 %v4865
    %v6255 = vunpack.c.l.b16 %v4866
    %v6256 = vunpack.c.h.b16 %v4866
    %v6257 = vunpack.c.l.b16 %v4867
    %v6258 = vunpack.c.h.b16 %v4867
    %v6259 = vunpack.c.l.b16 %v4868
    %v6260 = vunpack.c.h.b16 %v4868
    %v6261 = vunpack.c.l.b16 %v4869
    %v6262 = vunpack.c.h.b16 %v4869
    %v6263 = vunpack.c.l.b16 %v4870
    %v6264 = vunpack.c.h.b16 %v4870
    %v6265 = vunpack.c.l.b16 %v4871
    %v6266 = vunpack.c.h.b16 %v4871
    %v6267 = vunpack.c.l.b16 %v4872
    %v6268 = vunpack.c.h.b16 %v4872
    %v6269 = vunpack.c.l.b16 %v4873
    %v6270 = vunpack.c.h.b16 %v4873
    %v6271 = vunpack.c.l.b16 %v4874
    %v6272 = vunpack.c.h.b16 %v4874
    %v6273 = vunpack.c.l.b16 %v4875
    %v6274 = vunpack.c.h.b16 %v4875
    %v6275 = vunpack.c.l.b16 %v4876
    %v6276 = vunpack.c.h.b16 %v4876
    %v6277 = vunpack.c.l.b16 %v4877
    %v6278 = vunpack.c.h.b16 %v4877
    %v6279 = vunpack.c.l.b16 %v4878
    %v6280 = vunpack.c.h.b16 %v4878
    %v6281 = vunpack.c.l.b16 %v4879
    %v6282 = vunpack.c.h.b16 %v4879
    %v6283 = vunpack.c.l.b16 %v4880
    %v6284 = vunpack.c.h.b16 %v4880
    %v6285 = vunpack.c.l.b16 %v4881
    %v6286 = vunpack.c.h.b16 %v4881
    %v6287 = vunpack.c.l.b16 %v4882
    %v6288 = vunpack.c.h.b16 %v4882
    %v6289 = vunpack.c.l.b16 %v4883
    %v6290 = vunpack.c.h.b16 %v4883
    %v6291 = vunpack.c.l.b16 %v4884
    %v6292 = vunpack.c.h.b16 %v4884
    %v6293 = vunpack.c.l.b16 %v4885
    %v6294 = vunpack.c.h.b16 %v4885
    %v6295 = vunpack.c.l.b16 %v4886
    %v6296 = vunpack.c.h.b16 %v4886
    %v6297 = vunpack.c.l.b16 %v4887
    %v6298 = vunpack.c.h.b16 %v4887
    %v6299 = vunpack.c.l.b16 %v4888
    %v6300 = vunpack.c.h.b16 %v4888
    %v6301 = vunpack.c.l.b16 %v4889
    %v6302 = vunpack.c.h.b16 %v4889
    %v6303 = vunpack.c.l.b16 %v4890
    %v6304 = vunpack.c.h.b16 %v4890
    %v6305 = vunpack.c.l.b16 %v4891
    %v6306 = vunpack.c.h.b16 %v4891
    %v6307 = vunpack.c.l.b16 %v4892
    %v6308 = vunpack.c.h.b16 %v4892
    %v6309 = vunpack.c.l.b16 %v4893
    %v6310 = vunpack.c.h.b16 %v4893
    %v6311 = vunpack.c.l.b16 %v4894
    %v6312 = vunpack.c.h.b16 %v4894
    %v6313 = vunpack.c.l.b16 %v4895
    %v6314 = vunpack.c.h.b16 %v4895
    %v6315 = vunpack.c.l.b16 %v4896
    %v6316 = vunpack.c.h.b16 %v4896
    %v6317 = vunpack.c.l.b16 %v4897
    %v6318 = vunpack.c.h.b16 %v4897
    %v6319 = vunpack.c.l.b16 %v4898
    %v6320 = vunpack.c.h.b16 %v4898
    %v6321 = vunpack.c.l.b16 %v4899
    %v6322 = vunpack.c.h.b16 %v4899
    %v6323 = vunpack.c.l.b16 %v4900
    %v6324 = vunpack.c.h.b16 %v4900
    %v6325 = vunpack.c.l.b16 %v4901
    %v6326 = vunpack.c.h.b16 %v4901
    %v6327 = vunpack.c.l.b16 %v4902
    %v6328 = vunpack.c.h.b16 %v4902
    %v6329 = vunpack.c.l.b16 %v4903
    %v6330 = vunpack.c.h.b16 %v4903
    %v6331 = vunpack.c.l.b16 %v4904
    %v6332 = vunpack.c.h.b16 %v4904
    %v6333 = vunpack.c.l.b16 %v4905
    %v6334 = vunpack.c.h.b16 %v4905
    %v6335 = vunpack.c.l.b16 %v4906
    %v6336 = vunpack.c.h.b16 %v4906
    %v6337 = vunpack.c.l.b16 %v4907
    %v6338 = vunpack.c.h.b16 %v4907
    %v6339 = vunpack.c.l.b16 %v4908
    %v6340 = vunpack.c.h.b16 %v4908
    %v6341 = vunpack.c.l.b16 %v4909
    %v6342 = vunpack.c.h.b16 %v4909
    %v6343 = vunpack.c.l.b16 %v4910
    %v6344 = vunpack.c.h.b16 %v4910
    %v6345 = vunpack.c.l.b16 %v4911
    %v6346 = vunpack.c.h.b16 %v4911
    %v6347 = vunpack.c.l.b16 %v4912
    %v6348 = vunpack.c.h.b16 %v4912
    %v6349 = vunpack.c.l.b16 %v4913
    %v6350 = vunpack.c.h.b16 %v4913
    %v6351 = vunpack.c.l.b16 %v4914
    %v6352 = vunpack.c.h.b16 %v4914
    %v6353 = vunpack.c.l.b16 %v4915
    %v6354 = vunpack.c.h.b16 %v4915
    %v6355 = vunpack.c.l.b16 %v4916
    %v6356 = vunpack.c.h.b16 %v4916
    %v6357 = vunpack.c.l.b16 %v4917
    %v6358 = vunpack.c.h.b16 %v4917
    %v6359 = vunpack.c.l.b16 %v4918
    %v6360 = vunpack.c.h.b16 %v4918
    %v6361 = vunpack.c.l.b16 %v4919
    %v6362 = vunpack.c.h.b16 %v4919
    %v6363 = vunpack.c.l.b16 %v4920
    %v6364 = vunpack.c.h.b16 %v4920
    %v6365 = vunpack.c.l.b16 %v4921
    %v6366 = vunpack.c.h.b16 %v4921
    %v6367 = vunpack.c.l.b16 %v4922
    %v6368 = vunpack.c.h.b16 %v4922
    %v6369 = vunpack.c.l.b16 %v4923
    %v6370 = vunpack.c.h.b16 %v4923
    %v6371 = vunpack.c.l.b16 %v4924
    %v6372 = vunpack.c.h.b16 %v4924
    %v6373 = vunpack.c.l.b16 %v4925
    %v6374 = vunpack.c.h.b16 %v4925
    %v6375 = vunpack.c.l.b16 %v4926
    %v6376 = vunpack.c.h.b16 %v4926
    %v6377 = vunpack.c.l.b16 %v4927
    %v6378 = vunpack.c.h.b16 %v4927
    %v6379 = vunpack.c.l.b16 %v4928
    %v6380 = vunpack.c.h.b16 %v4928
    %v6381 = vunpack.c.l.b16 %v4929
    %v6382 = vunpack.c.h.b16 %v4929
    %v6383 = vunpack.c.l.b16 %v4930
    %v6384 = vunpack.c.h.b16 %v4930
    %v6385 = vunpack.c.l.b16 %v4931
    %v6386 = vunpack.c.h.b16 %v4931
    %v6387 = vunpack.c.l.b16 %v4932
    %v6388 = vunpack.c.h.b16 %v4932
    %v6389 = vunpack.c.l.b16 %v4933
    %v6390 = vunpack.c.h.b16 %v4933
    %v6391 = vunpack.c.l.b16 %v4934
    %v6392 = vunpack.c.h.b16 %v4934
    %v6393 = vunpack.c.l.b16 %v4935
    %v6394 = vunpack.c.h.b16 %v4935
    %v6395 = vunpack.c.l.b16 %v4936
    %v6396 = vunpack.c.h.b16 %v4936
    %v6397 = vunpack.c.l.b16 %v4937
    %v6398 = vunpack.c.h.b16 %v4937
    %v6399 = vunpack.c.l.b16 %v4938
    %v6400 = vunpack.c.h.b16 %v4938
    %v6401 = vunpack.c.l.b16 %v4939
    %v6402 = vunpack.c.h.b16 %v4939
    %v6403 = vunpack.c.l.b16 %v4940
    %v6404 = vunpack.c.h.b16 %v4940
    %v6405 = vunpack.c.l.b16 %v4941
    %v6406 = vunpack.c.h.b16 %v4941
    %v6407 = vunpack.c.l.b16 %v4942
    %v6408 = vunpack.c.h.b16 %v4942
    %v6409 = vunpack.c.l.b16 %v4943
    %v6410 = vunpack.c.h.b16 %v4943
    %v6411 = vunpack.c.l.b16 %v4944
    %v6412 = vunpack.c.h.b16 %v4944
    %v6413 = vunpack.c.l.b16 %v4945
    %v6414 = vunpack.c.h.b16 %v4945
    %v6415 = vunpack.c.l.b16 %v4946
    %v6416 = vunpack.c.h.b16 %v4946
    %v6417 = vunpack.c.l.b16 %v4947
    %v6418 = vunpack.c.h.b16 %v4947
    %v6419 = vunpack.c.l.b16 %v4948
    %v6420 = vunpack.c.h.b16 %v4948
    %v6421 = vunpack.c.l.b16 %v4949
    %v6422 = vunpack.c.h.b16 %v4949
    %v6423 = vunpack.c.l.b16 %v4950
    %v6424 = vunpack.c.h.b16 %v4950
    %v6425 = vunpack.c.l.b16 %v4951
    %v6426 = vunpack.c.h.b16 %v4951
    %v6427 = vunpack.c.l.b16 %v4952
    %v6428 = vunpack.c.h.b16 %v4952
    %v6429 = vunpack.c.l.b16 %v4953
    %v6430 = vunpack.c.h.b16 %v4953
    %v6431 = vunpack.c.l.b16 %v4954
    %v6432 = vunpack.c.h.b16 %v4954
    %v6433 = vunpack.c.l.b16 %v4955
    %v6434 = vunpack.c.h.b16 %v4955
    %v6435 = vunpack.c.l.b16 %v4956
    %v6436 = vunpack.c.h.b16 %v4956
    %v6437 = vunpack.c.l.b16 %v4957
    %v6438 = vunpack.c.h.b16 %v4957
    %v6439 = vunpack.c.l.b16 %v4958
    %v6440 = vunpack.c.h.b16 %v4958
    %v6441 = vunpack.c.l.b16 %v4959
    %v6442 = vunpack.c.h.b16 %v4959
    %v6443 = vunpack.c.l.b16 %v4960
    %v6444 = vunpack.c.h.b16 %v4960
    %v6445 = vunpack.c.l.b16 %v4961
    %v6446 = vunpack.c.h.b16 %v4961
    %v6447 = vunpack.c.l.b16 %v4962
    %v6448 = vunpack.c.h.b16 %v4962
    %v6449 = vunpack.c.l.b16 %v4963
    %v6450 = vunpack.c.h.b16 %v4963
    %v6451 = vunpack.c.l.b16 %v4964
    %v6452 = vunpack.c.h.b16 %v4964
    %v6453 = vunpack.c.l.b16 %v4965
    %v6454 = vunpack.c.h.b16 %v4965
    %v6455 = vunpack.c.l.b16 %v4966
    %v6456 = vunpack.c.h.b16 %v4966
    %v6457 = vunpack.c.l.b16 %v4967
    %v6458 = vunpack.c.h.b16 %v4967
    %v6459 = vunpack.c.l.b16 %v4968
    %v6460 = vunpack.c.h.b16 %v4968
    %v6461 = vunpack.c.l.b16 %v4969
    %v6462 = vunpack.c.h.b16 %v4969
    %v6463 = vunpack.c.l.b16 %v4970
    %v6464 = vunpack.c.h.b16 %v4970
    %v6465 = vunpack.c.l.b16 %v4971
    %v6466 = vunpack.c.h.b16 %v4971
    %v6467 = vunpack.c.l.b16 %v4972
    %v6468 = vunpack.c.h.b16 %v4972
    %v6469 = vunpack.c.l.b16 %v4973
    %v6470 = vunpack.c.h.b16 %v4973
    %v6471 = vunpack.c.l.b16 %v4974
    %v6472 = vunpack.c.h.b16 %v4974
    %v6473 = vunpack.c.l.b16 %v4975
    %v6474 = vunpack.c.h.b16 %v4975
    %v6475 = vunpack.c.l.b16 %v4976
    %v6476 = vunpack.c.h.b16 %v4976
    %v6477 = vunpack.c.l.b16 %v4977
    %v6478 = vunpack.c.h.b16 %v4977
    %v6479 = vunpack.c.l.b16 %v4978
    %v6480 = vunpack.c.h.b16 %v4978
    %v6481 = vunpack.c.l.b16 %v4979
    %v6482 = vunpack.c.h.b16 %v4979
    %v6483 = vunpack.c.l.b16 %v4980
    %v6484 = vunpack.c.h.b16 %v4980
    %v6485 = vunpack.c.l.b16 %v4981
    %v6486 = vunpack.c.h.b16 %v4981
    %v6487 = vunpack.c.l.b16 %v4982
    %v6488 = vunpack.c.h.b16 %v4982
    %v6489 = vunpack.c.l.b16 %v4983
    %v6490 = vunpack.c.h.b16 %v4983
    %v6491 = vunpack.c.l.b16 %v4984
    %v6492 = vunpack.c.h.b16 %v4984
    %v6493 = vunpack.c.l.b16 %v4985
    %v6494 = vunpack.c.h.b16 %v4985
    %v6495 = vunpack.c.l.b16 %v4986
    %v6496 = vunpack.c.h.b16 %v4986
    %v6497 = vunpack.c.l.b16 %v4987
    %v6498 = vunpack.c.h.b16 %v4987
    %v6499 = vunpack.c.l.b16 %v4988
    %v6500 = vunpack.c.h.b16 %v4988
    %v6501 = vunpack.c.l.b16 %v4989
    %v6502 = vunpack.c.h.b16 %v4989
    %v6503 = vunpack.c.l.b16 %v4990
    %v6504 = vunpack.c.h.b16 %v4990
    %v6505 = vunpack.c.l.b16 %v4991
    %v6506 = vunpack.c.h.b16 %v4991
    %v6507 = vunpack.c.l.b16 %v4992
    %v6508 = vunpack.c.h.b16 %v4992
    %v6509 = vunpack.c.l.b16 %v4993
    %v6510 = vunpack.c.h.b16 %v4993
    %v6511 = vunpack.c.l.b16 %v4994
    %v6512 = vunpack.c.h.b16 %v4994
    %v6513 = vunpack.c.l.b16 %v4995
    %v6514 = vunpack.c.h.b16 %v4995
    %v6515 = vunpack.c.l.b16 %v4996
    %v6516 = vunpack.c.h.b16 %v4996
    %v6517 = vunpack.c.l.b16 %v4997
    %v6518 = vunpack.c.h.b16 %v4997
    %v6519 = vunpack.c.l.b16 %v4998
    %v6520 = vunpack.c.h.b16 %v4998
    %v6521 = vunpack.c.l.b16 %v4999
    %v6522 = vunpack.c.h.b16 %v4999
    %v6523 = vunpack.c.l.b16 %v5000
    %v6524 = vunpack.c.h.b16 %v5000
    %v6525 = vunpack.c.l.b16 %v5001
    %v6526 = vunpack.c.h.b16 %v5001
    %v6527 = vunpack.c.l.b16 %v5002
    %v6528 = vunpack.c.h.b16 %v5002
    %v6529 = vunpack.c.l.b16 %v5003
    %v6530 = vunpack.c.h.b16 %v5003
    %v6531 = vunpack.c.l.b16 %v5004
    %v6532 = vunpack.c.h.b16 %v5004
    %v6533 = vunpack.c.l.b16 %v5005
    %v6534 = vunpack.c.h.b16 %v5005
    %v6535 = vunpack.c.l.b16 %v5006
    %v6536 = vunpack.c.h.b16 %v5006
    %v6537 = vunpack.c.l.b16 %v5007
    %v6538 = vunpack.c.h.b16 %v5007
    %v6539 = vunpack.c.l.b16 %v5008
    %v6540 = vunpack.c.h.b16 %v5008
    %v6541 = vunpack.c.l.b16 %v5009
    %v6542 = vunpack.c.h.b16 %v5009
    %v6543 = vunpack.c.l.b16 %v5010
    %v6544 = vunpack.c.h.b16 %v5010
    %v6545 = vunpack.c.l.b16 %v5011
    %v6546 = vunpack.c.h.b16 %v5011
    %v6547 = vunpack.c.l.b16 %v5012
    %v6548 = vunpack.c.h.b16 %v5012
    %v6549 = vunpack.c.l.b16 %v5013
    %v6550 = vunpack.c.h.b16 %v5013
    %v6551 = vunpack.c.l.b16 %v5014
    %v6552 = vunpack.c.h.b16 %v5014
    %v6553 = vunpack.c.l.b16 %v5015
    %v6554 = vunpack.c.h.b16 %v5015
    %v6555 = vunpack.c.l.b16 %v5016
    %v6556 = vunpack.c.h.b16 %v5016
    %v6557 = vunpack.c.l.b16 %v5017
    %v6558 = vunpack.c.h.b16 %v5017
    %v6559 = vunpack.c.l.b16 %v5018
    %v6560 = vunpack.c.h.b16 %v5018
    %v6561 = vunpack.c.l.b16 %v5019
    %v6562 = vunpack.c.h.b16 %v5019
    %v6563 = vunpack.c.l.b16 %v5020
    %v6564 = vunpack.c.h.b16 %v5020
    %v6565 = vunpack.c.l.b16 %v5021
    %v6566 = vunpack.c.h.b16 %v5021
    %v6567 = vunpack.c.l.b16 %v5022
    %v6568 = vunpack.c.h.b16 %v5022
    %v6569 = vunpack.c.l.b16 %v5023
    %v6570 = vunpack.c.h.b16 %v5023
    %v6571 = vunpack.c.l.b16 %v5024
    %v6572 = vunpack.c.h.b16 %v5024
    %v6573 = vunpack.c.l.b16 %v5025
    %v6574 = vunpack.c.h.b16 %v5025
    %v6575 = vunpack.c.l.b16 %v5026
    %v6576 = vunpack.c.h.b16 %v5026
    %v6577 = vunpack.c.l.b16 %v5027
    %v6578 = vunpack.c.h.b16 %v5027
    %v6579 = vunpack.c.l.b16 %v5028
    %v6580 = vunpack.c.h.b16 %v5028
    %v6581 = vunpack.c.l.b16 %v5029
    %v6582 = vunpack.c.h.b16 %v5029
    %v6583 = vunpack.c.l.b16 %v5030
    %v6584 = vunpack.c.h.b16 %v5030
    %v6585 = vunpack.c.l.b16 %v5031
    %v6586 = vunpack.c.h.b16 %v5031
    %v6587 = vunpack.c.l.b16 %v5032
    %v6588 = vunpack.c.h.b16 %v5032
    %v6589 = vunpack.c.l.b16 %v5033
    %v6590 = vunpack.c.h.b16 %v5033
    %v6591 = vunpack.c.l.b16 %v5034
    %v6592 = vunpack.c.h.b16 %v5034
    %v6593 = vunpack.c.l.b16 %v5035
    %v6594 = vunpack.c.h.b16 %v5035
    %v6595 = vunpack.c.l.b16 %v5036
    %v6596 = vunpack.c.h.b16 %v5036
    %v6597 = vunpack.c.l.b16 %v5037
    %v6598 = vunpack.c.h.b16 %v5037
    %v6599 = vunpack.c.l.b16 %v5038
    %v6600 = vunpack.c.h.b16 %v5038
    %v6601 = vunpack.c.l.b16 %v5039
    %v6602 = vunpack.c.h.b16 %v5039
    %v6603 = vunpack.c.l.b16 %v5040
    %v6604 = vunpack.c.h.b16 %v5040
    %v6605 = vunpack.c.l.b16 %v5041
    %v6606 = vunpack.c.h.b16 %v5041
    %v6607 = vunpack.c.l.b16 %v5042
    %v6608 = vunpack.c.h.b16 %v5042
    %v6609 = vunpack.c.l.b16 %v5043
    %v6610 = vunpack.c.h.b16 %v5043
    %v6611 = vunpack.c.l.b16 %v5044
    %v6612 = vunpack.c.h.b16 %v5044
    %v6613 = vunpack.c.l.b16 %v5045
    %v6614 = vunpack.c.h.b16 %v5045
    %v6615 = vunpack.c.l.b16 %v5046
    %v6616 = vunpack.c.h.b16 %v5046
    %v6617 = vunpack.c.l.b16 %v5047
    %v6618 = vunpack.c.h.b16 %v5047
    %v6619 = vunpack.c.l.b16 %v5048
    %v6620 = vunpack.c.h.b16 %v5048
    %v6621 = vunpack.c.l.b16 %v5049
    %v6622 = vunpack.c.h.b16 %v5049
    %v6623 = vunpack.c.l.b16 %v5050
    %v6624 = vunpack.c.h.b16 %v5050
    %v6625 = vunpack.c.l.b16 %v5051
    %v6626 = vunpack.c.h.b16 %v5051
    %v6627 = vunpack.c.l.b16 %v5052
    %v6628 = vunpack.c.h.b16 %v5052
    %v6629 = vunpack.c.l.b16 %v5053
    %v6630 = vunpack.c.h.b16 %v5053
    %v6631 = vunpack.c.l.b16 %v5054
    %v6632 = vunpack.c.h.b16 %v5054
    %v6633 = vunpack.c.l.b16 %v5055
    %v6634 = vunpack.c.h.b16 %v5055
    %v6635 = vunpack.c.l.b16 %v5056
    %v6636 = vunpack.c.h.b16 %v5056
    %v6637 = vunpack.c.l.b16 %v5057
    %v6638 = vunpack.c.h.b16 %v5057
    %v6639 = vunpack.c.l.b16 %v5058
    %v6640 = vunpack.c.h.b16 %v5058
    %v6641 = vunpack.c.l.b16 %v5059
    %v6642 = vunpack.c.h.b16 %v5059
    %v6643 = vunpack.c.l.b16 %v5060
    %v6644 = vunpack.c.h.b16 %v5060
    %v6645 = vunpack.c.l.b16 %v5061
    %v6646 = vunpack.c.h.b16 %v5061
    %v6647 = vunpack.c.l.b16 %v5062
    %v6648 = vunpack.c.h.b16 %v5062
    %v6649 = vunpack.c.l.b16 %v5063
    %v6650 = vunpack.c.h.b16 %v5063
    %v6651 = vunpack.c.l.b16 %v5064
    %v6652 = vunpack.c.h.b16 %v5064
    %v6653 = vunpack.c.l.b16 %v5065
    %v6654 = vunpack.c.h.b16 %v5065
    %v6655 = vunpack.c.l.b16 %v5066
    %v6656 = vunpack.c.h.b16 %v5066
    %v6657 = vunpack.c.l.b16 %v5067
    %v6658 = vunpack.c.h.b16 %v5067
    %v6659 = vunpack.c.l.b16 %v5068
    %v6660 = vunpack.c.h.b16 %v5068
    %v6661 = vunpack.c.l.b16 %v5069
    %v6662 = vunpack.c.h.b16 %v5069
    %v6663 = vunpack.c.l.b16 %v5070
    %v6664 = vunpack.c.h.b16 %v5070
    %v6665 = vunpack.c.l.b16 %v5071
    %v6666 = vunpack.c.h.b16 %v5071
    %v6667 = vunpack.c.l.b16 %v5072
    %v6668 = vunpack.c.h.b16 %v5072
    %v6669 = vunpack.c.l.b16 %v5073
    %v6670 = vunpack.c.h.b16 %v5073
    %v6671 = vunpack.c.l.b16 %v5074
    %v6672 = vunpack.c.h.b16 %v5074
    %v6673 = vunpack.c.l.b16 %v5075
    %v6674 = vunpack.c.h.b16 %v5075
    %v6675 = vunpack.c.l.b16 %v5076
    %v6676 = vunpack.c.h.b16 %v5076
    %v6677 = vunpack.c.l.b16 %v5077
    %v6678 = vunpack.c.h.b16 %v5077
    %v6679 = vunpack.c.l.b16 %v5078
    %v6680 = vunpack.c.h.b16 %v5078
    %v6681 = vunpack.c.l.b16 %v5079
    %v6682 = vunpack.c.h.b16 %v5079
    %v6683 = vunpack.c.l.b16 %v5080
    %v6684 = vunpack.c.h.b16 %v5080
    %v6685 = vunpack.c.l.b16 %v5081
    %v6686 = vunpack.c.h.b16 %v5081
    %v6687 = vunpack.c.l.b16 %v5082
    %v6688 = vunpack.c.h.b16 %v5082
    %v6689 = vunpack.c.l.b16 %v5083
    %v6690 = vunpack.c.h.b16 %v5083
    %v6691 = vunpack.c.l.b16 %v5084
    %v6692 = vunpack.c.h.b16 %v5084
    %v6693 = vunpack.c.l.b16 %v5085
    %v6694 = vunpack.c.h.b16 %v5085
    %v6695 = vunpack.c.l.b16 %v5086
    %v6696 = vunpack.c.h.b16 %v5086
    %v6697 = vunpack.c.l.b16 %v5087
    %v6698 = vunpack.c.h.b16 %v5087
    %v6699 = vunpack.c.l.b16 %v5088
    %v6700 = vunpack.c.h.b16 %v5088
    %v6701 = vunpack.c.l.b16 %v5089
    %v6702 = vunpack.c.h.b16 %v5089
    %v6703 = vunpack.c.l.b16 %v5090
    %v6704 = vunpack.c.h.b16 %v5090
    %v6705 = vunpack.c.l.b16 %v5091
    %v6706 = vunpack.c.h.b16 %v5091
    %v6707 = vunpack.c.l.b16 %v5092
    %v6708 = vunpack.c.h.b16 %v5092
    %v6709 = vunpack.c.l.b16 %v5093
    %v6710 = vunpack.c.h.b16 %v5093
    %v6711 = vunpack.c.l.b16 %v5094
    %v6712 = vunpack.c.h.b16 %v5094
    %v6713 = vunpack.c.l.b16 %v5095
    %v6714 = vunpack.c.h.b16 %v5095
    %v6715 = vunpack.c.l.b16 %v5096
    %v6716 = vunpack.c.h.b16 %v5096
    %v6717 = vunpack.c.l.b16 %v5097
    %v6718 = vunpack.c.h.b16 %v5097
    %v6719 = vunpack.c.l.b16 %v5098
    %v6720 = vunpack.c.h.b16 %v5098
    %v6721 = vunpack.c.l.b16 %v5099
    %v6722 = vunpack.c.h.b16 %v5099
    %v6723 = vunpack.c.l.b16 %v5100
    %v6724 = vunpack.c.h.b16 %v5100
    %v6725 = vunpack.c.l.b16 %v5101
    %v6726 = vunpack.c.h.b16 %v5101
    %v6727 = vunpack.c.l.b16 %v5102
    %v6728 = vunpack.c.h.b16 %v5102
    %v6729 = vunpack.c.l.b16 %v5103
    %v6730 = vunpack.c.h.b16 %v5103
    %v6731 = vunpack.c.l.b16 %v5104
    %v6732 = vunpack.c.h.b16 %v5104
    %v6733 = vunpack.c.l.b16 %v5105
    %v6734 = vunpack.c.h.b16 %v5105
    %v6735 = vunpack.c.l.b16 %v5106
    %v6736 = vunpack.c.h.b16 %v5106
    %v6737 = vunpack.c.l.b16 %v5107
    %v6738 = vunpack.c.h.b16 %v5107
    %v6739 = vunpack.c.l.b16 %v5108
    %v6740 = vunpack.c.h.b16 %v5108
    %v6741 = vunpack.c.l.b16 %v5109
    %v6742 = vunpack.c.h.b16 %v5109
    %v6743 = vunpack.c.l.b16 %v5110
    %v6744 = vunpack.c.h.b16 %v5110
    %v6745 = vunpack.c.l.b16 %v5111
    %v6746 = vunpack.c.h.b16 %v5111
    %v6747 = vunpack.c.l.b16 %v5112
    %v6748 = vunpack.c.h.b16 %v5112
    %v6749 = vunpack.c.l.b16 %v5113
    %v6750 = vunpack.c.h.b16 %v5113
    %v6751 = vunpack.c.l.b16 %v5114
    %v6752 = vunpack.c.h.b16 %v5114
    %v6753 = vunpack.c.l.b16 %v5115
    %v6754 = vunpack.c.h.b16 %v5115
    %v6755 = vunpack.c.l.b16 %v5116
    %v6756 = vunpack.c.h.b16 %v5116
    %v6757 = vunpack.c.l.b16 %v5117
    %v6758 = vunpack.c.h.b16 %v5117
    %v6759 = vunpack.c.l.b16 %v5118
    %v6760 = vunpack.c.h.b16 %v5118
    %v6761 = vunpack.c.l.b16 %v5119
    %v6762 = vunpack.c.h.b16 %v5119
    %v6763 = vunpack.c.l.b16 %v5120
    %v6764 = vunpack.c.h.b16 %v5120
    %v6765 = vunpack.c.l.b16 %v5121
    %v6766 = vunpack.c.h.b16 %v5121
    %v6767 = vunpack.c.l.b16 %v5122
    %v6768 = vunpack.c.h.b16 %v5122
    %v6769 = vunpack.c.l.b16 %v5123
    %v6770 = vunpack.c.h.b16 %v5123
    %v6771 = vunpack.c.l.b16 %v5124
    %v6772 = vunpack.c.h.b16 %v5124
    %v6773 = vunpack.c.l.b16 %v5125
    %v6774 = vunpack.c.h.b16 %v5125
    %v6775 = vunpack.c.l.b16 %v5126
    %v6776 = vunpack.c.h.b16 %v5126
    %v6777 = vunpack.c.l.b16 %v5127
    %v6778 = vunpack.c.h.b16 %v5127
    %v6779 = vunpack.c.l.b16 %v5128
    %v6780 = vunpack.c.h.b16 %v5128
    %v6781 = vunpack.c.l.b16 %v5129
    %v6782 = vunpack.c.h.b16 %v5129
    %v6783 = vunpack.c.l.b16 %v5130
    %v6784 = vunpack.c.h.b16 %v5130
    %v6785 = vunpack.c.l.b16 %v5131
    %v6786 = vunpack.c.h.b16 %v5131
    %v6787 = vunpack.c.l.b16 %v5132
    %v6788 = vunpack.c.h.b16 %v5132
    %v6789 = vunpack.c.l.b16 %v5133
    %v6790 = vunpack.c.h.b16 %v5133
    %v6791 = vunpack.c.l.b16 %v5134
    %v6792 = vunpack.c.h.b16 %v5134
    %v6793 = vunpack.c.l.b16 %v5135
    %v6794 = vunpack.c.h.b16 %v5135
    %v6795 = vunpack.c.l.b16 %v5136
    %v6796 = vunpack.c.h.b16 %v5136
    %v6797 = vunpack.c.l.b16 %v5137
    %v6798 = vunpack.c.h.b16 %v5137
    %v6799 = vunpack.c.l.b16 %v5138
    %v6800 = vunpack.c.h.b16 %v5138
    %v6801 = vunpack.c.l.b16 %v5139
    %v6802 = vunpack.c.h.b16 %v5139
    %v6803 = vunpack.c.l.b16 %v5140
    %v6804 = vunpack.c.h.b16 %v5140
    %v6805 = vunpack.c.l.b16 %v5141
    %v6806 = vunpack.c.h.b16 %v5141
    %v6807 = vunpack.c.l.b16 %v5142
    %v6808 = vunpack.c.h.b16 %v5142
    %v6809 = vunpack.c.l.b16 %v5143
    %v6810 = vunpack.c.h.b16 %v5143
    %v6811 = vunpack.c.l.b16 %v5144
    %v6812 = vunpack.c.h.b16 %v5144
    %v6813 = vunpack.c.l.b16 %v5145
    %v6814 = vunpack.c.h.b16 %v5145
    %v6815 = vunpack.c.l.b16 %v5146
    %v6816 = vunpack.c.h.b16 %v5146
    %v6817 = vunpack.c.l.b16 %v5147
    %v6818 = vunpack.c.h.b16 %v5147
    %v6819 = vunpack.c.l.b16 %v5148
    %v6820 = vunpack.c.h.b16 %v5148
    %v6821 = vunpack.c.l.b16 %v5149
    %v6822 = vunpack.c.h.b16 %v5149
    %v6823 = vunpack.c.l.b16 %v5150
    %v6824 = vunpack.c.h.b16 %v5150
    %v6825 = vunpack.c.l.b16 %v5151
    %v6826 = vunpack.c.h.b16 %v5151
    %v6827 = vunpack.c.l.b16 %v5152
    %v6828 = vunpack.c.h.b16 %v5152
    %v6829 = vunpack.c.l.b16 %v5153
    %v6830 = vunpack.c.h.b16 %v5153
    %v6831 = vunpack.c.l.b16 %v5154
    %v6832 = vunpack.c.h.b16 %v5154
    %v6833 = vunpack.c.l.b16 %v5155
    %v6834 = vunpack.c.h.b16 %v5155
    %v6835 = vunpack.c.l.b16 %v5156
    %v6836 = vunpack.c.h.b16 %v5156
    %v6837 = vunpack.c.l.b16 %v5157
    %v6838 = vunpack.c.h.b16 %v5157
    %v6839 = vunpack.c.l.b16 %v5158
    %v6840 = vunpack.c.h.b16 %v5158
    %v6841 = vunpack.c.l.b16 %v5159
    %v6842 = vunpack.c.h.b16 %v5159
    %v6843 = vunpack.c.l.b16 %v5160
    %v6844 = vunpack.c.h.b16 %v5160
    %v6845 = vunpack.c.l.b16 %v5161
    %v6846 = vunpack.c.h.b16 %v5161
    %v6847 = vunpack.c.l.b16 %v5162
    %v6848 = vunpack.c.h.b16 %v5162
    %v6849 = vunpack.c.l.b16 %v5163
    %v6850 = vunpack.c.h.b16 %v5163
    %v6851 = vunpack.c.l.b16 %v5164
    %v6852 = vunpack.c.h.b16 %v5164
    %v6853 = vunpack.c.l.b16 %v5165
    %v6854 = vunpack.c.h.b16 %v5165
    %v6855 = vunpack.c.l.b16 %v5166
    %v6856 = vunpack.c.h.b16 %v5166
    %v6857 = vunpack.c.l.b16 %v5167
    %v6858 = vunpack.c.h.b16 %v5167
    %v6859 = vunpack.c.l.b16 %v5168
    %v6860 = vunpack.c.h.b16 %v5168
    %v6861 = vunpack.c.l.b16 %v5169
    %v6862 = vunpack.c.h.b16 %v5169
    %v6863 = vunpack.c.l.b16 %v5170
    %v6864 = vunpack.c.h.b16 %v5170
    %v6865 = vunpack.c.l.b16 %v5171
    %v6866 = vunpack.c.h.b16 %v5171
    %v6867 = vunpack.c.l.b16 %v5172
    %v6868 = vunpack.c.h.b16 %v5172
    %v6869 = vunpack.c.l.b16 %v5173
    %v6870 = vunpack.c.h.b16 %v5173
    %v6871 = vunpack.c.l.b16 %v5174
    %v6872 = vunpack.c.h.b16 %v5174
    %v6873 = vunpack.c.l.b16 %v5175
    %v6874 = vunpack.c.h.b16 %v5175
    %v6875 = vunpack.c.l.b16 %v5176
    %v6876 = vunpack.c.h.b16 %v5176
    %v6877 = vunpack.c.l.b16 %v5177
    %v6878 = vunpack.c.h.b16 %v5177
    %v6879 = vunpack.c.l.b16 %v5178
    %v6880 = vunpack.c.h.b16 %v5178
    %v6881 = vunpack.c.l.b16 %v5179
    %v6882 = vunpack.c.h.b16 %v5179
    %v6883 = vunpack.c.l.b16 %v5180
    %v6884 = vunpack.c.h.b16 %v5180
    %v6885 = vunpack.c.l.b16 %v5181
    %v6886 = vunpack.c.h.b16 %v5181
    %v6887 = vunpack.c.l.b16 %v5182
    %v6888 = vunpack.c.h.b16 %v5182
    %v6889 = vunpack.c.l.b16 %v5183
    %v6890 = vunpack.c.h.b16 %v5183
    %v6891 = vunpack.c.l.b16 %v5184
    %v6892 = vunpack.c.h.b16 %v5184
    %v6893 = vunpack.c.l.b16 %v5185
    %v6894 = vunpack.c.h.b16 %v5185
    %v6895 = vunpack.c.l.b16 %v5186
    %v6896 = vunpack.c.h.b16 %v5186
    %v6897 = vunpack.c.l.b16 %v5187
    %v6898 = vunpack.c.h.b16 %v5187
    %v6899 = vunpack.c.l.b16 %v5188
    %v6900 = vunpack.c.h.b16 %v5188
    %v6901 = vunpack.c.l.b16 %v5189
    %v6902 = vunpack.c.h.b16 %v5189
    %v6903 = vunpack.c.l.b16 %v5190
    %v6904 = vunpack.c.h.b16 %v5190
    %v6905 = vunpack.c.l.b16 %v5191
    %v6906 = vunpack.c.h.b16 %v5191
    %v6907 = vunpack.c.l.b16 %v5192
    %v6908 = vunpack.c.h.b16 %v5192
    %v6909 = vunpack.c.l.b16 %v5193
    %v6910 = vunpack.c.h.b16 %v5193
    %v6911 = vunpack.c.l.b16 %v5194
    %v6912 = vunpack.c.h.b16 %v5194
    %v6913 = vunpack.c.l.b16 %v5195
    %v6914 = vunpack.c.h.b16 %v5195
    %v6915 = vunpack.c.l.b16 %v5196
    %v6916 = vunpack.c.h.b16 %v5196
    %v6917 = vunpack.c.l.b16 %v5197
    %v6918 = vunpack.c.h.b16 %v5197
    %v6919 = vunpack.c.l.b16 %v5198
    %v6920 = vunpack.c.h.b16 %v5198
    %v6921 = vunpack.c.l.b16 %v5199
    %v6922 = vunpack.c.h.b16 %v5199
    %v6923 = vunpack.c.l.b16 %v5200
    %v6924 = vunpack.c.h.b16 %v5200
    %v6925 = vunpack.c.l.b16 %v5201
    %v6926 = vunpack.c.h.b16 %v5201
    %v6927 = vunpack.c.l.b16 %v5202
    %v6928 = vunpack.c.h.b16 %v5202
    %v6929 = vunpack.c.l.b16 %v5203
    %v6930 = vunpack.c.h.b16 %v5203
    %v6931 = vunpack.c.l.b16 %v5204
    %v6932 = vunpack.c.h.b16 %v5204
    %v6933 = vpack.c.b16 %v5793, %v5781
    %v6934 = vpack.c.b16 %v5794, %v5782
    %v6935 = vpack.c.b16 %v5795, %v5783
    %v6936 = vpack.c.b16 %v5796, %v5784
    %v6937 = vpack.c.b16 %v5797, %v5785
    %v6938 = vpack.c.b16 %v5798, %v5786
    %v6939 = vpack.c.b16 %v5799, %v5787
    %v6940 = vpack.c.b16 %v5800, %v5788
    %v6941 = vpack.c.b16 %v5801, %v5789
    %v6942 = vpack.c.b16 %v5802, %v5790
    %v6943 = vpack.c.b16 %v5803, %v5791
    %v6944 = vpack.c.b16 %v5804, %v5792
    %v6945 = vpack.c.b16 %v5817, %v5805
    %v6946 = vpack.c.b16 %v5818, %v5806
    %v6947 = vpack.c.b16 %v5819, %v5807
    %v6948 = vpack.c.b16 %v5820, %v5808
    %v6949 = vpack.c.b16 %v5821, %v5809
    %v6950 = vpack.c.b16 %v5822, %v5810
    %v6951 = vpack.c.b16 %v5823, %v5811
    %v6952 = vpack.c.b16 %v5824, %v5812
    %v6953 = vpack.c.b16 %v5825, %v5813
    %v6954 = vpack.c.b16 %v5826, %v5814
    %v6955 = vpack.c.b16 %v5827, %v5815
    %v6956 = vpack.c.b16 %v5828, %v5816
    %v6957 = vpack.c.b16 %v5841, %v5829
    %v6958 = vpack.c.b16 %v5842, %v5830
    %v6959 = vpack.c.b16 %v5843, %v5831
    %v6960 = vpack.c.b16 %v5844, %v5832
    %v6961 = vpack.c.b16 %v5845, %v5833
    %v6962 = vpack.c.b16 %v5846, %v5834
    %v6963 = vpack.c.b16 %v5847, %v5835
    %v6964 = vpack.c.b16 %v5848, %v5836
    %v6965 = vpack.c.b16 %v5849, %v5837
    %v6966 = vpack.c.b16 %v5850, %v5838
    %v6967 = vpack.c.b16 %v5851, %v5839
    %v6968 = vpack.c.b16 %v5852, %v5840
    %v6969 = vpack.c.b16 %v5865, %v5853
    %v6970 = vpack.c.b16 %v5866, %v5854
    %v6971 = vpack.c.b16 %v5867, %v5855
    %v6972 = vpack.c.b16 %v5868, %v5856
    %v6973 = vpack.c.b16 %v5869, %v5857
    %v6974 = vpack.c.b16 %v5870, %v5858
    %v6975 = vpack.c.b16 %v5871, %v5859
    %v6976 = vpack.c.b16 %v5872, %v5860
    %v6977 = vpack.c.b16 %v5873, %v5861
    %v6978 = vpack.c.b16 %v5874, %v5862
    %v6979 = vpack.c.b16 %v5875, %v5863
    %v6980 = vpack.c.b16 %v5876, %v5864
    %v6981 = vpack.c.b16 %v5889, %v5877
    %v6982 = vpack.c.b16 %v5890, %v5878
    %v6983 = vpack.c.b16 %v5891, %v5879
    %v6984 = vpack.c.b16 %v5892, %v5880
    %v6985 = vpack.c.b16 %v5893, %v5881
    %v6986 = vpack.c.b16 %v5894, %v5882
    %v6987 = vpack.c.b16 %v5895, %v5883
    %v6988 = vpack.c.b16 %v5896, %v5884
    %v6989 = vpack.c.b16 %v5897, %v5885
    %v6990 = vpack.c.b16 %v5898, %v5886
    %v6991 = vpack.c.b16 %v5899, %v5887
    %v6992 = vpack.c.b16 %v5900, %v5888
    %v6993 = vpack.c.b16 %v5913, %v5901
    %v6994 = vpack.c.b16 %v5914, %v5902
    %v6995 = vpack.c.b16 %v5915, %v5903
    %v6996 = vpack.c.b16 %v5916, %v5904
    %v6997 = vpack.c.b16 %v5917, %v5905
    %v6998 = vpack.c.b16 %v5918, %v5906
    %v6999 = vpack.c.b16 %v5919, %v5907
    %v7000 = vpack.c.b16 %v5920, %v5908
    %v7001 = vpack.c.b16 %v5921, %v5909
    %v7002 = vpack.c.b16 %v5922, %v5910
    %v7003 = vpack.c.b16 %v5923, %v5911
    %v7004 = vpack.c.b16 %v5924, %v5912
    %v7005 = vpack.c.b16 %v5937, %v5925
    %v7006 = vpack.c.b16 %v5938, %v5926
    %v7007 = vpack.c.b16 %v5939, %v5927
    %v7008 = vpack.c.b16 %v5940, %v5928
    %v7009 = vpack.c.b16 %v5941, %v5929
    %v7010 = vpack.c.b16 %v5942, %v5930
    %v7011 = vpack.c.b16 %v5943, %v5931
    %v7012 = vpack.c.b16 %v5944, %v5932
    %v7013 = vpack.c.b16 %v5945, %v5933
    %v7014 = vpack.c.b16 %v5946, %v5934
    %v7015 = vpack.c.b16 %v5947, %v5935
    %v7016 = vpack.c.b16 %v5948, %v5936
    %v7017 = vpack.c.b16 %v5961, %v5949
    %v7018 = vpack.c.b16 %v5962, %v5950
    %v7019 = vpack.c.b16 %v5963, %v5951
    %v7020 = vpack.c.b16 %v5964, %v5952
    %v7021 = vpack.c.b16 %v5965, %v5953
    %v7022 = vpack.c.b16 %v5966, %v5954
    %v7023 = vpack.c.b16 %v5967, %v5955
    %v7024 = vpack.c.b16 %v5968, %v5956
    %v7025 = vpack.c.b16 %v5969, %v5957
    %v7026 = vpack.c.b16 %v5970, %v5958
    %v7027 = vpack.c.b16 %v5971, %v5959
    %v7028 = vpack.c.b16 %v5972, %v5960
    %v7029 = vpack.c.b16 %v5985, %v5973
    %v7030 = vpack.c.b16 %v5986, %v5974
    %v7031 = vpack.c.b16 %v5987, %v5975
    %v7032 = vpack.c.b16 %v5988, %v5976
    %v7033 = vpack.c.b16 %v5989, %v5977
    %v7034 = vpack.c.b16 %v5990, %v5978
    %v7035 = vpack.c.b16 %v5991, %v5979
    %v7036 = vpack.c.b16 %v5992, %v5980
    %v7037 = vpack.c.b16 %v5993, %v5981
    %v7038 = vpack.c.b16 %v5994, %v5982
    %v7039 = vpack.c.b16 %v5995, %v5983
    %v7040 = vpack.c.b16 %v5996, %v5984
    %v7041 = vpack.c.b16 %v6009, %v5997
    %v7042 = vpack.c.b16 %v6010, %v5998
    %v7043 = vpack.c.b16 %v6011, %v5999
    %v7044 = vpack.c.b16 %v6012, %v6000
    %v7045 = vpack.c.b16 %v6013, %v6001
    %v7046 = vpack.c.b16 %v6014, %v6002
    %v7047 = vpack.c.b16 %v6015, %v6003
    %v7048 = vpack.c.b16 %v6016, %v6004
    %v7049 = vpack.c.b16 %v6017, %v6005
    %v7050 = vpack.c.b16 %v6018, %v6006
    %v7051 = vpack.c.b16 %v6019, %v6007
    %v7052 = vpack.c.b16 %v6020, %v6008
    %v7053 = vpack.c.b16 %v6033, %v6021
    %v7054 = vpack.c.b16 %v6034, %v6022
    %v7055 = vpack.c.b16 %v6035, %v6023
    %v7056 = vpack.c.b16 %v6036, %v6024
    %v7057 = vpack.c.b16 %v6037, %v6025
    %v7058 = vpack.c.b16 %v6038, %v6026
    %v7059 = vpack.c.b16 %v6039, %v6027
    %v7060 = vpack.c.b16 %v6040, %v6028
    %v7061 = vpack.c.b16 %v6041, %v6029
    %v7062 = vpack.c.b16 %v6042, %v6030
    %v7063 = vpack.c.b16 %v6043, %v6031
    %v7064 = vpack.c.b16 %v6044, %v6032
    %v7065 = vpack.c.b16 %v6057, %v6045
    %v7066 = vpack.c.b16 %v6058, %v6046
    %v7067 = vpack.c.b16 %v6059, %v6047
    %v7068 = vpack.c.b16 %v6060, %v6048
    %v7069 = vpack.c.b16 %v6061, %v6049
    %v7070 = vpack.c.b16 %v6062, %v6050
    %v7071 = vpack.c.b16 %v6063, %v6051
    %v7072 = vpack.c.b16 %v6064, %v6052
    %v7073 = vpack.c.b16 %v6065, %v6053
    %v7074 = vpack.c.b16 %v6066, %v6054
    %v7075 = vpack.c.b16 %v6067, %v6055
    %v7076 = vpack.c.b16 %v6068, %v6056
    %v7077 = vpack.c.b16 %v6081, %v6069
    %v7078 = vpack.c.b16 %v6082, %v6070
    %v7079 = vpack.c.b16 %v6083, %v6071
    %v7080 = vpack.c.b16 %v6084, %v6072
    %v7081 = vpack.c.b16 %v6085, %v6073
    %v7082 = vpack.c.b16 %v6086, %v6074
    %v7083 = vpack.c.b16 %v6087, %v6075
    %v7084 = vpack.c.b16 %v6088, %v6076
    %v7085 = vpack.c.b16 %v6089, %v6077
    %v7086 = vpack.c.b16 %v6090, %v6078
    %v7087 = vpack.c.b16 %v6091, %v6079
    %v7088 = vpack.c.b16 %v6092, %v6080
    %v7089 = vpack.c.b16 %v6105, %v6093
    %v7090 = vpack.c.b16 %v6106, %v6094
    %v7091 = vpack.c.b16 %v6107, %v6095
    %v7092 = vpack.c.b16 %v6108, %v6096
    %v7093 = vpack.c.b16 %v6109, %v6097
    %v7094 = vpack.c.b16 %v6110, %v6098
    %v7095 = vpack.c.b16 %v6111, %v6099
    %v7096 = vpack.c.b16 %v6112, %v6100
    %v7097 = vpack.c.b16 %v6113, %v6101
    %v7098 = vpack.c.b16 %v6114, %v6102
    %v7099 = vpack.c.b16 %v6115, %v6103
    %v7100 = vpack.c.b16 %v6116, %v6104
    %v7101 = vpack.c.b16 %v6129, %v6117
    %v7102 = vpack.c.b16 %v6130, %v6118
    %v7103 = vpack.c.b16 %v6131, %v6119
    %v7104 = vpack.c.b16 %v6132, %v6120
    %v7105 = vpack.c.b16 %v6133, %v6121
    %v7106 = vpack.c.b16 %v6134, %v6122
    %v7107 = vpack.c.b16 %v6135, %v6123
    %v7108 = vpack.c.b16 %v6136, %v6124
    %v7109 = vpack.c.b16 %v6137, %v6125
    %v7110 = vpack.c.b16 %v6138, %v6126
    %v7111 = vpack.c.b16 %v6139, %v6127
    %v7112 = vpack.c.b16 %v6140, %v6128
    %v7113 = vpack.c.b16 %v6153, %v6141
    %v7114 = vpack.c.b16 %v6154, %v6142
    %v7115 = vpack.c.b16 %v6155, %v6143
    %v7116 = vpack.c.b16 %v6156, %v6144
    %v7117 = vpack.c.b16 %v6157, %v6145
    %v7118 = vpack.c.b16 %v6158, %v6146
    %v7119 = vpack.c.b16 %v6159, %v6147
    %v7120 = vpack.c.b16 %v6160, %v6148
    %v7121 = vpack.c.b16 %v6161, %v6149
    %v7122 = vpack.c.b16 %v6162, %v6150
    %v7123 = vpack.c.b16 %v6163, %v6151
    %v7124 = vpack.c.b16 %v6164, %v6152
    %v7125 = vpack.c.b16 %v6177, %v6165
    %v7126 = vpack.c.b16 %v6178, %v6166
    %v7127 = vpack.c.b16 %v6179, %v6167
    %v7128 = vpack.c.b16 %v6180, %v6168
    %v7129 = vpack.c.b16 %v6181, %v6169
    %v7130 = vpack.c.b16 %v6182, %v6170
    %v7131 = vpack.c.b16 %v6183, %v6171
    %v7132 = vpack.c.b16 %v6184, %v6172
    %v7133 = vpack.c.b16 %v6185, %v6173
    %v7134 = vpack.c.b16 %v6186, %v6174
    %v7135 = vpack.c.b16 %v6187, %v6175
    %v7136 = vpack.c.b16 %v6188, %v6176
    %v7137 = vpack.c.b16 %v6201, %v6189
    %v7138 = vpack.c.b16 %v6202, %v6190
    %v7139 = vpack.c.b16 %v6203, %v6191
    %v7140 = vpack.c.b16 %v6204, %v6192
    %v7141 = vpack.c.b16 %v6205, %v6193
    %v7142 = vpack.c.b16 %v6206, %v6194
    %v7143 = vpack.c.b16 %v6207, %v6195
    %v7144 = vpack.c.b16 %v6208, %v6196
    %v7145 = vpack.c.b16 %v6209, %v6197
    %v7146 = vpack.c.b16 %v6210, %v6198
    %v7147 = vpack.c.b16 %v6211, %v6199
    %v7148 = vpack.c.b16 %v6212, %v6200
    %v7149 = vpack.c.b16 %v6225, %v6213
    %v7150 = vpack.c.b16 %v6226, %v6214
    %v7151 = vpack.c.b16 %v6227, %v6215
    %v7152 = vpack.c.b16 %v6228, %v6216
    %v7153 = vpack.c.b16 %v6229, %v6217
    %v7154 = vpack.c.b16 %v6230, %v6218
    %v7155 = vpack.c.b16 %v6231, %v6219
    %v7156 = vpack.c.b16 %v6232, %v6220
    %v7157 = vpack.c.b16 %v6233, %v6221
    %v7158 = vpack.c.b16 %v6234, %v6222
    %v7159 = vpack.c.b16 %v6235, %v6223
    %v7160 = vpack.c.b16 %v6236, %v6224
    %v7161 = vpack.c.b16 %v6249, %v6237
    %v7162 = vpack.c.b16 %v6250, %v6238
    %v7163 = vpack.c.b16 %v6251, %v6239
    %v7164 = vpack.c.b16 %v6252, %v6240
    %v7165 = vpack.c.b16 %v6253, %v6241
    %v7166 = vpack.c.b16 %v6254, %v6242
    %v7167 = vpack.c.b16 %v6255, %v6243
    %v7168 = vpack.c.b16 %v6256, %v6244
    %v7169 = vpack.c.b16 %v6257, %v6245
    %v7170 = vpack.c.b16 %v6258, %v6246
    %v7171 = vpack.c.b16 %v6259, %v6247
    %v7172 = vpack.c.b16 %v6260, %v6248
    %v7173 = vpack.c.b16 %v6273, %v6261
    %v7174 = vpack.c.b16 %v6274, %v6262
    %v7175 = vpack.c.b16 %v6275, %v6263
    %v7176 = vpack.c.b16 %v6276, %v6264
    %v7177 = vpack.c.b16 %v6277, %v6265
    %v7178 = vpack.c.b16 %v6278, %v6266
    %v7179 = vpack.c.b16 %v6279, %v6267
    %v7180 = vpack.c.b16 %v6280, %v6268
    %v7181 = vpack.c.b16 %v6281, %v6269
    %v7182 = vpack.c.b16 %v6282, %v6270
    %v7183 = vpack.c.b16 %v6283, %v6271
    %v7184 = vpack.c.b16 %v6284, %v6272
    %v7185 = vpack.c.b16 %v6297, %v6285
    %v7186 = vpack.c.b16 %v6298, %v6286
    %v7187 = vpack.c.b16 %v6299, %v6287
    %v7188 = vpack.c.b16 %v6300, %v6288
    %v7189 = vpack.c.b16 %v6301, %v6289
    %v7190 = vpack.c.b16 %v6302, %v6290
    %v7191 = vpack.c.b16 %v6303, %v6291
    %v7192 = vpack.c.b16 %v6304, %v6292
    %v7193 = vpack.c.b16 %v6305, %v6293
    %v7194 = vpack.c.b16 %v6306, %v6294
    %v7195 = vpack.c.b16 %v6307, %v6295
    %v7196 = vpack.c.b16 %v6308, %v6296
    %v7197 = vpack.c.b16 %v6321, %v6309
    %v7198 = vpack.c.b16 %v6322, %v6310
    %v7199 = vpack.c.b16 %v6323, %v6311
    %v7200 = vpack.c.b16 %v6324, %v6312
    %v7201 = vpack.c.b16 %v6325, %v6313
    %v7202 = vpack.c.b16 %v6326, %v6314
    %v7203 = vpack.c.b16 %v6327, %v6315
    %v7204 = vpack.c.b16 %v6328, %v6316
    %v7205 = vpack.c.b16 %v6329, %v6317
    %v7206 = vpack.c.b16 %v6330, %v6318
    %v7207 = vpack.c.b16 %v6331, %v6319
    %v7208 = vpack.c.b16 %v6332, %v6320
    %v7209 = vpack.c.b16 %v6345, %v6333
    %v7210 = vpack.c.b16 %v6346, %v6334
    %v7211 = vpack.c.b16 %v6347, %v6335
    %v7212 = vpack.c.b16 %v6348, %v6336
    %v7213 = vpack.c.b16 %v6349, %v6337
    %v7214 = vpack.c.b16 %v6350, %v6338
    %v7215 = vpack.c.b16 %v6351, %v6339
    %v7216 = vpack.c.b16 %v6352, %v6340
    %v7217 = vpack.c.b16 %v6353, %v6341
    %v7218 = vpack.c.b16 %v6354, %v6342
    %v7219 = vpack.c.b16 %v6355, %v6343
    %v7220 = vpack.c.b16 %v6356, %v6344
    %v7221 = vpack.c.b16 %v6369, %v6357
    %v7222 = vpack.c.b16 %v6370, %v6358
    %v7223 = vpack.c.b16 %v6371, %v6359
    %v7224 = vpack.c.b16 %v6372, %v6360
    %v7225 = vpack.c.b16 %v6373, %v6361
    %v7226 = vpack.c.b16 %v6374, %v6362
    %v7227 = vpack.c.b16 %v6375, %v6363
    %v7228 = vpack.c.b16 %v6376, %v6364
    %v7229 = vpack.c.b16 %v6377, %v6365
    %v7230 = vpack.c.b16 %v6378, %v6366
    %v7231 = vpack.c.b16 %v6379, %v6367
    %v7232 = vpack.c.b16 %v6380, %v6368
    %v7233 = vpack.c.b16 %v6393, %v6381
    %v7234 = vpack.c.b16 %v6394, %v6382
    %v7235 = vpack.c.b16 %v6395, %v6383
    %v7236 = vpack.c.b16 %v6396, %v6384
    %v7237 = vpack.c.b16 %v6397, %v6385
    %v7238 = vpack.c.b16 %v6398, %v6386
    %v7239 = vpack.c.b16 %v6399, %v6387
    %v7240 = vpack.c.b16 %v6400, %v6388
    %v7241 = vpack.c.b16 %v6401, %v6389
    %v7242 = vpack.c.b16 %v6402, %v6390
    %v7243 = vpack.c.b16 %v6403, %v6391
    %v7244 = vpack.c.b16 %v6404, %v6392
    %v7245 = vpack.c.b16 %v6417, %v6405
    %v7246 = vpack.c.b16 %v6418, %v6406
    %v7247 = vpack.c.b16 %v6419, %v6407
    %v7248 = vpack.c.b16 %v6420, %v6408
    %v7249 = vpack.c.b16 %v6421, %v6409
    %v7250 = vpack.c.b16 %v6422, %v6410
    %v7251 = vpack.c.b16 %v6423, %v6411
    %v7252 = vpack.c.b16 %v6424, %v6412
    %v7253 = vpack.c.b16 %v6425, %v6413
    %v7254 = vpack.c.b16 %v6426, %v6414
    %v7255 = vpack.c.b16 %v6427, %v6415
    %v7256 = vpack.c.b16 %v6428, %v6416
    %v7257 = vpack.c.b16 %v6441, %v6429
    %v7258 = vpack.c.b16 %v6442, %v6430
    %v7259 = vpack.c.b16 %v6443, %v6431
    %v7260 = vpack.c.b16 %v6444, %v6432
    %v7261 = vpack.c.b16 %v6445, %v6433
    %v7262 = vpack.c.b16 %v6446, %v6434
    %v7263 = vpack.c.b16 %v6447, %v6435
    %v7264 = vpack.c.b16 %v6448, %v6436
    %v7265 = vpack.c.b16 %v6449, %v6437
    %v7266 = vpack.c.b16 %v6450, %v6438
    %v7267 = vpack.c.b16 %v6451, %v6439
    %v7268 = vpack.c.b16 %v6452, %v6440
    %v7269 = vpack.c.b16 %v6465, %v6453
    %v7270 = vpack.c.b16 %v6466, %v6454
    %v7271 = vpack.c.b16 %v6467, %v6455
    %v7272 = vpack.c.b16 %v6468, %v6456
    %v7273 = vpack.c.b16 %v6469, %v6457
    %v7274 = vpack.c.b16 %v6470, %v6458
    %v7275 = vpack.c.b16 %v6471, %v6459
    %v7276 = vpack.c.b16 %v6472, %v6460
    %v7277 = vpack.c.b16 %v6473, %v6461
    %v7278 = vpack.c.b16 %v6474, %v6462
    %v7279 = vpack.c.b16 %v6475, %v6463
    %v7280 = vpack.c.b16 %v6476, %v6464
    %v7281 = vpack.c.b16 %v6489, %v6477
    %v7282 = vpack.c.b16 %v6490, %v6478
    %v7283 = vpack.c.b16 %v6491, %v6479
    %v7284 = vpack.c.b16 %v6492, %v6480
    %v7285 = vpack.c.b16 %v6493, %v6481
    %v7286 = vpack.c.b16 %v6494, %v6482
    %v7287 = vpack.c.b16 %v6495, %v6483
    %v7288 = vpack.c.b16 %v6496, %v6484
    %v7289 = vpack.c.b16 %v6497, %v6485
    %v7290 = vpack.c.b16 %v6498, %v6486
    %v7291 = vpack.c.b16 %v6499, %v6487
    %v7292 = vpack.c.b16 %v6500, %v6488
    %v7293 = vpack.c.b16 %v6513, %v6501
    %v7294 = vpack.c.b16 %v6514, %v6502
    %v7295 = vpack.c.b16 %v6515, %v6503
    %v7296 = vpack.c.b16 %v6516, %v6504
    %v7297 = vpack.c.b16 %v6517, %v6505
    %v7298 = vpack.c.b16 %v6518, %v6506
    %v7299 = vpack.c.b16 %v6519, %v6507
    %v7300 = vpack.c.b16 %v6520, %v6508
    %v7301 = vpack.c.b16 %v6521, %v6509
    %v7302 = vpack.c.b16 %v6522, %v6510
    %v7303 = vpack.c.b16 %v6523, %v6511
    %v7304 = vpack.c.b16 %v6524, %v6512
    %v7305 = vpack.c.b16 %v6537, %v6525
    %v7306 = vpack.c.b16 %v6538, %v6526
    %v7307 = vpack.c.b16 %v6539, %v6527
    %v7308 = vpack.c.b16 %v6540, %v6528
    %v7309 = vpack.c.b16 %v6541, %v6529
    %v7310 = vpack.c.b16 %v6542, %v6530
    %v7311 = vpack.c.b16 %v6543, %v6531
    %v7312 = vpack.c.b16 %v6544, %v6532
    %v7313 = vpack.c.b16 %v6545, %v6533
    %v7314 = vpack.c.b16 %v6546, %v6534
    %v7315 = vpack.c.b16 %v6547, %v6535
    %v7316 = vpack.c.b16 %v6548, %v6536
    %v7317 = vpack.c.b16 %v6561, %v6549
    %v7318 = vpack.c.b16 %v6562, %v6550
    %v7319 = vpack.c.b16 %v6563, %v6551
    %v7320 = vpack.c.b16 %v6564, %v6552
    %v7321 = vpack.c.b16 %v6565, %v6553
    %v7322 = vpack.c.b16 %v6566, %v6554
    %v7323 = vpack.c.b16 %v6567, %v6555
    %v7324 = vpack.c.b16 %v6568, %v6556
    %v7325 = vpack.c.b16 %v6569, %v6557
    %v7326 = vpack.c.b16 %v6570, %v6558
    %v7327 = vpack.c.b16 %v6571, %v6559
    %v7328 = vpack.c.b16 %v6572, %v6560
    %v7329 = vpack.c.b16 %v6585, %v6573
    %v7330 = vpack.c.b16 %v6586, %v6574
    %v7331 = vpack.c.b16 %v6587, %v6575
    %v7332 = vpack.c.b16 %v6588, %v6576
    %v7333 = vpack.c.b16 %v6589, %v6577
    %v7334 = vpack.c.b16 %v6590, %v6578
    %v7335 = vpack.c.b16 %v6591, %v6579
    %v7336 = vpack.c.b16 %v6592, %v6580
    %v7337 = vpack.c.b16 %v6593, %v6581
    %v7338 = vpack.c.b16 %v6594, %v6582
    %v7339 = vpack.c.b16 %v6595, %v6583
    %v7340 = vpack.c.b16 %v6596, %v6584
    %v7341 = vpack.c.b16 %v6609, %v6597
    %v7342 = vpack.c.b16 %v6610, %v6598
    %v7343 = vpack.c.b16 %v6611, %v6599
    %v7344 = vpack.c.b16 %v6612, %v6600
    %v7345 = vpack.c.b16 %v6613, %v6601
    %v7346 = vpack.c.b16 %v6614, %v6602
    %v7347 = vpack.c.b16 %v6615, %v6603
    %v7348 = vpack.c.b16 %v6616, %v6604
    %v7349 = vpack.c.b16 %v6617, %v6605
    %v7350 = vpack.c.b16 %v6618, %v6606
    %v7351 = vpack.c.b16 %v6619, %v6607
    %v7352 = vpack.c.b16 %v6620, %v6608
    %v7353 = vpack.c.b16 %v6633, %v6621
    %v7354 = vpack.c.b16 %v6634, %v6622
    %v7355 = vpack.c.b16 %v6635, %v6623
    %v7356 = vpack.c.b16 %v6636, %v6624
    %v7357 = vpack.c.b16 %v6637, %v6625
    %v7358 = vpack.c.b16 %v6638, %v6626
    %v7359 = vpack.c.b16 %v6639, %v6627
    %v7360 = vpack.c.b16 %v6640, %v6628
    %v7361 = vpack.c.b16 %v6641, %v6629
    %v7362 = vpack.c.b16 %v6642, %v6630
    %v7363 = vpack.c.b16 %v6643, %v6631
    %v7364 = vpack.c.b16 %v6644, %v6632
    %v7365 = vpack.c.b16 %v6657, %v6645
    %v7366 = vpack.c.b16 %v6658, %v6646
    %v7367 = vpack.c.b16 %v6659, %v6647
    %v7368 = vpack.c.b16 %v6660, %v6648
    %v7369 = vpack.c.b16 %v6661, %v6649
    %v7370 = vpack.c.b16 %v6662, %v6650
    %v7371 = vpack.c.b16 %v6663, %v6651
    %v7372 = vpack.c.b16 %v6664, %v6652
    %v7373 = vpack.c.b16 %v6665, %v6653
    %v7374 = vpack.c.b16 %v6666, %v6654
    %v7375 = vpack.c.b16 %v6667, %v6655
    %v7376 = vpack.c.b16 %v6668, %v6656
    %v7377 = vpack.c.b16 %v6681, %v6669
    %v7378 = vpack.c.b16 %v6682, %v6670
    %v7379 = vpack.c.b16 %v6683, %v6671
    %v7380 = vpack.c.b16 %v6684, %v6672
    %v7381 = vpack.c.b16 %v6685, %v6673
    %v7382 = vpack.c.b16 %v6686, %v6674
    %v7383 = vpack.c.b16 %v6687, %v6675
    %v7384 = vpack.c.b16 %v6688, %v6676
    %v7385 = vpack.c.b16 %v6689, %v6677
    %v7386 = vpack.c.b16 %v6690, %v6678
    %v7387 = vpack.c.b16 %v6691, %v6679
    %v7388 = vpack.c.b16 %v6692, %v6680
    %v7389 = vpack.c.b16 %v6705, %v6693
    %v7390 = vpack.c.b16 %v6706, %v6694
    %v7391 = vpack.c.b16 %v6707, %v6695
    %v7392 = vpack.c.b16 %v6708, %v6696
    %v7393 = vpack.c.b16 %v6709, %v6697
    %v7394 = vpack.c.b16 %v6710, %v6698
    %v7395 = vpack.c.b16 %v6711, %v6699
    %v7396 = vpack.c.b16 %v6712, %v6700
    %v7397 = vpack.c.b16 %v6713, %v6701
    %v7398 = vpack.c.b16 %v6714, %v6702
    %v7399 = vpack.c.b16 %v6715, %v6703
    %v7400 = vpack.c.b16 %v6716, %v6704
    %v7401 = vpack.c.b16 %v6729, %v6717
    %v7402 = vpack.c.b16 %v6730, %v6718
    %v7403 = vpack.c.b16 %v6731, %v6719
    %v7404 = vpack.c.b16 %v6732, %v6720
    %v7405 = vpack.c.b16 %v6733, %v6721
    %v7406 = vpack.c.b16 %v6734, %v6722
    %v7407 = vpack.c.b16 %v6735, %v6723
    %v7408 = vpack.c.b16 %v6736, %v6724
    %v7409 = vpack.c.b16 %v6737, %v6725
    %v7410 = vpack.c.b16 %v6738, %v6726
    %v7411 = vpack.c.b16 %v6739, %v6727
    %v7412 = vpack.c.b16 %v6740, %v6728
    %v7413 = vpack.c.b16 %v6753, %v6741
    %v7414 = vpack.c.b16 %v6754, %v6742
    %v7415 = vpack.c.b16 %v6755, %v6743
    %v7416 = vpack.c.b16 %v6756, %v6744
    %v7417 = vpack.c.b16 %v6757, %v6745
    %v7418 = vpack.c.b16 %v6758, %v6746
    %v7419 = vpack.c.b16 %v6759, %v6747
    %v7420 = vpack.c.b16 %v6760, %v6748
    %v7421 = vpack.c.b16 %v6761, %v6749
    %v7422 = vpack.c.b16 %v6762, %v6750
    %v7423 = vpack.c.b16 %v6763, %v6751
    %v7424 = vpack.c.b16 %v6764, %v6752
    %v7425 = vpack.c.b16 %v6777, %v6765
    %v7426 = vpack.c.b16 %v6778, %v6766
    %v7427 = vpack.c.b16 %v6779, %v6767
    %v7428 = vpack.c.b16 %v6780, %v6768
    %v7429 = vpack.c.b16 %v6781, %v6769
    %v7430 = vpack.c.b16 %v6782, %v6770
    %v7431 = vpack.c.b16 %v6783, %v6771
    %v7432 = vpack.c.b16 %v6784, %v6772
    %v7433 = vpack.c.b16 %v6785, %v6773
    %v7434 = vpack.c.b16 %v6786, %v6774
    %v7435 = vpack.c.b16 %v6787, %v6775
    %v7436 = vpack.c.b16 %v6788, %v6776
    %v7437 = vpack.c.b16 %v6801, %v6789
    %v7438 = vpack.c.b16 %v6802, %v6790
    %v7439 = vpack.c.b16 %v6803, %v6791
    %v7440 = vpack.c.b16 %v6804, %v6792
    %v7441 = vpack.c.b16 %v6805, %v6793
    %v7442 = vpack.c.b16 %v6806, %v6794
    %v7443 = vpack.c.b16 %v6807, %v6795
    %v7444 = vpack.c.b16 %v6808, %v6796
    %v7445 = vpack.c.b16 %v6809, %v6797
    %v7446 = vpack.c.b16 %v6810, %v6798
    %v7447 = vpack.c.b16 %v6811, %v6799
    %v7448 = vpack.c.b16 %v6812, %v6800
    %v7449 = vpack.c.b16 %v6825, %v6813
    %v7450 = vpack.c.b16 %v6826, %v6814
    %v7451 = vpack.c.b16 %v6827, %v6815
    %v7452 = vpack.c.b16 %v6828, %v6816
    %v7453 = vpack.c.b16 %v6829, %v6817
    %v7454 = vpack.c.b16 %v6830, %v6818
    %v7455 = vpack.c.b16 %v6831, %v6819
    %v7456 = vpack.c.b16 %v6832, %v6820
    %v7457 = vpack.c.b16 %v6833, %v6821
    %v7458 = vpack.c.b16 %v6834, %v6822
    %v7459 = vpack.c.b16 %v6835, %v6823
    %v7460 = vpack.c.b16 %v6836, %v6824
    %v7461 = vpack.c.b16 %v6849, %v6837
    %v7462 = vpack.c.b16 %v6850, %v6838
    %v7463 = vpack.c.b16 %v6851, %v6839
    %v7464 = vpack.c.b16 %v6852, %v6840
    %v7465 = vpack.c.b16 %v6853, %v6841
    %v7466 = vpack.c.b16 %v6854, %v6842
    %v7467 = vpack.c.b16 %v6855, %v6843
    %v7468 = vpack.c.b16 %v6856, %v6844
    %v7469 = vpack.c.b16 %v6857, %v6845
    %v7470 = vpack.c.b16 %v6858, %v6846
    %v7471 = vpack.c.b16 %v6859, %v6847
    %v7472 = vpack.c.b16 %v6860, %v6848
    %v7473 = vpack.c.b16 %v6873, %v6861
    %v7474 = vpack.c.b16 %v6874, %v6862
    %v7475 = vpack.c.b16 %v6875, %v6863
    %v7476 = vpack.c.b16 %v6876, %v6864
    %v7477 = vpack.c.b16 %v6877, %v6865
    %v7478 = vpack.c.b16 %v6878, %v6866
    %v7479 = vpack.c.b16 %v6879, %v6867
    %v7480 = vpack.c.b16 %v6880, %v6868
    %v7481 = vpack.c.b16 %v6881, %v6869
    %v7482 = vpack.c.b16 %v6882, %v6870
    %v7483 = vpack.c.b16 %v6883, %v6871
    %v7484 = vpack.c.b16 %v6884, %v6872
    %v7485 = vpack.c.b16 %v6897, %v6885
    %v7486 = vpack.c.b16 %v6898, %v6886
    %v7487 = vpack.c.b16 %v6899, %v6887
    %v7488 = vpack.c.b16 %v6900, %v6888
    %v7489 = vpack.c.b16 %v6901, %v6889
    %v7490 = vpack.c.b16 %v6902, %v6890
    %v7491 = vpack.c.b16 %v6903, %v6891
    %v7492 = vpack.c.b16 %v6904, %v6892
    %v7493 = vpack.c.b16 %v6905, %v6893
    %v7494 = vpack.c.b16 %v6906, %v6894
    %v7495 = vpack.c.b16 %v6907, %v6895
    %v7496 = vpack.c.b16 %v6908, %v6896
    %v7497 = vpack.c.b16 %v6921, %v6909
    %v7498 = vpack.c.b16 %v6922, %v6910
    %v7499 = vpack.c.b16 %v6923, %v6911
    %v7500 = vpack.c.b16 %v6924, %v6912
    %v7501 = vpack.c.b16 %v6925, %v6913
    %v7502 = vpack.c.b16 %v6926, %v6914
    %v7503 = vpack.c.b16 %v6927, %v6915
    %v7504 = vpack.c.b16 %v6928, %v6916
    %v7505 = vpack.c.b16 %v6929, %v6917
    %v7506 = vpack.c.b16 %v6930, %v6918
    %v7507 = vpack.c.b16 %v6931, %v6919
    %v7508 = vpack.c.b16 %v6932, %v6920
    %8085 = vmatprep.subr.bf16.mxu0 %v6934
    %8086 = vmatpush1.bf16.msra.mxu0 %v6933
    %8087 = vmatprep.subr.bf16.mxu0 %v6946
    %8088 = vmatpush1.bf16.msra.mxu0 %v6945
    %8089 = vmatprep.subr.bf16.mxu0 %v6958
    %8090 = vmatpush1.bf16.msra.mxu0 %v6957
    %8091 = vmatprep.subr.bf16.mxu0 %v6970
    %8092 = vmatpush1.bf16.msra.mxu0 %v6969
    %8093 = vmatprep.subr.bf16.mxu0 %v6982
    %8094 = vmatpush1.bf16.msra.mxu0 %v6981
    %8095 = vmatprep.subr.bf16.mxu0 %v6994
    %8096 = vmatpush1.bf16.msra.mxu0 %v6993
    %8097 = vmatprep.subr.bf16.mxu0 %v7006
    %8098 = vmatpush1.bf16.msra.mxu0 %v7005
    %8099 = vmatprep.subr.bf16.mxu0 %v7018
    %8100 = vmatpush1.bf16.msra.mxu0 %v7017
    %8101 = vmatprep.subr.bf16.mxu0 %v7030
    %8102 = vmatpush1.bf16.msra.mxu0 %v7029
    %8103 = vmatprep.subr.bf16.mxu0 %v7042
    %8104 = vmatpush1.bf16.msra.mxu0 %v7041
    %8105 = vmatprep.subr.bf16.mxu0 %v7054
    %8106 = vmatpush1.bf16.msra.mxu0 %v7053
    %8107 = vmatprep.subr.bf16.mxu0 %v7066
    %8108 = vmatpush1.bf16.msra.mxu0 %v7065
    %8109 = vmatprep.subr.bf16.mxu0 %v7078
    %8110 = vmatpush1.bf16.msra.mxu0 %v7077
    %8111 = vmatprep.subr.bf16.mxu0 %v7090
    %8112 = vmatpush1.bf16.msra.mxu0 %v7089
    %8113 = vmatprep.subr.bf16.mxu0 %v7102
    %8114 = vmatpush1.bf16.msra.mxu0 %v7101
    %8115 = vmatprep.subr.bf16.mxu0 %v7114
    %8116 = vmatpush1.bf16.msra.mxu0 %v7113
    %8117 = vmatprep.mubr.bf16.mxu0 %v4624
    %8118 = vmatmul.mubr.bf16.gmra.mrb[0].mxu0 %v4623
    %v8119 = vpop.f32.mrb[0].mxu0
    %v8120 = vadd.f32 0.0, %v8119
    %v8121 = vpop.f32.mrb[0].mxu0
    %v8122 = vadd.f32 0.0, %v8121
    %v8123 = vpop.f32.mrb[0].mxu0
    %v8124 = vpop.f32.mrb[0].mxu0
    %8125 = vdwg.mxu0
    %8126 = vmatprep.subr.bf16.mxu0 %v7126
    %8127 = vmatpush1.bf16.msra.mxu0 %v7125
    %8128 = vmatprep.subr.bf16.mxu0 %v7138
    %8129 = vmatpush1.bf16.msra.mxu0 %v7137
    %8130 = vmatprep.subr.bf16.mxu0 %v7150
    %8131 = vmatpush1.bf16.msra.mxu0 %v7149
    %8132 = vmatprep.subr.bf16.mxu0 %v7162
    %8133 = vmatpush1.bf16.msra.mxu0 %v7161
    %8134 = vmatprep.subr.bf16.mxu0 %v7174
    %8135 = vmatpush1.bf16.msra.mxu0 %v7173
    %8136 = vmatprep.subr.bf16.mxu0 %v7186
    %8137 = vmatpush1.bf16.msra.mxu0 %v7185
    %8138 = vmatprep.subr.bf16.mxu0 %v7198
    %8139 = vmatpush1.bf16.msra.mxu0 %v7197
    %8140 = vmatprep.subr.bf16.mxu0 %v7210
    %8141 = vmatpush1.bf16.msra.mxu0 %v7209
    %8142 = vmatprep.subr.bf16.mxu0 %v7222
    %8143 = vmatpush1.bf16.msra.mxu0 %v7221
    %8144 = vmatprep.subr.bf16.mxu0 %v7234
    %8145 = vmatpush1.bf16.msra.mxu0 %v7233
    %8146 = vmatprep.subr.bf16.mxu0 %v7246
    %8147 = vmatpush1.bf16.msra.mxu0 %v7245
    %8148 = vmatprep.subr.bf16.mxu0 %v7258
    %8149 = vmatpush1.bf16.msra.mxu0 %v7257
    %8150 = vmatprep.subr.bf16.mxu0 %v7270
    %8151 = vmatpush1.bf16.msra.mxu0 %v7269
    %8152 = vmatprep.subr.bf16.mxu0 %v7282
    %8153 = vmatpush1.bf16.msra.mxu0 %v7281
    %8154 = vmatprep.subr.bf16.mxu0 %v7294
    %8155 = vmatpush1.bf16.msra.mxu0 %v7293
    %8156 = vmatprep.subr.bf16.mxu0 %v7306
    %8157 = vmatpush1.bf16.msra.mxu0 %v7305
    %8158 = vmatprep.mubr.bf16.mxu0 %v4626
    %8159 = vmatmul.mubr.bf16.gmra.mrb[0].mxu0 %v4625
    %v8160 = vpop.f32.mrb[0].mxu0
    %v8161 = vadd.f32 %v8120, %v8160
    %v8162 = vpop.f32.mrb[0].mxu0
    %v8163 = vadd.f32 %v8122, %v8162
    %v8164 = vpop.f32.mrb[0].mxu0
    %v8165 = vpop.f32.mrb[0].mxu0
    %8166 = vdwg.mxu0
    %8167 = vmatprep.subr.bf16.mxu0 %v7318
    %8168 = vmatpush1.bf16.msra.mxu0 %v7317
    %8169 = vmatprep.subr.bf16.mxu0 %v7330
    %8170 = vmatpush1.bf16.msra.mxu0 %v7329
    %8171 = vmatprep.subr.bf16.mxu0 %v7342
    %8172 = vmatpush1.bf16.msra.mxu0 %v7341
    %8173 = vmatprep.subr.bf16.mxu0 %v7354
    %8174 = vmatpush1.bf16.msra.mxu0 %v7353
    %8175 = vmatprep.subr.bf16.mxu0 %v7366
    %8176 = vmatpush1.bf16.msra.mxu0 %v7365
    %8177 = vmatprep.subr.bf16.mxu0 %v7378
    %8178 = vmatpush1.bf16.msra.mxu0 %v7377
    %8179 = vmatprep.subr.bf16.mxu0 %v7390
    %8180 = vmatpush1.bf16.msra.mxu0 %v7389
    %8181 = vmatprep.subr.bf16.mxu0 %v7402
    %8182 = vmatpush1.bf16.msra.mxu0 %v7401
    %8183 = vmatprep.subr.bf16.mxu0 %v7414
    %8184 = vmatpush1.bf16.msra.mxu0 %v7413
    %8185 = vmatprep.subr.bf16.mxu0 %v7426
    %8186 = vmatpush1.bf16.msra.mxu0 %v7425
    %8187 = vmatprep.subr.bf16.mxu0 %v7438
    %8188 = vmatpush1.bf16.msra.mxu0 %v7437
    %8189 = vmatprep.subr.bf16.mxu0 %v7450
    %8190 = vmatpush1.bf16.msra.mxu0 %v7449
    %8191 = vmatprep.subr.bf16.mxu0 %v7462
    %8192 = vmatpush1.bf16.msra.mxu0 %v7461
    %8193 = vmatprep.subr.bf16.mxu0 %v7474
    %8194 = vmatpush1.bf16.msra.mxu0 %v7473
    %8195 = vmatprep.subr.bf16.mxu0 %v7486
    %8196 = vmatpush1.bf16.msra.mxu0 %v7485
    %8197 = vmatprep.subr.bf16.mxu0 %v7498
    %8198 = vmatpush1.bf16.msra.mxu0 %v7497
    %8199 = vmatprep.mubr.bf16.mxu0 %v4628
    %8200 = vmatmul.mubr.bf16.gmra.mrb[0].mxu0 %v4627
    %v8201 = vpop.f32.mrb[0].mxu0
    %v8202 = vadd.f32 %v8161, %v8201
    %v8203 = vpop.f32.mrb[0].mxu0
    %v8204 = vadd.f32 %v8163, %v8203
    %v8205 = vpop.f32.mrb[0].mxu0
    %v8206 = vpop.f32.mrb[0].mxu0
    %8207 = vdwg.mxu0
    %8208 = vmatprep.subr.bf16.mxu0 %v6936
    %8209 = vmatpush1.bf16.msra.mxu0 %v6935
    %8210 = vmatprep.subr.bf16.mxu0 %v6948
    %8211 = vmatpush1.bf16.msra.mxu0 %v6947
    %8212 = vmatprep.subr.bf16.mxu0 %v6960
    %8213 = vmatpush1.bf16.msra.mxu0 %v6959
    %8214 = vmatprep.subr.bf16.mxu0 %v6972
    %8215 = vmatpush1.bf16.msra.mxu0 %v6971
    %8216 = vmatprep.subr.bf16.mxu0 %v6984
    %8217 = vmatpush1.bf16.msra.mxu0 %v6983
    %8218 = vmatprep.subr.bf16.mxu0 %v6996
    %8219 = vmatpush1.bf16.msra.mxu0 %v6995
    %8220 = vmatprep.subr.bf16.mxu0 %v7008
    %8221 = vmatpush1.bf16.msra.mxu0 %v7007
    %8222 = vmatprep.subr.bf16.mxu0 %v7020
    %8223 = vmatpush1.bf16.msra.mxu0 %v7019
    %8224 = vmatprep.subr.bf16.mxu0 %v7032
    %8225 = vmatpush1.bf16.msra.mxu0 %v7031
    %8226 = vmatprep.subr.bf16.mxu0 %v7044
    %8227 = vmatpush1.bf16.msra.mxu0 %v7043
    %8228 = vmatprep.subr.bf16.mxu0 %v7056
    %8229 = vmatpush1.bf16.msra.mxu0 %v7055
    %8230 = vmatprep.subr.bf16.mxu0 %v7068
    %8231 = vmatpush1.bf16.msra.mxu0 %v7067
    %8232 = vmatprep.subr.bf16.mxu0 %v7080
    %8233 = vmatpush1.bf16.msra.mxu0 %v7079
    %8234 = vmatprep.subr.bf16.mxu0 %v7092
    %8235 = vmatpush1.bf16.msra.mxu0 %v7091
    %8236 = vmatprep.subr.bf16.mxu0 %v7104
    %8237 = vmatpush1.bf16.msra.mxu0 %v7103
    %8238 = vmatprep.subr.bf16.mxu0 %v7116
    %8239 = vmatpush1.bf16.msra.mxu0 %v7115
    %8240 = vmatprep.mubr.bf16.mxu0 %v4624
    %8241 = vmatmul.mubr.bf16.gmra.mrb[0].mxu0 %v4623
    %v8242 = vpop.f32.mrb[0].mxu0
    %v8243 = vadd.f32 0.0, %v8242
    %v8244 = vpop.f32.mrb[0].mxu0
    %v8245 = vadd.f32 0.0, %v8244
    %v8246 = vpop.f32.mrb[0].mxu0
    %v8247 = vpop.f32.mrb[0].mxu0
    %8248 = vdwg.mxu0
    %8249 = vmatprep.subr.bf16.mxu0 %v7128
    %8250 = vmatpush1.bf16.msra.mxu0 %v7127
    %8251 = vmatprep.subr.bf16.mxu0 %v7140
    %8252 = vmatpush1.bf16.msra.mxu0 %v7139
    %8253 = vmatprep.subr.bf16.mxu0 %v7152
    %8254 = vmatpush1.bf16.msra.mxu0 %v7151
    %8255 = vmatprep.subr.bf16.mxu0 %v7164
    %8256 = vmatpush1.bf16.msra.mxu0 %v7163
    %8257 = vmatprep.subr.bf16.mxu0 %v7176
    %8258 = vmatpush1.bf16.msra.mxu0 %v7175
    %8259 = vmatprep.subr.bf16.mxu0 %v7188
    %8260 = vmatpush1.bf16.msra.mxu0 %v7187
    %8261 = vmatprep.subr.bf16.mxu0 %v7200
    %8262 = vmatpush1.bf16.msra.mxu0 %v7199
    %8263 = vmatprep.subr.bf16.mxu0 %v7212
    %8264 = vmatpush1.bf16.msra.mxu0 %v7211
    %8265 = vmatprep.subr.bf16.mxu0 %v7224
    %8266 = vmatpush1.bf16.msra.mxu0 %v7223
    %8267 = vmatprep.subr.bf16.mxu0 %v7236
    %8268 = vmatpush1.bf16.msra.mxu0 %v7235
    %8269 = vmatprep.subr.bf16.mxu0 %v7248
    %8270 = vmatpush1.bf16.msra.mxu0 %v7247
    %8271 = vmatprep.subr.bf16.mxu0 %v7260
    %8272 = vmatpush1.bf16.msra.mxu0 %v7259
    %8273 = vmatprep.subr.bf16.mxu0 %v7272
    %8274 = vmatpush1.bf16.msra.mxu0 %v7271
    %8275 = vmatprep.subr.bf16.mxu0 %v7284
    %8276 = vmatpush1.bf16.msra.mxu0 %v7283
    %8277 = vmatprep.subr.bf16.mxu0 %v7296
    %8278 = vmatpush1.bf16.msra.mxu0 %v7295
    %8279 = vmatprep.subr.bf16.mxu0 %v7308
    %8280 = vmatpush1.bf16.msra.mxu0 %v7307
    %8281 = vmatprep.mubr.bf16.mxu0 %v4626
    %8282 = vmatmul.mubr.bf16.gmra.mrb[0].mxu0 %v4625
    %v8283 = vpop.f32.mrb[0].mxu0
    %v8284 = vadd.f32 %v8243, %v8283
    %v8285 = vpop.f32.mrb[0].mxu0
    %v8286 = vadd.f32 %v8245, %v8285
    %v8287 = vpop.f32.mrb[0].mxu0
    %v8288 = vpop.f32.mrb[0].mxu0
    %8289 = vdwg.mxu0
    %8290 = vmatprep.subr.bf16.mxu0 %v7320
    %8291 = vmatpush1.bf16.msra.mxu0 %v7319
    %8292 = vmatprep.subr.bf16.mxu0 %v7332
    %8293 = vmatpush1.bf16.msra.mxu0 %v7331
    %8294 = vmatprep.subr.bf16.mxu0 %v7344
    %8295 = vmatpush1.bf16.msra.mxu0 %v7343
    %8296 = vmatprep.subr.bf16.mxu0 %v7356
    %8297 = vmatpush1.bf16.msra.mxu0 %v7355
    %8298 = vmatprep.subr.bf16.mxu0 %v7368
    %8299 = vmatpush1.bf16.msra.mxu0 %v7367
    %8300 = vmatprep.subr.bf16.mxu0 %v7380
    %8301 = vmatpush1.bf16.msra.mxu0 %v7379
    %8302 = vmatprep.subr.bf16.mxu0 %v7392
    %8303 = vmatpush1.bf16.msra.mxu0 %v7391
    %8304 = vmatprep.subr.bf16.mxu0 %v7404
    %8305 = vmatpush1.bf16.msra.mxu0 %v7403
    %8306 = vmatprep.subr.bf16.mxu0 %v7416
    %8307 = vmatpush1.bf16.msra.mxu0 %v7415
    %8308 = vmatprep.subr.bf16.mxu0 %v7428
    %8309 = vmatpush1.bf16.msra.mxu0 %v7427
    %8310 = vmatprep.subr.bf16.mxu0 %v7440
    %8311 = vmatpush1.bf16.msra.mxu0 %v7439
    %8312 = vmatprep.subr.bf16.mxu0 %v7452
    %8313 = vmatpush1.bf16.msra.mxu0 %v7451
    %8314 = vmatprep.subr.bf16.mxu0 %v7464
    %8315 = vmatpush1.bf16.msra.mxu0 %v7463
    %8316 = vmatprep.subr.bf16.mxu0 %v7476
    %8317 = vmatpush1.bf16.msra.mxu0 %v7475
    %8318 = vmatprep.subr.bf16.mxu0 %v7488
    %8319 = vmatpush1.bf16.msra.mxu0 %v7487
    %8320 = vmatprep.subr.bf16.mxu0 %v7500
    %8321 = vmatpush1.bf16.msra.mxu0 %v7499
    %8322 = vmatprep.mubr.bf16.mxu0 %v4628
    %8323 = vmatmul.mubr.bf16.gmra.mrb[0].mxu0 %v4627
    %v8324 = vpop.f32.mrb[0].mxu0
    %v8325 = vadd.f32 %v8284, %v8324
    %v8326 = vpop.f32.mrb[0].mxu0
    %v8327 = vadd.f32 %v8286, %v8326
    %v8328 = vpop.f32.mrb[0].mxu0
    %v8329 = vpop.f32.mrb[0].mxu0
    %8330 = vdwg.mxu0
    %8331 = vmatprep.subr.bf16.mxu0 %v6938
    %8332 = vmatpush1.bf16.msra.mxu0 %v6937
    %8333 = vmatprep.subr.bf16.mxu0 %v6950
    %8334 = vmatpush1.bf16.msra.mxu0 %v6949
    %8335 = vmatprep.subr.bf16.mxu0 %v6962
    %8336 = vmatpush1.bf16.msra.mxu0 %v6961
    %8337 = vmatprep.subr.bf16.mxu0 %v6974
    %8338 = vmatpush1.bf16.msra.mxu0 %v6973
    %8339 = vmatprep.subr.bf16.mxu0 %v6986
    %8340 = vmatpush1.bf16.msra.mxu0 %v6985
    %8341 = vmatprep.subr.bf16.mxu0 %v6998
    %8342 = vmatpush1.bf16.msra.mxu0 %v6997
    %8343 = vmatprep.subr.bf16.mxu0 %v7010
    %8344 = vmatpush1.bf16.msra.mxu0 %v7009
    %8345 = vmatprep.subr.bf16.mxu0 %v7022
    %8346 = vmatpush1.bf16.msra.mxu0 %v7021
    %8347 = vmatprep.subr.bf16.mxu0 %v7034
    %8348 = vmatpush1.bf16.msra.mxu0 %v7033
    %8349 = vmatprep.subr.bf16.mxu0 %v7046
    %8350 = vmatpush1.bf16.msra.mxu0 %v7045
    %8351 = vmatprep.subr.bf16.mxu0 %v7058
    %8352 = vmatpush1.bf16.msra.mxu0 %v7057
    %8353 = vmatprep.subr.bf16.mxu0 %v7070
    %8354 = vmatpush1.bf16.msra.mxu0 %v7069
    %8355 = vmatprep.subr.bf16.mxu0 %v7082
    %8356 = vmatpush1.bf16.msra.mxu0 %v7081
    %8357 = vmatprep.subr.bf16.mxu0 %v7094
    %8358 = vmatpush1.bf16.msra.mxu0 %v7093
    %8359 = vmatprep.subr.bf16.mxu0 %v7106
    %8360 = vmatpush1.bf16.msra.mxu0 %v7105
    %8361 = vmatprep.subr.bf16.mxu0 %v7118
    %8362 = vmatpush1.bf16.msra.mxu0 %v7117
    %8363 = vmatprep.mubr.bf16.mxu0 %v4624
    %8364 = vmatmul.mubr.bf16.gmra.mrb[0].mxu0 %v4623
    %v8365 = vpop.f32.mrb[0].mxu0
    %v8366 = vadd.f32 0.0, %v8365
    %v8367 = vpop.f32.mrb[0].mxu0
    %v8368 = vadd.f32 0.0, %v8367
    %v8369 = vpop.f32.mrb[0].mxu0
    %v8370 = vpop.f32.mrb[0].mxu0
    %8371 = vdwg.mxu0
    %8372 = vmatprep.subr.bf16.mxu0 %v7130
    %8373 = vmatpush1.bf16.msra.mxu0 %v7129
    %8374 = vmatprep.subr.bf16.mxu0 %v7142
    %8375 = vmatpush1.bf16.msra.mxu0 %v7141
    %8376 = vmatprep.subr.bf16.mxu0 %v7154
    %8377 = vmatpush1.bf16.msra.mxu0 %v7153
    %8378 = vmatprep.subr.bf16.mxu0 %v7166
    %8379 = vmatpush1.bf16.msra.mxu0 %v7165
    %8380 = vmatprep.subr.bf16.mxu0 %v7178
    %8381 = vmatpush1.bf16.msra.mxu0 %v7177
    %8382 = vmatprep.subr.bf16.mxu0 %v7190
    %8383 = vmatpush1.bf16.msra.mxu0 %v7189
    %8384 = vmatprep.subr.bf16.mxu0 %v7202
    %8385 = vmatpush1.bf16.msra.mxu0 %v7201
    %8386 = vmatprep.subr.bf16.mxu0 %v7214
    %8387 = vmatpush1.bf16.msra.mxu0 %v7213
    %8388 = vmatprep.subr.bf16.mxu0 %v7226
    %8389 = vmatpush1.bf16.msra.mxu0 %v7225
    %8390 = vmatprep.subr.bf16.mxu0 %v7238
    %8391 = vmatpush1.bf16.msra.mxu0 %v7237
    %8392 = vmatprep.subr.bf16.mxu0 %v7250
    %8393 = vmatpush1.bf16.msra.mxu0 %v7249
    %8394 = vmatprep.subr.bf16.mxu0 %v7262
    %8395 = vmatpush1.bf16.msra.mxu0 %v7261
    %8396 = vmatprep.subr.bf16.mxu0 %v7274
    %8397 = vmatpush1.bf16.msra.mxu0 %v7273
    %8398 = vmatprep.subr.bf16.mxu0 %v7286
    %8399 = vmatpush1.bf16.msra.mxu0 %v7285
    %8400 = vmatprep.subr.bf16.mxu0 %v7298
    %8401 = vmatpush1.bf16.msra.mxu0 %v7297
    %8402 = vmatprep.subr.bf16.mxu0 %v7310
    %8403 = vmatpush1.bf16.msra.mxu0 %v7309
    %8404 = vmatprep.mubr.bf16.mxu0 %v4626
    %8405 = vmatmul.mubr.bf16.gmra.mrb[0].mxu0 %v4625
    %v8406 = vpop.f32.mrb[0].mxu0
    %v8407 = vadd.f32 %v8366, %v8406
    %v8408 = vpop.f32.mrb[0].mxu0
    %v8409 = vadd.f32 %v8368, %v8408
    %v8410 = vpop.f32.mrb[0].mxu0
    %v8411 = vpop.f32.mrb[0].mxu0
    %8412 = vdwg.mxu0
    %8413 = vmatprep.subr.bf16.mxu0 %v7322
    %8414 = vmatpush1.bf16.msra.mxu0 %v7321
    %8415 = vmatprep.subr.bf16.mxu0 %v7334
    %8416 = vmatpush1.bf16.msra.mxu0 %v7333
    %8417 = vmatprep.subr.bf16.mxu0 %v7346
    %8418 = vmatpush1.bf16.msra.mxu0 %v7345
    %8419 = vmatprep.subr.bf16.mxu0 %v7358
    %8420 = vmatpush1.bf16.msra.mxu0 %v7357
    %8421 = vmatprep.subr.bf16.mxu0 %v7370
    %8422 = vmatpush1.bf16.msra.mxu0 %v7369
    %8423 = vmatprep.subr.bf16.mxu0 %v7382
    %8424 = vmatpush1.bf16.msra.mxu0 %v7381
    %8425 = vmatprep.subr.bf16.mxu0 %v7394
    %8426 = vmatpush1.bf16.msra.mxu0 %v7393
    %8427 = vmatprep.subr.bf16.mxu0 %v7406
    %8428 = vmatpush1.bf16.msra.mxu0 %v7405
    %8429 = vmatprep.subr.bf16.mxu0 %v7418
    %8430 = vmatpush1.bf16.msra.mxu0 %v7417
    %8431 = vmatprep.subr.bf16.mxu0 %v7430
    %8432 = vmatpush1.bf16.msra.mxu0 %v7429
    %8433 = vmatprep.subr.bf16.mxu0 %v7442
    %8434 = vmatpush1.bf16.msra.mxu0 %v7441
    %8435 = vmatprep.subr.bf16.mxu0 %v7454
    %8436 = vmatpush1.bf16.msra.mxu0 %v7453
    %8437 = vmatprep.subr.bf16.mxu0 %v7466
    %8438 = vmatpush1.bf16.msra.mxu0 %v7465
    %8439 = vmatprep.subr.bf16.mxu0 %v7478
    %8440 = vmatpush1.bf16.msra.mxu0 %v7477
    %8441 = vmatprep.subr.bf16.mxu0 %v7490
    %8442 = vmatpush1.bf16.msra.mxu0 %v7489
    %8443 = vmatprep.subr.bf16.mxu0 %v7502
    %8444 = vmatpush1.bf16.msra.mxu0 %v7501
    %8445 = vmatprep.mubr.bf16.mxu0 %v4628
    %8446 = vmatmul.mubr.bf16.gmra.mrb[0].mxu0 %v4627
    %v8447 = vpop.f32.mrb[0].mxu0
    %v8448 = vadd.f32 %v8407, %v8447
    %v8449 = vpop.f32.mrb[0].mxu0
    %v8450 = vadd.f32 %v8409, %v8449
    %v8451 = vpop.f32.mrb[0].mxu0
    %v8452 = vpop.f32.mrb[0].mxu0
    %8453 = vdwg.mxu0
    %8454 = vmatprep.subr.bf16.mxu0 %v6940
    %8455 = vmatpush1.bf16.msra.mxu0 %v6939
    %8456 = vmatprep.subr.bf16.mxu0 %v6952
    %8457 = vmatpush1.bf16.msra.mxu0 %v6951
    %8458 = vmatprep.subr.bf16.mxu0 %v6964
    %8459 = vmatpush1.bf16.msra.mxu0 %v6963
    %8460 = vmatprep.subr.bf16.mxu0 %v6976
    %8461 = vmatpush1.bf16.msra.mxu0 %v6975
    %8462 = vmatprep.subr.bf16.mxu0 %v6988
    %8463 = vmatpush1.bf16.msra.mxu0 %v6987
    %8464 = vmatprep.subr.bf16.mxu0 %v7000
    %8465 = vmatpush1.bf16.msra.mxu0 %v6999
    %8466 = vmatprep.subr.bf16.mxu0 %v7012
    %8467 = vmatpush1.bf16.msra.mxu0 %v7011
    %8468 = vmatprep.subr.bf16.mxu0 %v7024
    %8469 = vmatpush1.bf16.msra.mxu0 %v7023
    %8470 = vmatprep.subr.bf16.mxu0 %v7036
    %8471 = vmatpush1.bf16.msra.mxu0 %v7035
    %8472 = vmatprep.subr.bf16.mxu0 %v7048
    %8473 = vmatpush1.bf16.msra.mxu0 %v7047
    %8474 = vmatprep.subr.bf16.mxu0 %v7060
    %8475 = vmatpush1.bf16.msra.mxu0 %v7059
    %8476 = vmatprep.subr.bf16.mxu0 %v7072
    %8477 = vmatpush1.bf16.msra.mxu0 %v7071
    %8478 = vmatprep.subr.bf16.mxu0 %v7084
    %8479 = vmatpush1.bf16.msra.mxu0 %v7083
    %8480 = vmatprep.subr.bf16.mxu0 %v7096
    %8481 = vmatpush1.bf16.msra.mxu0 %v7095
    %8482 = vmatprep.subr.bf16.mxu0 %v7108
    %8483 = vmatpush1.bf16.msra.mxu0 %v7107
    %8484 = vmatprep.subr.bf16.mxu0 %v7120
    %8485 = vmatpush1.bf16.msra.mxu0 %v7119
    %8486 = vmatprep.mubr.bf16.mxu0 %v4624
    %8487 = vmatmul.mubr.bf16.gmra.mrb[0].mxu0 %v4623
    %v8488 = vpop.f32.mrb[0].mxu0
    %v8489 = vadd.f32 0.0, %v8488
    %v8490 = vpop.f32.mrb[0].mxu0
    %v8491 = vadd.f32 0.0, %v8490
    %v8492 = vpop.f32.mrb[0].mxu0
    %v8493 = vpop.f32.mrb[0].mxu0
    %8494 = vdwg.mxu0
    %8495 = vmatprep.subr.bf16.mxu0 %v7132
    %8496 = vmatpush1.bf16.msra.mxu0 %v7131
    %8497 = vmatprep.subr.bf16.mxu0 %v7144
    %8498 = vmatpush1.bf16.msra.mxu0 %v7143
    %8499 = vmatprep.subr.bf16.mxu0 %v7156
    %8500 = vmatpush1.bf16.msra.mxu0 %v7155
    %8501 = vmatprep.subr.bf16.mxu0 %v7168
    %8502 = vmatpush1.bf16.msra.mxu0 %v7167
    %8503 = vmatprep.subr.bf16.mxu0 %v7180
    %8504 = vmatpush1.bf16.msra.mxu0 %v7179
    %8505 = vmatprep.subr.bf16.mxu0 %v7192
    %8506 = vmatpush1.bf16.msra.mxu0 %v7191
    %8507 = vmatprep.subr.bf16.mxu0 %v7204
    %8508 = vmatpush1.bf16.msra.mxu0 %v7203
    %8509 = vmatprep.subr.bf16.mxu0 %v7216
    %8510 = vmatpush1.bf16.msra.mxu0 %v7215
    %8511 = vmatprep.subr.bf16.mxu0 %v7228
    %8512 = vmatpush1.bf16.msra.mxu0 %v7227
    %8513 = vmatprep.subr.bf16.mxu0 %v7240
    %8514 = vmatpush1.bf16.msra.mxu0 %v7239
    %8515 = vmatprep.subr.bf16.mxu0 %v7252
    %8516 = vmatpush1.bf16.msra.mxu0 %v7251
    %8517 = vmatprep.subr.bf16.mxu0 %v7264
    %8518 = vmatpush1.bf16.msra.mxu0 %v7263
    %8519 = vmatprep.subr.bf16.mxu0 %v7276
    %8520 = vmatpush1.bf16.msra.mxu0 %v7275
    %8521 = vmatprep.subr.bf16.mxu0 %v7288
    %8522 = vmatpush1.bf16.msra.mxu0 %v7287
    %8523 = vmatprep.subr.bf16.mxu0 %v7300
    %8524 = vmatpush1.bf16.msra.mxu0 %v7299
    %8525 = vmatprep.subr.bf16.mxu0 %v7312
    %8526 = vmatpush1.bf16.msra.mxu0 %v7311
    %8527 = vmatprep.mubr.bf16.mxu0 %v4626
    %8528 = vmatmul.mubr.bf16.gmra.mrb[0].mxu0 %v4625
    %v8529 = vpop.f32.mrb[0].mxu0
    %v8530 = vadd.f32 %v8489, %v8529
    %v8531 = vpop.f32.mrb[0].mxu0
    %v8532 = vadd.f32 %v8491, %v8531
    %v8533 = vpop.f32.mrb[0].mxu0
    %v8534 = vpop.f32.mrb[0].mxu0
    %8535 = vdwg.mxu0
    %8536 = vmatprep.subr.bf16.mxu0 %v7324
    %8537 = vmatpush1.bf16.msra.mxu0 %v7323
    %8538 = vmatprep.subr.bf16.mxu0 %v7336
    %8539 = vmatpush1.bf16.msra.mxu0 %v7335
    %8540 = vmatprep.subr.bf16.mxu0 %v7348
    %8541 = vmatpush1.bf16.msra.mxu0 %v7347
    %8542 = vmatprep.subr.bf16.mxu0 %v7360
    %8543 = vmatpush1.bf16.msra.mxu0 %v7359
    %8544 = vmatprep.subr.bf16.mxu0 %v7372
    %8545 = vmatpush1.bf16.msra.mxu0 %v7371
    %8546 = vmatprep.subr.bf16.mxu0 %v7384
    %8547 = vmatpush1.bf16.msra.mxu0 %v7383
    %8548 = vmatprep.subr.bf16.mxu0 %v7396
    %8549 = vmatpush1.bf16.msra.mxu0 %v7395
    %8550 = vmatprep.subr.bf16.mxu0 %v7408
    %8551 = vmatpush1.bf16.msra.mxu0 %v7407
    %8552 = vmatprep.subr.bf16.mxu0 %v7420
    %8553 = vmatpush1.bf16.msra.mxu0 %v7419
    %8554 = vmatprep.subr.bf16.mxu0 %v7432
    %8555 = vmatpush1.bf16.msra.mxu0 %v7431
    %8556 = vmatprep.subr.bf16.mxu0 %v7444
    %8557 = vmatpush1.bf16.msra.mxu0 %v7443
    %8558 = vmatprep.subr.bf16.mxu0 %v7456
    %8559 = vmatpush1.bf16.msra.mxu0 %v7455
    %8560 = vmatprep.subr.bf16.mxu0 %v7468
    %8561 = vmatpush1.bf16.msra.mxu0 %v7467
    %8562 = vmatprep.subr.bf16.mxu0 %v7480
    %8563 = vmatpush1.bf16.msra.mxu0 %v7479
    %8564 = vmatprep.subr.bf16.mxu0 %v7492
    %8565 = vmatpush1.bf16.msra.mxu0 %v7491
    %8566 = vmatprep.subr.bf16.mxu0 %v7504
    %8567 = vmatpush1.bf16.msra.mxu0 %v7503
    %8568 = vmatprep.mubr.bf16.mxu0 %v4628
    %8569 = vmatmul.mubr.bf16.gmra.mrb[0].mxu0 %v4627
    %v8570 = vpop.f32.mrb[0].mxu0
    %v8571 = vadd.f32 %v8530, %v8570
    %v8572 = vpop.f32.mrb[0].mxu0
    %v8573 = vadd.f32 %v8532, %v8572
    %v8574 = vpop.f32.mrb[0].mxu0
    %v8575 = vpop.f32.mrb[0].mxu0
    %8576 = vdwg.mxu0
    %8577 = vmatprep.subr.bf16.mxu0 %v6942
    %8578 = vmatpush1.bf16.msra.mxu0 %v6941
    %8579 = vmatprep.subr.bf16.mxu0 %v6954
    %8580 = vmatpush1.bf16.msra.mxu0 %v6953
    %8581 = vmatprep.subr.bf16.mxu0 %v6966
    %8582 = vmatpush1.bf16.msra.mxu0 %v6965
    %8583 = vmatprep.subr.bf16.mxu0 %v6978
    %8584 = vmatpush1.bf16.msra.mxu0 %v6977
    %8585 = vmatprep.subr.bf16.mxu0 %v6990
    %8586 = vmatpush1.bf16.msra.mxu0 %v6989
    %8587 = vmatprep.subr.bf16.mxu0 %v7002
    %8588 = vmatpush1.bf16.msra.mxu0 %v7001
    %8589 = vmatprep.subr.bf16.mxu0 %v7014
    %8590 = vmatpush1.bf16.msra.mxu0 %v7013
    %8591 = vmatprep.subr.bf16.mxu0 %v7026
    %8592 = vmatpush1.bf16.msra.mxu0 %v7025
    %8593 = vmatprep.subr.bf16.mxu0 %v7038
    %8594 = vmatpush1.bf16.msra.mxu0 %v7037
    %8595 = vmatprep.subr.bf16.mxu0 %v7050
    %8596 = vmatpush1.bf16.msra.mxu0 %v7049
    %8597 = vmatprep.subr.bf16.mxu0 %v7062
    %8598 = vmatpush1.bf16.msra.mxu0 %v7061
    %8599 = vmatprep.subr.bf16.mxu0 %v7074
    %8600 = vmatpush1.bf16.msra.mxu0 %v7073
    %8601 = vmatprep.subr.bf16.mxu0 %v7086
    %8602 = vmatpush1.bf16.msra.mxu0 %v7085
    %8603 = vmatprep.subr.bf16.mxu0 %v7098
    %8604 = vmatpush1.bf16.msra.mxu0 %v7097
    %8605 = vmatprep.subr.bf16.mxu0 %v7110
    %8606 = vmatpush1.bf16.msra.mxu0 %v7109
    %8607 = vmatprep.subr.bf16.mxu0 %v7122
    %8608 = vmatpush1.bf16.msra.mxu0 %v7121
    %8609 = vmatprep.mubr.bf16.mxu0 %v4624
    %8610 = vmatmul.mubr.bf16.gmra.mrb[0].mxu0 %v4623
    %v8611 = vpop.f32.mrb[0].mxu0
    %v8612 = vadd.f32 0.0, %v8611
    %v8613 = vpop.f32.mrb[0].mxu0
    %v8614 = vadd.f32 0.0, %v8613
    %v8615 = vpop.f32.mrb[0].mxu0
    %v8616 = vpop.f32.mrb[0].mxu0
    %8617 = vdwg.mxu0
    %8618 = vmatprep.subr.bf16.mxu0 %v7134
    %8619 = vmatpush1.bf16.msra.mxu0 %v7133
    %8620 = vmatprep.subr.bf16.mxu0 %v7146
    %8621 = vmatpush1.bf16.msra.mxu0 %v7145
    %8622 = vmatprep.subr.bf16.mxu0 %v7158
    %8623 = vmatpush1.bf16.msra.mxu0 %v7157
    %8624 = vmatprep.subr.bf16.mxu0 %v7170
    %8625 = vmatpush1.bf16.msra.mxu0 %v7169
    %8626 = vmatprep.subr.bf16.mxu0 %v7182
    %8627 = vmatpush1.bf16.msra.mxu0 %v7181
    %8628 = vmatprep.subr.bf16.mxu0 %v7194
    %8629 = vmatpush1.bf16.msra.mxu0 %v7193
    %8630 = vmatprep.subr.bf16.mxu0 %v7206
    %8631 = vmatpush1.bf16.msra.mxu0 %v7205
    %8632 = vmatprep.subr.bf16.mxu0 %v7218
    %8633 = vmatpush1.bf16.msra.mxu0 %v7217
    %8634 = vmatprep.subr.bf16.mxu0 %v7230
    %8635 = vmatpush1.bf16.msra.mxu0 %v7229
    %8636 = vmatprep.subr.bf16.mxu0 %v7242
    %8637 = vmatpush1.bf16.msra.mxu0 %v7241
    %8638 = vmatprep.subr.bf16.mxu0 %v7254
    %8639 = vmatpush1.bf16.msra.mxu0 %v7253
    %8640 = vmatprep.subr.bf16.mxu0 %v7266
    %8641 = vmatpush1.bf16.msra.mxu0 %v7265
    %8642 = vmatprep.subr.bf16.mxu0 %v7278
    %8643 = vmatpush1.bf16.msra.mxu0 %v7277
    %8644 = vmatprep.subr.bf16.mxu0 %v7290
    %8645 = vmatpush1.bf16.msra.mxu0 %v7289
    %8646 = vmatprep.subr.bf16.mxu0 %v7302
    %8647 = vmatpush1.bf16.msra.mxu0 %v7301
    %8648 = vmatprep.subr.bf16.mxu0 %v7314
    %8649 = vmatpush1.bf16.msra.mxu0 %v7313
    %8650 = vmatprep.mubr.bf16.mxu0 %v4626
    %8651 = vmatmul.mubr.bf16.gmra.mrb[0].mxu0 %v4625
    %v8652 = vpop.f32.mrb[0].mxu0
    %v8653 = vadd.f32 %v8612, %v8652
    %v8654 = vpop.f32.mrb[0].mxu0
    %v8655 = vadd.f32 %v8614, %v8654
    %v8656 = vpop.f32.mrb[0].mxu0
    %v8657 = vpop.f32.mrb[0].mxu0
    %8658 = vdwg.mxu0
    %8659 = vmatprep.subr.bf16.mxu0 %v7326
    %8660 = vmatpush1.bf16.msra.mxu0 %v7325
    %8661 = vmatprep.subr.bf16.mxu0 %v7338
    %8662 = vmatpush1.bf16.msra.mxu0 %v7337
    %8663 = vmatprep.subr.bf16.mxu0 %v7350
    %8664 = vmatpush1.bf16.msra.mxu0 %v7349
    %8665 = vmatprep.subr.bf16.mxu0 %v7362
    %8666 = vmatpush1.bf16.msra.mxu0 %v7361
    %8667 = vmatprep.subr.bf16.mxu0 %v7374
    %8668 = vmatpush1.bf16.msra.mxu0 %v7373
    %8669 = vmatprep.subr.bf16.mxu0 %v7386
    %8670 = vmatpush1.bf16.msra.mxu0 %v7385
    %8671 = vmatprep.subr.bf16.mxu0 %v7398
    %8672 = vmatpush1.bf16.msra.mxu0 %v7397
    %8673 = vmatprep.subr.bf16.mxu0 %v7410
    %8674 = vmatpush1.bf16.msra.mxu0 %v7409
    %8675 = vmatprep.subr.bf16.mxu0 %v7422
    %8676 = vmatpush1.bf16.msra.mxu0 %v7421
    %8677 = vmatprep.subr.bf16.mxu0 %v7434
    %8678 = vmatpush1.bf16.msra.mxu0 %v7433
    %8679 = vmatprep.subr.bf16.mxu0 %v7446
    %8680 = vmatpush1.bf16.msra.mxu0 %v7445
    %8681 = vmatprep.subr.bf16.mxu0 %v7458
    %8682 = vmatpush1.bf16.msra.mxu0 %v7457
    %8683 = vmatprep.subr.bf16.mxu0 %v7470
    %8684 = vmatpush1.bf16.msra.mxu0 %v7469
    %8685 = vmatprep.subr.bf16.mxu0 %v7482
    %8686 = vmatpush1.bf16.msra.mxu0 %v7481
    %8687 = vmatprep.subr.bf16.mxu0 %v7494
    %8688 = vmatpush1.bf16.msra.mxu0 %v7493
    %8689 = vmatprep.subr.bf16.mxu0 %v7506
    %8690 = vmatpush1.bf16.msra.mxu0 %v7505
    %8691 = vmatprep.mubr.bf16.mxu0 %v4628
    %8692 = vmatmul.mubr.bf16.gmra.mrb[0].mxu0 %v4627
    %v8693 = vpop.f32.mrb[0].mxu0
    %v8694 = vadd.f32 %v8653, %v8693
    %v8695 = vpop.f32.mrb[0].mxu0
    %v8696 = vadd.f32 %v8655, %v8695
    %v8697 = vpop.f32.mrb[0].mxu0
    %v8698 = vpop.f32.mrb[0].mxu0
    %8699 = vdwg.mxu0
    %8700 = vmatprep.subr.bf16.mxu0 %v6944
    %8701 = vmatpush1.bf16.msra.mxu0 %v6943
    %8702 = vmatprep.subr.bf16.mxu0 %v6956
    %8703 = vmatpush1.bf16.msra.mxu0 %v6955
    %8704 = vmatprep.subr.bf16.mxu0 %v6968
    %8705 = vmatpush1.bf16.msra.mxu0 %v6967
    %8706 = vmatprep.subr.bf16.mxu0 %v6980
    %8707 = vmatpush1.bf16.msra.mxu0 %v6979
    %8708 = vmatprep.subr.bf16.mxu0 %v6992
    %8709 = vmatpush1.bf16.msra.mxu0 %v6991
    %8710 = vmatprep.subr.bf16.mxu0 %v7004
    %8711 = vmatpush1.bf16.msra.mxu0 %v7003
    %8712 = vmatprep.subr.bf16.mxu0 %v7016
    %8713 = vmatpush1.bf16.msra.mxu0 %v7015
    %8714 = vmatprep.subr.bf16.mxu0 %v7028
    %8715 = vmatpush1.bf16.msra.mxu0 %v7027
    %8716 = vmatprep.subr.bf16.mxu0 %v7040
    %8717 = vmatpush1.bf16.msra.mxu0 %v7039
    %8718 = vmatprep.subr.bf16.mxu0 %v7052
    %8719 = vmatpush1.bf16.msra.mxu0 %v7051
    %8720 = vmatprep.subr.bf16.mxu0 %v7064
    %8721 = vmatpush1.bf16.msra.mxu0 %v7063
    %8722 = vmatprep.subr.bf16.mxu0 %v7076
    %8723 = vmatpush1.bf16.msra.mxu0 %v7075
    %8724 = vmatprep.subr.bf16.mxu0 %v7088
    %8725 = vmatpush1.bf16.msra.mxu0 %v7087
    %8726 = vmatprep.subr.bf16.mxu0 %v7100
    %8727 = vmatpush1.bf16.msra.mxu0 %v7099
    %8728 = vmatprep.subr.bf16.mxu0 %v7112
    %8729 = vmatpush1.bf16.msra.mxu0 %v7111
    %8730 = vmatprep.subr.bf16.mxu0 %v7124
    %8731 = vmatpush1.bf16.msra.mxu0 %v7123
    %8732 = vmatprep.mubr.bf16.mxu0 %v4624
    %8733 = vmatmul.mubr.bf16.gmra.mrb[0].mxu0 %v4623
    %v8734 = vpop.f32.mrb[0].mxu0
    %v8735 = vadd.f32 0.0, %v8734
    %v8736 = vpop.f32.mrb[0].mxu0
    %v8737 = vadd.f32 0.0, %v8736
    %v8738 = vpop.f32.mrb[0].mxu0
    %v8739 = vpop.f32.mrb[0].mxu0
    %8740 = vdwg.mxu0
    %8741 = vmatprep.subr.bf16.mxu0 %v7136
    %8742 = vmatpush1.bf16.msra.mxu0 %v7135
    %8743 = vmatprep.subr.bf16.mxu0 %v7148
    %8744 = vmatpush1.bf16.msra.mxu0 %v7147
    %8745 = vmatprep.subr.bf16.mxu0 %v7160
    %8746 = vmatpush1.bf16.msra.mxu0 %v7159
    %8747 = vmatprep.subr.bf16.mxu0 %v7172
    %8748 = vmatpush1.bf16.msra.mxu0 %v7171
    %8749 = vmatprep.subr.bf16.mxu0 %v7184
    %8750 = vmatpush1.bf16.msra.mxu0 %v7183
    %8751 = vmatprep.subr.bf16.mxu0 %v7196
    %8752 = vmatpush1.bf16.msra.mxu0 %v7195
    %8753 = vmatprep.subr.bf16.mxu0 %v7208
    %8754 = vmatpush1.bf16.msra.mxu0 %v7207
    %8755 = vmatprep.subr.bf16.mxu0 %v7220
    %8756 = vmatpush1.bf16.msra.mxu0 %v7219
    %8757 = vmatprep.subr.bf16.mxu0 %v7232
    %8758 = vmatpush1.bf16.msra.mxu0 %v7231
    %8759 = vmatprep.subr.bf16.mxu0 %v7244
    %8760 = vmatpush1.bf16.msra.mxu0 %v7243
    %8761 = vmatprep.subr.bf16.mxu0 %v7256
    %8762 = vmatpush1.bf16.msra.mxu0 %v7255
    %8763 = vmatprep.subr.bf16.mxu0 %v7268
    %8764 = vmatpush1.bf16.msra.mxu0 %v7267
    %8765 = vmatprep.subr.bf16.mxu0 %v7280
    %8766 = vmatpush1.bf16.msra.mxu0 %v7279
    %8767 = vmatprep.subr.bf16.mxu0 %v7292
    %8768 = vmatpush1.bf16.msra.mxu0 %v7291
    %8769 = vmatprep.subr.bf16.mxu0 %v7304
    %8770 = vmatpush1.bf16.msra.mxu0 %v7303
    %8771 = vmatprep.subr.bf16.mxu0 %v7316
    %8772 = vmatpush1.bf16.msra.mxu0 %v7315
    %8773 = vmatprep.mubr.bf16.mxu0 %v4626
    %8774 = vmatmul.mubr.bf16.gmra.mrb[0].mxu0 %v4625
    %v8775 = vpop.f32.mrb[0].mxu0
    %v8776 = vadd.f32 %v8735, %v8775
    %v8777 = vpop.f32.mrb[0].mxu0
    %v8778 = vadd.f32 %v8737, %v8777
    %v8779 = vpop.f32.mrb[0].mxu0
    %v8780 = vpop.f32.mrb[0].mxu0
    %8781 = vdwg.mxu0
    %8782 = vmatprep.subr.bf16.mxu0 %v7328
    %8783 = vmatpush1.bf16.msra.mxu0 %v7327
    %8784 = vmatprep.subr.bf16.mxu0 %v7340
    %8785 = vmatpush1.bf16.msra.mxu0 %v7339
    %8786 = vmatprep.subr.bf16.mxu0 %v7352
    %8787 = vmatpush1.bf16.msra.mxu0 %v7351
    %8788 = vmatprep.subr.bf16.mxu0 %v7364
    %8789 = vmatpush1.bf16.msra.mxu0 %v7363
    %8790 = vmatprep.subr.bf16.mxu0 %v7376
    %8791 = vmatpush1.bf16.msra.mxu0 %v7375
    %8792 = vmatprep.subr.bf16.mxu0 %v7388
    %8793 = vmatpush1.bf16.msra.mxu0 %v7387
    %8794 = vmatprep.subr.bf16.mxu0 %v7400
    %8795 = vmatpush1.bf16.msra.mxu0 %v7399
    %8796 = vmatprep.subr.bf16.mxu0 %v7412
    %8797 = vmatpush1.bf16.msra.mxu0 %v7411
    %8798 = vmatprep.subr.bf16.mxu0 %v7424
    %8799 = vmatpush1.bf16.msra.mxu0 %v7423
    %8800 = vmatprep.subr.bf16.mxu0 %v7436
    %8801 = vmatpush1.bf16.msra.mxu0 %v7435
    %8802 = vmatprep.subr.bf16.mxu0 %v7448
    %8803 = vmatpush1.bf16.msra.mxu0 %v7447
    %8804 = vmatprep.subr.bf16.mxu0 %v7460
    %8805 = vmatpush1.bf16.msra.mxu0 %v7459
    %8806 = vmatprep.subr.bf16.mxu0 %v7472
    %8807 = vmatpush1.bf16.msra.mxu0 %v7471
    %8808 = vmatprep.subr.bf16.mxu0 %v7484
    %8809 = vmatpush1.bf16.msra.mxu0 %v7483
    %8810 = vmatprep.subr.bf16.mxu0 %v7496
    %8811 = vmatpush1.bf16.msra.mxu0 %v7495
    %8812 = vmatprep.subr.bf16.mxu0 %v7508
    %8813 = vmatpush1.bf16.msra.mxu0 %v7507
    %8814 = vmatprep.mubr.bf16.mxu0 %v4628
    %8815 = vmatmul.mubr.bf16.gmra.mrb[0].mxu0 %v4627
    %v8816 = vpop.f32.mrb[0].mxu0
    %v8817 = vadd.f32 %v8776, %v8816
    %v8818 = vpop.f32.mrb[0].mxu0
    %v8819 = vadd.f32 %v8778, %v8818
    %v8820 = vpop.f32.mrb[0].mxu0
    %v8821 = vpop.f32.mrb[0].mxu0
    %8822 = vdwg.mxu0
    %v8823 = vpack.c.bf16 %v4301, %v4301
    %v8824 = vpack.c.bf16 %v4303, %v4303
    %v8825 = vpack.c.bf16 %v4424, %v4424
    %v8826 = vpack.c.bf16 %v4426, %v4426
    %v8827 = vpack.c.bf16 %v4547, %v4547
    %v8828 = vpack.c.bf16 %v4549, %v4549
    %v8829 = vld [vmem:[#allocation16] sm:$0xff]
    %v8830 = vld [vmem:[#allocation16 + $0x8] sm:$0xff]
    %v8831 = vld [vmem:[#allocation16 + $0x10] sm:$0xff]
    %v8832 = vld [vmem:[#allocation16 + $0x18] sm:$0xff]
    %v8833 = vld [vmem:[#allocation16 + $0x20] sm:$0xff]
    %v8834 = vld [vmem:[#allocation16 + $0x28] sm:$0xff]
    %v8835 = vld [vmem:[#allocation16 + $0x30] sm:$0xff]
    %v8836 = vld [vmem:[#allocation16 + $0x38] sm:$0xff]
    %v8837 = vld [vmem:[#allocation16 + $0x40] sm:$0xff]
    %v8838 = vld [vmem:[#allocation16 + $0x48] sm:$0xff]
    %v8839 = vld [vmem:[#allocation16 + $0x50] sm:$0xff]
    %v8840 = vld [vmem:[#allocation16 + $0x58] sm:$0xff]
    %v8841 = vld [vmem:[#allocation16 + $0x60] sm:$0xff]
    %v8842 = vld [vmem:[#allocation16 + $0x68] sm:$0xff]
    %v8843 = vld [vmem:[#allocation16 + $0x70] sm:$0xff]
    %v8844 = vld [vmem:[#allocation16 + $0x78] sm:$0xff]
    %v8845 = vld [vmem:[#allocation16 + $0x80] sm:$0xff]
    %v8846 = vld [vmem:[#allocation16 + $0x88] sm:$0xff]
    %v8847 = vld [vmem:[#allocation16 + $0x90] sm:$0xff]
    %v8848 = vld [vmem:[#allocation16 + $0x98] sm:$0xff]
    %v8849 = vld [vmem:[#allocation16 + $0xa0] sm:$0xff]
    %v8850 = vld [vmem:[#allocation16 + $0xa8] sm:$0xff]
    %v8851 = vld [vmem:[#allocation16 + $0xb0] sm:$0xff]
    %v8852 = vld [vmem:[#allocation16 + $0xb8] sm:$0xff]
    %v8853 = vld [vmem:[#allocation16 + $0xc0] sm:$0xff]
    %v8854 = vld [vmem:[#allocation16 + $0xc8] sm:$0xff]
    %v8855 = vld [vmem:[#allocation16 + $0xd0] sm:$0xff]
    %v8856 = vld [vmem:[#allocation16 + $0xd8] sm:$0xff]
    %v8857 = vld [vmem:[#allocation16 + $0xe0] sm:$0xff]
    %v8858 = vld [vmem:[#allocation16 + $0xe8] sm:$0xff]
    %v8859 = vld [vmem:[#allocation16 + $0xf0] sm:$0xff]
    %v8860 = vld [vmem:[#allocation16 + $0xf8] sm:$0xff]
    %v8861 = vld [vmem:[#allocation16 + $0x100] sm:$0xff]
    %v8862 = vld [vmem:[#allocation16 + $0x108] sm:$0xff]
    %v8863 = vld [vmem:[#allocation16 + $0x110] sm:$0xff]
    %v8864 = vld [vmem:[#allocation16 + $0x118] sm:$0xff]
    %v8865 = vld [vmem:[#allocation16 + $0x120] sm:$0xff]
    %v8866 = vld [vmem:[#allocation16 + $0x128] sm:$0xff]
    %v8867 = vld [vmem:[#allocation16 + $0x130] sm:$0xff]
    %v8868 = vld [vmem:[#allocation16 + $0x138] sm:$0xff]
    %v8869 = vld [vmem:[#allocation16 + $0x140] sm:$0xff]
    %v8870 = vld [vmem:[#allocation16 + $0x148] sm:$0xff]
    %v8871 = vld [vmem:[#allocation16 + $0x150] sm:$0xff]
    %v8872 = vld [vmem:[#allocation16 + $0x158] sm:$0xff]
    %v8873 = vld [vmem:[#allocation16 + $0x160] sm:$0xff]
    %v8874 = vld [vmem:[#allocation16 + $0x168] sm:$0xff]
    %v8875 = vld [vmem:[#allocation16 + $0x170] sm:$0xff]
    %v8876 = vld [vmem:[#allocation16 + $0x178] sm:$0xff]
    %v8877 = vld [vmem:[#allocation16 + $0x180] sm:$0xff]
    %v8878 = vld [vmem:[#allocation16 + $0x188] sm:$0xff]
    %v8879 = vld [vmem:[#allocation16 + $0x190] sm:$0xff]
    %v8880 = vld [vmem:[#allocation16 + $0x198] sm:$0xff]
    %v8881 = vld [vmem:[#allocation16 + $0x1a0] sm:$0xff]
    %v8882 = vld [vmem:[#allocation16 + $0x1a8] sm:$0xff]
    %v8883 = vld [vmem:[#allocation16 + $0x1b0] sm:$0xff]
    %v8884 = vld [vmem:[#allocation16 + $0x1b8] sm:$0xff]
    %v8885 = vld [vmem:[#allocation16 + $0x1c0] sm:$0xff]
    %v8886 = vld [vmem:[#allocation16 + $0x1c8] sm:$0xff]
    %v8887 = vld [vmem:[#allocation16 + $0x1d0] sm:$0xff]
    %v8888 = vld [vmem:[#allocation16 + $0x1d8] sm:$0xff]
    %v8889 = vld [vmem:[#allocation16 + $0x1e0] sm:$0xff]
    %v8890 = vld [vmem:[#allocation16 + $0x1e8] sm:$0xff]
    %v8891 = vld [vmem:[#allocation16 + $0x1f0] sm:$0xff]
    %v8892 = vld [vmem:[#allocation16 + $0x1f8] sm:$0xff]
    %v8893 = vld [vmem:[#allocation16 + $0x200] sm:$0xff]
    %v8894 = vld [vmem:[#allocation16 + $0x208] sm:$0xff]
    %v8895 = vld [vmem:[#allocation16 + $0x210] sm:$0xff]
    %v8896 = vld [vmem:[#allocation16 + $0x218] sm:$0xff]
    %v8897 = vld [vmem:[#allocation16 + $0x220] sm:$0xff]
    %v8898 = vld [vmem:[#allocation16 + $0x228] sm:$0xff]
    %v8899 = vld [vmem:[#allocation16 + $0x230] sm:$0xff]
    %v8900 = vld [vmem:[#allocation16 + $0x238] sm:$0xff]
    %v8901 = vld [vmem:[#allocation16 + $0x240] sm:$0xff]
    %v8902 = vld [vmem:[#allocation16 + $0x248] sm:$0xff]
    %v8903 = vld [vmem:[#allocation16 + $0x250] sm:$0xff]
    %v8904 = vld [vmem:[#allocation16 + $0x258] sm:$0xff]
    %v8905 = vld [vmem:[#allocation16 + $0x260] sm:$0xff]
    %v8906 = vld [vmem:[#allocation16 + $0x268] sm:$0xff]
    %v8907 = vld [vmem:[#allocation16 + $0x270] sm:$0xff]
    %v8908 = vld [vmem:[#allocation16 + $0x278] sm:$0xff]
    %v8909 = vld [vmem:[#allocation16 + $0x280] sm:$0xff]
    %v8910 = vld [vmem:[#allocation16 + $0x288] sm:$0xff]
    %v8911 = vld [vmem:[#allocation16 + $0x290] sm:$0xff]
    %v8912 = vld [vmem:[#allocation16 + $0x298] sm:$0xff]
    %v8913 = vld [vmem:[#allocation16 + $0x2a0] sm:$0xff]
    %v8914 = vld [vmem:[#allocation16 + $0x2a8] sm:$0xff]
    %v8915 = vld [vmem:[#allocation16 + $0x2b0] sm:$0xff]
    %v8916 = vld [vmem:[#allocation16 + $0x2b8] sm:$0xff]
    %v8917 = vld [vmem:[#allocation16 + $0x2c0] sm:$0xff]
    %v8918 = vld [vmem:[#allocation16 + $0x2c8] sm:$0xff]
    %v8919 = vld [vmem:[#allocation16 + $0x2d0] sm:$0xff]
    %v8920 = vld [vmem:[#allocation16 + $0x2d8] sm:$0xff]
    %v8921 = vld [vmem:[#allocation16 + $0x2e0] sm:$0xff]
    %v8922 = vld [vmem:[#allocation16 + $0x2e8] sm:$0xff]
    %v8923 = vld [vmem:[#allocation16 + $0x2f0] sm:$0xff]
    %v8924 = vld [vmem:[#allocation16 + $0x2f8] sm:$0xff]
    %v8925 = vld [vmem:[#allocation16 + $0x300] sm:$0xff]
    %v8926 = vld [vmem:[#allocation16 + $0x308] sm:$0xff]
    %v8927 = vld [vmem:[#allocation16 + $0x310] sm:$0xff]
    %v8928 = vld [vmem:[#allocation16 + $0x318] sm:$0xff]
    %v8929 = vld [vmem:[#allocation16 + $0x320] sm:$0xff]
    %v8930 = vld [vmem:[#allocation16 + $0x328] sm:$0xff]
    %v8931 = vld [vmem:[#allocation16 + $0x330] sm:$0xff]
    %v8932 = vld [vmem:[#allocation16 + $0x338] sm:$0xff]
    %v8933 = vld [vmem:[#allocation16 + $0x340] sm:$0xff]
    %v8934 = vld [vmem:[#allocation16 + $0x348] sm:$0xff]
    %v8935 = vld [vmem:[#allocation16 + $0x350] sm:$0xff]
    %v8936 = vld [vmem:[#allocation16 + $0x358] sm:$0xff]
    %v8937 = vld [vmem:[#allocation16 + $0x360] sm:$0xff]
    %v8938 = vld [vmem:[#allocation16 + $0x368] sm:$0xff]
    %v8939 = vld [vmem:[#allocation16 + $0x370] sm:$0xff]
    %v8940 = vld [vmem:[#allocation16 + $0x378] sm:$0xff]
    %v8941 = vld [vmem:[#allocation16 + $0x380] sm:$0xff]
    %v8942 = vld [vmem:[#allocation16 + $0x388] sm:$0xff]
    %v8943 = vld [vmem:[#allocation16 + $0x390] sm:$0xff]
    %v8944 = vld [vmem:[#allocation16 + $0x398] sm:$0xff]
    %v8945 = vld [vmem:[#allocation16 + $0x3a0] sm:$0xff]
    %v8946 = vld [vmem:[#allocation16 + $0x3a8] sm:$0xff]
    %v8947 = vld [vmem:[#allocation16 + $0x3b0] sm:$0xff]
    %v8948 = vld [vmem:[#allocation16 + $0x3b8] sm:$0xff]
    %v8949 = vld [vmem:[#allocation16 + $0x3c0] sm:$0xff]
    %v8950 = vld [vmem:[#allocation16 + $0x3c8] sm:$0xff]
    %v8951 = vld [vmem:[#allocation16 + $0x3d0] sm:$0xff]
    %v8952 = vld [vmem:[#allocation16 + $0x3d8] sm:$0xff]
    %v8953 = vld [vmem:[#allocation16 + $0x3e0] sm:$0xff]
    %v8954 = vld [vmem:[#allocation16 + $0x3e8] sm:$0xff]
    %v8955 = vld [vmem:[#allocation16 + $0x3f0] sm:$0xff]
    %v8956 = vld [vmem:[#allocation16 + $0x3f8] sm:$0xff]
    %v8957 = vld [vmem:[#allocation16 + $0x400] sm:$0xff]
    %v8958 = vld [vmem:[#allocation16 + $0x408] sm:$0xff]
    %v8959 = vld [vmem:[#allocation16 + $0x410] sm:$0xff]
    %v8960 = vld [vmem:[#allocation16 + $0x418] sm:$0xff]
    %v8961 = vld [vmem:[#allocation16 + $0x420] sm:$0xff]
    %v8962 = vld [vmem:[#allocation16 + $0x428] sm:$0xff]
    %v8963 = vld [vmem:[#allocation16 + $0x430] sm:$0xff]
    %v8964 = vld [vmem:[#allocation16 + $0x438] sm:$0xff]
    %v8965 = vld [vmem:[#allocation16 + $0x440] sm:$0xff]
    %v8966 = vld [vmem:[#allocation16 + $0x448] sm:$0xff]
    %v8967 = vld [vmem:[#allocation16 + $0x450] sm:$0xff]
    %v8968 = vld [vmem:[#allocation16 + $0x458] sm:$0xff]
    %v8969 = vld [vmem:[#allocation16 + $0x460] sm:$0xff]
    %v8970 = vld [vmem:[#allocation16 + $0x468] sm:$0xff]
    %v8971 = vld [vmem:[#allocation16 + $0x470] sm:$0xff]
    %v8972 = vld [vmem:[#allocation16 + $0x478] sm:$0xff]
    %v8973 = vld [vmem:[#allocation16 + $0x480] sm:$0xff]
    %v8974 = vld [vmem:[#allocation16 + $0x488] sm:$0xff]
    %v8975 = vld [vmem:[#allocation16 + $0x490] sm:$0xff]
    %v8976 = vld [vmem:[#allocation16 + $0x498] sm:$0xff]
    %v8977 = vld [vmem:[#allocation16 + $0x4a0] sm:$0xff]
    %v8978 = vld [vmem:[#allocation16 + $0x4a8] sm:$0xff]
    %v8979 = vld [vmem:[#allocation16 + $0x4b0] sm:$0xff]
    %v8980 = vld [vmem:[#allocation16 + $0x4b8] sm:$0xff]
    %v8981 = vld [vmem:[#allocation16 + $0x4c0] sm:$0xff]
    %v8982 = vld [vmem:[#allocation16 + $0x4c8] sm:$0xff]
    %v8983 = vld [vmem:[#allocation16 + $0x4d0] sm:$0xff]
    %v8984 = vld [vmem:[#allocation16 + $0x4d8] sm:$0xff]
    %v8985 = vld [vmem:[#allocation16 + $0x4e0] sm:$0xff]
    %v8986 = vld [vmem:[#allocation16 + $0x4e8] sm:$0xff]
    %v8987 = vld [vmem:[#allocation16 + $0x4f0] sm:$0xff]
    %v8988 = vld [vmem:[#allocation16 + $0x4f8] sm:$0xff]
    %v8989 = vld [vmem:[#allocation16 + $0x500] sm:$0xff]
    %v8990 = vld [vmem:[#allocation16 + $0x508] sm:$0xff]
    %v8991 = vld [vmem:[#allocation16 + $0x510] sm:$0xff]
    %v8992 = vld [vmem:[#allocation16 + $0x518] sm:$0xff]
    %v8993 = vld [vmem:[#allocation16 + $0x520] sm:$0xff]
    %v8994 = vld [vmem:[#allocation16 + $0x528] sm:$0xff]
    %v8995 = vld [vmem:[#allocation16 + $0x530] sm:$0xff]
    %v8996 = vld [vmem:[#allocation16 + $0x538] sm:$0xff]
    %v8997 = vld [vmem:[#allocation16 + $0x540] sm:$0xff]
    %v8998 = vld [vmem:[#allocation16 + $0x548] sm:$0xff]
    %v8999 = vld [vmem:[#allocation16 + $0x550] sm:$0xff]
    %v9000 = vld [vmem:[#allocation16 + $0x558] sm:$0xff]
    %v9001 = vld [vmem:[#allocation16 + $0x560] sm:$0xff]
    %v9002 = vld [vmem:[#allocation16 + $0x568] sm:$0xff]
    %v9003 = vld [vmem:[#allocation16 + $0x570] sm:$0xff]
    %v9004 = vld [vmem:[#allocation16 + $0x578] sm:$0xff]
    %v9005 = vld [vmem:[#allocation16 + $0x580] sm:$0xff]
    %v9006 = vld [vmem:[#allocation16 + $0x588] sm:$0xff]
    %v9007 = vld [vmem:[#allocation16 + $0x590] sm:$0xff]
    %v9008 = vld [vmem:[#allocation16 + $0x598] sm:$0xff]
    %v9009 = vld [vmem:[#allocation16 + $0x5a0] sm:$0xff]
    %v9010 = vld [vmem:[#allocation16 + $0x5a8] sm:$0xff]
    %v9011 = vld [vmem:[#allocation16 + $0x5b0] sm:$0xff]
    %v9012 = vld [vmem:[#allocation16 + $0x5b8] sm:$0xff]
    %v9013 = vld [vmem:[#allocation16 + $0x5c0] sm:$0xff]
    %v9014 = vld [vmem:[#allocation16 + $0x5c8] sm:$0xff]
    %v9015 = vld [vmem:[#allocation16 + $0x5d0] sm:$0xff]
    %v9016 = vld [vmem:[#allocation16 + $0x5d8] sm:$0xff]
    %v9017 = vld [vmem:[#allocation16 + $0x5e0] sm:$0xff]
    %v9018 = vld [vmem:[#allocation16 + $0x5e8] sm:$0xff]
    %v9019 = vld [vmem:[#allocation16 + $0x5f0] sm:$0xff]
    %v9020 = vld [vmem:[#allocation16 + $0x5f8] sm:$0xff]
    %v9021 = vld [vmem:[#allocation16 + $0x600] sm:$0xff]
    %v9022 = vld [vmem:[#allocation16 + $0x608] sm:$0xff]
    %v9023 = vld [vmem:[#allocation16 + $0x610] sm:$0xff]
    %v9024 = vld [vmem:[#allocation16 + $0x618] sm:$0xff]
    %v9025 = vld [vmem:[#allocation16 + $0x620] sm:$0xff]
    %v9026 = vld [vmem:[#allocation16 + $0x628] sm:$0xff]
    %v9027 = vld [vmem:[#allocation16 + $0x630] sm:$0xff]
    %v9028 = vld [vmem:[#allocation16 + $0x638] sm:$0xff]
    %v9029 = vld [vmem:[#allocation16 + $0x640] sm:$0xff]
    %v9030 = vld [vmem:[#allocation16 + $0x648] sm:$0xff]
    %v9031 = vld [vmem:[#allocation16 + $0x650] sm:$0xff]
    %v9032 = vld [vmem:[#allocation16 + $0x658] sm:$0xff]
    %v9033 = vld [vmem:[#allocation16 + $0x660] sm:$0xff]
    %v9034 = vld [vmem:[#allocation16 + $0x668] sm:$0xff]
    %v9035 = vld [vmem:[#allocation16 + $0x670] sm:$0xff]
    %v9036 = vld [vmem:[#allocation16 + $0x678] sm:$0xff]
    %v9037 = vld [vmem:[#allocation16 + $0x680] sm:$0xff]
    %v9038 = vld [vmem:[#allocation16 + $0x688] sm:$0xff]
    %v9039 = vld [vmem:[#allocation16 + $0x690] sm:$0xff]
    %v9040 = vld [vmem:[#allocation16 + $0x698] sm:$0xff]
    %v9041 = vld [vmem:[#allocation16 + $0x6a0] sm:$0xff]
    %v9042 = vld [vmem:[#allocation16 + $0x6a8] sm:$0xff]
    %v9043 = vld [vmem:[#allocation16 + $0x6b0] sm:$0xff]
    %v9044 = vld [vmem:[#allocation16 + $0x6b8] sm:$0xff]
    %v9045 = vld [vmem:[#allocation16 + $0x6c0] sm:$0xff]
    %v9046 = vld [vmem:[#allocation16 + $0x6c8] sm:$0xff]
    %v9047 = vld [vmem:[#allocation16 + $0x6d0] sm:$0xff]
    %v9048 = vld [vmem:[#allocation16 + $0x6d8] sm:$0xff]
    %v9049 = vld [vmem:[#allocation16 + $0x6e0] sm:$0xff]
    %v9050 = vld [vmem:[#allocation16 + $0x6e8] sm:$0xff]
    %v9051 = vld [vmem:[#allocation16 + $0x6f0] sm:$0xff]
    %v9052 = vld [vmem:[#allocation16 + $0x6f8] sm:$0xff]
    %v9053 = vld [vmem:[#allocation16 + $0x700] sm:$0xff]
    %v9054 = vld [vmem:[#allocation16 + $0x708] sm:$0xff]
    %v9055 = vld [vmem:[#allocation16 + $0x710] sm:$0xff]
    %v9056 = vld [vmem:[#allocation16 + $0x718] sm:$0xff]
    %v9057 = vld [vmem:[#allocation16 + $0x720] sm:$0xff]
    %v9058 = vld [vmem:[#allocation16 + $0x728] sm:$0xff]
    %v9059 = vld [vmem:[#allocation16 + $0x730] sm:$0xff]
    %v9060 = vld [vmem:[#allocation16 + $0x738] sm:$0xff]
    %v9061 = vld [vmem:[#allocation16 + $0x740] sm:$0xff]
    %v9062 = vld [vmem:[#allocation16 + $0x748] sm:$0xff]
    %v9063 = vld [vmem:[#allocation16 + $0x750] sm:$0xff]
    %v9064 = vld [vmem:[#allocation16 + $0x758] sm:$0xff]
    %v9065 = vld [vmem:[#allocation16 + $0x760] sm:$0xff]
    %v9066 = vld [vmem:[#allocation16 + $0x768] sm:$0xff]
    %v9067 = vld [vmem:[#allocation16 + $0x770] sm:$0xff]
    %v9068 = vld [vmem:[#allocation16 + $0x778] sm:$0xff]
    %v9069 = vld [vmem:[#allocation16 + $0x780] sm:$0xff]
    %v9070 = vld [vmem:[#allocation16 + $0x788] sm:$0xff]
    %v9071 = vld [vmem:[#allocation16 + $0x790] sm:$0xff]
    %v9072 = vld [vmem:[#allocation16 + $0x798] sm:$0xff]
    %v9073 = vld [vmem:[#allocation16 + $0x7a0] sm:$0xff]
    %v9074 = vld [vmem:[#allocation16 + $0x7a8] sm:$0xff]
    %v9075 = vld [vmem:[#allocation16 + $0x7b0] sm:$0xff]
    %v9076 = vld [vmem:[#allocation16 + $0x7b8] sm:$0xff]
    %v9077 = vld [vmem:[#allocation16 + $0x7c0] sm:$0xff]
    %v9078 = vld [vmem:[#allocation16 + $0x7c8] sm:$0xff]
    %v9079 = vld [vmem:[#allocation16 + $0x7d0] sm:$0xff]
    %v9080 = vld [vmem:[#allocation16 + $0x7d8] sm:$0xff]
    %v9081 = vld [vmem:[#allocation16 + $0x7e0] sm:$0xff]
    %v9082 = vld [vmem:[#allocation16 + $0x7e8] sm:$0xff]
    %v9083 = vld [vmem:[#allocation16 + $0x7f0] sm:$0xff]
    %v9084 = vld [vmem:[#allocation16 + $0x7f8] sm:$0xff]
    %v9085 = vld [vmem:[#allocation16 + $0x800] sm:$0xff]
    %v9086 = vld [vmem:[#allocation16 + $0x808] sm:$0xff]
    %v9087 = vld [vmem:[#allocation16 + $0x810] sm:$0xff]
    %v9088 = vld [vmem:[#allocation16 + $0x818] sm:$0xff]
    %v9089 = vld [vmem:[#allocation16 + $0x820] sm:$0xff]
    %v9090 = vld [vmem:[#allocation16 + $0x828] sm:$0xff]
    %v9091 = vld [vmem:[#allocation16 + $0x830] sm:$0xff]
    %v9092 = vld [vmem:[#allocation16 + $0x838] sm:$0xff]
    %v9093 = vld [vmem:[#allocation16 + $0x840] sm:$0xff]
    %v9094 = vld [vmem:[#allocation16 + $0x848] sm:$0xff]
    %v9095 = vld [vmem:[#allocation16 + $0x850] sm:$0xff]
    %v9096 = vld [vmem:[#allocation16 + $0x858] sm:$0xff]
    %v9097 = vld [vmem:[#allocation16 + $0x860] sm:$0xff]
    %v9098 = vld [vmem:[#allocation16 + $0x868] sm:$0xff]
    %v9099 = vld [vmem:[#allocation16 + $0x870] sm:$0xff]
    %v9100 = vld [vmem:[#allocation16 + $0x878] sm:$0xff]
    %v9101 = vld [vmem:[#allocation16 + $0x880] sm:$0xff]
    %v9102 = vld [vmem:[#allocation16 + $0x888] sm:$0xff]
    %v9103 = vld [vmem:[#allocation16 + $0x890] sm:$0xff]
    %v9104 = vld [vmem:[#allocation16 + $0x898] sm:$0xff]
    %v9105 = vld [vmem:[#allocation16 + $0x8a0] sm:$0xff]
    %v9106 = vld [vmem:[#allocation16 + $0x8a8] sm:$0xff]
    %v9107 = vld [vmem:[#allocation16 + $0x8b0] sm:$0xff]
    %v9108 = vld [vmem:[#allocation16 + $0x8b8] sm:$0xff]
    %v9109 = vld [vmem:[#allocation16 + $0x8c0] sm:$0xff]
    %v9110 = vld [vmem:[#allocation16 + $0x8c8] sm:$0xff]
    %v9111 = vld [vmem:[#allocation16 + $0x8d0] sm:$0xff]
    %v9112 = vld [vmem:[#allocation16 + $0x8d8] sm:$0xff]
    %v9113 = vld [vmem:[#allocation16 + $0x8e0] sm:$0xff]
    %v9114 = vld [vmem:[#allocation16 + $0x8e8] sm:$0xff]
    %v9115 = vld [vmem:[#allocation16 + $0x8f0] sm:$0xff]
    %v9116 = vld [vmem:[#allocation16 + $0x8f8] sm:$0xff]
    %v9117 = vld [vmem:[#allocation16 + $0x900] sm:$0xff]
    %v9118 = vld [vmem:[#allocation16 + $0x908] sm:$0xff]
    %v9119 = vld [vmem:[#allocation16 + $0x910] sm:$0xff]
    %v9120 = vld [vmem:[#allocation16 + $0x918] sm:$0xff]
    %v9121 = vld [vmem:[#allocation16 + $0x920] sm:$0xff]
    %v9122 = vld [vmem:[#allocation16 + $0x928] sm:$0xff]
    %v9123 = vld [vmem:[#allocation16 + $0x930] sm:$0xff]
    %v9124 = vld [vmem:[#allocation16 + $0x938] sm:$0xff]
    %v9125 = vld [vmem:[#allocation16 + $0x940] sm:$0xff]
    %v9126 = vld [vmem:[#allocation16 + $0x948] sm:$0xff]
    %v9127 = vld [vmem:[#allocation16 + $0x950] sm:$0xff]
    %v9128 = vld [vmem:[#allocation16 + $0x958] sm:$0xff]
    %v9129 = vld [vmem:[#allocation16 + $0x960] sm:$0xff]
    %v9130 = vld [vmem:[#allocation16 + $0x968] sm:$0xff]
    %v9131 = vld [vmem:[#allocation16 + $0x970] sm:$0xff]
    %v9132 = vld [vmem:[#allocation16 + $0x978] sm:$0xff]
    %v9133 = vld [vmem:[#allocation16 + $0x980] sm:$0xff]
    %v9134 = vld [vmem:[#allocation16 + $0x988] sm:$0xff]
    %v9135 = vld [vmem:[#allocation16 + $0x990] sm:$0xff]
    %v9136 = vld [vmem:[#allocation16 + $0x998] sm:$0xff]
    %v9137 = vld [vmem:[#allocation16 + $0x9a0] sm:$0xff]
    %v9138 = vld [vmem:[#allocation16 + $0x9a8] sm:$0xff]
    %v9139 = vld [vmem:[#allocation16 + $0x9b0] sm:$0xff]
    %v9140 = vld [vmem:[#allocation16 + $0x9b8] sm:$0xff]
    %v9141 = vld [vmem:[#allocation16 + $0x9c0] sm:$0xff]
    %v9142 = vld [vmem:[#allocation16 + $0x9c8] sm:$0xff]
    %v9143 = vld [vmem:[#allocation16 + $0x9d0] sm:$0xff]
    %v9144 = vld [vmem:[#allocation16 + $0x9d8] sm:$0xff]
    %v9145 = vld [vmem:[#allocation16 + $0x9e0] sm:$0xff]
    %v9146 = vld [vmem:[#allocation16 + $0x9e8] sm:$0xff]
    %v9147 = vld [vmem:[#allocation16 + $0x9f0] sm:$0xff]
    %v9148 = vld [vmem:[#allocation16 + $0x9f8] sm:$0xff]
    %v9149 = vld [vmem:[#allocation16 + $0xa00] sm:$0xff]
    %v9150 = vld [vmem:[#allocation16 + $0xa08] sm:$0xff]
    %v9151 = vld [vmem:[#allocation16 + $0xa10] sm:$0xff]
    %v9152 = vld [vmem:[#allocation16 + $0xa18] sm:$0xff]
    %v9153 = vld [vmem:[#allocation16 + $0xa20] sm:$0xff]
    %v9154 = vld [vmem:[#allocation16 + $0xa28] sm:$0xff]
    %v9155 = vld [vmem:[#allocation16 + $0xa30] sm:$0xff]
    %v9156 = vld [vmem:[#allocation16 + $0xa38] sm:$0xff]
    %v9157 = vld [vmem:[#allocation16 + $0xa40] sm:$0xff]
    %v9158 = vld [vmem:[#allocation16 + $0xa48] sm:$0xff]
    %v9159 = vld [vmem:[#allocation16 + $0xa50] sm:$0xff]
    %v9160 = vld [vmem:[#allocation16 + $0xa58] sm:$0xff]
    %v9161 = vld [vmem:[#allocation16 + $0xa60] sm:$0xff]
    %v9162 = vld [vmem:[#allocation16 + $0xa68] sm:$0xff]
    %v9163 = vld [vmem:[#allocation16 + $0xa70] sm:$0xff]
    %v9164 = vld [vmem:[#allocation16 + $0xa78] sm:$0xff]
    %v9165 = vld [vmem:[#allocation16 + $0xa80] sm:$0xff]
    %v9166 = vld [vmem:[#allocation16 + $0xa88] sm:$0xff]
    %v9167 = vld [vmem:[#allocation16 + $0xa90] sm:$0xff]
    %v9168 = vld [vmem:[#allocation16 + $0xa98] sm:$0xff]
    %v9169 = vld [vmem:[#allocation16 + $0xaa0] sm:$0xff]
    %v9170 = vld [vmem:[#allocation16 + $0xaa8] sm:$0xff]
    %v9171 = vld [vmem:[#allocation16 + $0xab0] sm:$0xff]
    %v9172 = vld [vmem:[#allocation16 + $0xab8] sm:$0xff]
    %v9173 = vld [vmem:[#allocation16 + $0xac0] sm:$0xff]
    %v9174 = vld [vmem:[#allocation16 + $0xac8] sm:$0xff]
    %v9175 = vld [vmem:[#allocation16 + $0xad0] sm:$0xff]
    %v9176 = vld [vmem:[#allocation16 + $0xad8] sm:$0xff]
    %v9177 = vld [vmem:[#allocation16 + $0xae0] sm:$0xff]
    %v9178 = vld [vmem:[#allocation16 + $0xae8] sm:$0xff]
    %v9179 = vld [vmem:[#allocation16 + $0xaf0] sm:$0xff]
    %v9180 = vld [vmem:[#allocation16 + $0xaf8] sm:$0xff]
    %v9181 = vld [vmem:[#allocation16 + $0xb00] sm:$0xff]
    %v9182 = vld [vmem:[#allocation16 + $0xb08] sm:$0xff]
    %v9183 = vld [vmem:[#allocation16 + $0xb10] sm:$0xff]
    %v9184 = vld [vmem:[#allocation16 + $0xb18] sm:$0xff]
    %v9185 = vld [vmem:[#allocation16 + $0xb20] sm:$0xff]
    %v9186 = vld [vmem:[#allocation16 + $0xb28] sm:$0xff]
    %v9187 = vld [vmem:[#allocation16 + $0xb30] sm:$0xff]
    %v9188 = vld [vmem:[#allocation16 + $0xb38] sm:$0xff]
    %v9189 = vld [vmem:[#allocation16 + $0xb40] sm:$0xff]
    %v9190 = vld [vmem:[#allocation16 + $0xb48] sm:$0xff]
    %v9191 = vld [vmem:[#allocation16 + $0xb50] sm:$0xff]
    %v9192 = vld [vmem:[#allocation16 + $0xb58] sm:$0xff]
    %v9193 = vld [vmem:[#allocation16 + $0xb60] sm:$0xff]
    %v9194 = vld [vmem:[#allocation16 + $0xb68] sm:$0xff]
    %v9195 = vld [vmem:[#allocation16 + $0xb70] sm:$0xff]
    %v9196 = vld [vmem:[#allocation16 + $0xb78] sm:$0xff]
    %v9197 = vld [vmem:[#allocation16 + $0xb80] sm:$0xff]
    %v9198 = vld [vmem:[#allocation16 + $0xb88] sm:$0xff]
    %v9199 = vld [vmem:[#allocation16 + $0xb90] sm:$0xff]
    %v9200 = vld [vmem:[#allocation16 + $0xb98] sm:$0xff]
    %v9201 = vld [vmem:[#allocation16 + $0xba0] sm:$0xff]
    %v9202 = vld [vmem:[#allocation16 + $0xba8] sm:$0xff]
    %v9203 = vld [vmem:[#allocation16 + $0xbb0] sm:$0xff]
    %v9204 = vld [vmem:[#allocation16 + $0xbb8] sm:$0xff]
    %v9205 = vld [vmem:[#allocation16 + $0xbc0] sm:$0xff]
    %v9206 = vld [vmem:[#allocation16 + $0xbc8] sm:$0xff]
    %v9207 = vld [vmem:[#allocation16 + $0xbd0] sm:$0xff]
    %v9208 = vld [vmem:[#allocation16 + $0xbd8] sm:$0xff]
    %v9209 = vld [vmem:[#allocation16 + $0xbe0] sm:$0xff]
    %v9210 = vld [vmem:[#allocation16 + $0xbe8] sm:$0xff]
    %v9211 = vld [vmem:[#allocation16 + $0xbf0] sm:$0xff]
    %v9212 = vld [vmem:[#allocation16 + $0xbf8] sm:$0xff]
    %v9213 = vld [vmem:[#allocation16 + $0xc00] sm:$0xff]
    %v9214 = vld [vmem:[#allocation16 + $0xc08] sm:$0xff]
    %v9215 = vld [vmem:[#allocation16 + $0xc10] sm:$0xff]
    %v9216 = vld [vmem:[#allocation16 + $0xc18] sm:$0xff]
    %v9217 = vld [vmem:[#allocation16 + $0xc20] sm:$0xff]
    %v9218 = vld [vmem:[#allocation16 + $0xc28] sm:$0xff]
    %v9219 = vld [vmem:[#allocation16 + $0xc30] sm:$0xff]
    %v9220 = vld [vmem:[#allocation16 + $0xc38] sm:$0xff]
    %v9221 = vld [vmem:[#allocation16 + $0xc40] sm:$0xff]
    %v9222 = vld [vmem:[#allocation16 + $0xc48] sm:$0xff]
    %v9223 = vld [vmem:[#allocation16 + $0xc50] sm:$0xff]
    %v9224 = vld [vmem:[#allocation16 + $0xc58] sm:$0xff]
    %v9225 = vld [vmem:[#allocation16 + $0xc60] sm:$0xff]
    %v9226 = vld [vmem:[#allocation16 + $0xc68] sm:$0xff]
    %v9227 = vld [vmem:[#allocation16 + $0xc70] sm:$0xff]
    %v9228 = vld [vmem:[#allocation16 + $0xc78] sm:$0xff]
    %v9229 = vld [vmem:[#allocation16 + $0xc80] sm:$0xff]
    %v9230 = vld [vmem:[#allocation16 + $0xc88] sm:$0xff]
    %v9231 = vld [vmem:[#allocation16 + $0xc90] sm:$0xff]
    %v9232 = vld [vmem:[#allocation16 + $0xc98] sm:$0xff]
    %v9233 = vld [vmem:[#allocation16 + $0xca0] sm:$0xff]
    %v9234 = vld [vmem:[#allocation16 + $0xca8] sm:$0xff]
    %v9235 = vld [vmem:[#allocation16 + $0xcb0] sm:$0xff]
    %v9236 = vld [vmem:[#allocation16 + $0xcb8] sm:$0xff]
    %v9237 = vld [vmem:[#allocation16 + $0xcc0] sm:$0xff]
    %v9238 = vld [vmem:[#allocation16 + $0xcc8] sm:$0xff]
    %v9239 = vld [vmem:[#allocation16 + $0xcd0] sm:$0xff]
    %v9240 = vld [vmem:[#allocation16 + $0xcd8] sm:$0xff]
    %v9241 = vld [vmem:[#allocation16 + $0xce0] sm:$0xff]
    %v9242 = vld [vmem:[#allocation16 + $0xce8] sm:$0xff]
    %v9243 = vld [vmem:[#allocation16 + $0xcf0] sm:$0xff]
    %v9244 = vld [vmem:[#allocation16 + $0xcf8] sm:$0xff]
    %v9245 = vld [vmem:[#allocation16 + $0xd00] sm:$0xff]
    %v9246 = vld [vmem:[#allocation16 + $0xd08] sm:$0xff]
    %v9247 = vld [vmem:[#allocation16 + $0xd10] sm:$0xff]
    %v9248 = vld [vmem:[#allocation16 + $0xd18] sm:$0xff]
    %v9249 = vld [vmem:[#allocation16 + $0xd20] sm:$0xff]
    %v9250 = vld [vmem:[#allocation16 + $0xd28] sm:$0xff]
    %v9251 = vld [vmem:[#allocation16 + $0xd30] sm:$0xff]
    %v9252 = vld [vmem:[#allocation16 + $0xd38] sm:$0xff]
    %v9253 = vld [vmem:[#allocation16 + $0xd40] sm:$0xff]
    %v9254 = vld [vmem:[#allocation16 + $0xd48] sm:$0xff]
    %v9255 = vld [vmem:[#allocation16 + $0xd50] sm:$0xff]
    %v9256 = vld [vmem:[#allocation16 + $0xd58] sm:$0xff]
    %v9257 = vld [vmem:[#allocation16 + $0xd60] sm:$0xff]
    %v9258 = vld [vmem:[#allocation16 + $0xd68] sm:$0xff]
    %v9259 = vld [vmem:[#allocation16 + $0xd70] sm:$0xff]
    %v9260 = vld [vmem:[#allocation16 + $0xd78] sm:$0xff]
    %v9261 = vld [vmem:[#allocation16 + $0xd80] sm:$0xff]
    %v9262 = vld [vmem:[#allocation16 + $0xd88] sm:$0xff]
    %v9263 = vld [vmem:[#allocation16 + $0xd90] sm:$0xff]
    %v9264 = vld [vmem:[#allocation16 + $0xd98] sm:$0xff]
    %v9265 = vld [vmem:[#allocation16 + $0xda0] sm:$0xff]
    %v9266 = vld [vmem:[#allocation16 + $0xda8] sm:$0xff]
    %v9267 = vld [vmem:[#allocation16 + $0xdb0] sm:$0xff]
    %v9268 = vld [vmem:[#allocation16 + $0xdb8] sm:$0xff]
    %v9269 = vld [vmem:[#allocation16 + $0xdc0] sm:$0xff]
    %v9270 = vld [vmem:[#allocation16 + $0xdc8] sm:$0xff]
    %v9271 = vld [vmem:[#allocation16 + $0xdd0] sm:$0xff]
    %v9272 = vld [vmem:[#allocation16 + $0xdd8] sm:$0xff]
    %v9273 = vld [vmem:[#allocation16 + $0xde0] sm:$0xff]
    %v9274 = vld [vmem:[#allocation16 + $0xde8] sm:$0xff]
    %v9275 = vld [vmem:[#allocation16 + $0xdf0] sm:$0xff]
    %v9276 = vld [vmem:[#allocation16 + $0xdf8] sm:$0xff]
    %v9277 = vld [vmem:[#allocation16 + $0xe00] sm:$0xff]
    %v9278 = vld [vmem:[#allocation16 + $0xe08] sm:$0xff]
    %v9279 = vld [vmem:[#allocation16 + $0xe10] sm:$0xff]
    %v9280 = vld [vmem:[#allocation16 + $0xe18] sm:$0xff]
    %v9281 = vld [vmem:[#allocation16 + $0xe20] sm:$0xff]
    %v9282 = vld [vmem:[#allocation16 + $0xe28] sm:$0xff]
    %v9283 = vld [vmem:[#allocation16 + $0xe30] sm:$0xff]
    %v9284 = vld [vmem:[#allocation16 + $0xe38] sm:$0xff]
    %v9285 = vld [vmem:[#allocation16 + $0xe40] sm:$0xff]
    %v9286 = vld [vmem:[#allocation16 + $0xe48] sm:$0xff]
    %v9287 = vld [vmem:[#allocation16 + $0xe50] sm:$0xff]
    %v9288 = vld [vmem:[#allocation16 + $0xe58] sm:$0xff]
    %v9289 = vld [vmem:[#allocation16 + $0xe60] sm:$0xff]
    %v9290 = vld [vmem:[#allocation16 + $0xe68] sm:$0xff]
    %v9291 = vld [vmem:[#allocation16 + $0xe70] sm:$0xff]
    %v9292 = vld [vmem:[#allocation16 + $0xe78] sm:$0xff]
    %v9293 = vld [vmem:[#allocation16 + $0xe80] sm:$0xff]
    %v9294 = vld [vmem:[#allocation16 + $0xe88] sm:$0xff]
    %v9295 = vld [vmem:[#allocation16 + $0xe90] sm:$0xff]
    %v9296 = vld [vmem:[#allocation16 + $0xe98] sm:$0xff]
    %v9297 = vld [vmem:[#allocation16 + $0xea0] sm:$0xff]
    %v9298 = vld [vmem:[#allocation16 + $0xea8] sm:$0xff]
    %v9299 = vld [vmem:[#allocation16 + $0xeb0] sm:$0xff]
    %v9300 = vld [vmem:[#allocation16 + $0xeb8] sm:$0xff]
    %v9301 = vld [vmem:[#allocation16 + $0xec0] sm:$0xff]
    %v9302 = vld [vmem:[#allocation16 + $0xec8] sm:$0xff]
    %v9303 = vld [vmem:[#allocation16 + $0xed0] sm:$0xff]
    %v9304 = vld [vmem:[#allocation16 + $0xed8] sm:$0xff]
    %v9305 = vld [vmem:[#allocation16 + $0xee0] sm:$0xff]
    %v9306 = vld [vmem:[#allocation16 + $0xee8] sm:$0xff]
    %v9307 = vld [vmem:[#allocation16 + $0xef0] sm:$0xff]
    %v9308 = vld [vmem:[#allocation16 + $0xef8] sm:$0xff]
    %v9309 = vld [vmem:[#allocation16 + $0xf00] sm:$0xff]
    %v9310 = vld [vmem:[#allocation16 + $0xf08] sm:$0xff]
    %v9311 = vld [vmem:[#allocation16 + $0xf10] sm:$0xff]
    %v9312 = vld [vmem:[#allocation16 + $0xf18] sm:$0xff]
    %v9313 = vld [vmem:[#allocation16 + $0xf20] sm:$0xff]
    %v9314 = vld [vmem:[#allocation16 + $0xf28] sm:$0xff]
    %v9315 = vld [vmem:[#allocation16 + $0xf30] sm:$0xff]
    %v9316 = vld [vmem:[#allocation16 + $0xf38] sm:$0xff]
    %v9317 = vld [vmem:[#allocation16 + $0xf40] sm:$0xff]
    %v9318 = vld [vmem:[#allocation16 + $0xf48] sm:$0xff]
    %v9319 = vld [vmem:[#allocation16 + $0xf50] sm:$0xff]
    %v9320 = vld [vmem:[#allocation16 + $0xf58] sm:$0xff]
    %v9321 = vld [vmem:[#allocation16 + $0xf60] sm:$0xff]
    %v9322 = vld [vmem:[#allocation16 + $0xf68] sm:$0xff]
    %v9323 = vld [vmem:[#allocation16 + $0xf70] sm:$0xff]
    %v9324 = vld [vmem:[#allocation16 + $0xf78] sm:$0xff]
    %v9325 = vld [vmem:[#allocation16 + $0xf80] sm:$0xff]
    %v9326 = vld [vmem:[#allocation16 + $0xf88] sm:$0xff]
    %v9327 = vld [vmem:[#allocation16 + $0xf90] sm:$0xff]
    %v9328 = vld [vmem:[#allocation16 + $0xf98] sm:$0xff]
    %v9329 = vld [vmem:[#allocation16 + $0xfa0] sm:$0xff]
    %v9330 = vld [vmem:[#allocation16 + $0xfa8] sm:$0xff]
    %v9331 = vld [vmem:[#allocation16 + $0xfb0] sm:$0xff]
    %v9332 = vld [vmem:[#allocation16 + $0xfb8] sm:$0xff]
    %v9333 = vld [vmem:[#allocation16 + $0xfc0] sm:$0xff]
    %v9334 = vld [vmem:[#allocation16 + $0xfc8] sm:$0xff]
    %v9335 = vld [vmem:[#allocation16 + $0xfd0] sm:$0xff]
    %v9336 = vld [vmem:[#allocation16 + $0xfd8] sm:$0xff]
    %v9337 = vld [vmem:[#allocation16 + $0xfe0] sm:$0xff]
    %v9338 = vld [vmem:[#allocation16 + $0xfe8] sm:$0xff]
    %v9339 = vld [vmem:[#allocation16 + $0xff0] sm:$0xff]
    %v9340 = vld [vmem:[#allocation16 + $0xff8] sm:$0xff]
    %v9341 = vld [vmem:[#allocation16 + $0x1000] sm:$0xff]
    %v9342 = vld [vmem:[#allocation16 + $0x1008] sm:$0xff]
    %v9343 = vld [vmem:[#allocation16 + $0x1010] sm:$0xff]
    %v9344 = vld [vmem:[#allocation16 + $0x1018] sm:$0xff]
    %v9345 = vld [vmem:[#allocation16 + $0x1020] sm:$0xff]
    %v9346 = vld [vmem:[#allocation16 + $0x1028] sm:$0xff]
    %v9347 = vld [vmem:[#allocation16 + $0x1030] sm:$0xff]
    %v9348 = vld [vmem:[#allocation16 + $0x1038] sm:$0xff]
    %v9349 = vld [vmem:[#allocation16 + $0x1040] sm:$0xff]
    %v9350 = vld [vmem:[#allocation16 + $0x1048] sm:$0xff]
    %v9351 = vld [vmem:[#allocation16 + $0x1050] sm:$0xff]
    %v9352 = vld [vmem:[#allocation16 + $0x1058] sm:$0xff]
    %v9353 = vld [vmem:[#allocation16 + $0x1060] sm:$0xff]
    %v9354 = vld [vmem:[#allocation16 + $0x1068] sm:$0xff]
    %v9355 = vld [vmem:[#allocation16 + $0x1070] sm:$0xff]
    %v9356 = vld [vmem:[#allocation16 + $0x1078] sm:$0xff]
    %v9357 = vld [vmem:[#allocation16 + $0x1080] sm:$0xff]
    %v9358 = vld [vmem:[#allocation16 + $0x1088] sm:$0xff]
    %v9359 = vld [vmem:[#allocation16 + $0x1090] sm:$0xff]
    %v9360 = vld [vmem:[#allocation16 + $0x1098] sm:$0xff]
    %v9361 = vld [vmem:[#allocation16 + $0x10a0] sm:$0xff]
    %v9362 = vld [vmem:[#allocation16 + $0x10a8] sm:$0xff]
    %v9363 = vld [vmem:[#allocation16 + $0x10b0] sm:$0xff]
    %v9364 = vld [vmem:[#allocation16 + $0x10b8] sm:$0xff]
    %v9365 = vld [vmem:[#allocation16 + $0x10c0] sm:$0xff]
    %v9366 = vld [vmem:[#allocation16 + $0x10c8] sm:$0xff]
    %v9367 = vld [vmem:[#allocation16 + $0x10d0] sm:$0xff]
    %v9368 = vld [vmem:[#allocation16 + $0x10d8] sm:$0xff]
    %v9369 = vld [vmem:[#allocation16 + $0x10e0] sm:$0xff]
    %v9370 = vld [vmem:[#allocation16 + $0x10e8] sm:$0xff]
    %v9371 = vld [vmem:[#allocation16 + $0x10f0] sm:$0xff]
    %v9372 = vld [vmem:[#allocation16 + $0x10f8] sm:$0xff]
    %v9373 = vld [vmem:[#allocation16 + $0x1100] sm:$0xff]
    %v9374 = vld [vmem:[#allocation16 + $0x1108] sm:$0xff]
    %v9375 = vld [vmem:[#allocation16 + $0x1110] sm:$0xff]
    %v9376 = vld [vmem:[#allocation16 + $0x1118] sm:$0xff]
    %v9377 = vld [vmem:[#allocation16 + $0x1120] sm:$0xff]
    %v9378 = vld [vmem:[#allocation16 + $0x1128] sm:$0xff]
    %v9379 = vld [vmem:[#allocation16 + $0x1130] sm:$0xff]
    %v9380 = vld [vmem:[#allocation16 + $0x1138] sm:$0xff]
    %v9381 = vld [vmem:[#allocation16 + $0x1140] sm:$0xff]
    %v9382 = vld [vmem:[#allocation16 + $0x1148] sm:$0xff]
    %v9383 = vld [vmem:[#allocation16 + $0x1150] sm:$0xff]
    %v9384 = vld [vmem:[#allocation16 + $0x1158] sm:$0xff]
    %v9385 = vld [vmem:[#allocation16 + $0x1160] sm:$0xff]
    %v9386 = vld [vmem:[#allocation16 + $0x1168] sm:$0xff]
    %v9387 = vld [vmem:[#allocation16 + $0x1170] sm:$0xff]
    %v9388 = vld [vmem:[#allocation16 + $0x1178] sm:$0xff]
    %v9389 = vld [vmem:[#allocation16 + $0x1180] sm:$0xff]
    %v9390 = vld [vmem:[#allocation16 + $0x1188] sm:$0xff]
    %v9391 = vld [vmem:[#allocation16 + $0x1190] sm:$0xff]
    %v9392 = vld [vmem:[#allocation16 + $0x1198] sm:$0xff]
    %v9393 = vld [vmem:[#allocation16 + $0x11a0] sm:$0xff]
    %v9394 = vld [vmem:[#allocation16 + $0x11a8] sm:$0xff]
    %v9395 = vld [vmem:[#allocation16 + $0x11b0] sm:$0xff]
    %v9396 = vld [vmem:[#allocation16 + $0x11b8] sm:$0xff]
    %v9397 = vld [vmem:[#allocation16 + $0x11c0] sm:$0xff]
    %v9398 = vld [vmem:[#allocation16 + $0x11c8] sm:$0xff]
    %v9399 = vld [vmem:[#allocation16 + $0x11d0] sm:$0xff]
    %v9400 = vld [vmem:[#allocation16 + $0x11d8] sm:$0xff]
    %v9401 = vld [vmem:[#allocation16 + $0x11e0] sm:$0xff]
    %v9402 = vld [vmem:[#allocation16 + $0x11e8] sm:$0xff]
    %v9403 = vld [vmem:[#allocation16 + $0x11f0] sm:$0xff]
    %v9404 = vld [vmem:[#allocation16 + $0x11f8] sm:$0xff]
    %v9981 = vunpack.c.l.b16 %v8829
    %v9982 = vunpack.c.h.b16 %v8829
    %v9983 = vunpack.c.l.b16 %v8830
    %v9984 = vunpack.c.h.b16 %v8830
    %v9985 = vunpack.c.l.b16 %v8831
    %v9986 = vunpack.c.h.b16 %v8831
    %v9987 = vunpack.c.l.b16 %v8832
    %v9988 = vunpack.c.h.b16 %v8832
    %v9989 = vunpack.c.l.b16 %v8833
    %v9990 = vunpack.c.h.b16 %v8833
    %v9991 = vunpack.c.l.b16 %v8834
    %v9992 = vunpack.c.h.b16 %v8834
    %v9993 = vunpack.c.l.b16 %v8835
    %v9994 = vunpack.c.h.b16 %v8835
    %v9995 = vunpack.c.l.b16 %v8836
    %v9996 = vunpack.c.h.b16 %v8836
    %v9997 = vunpack.c.l.b16 %v8837
    %v9998 = vunpack.c.h.b16 %v8837
    %v9999 = vunpack.c.l.b16 %v8838
    %v10000 = vunpack.c.h.b16 %v8838
    %v10001 = vunpack.c.l.b16 %v8839
    %v10002 = vunpack.c.h.b16 %v8839
    %v10003 = vunpack.c.l.b16 %v8840
    %v10004 = vunpack.c.h.b16 %v8840
    %v10005 = vunpack.c.l.b16 %v8841
    %v10006 = vunpack.c.h.b16 %v8841
    %v10007 = vunpack.c.l.b16 %v8842
    %v10008 = vunpack.c.h.b16 %v8842
    %v10009 = vunpack.c.l.b16 %v8843
    %v10010 = vunpack.c.h.b16 %v8843
    %v10011 = vunpack.c.l.b16 %v8844
    %v10012 = vunpack.c.h.b16 %v8844
    %v10013 = vunpack.c.l.b16 %v8845
    %v10014 = vunpack.c.h.b16 %v8845
    %v10015 = vunpack.c.l.b16 %v8846
    %v10016 = vunpack.c.h.b16 %v8846
    %v10017 = vunpack.c.l.b16 %v8847
    %v10018 = vunpack.c.h.b16 %v8847
    %v10019 = vunpack.c.l.b16 %v8848
    %v10020 = vunpack.c.h.b16 %v8848
    %v10021 = vunpack.c.l.b16 %v8849
    %v10022 = vunpack.c.h.b16 %v8849
    %v10023 = vunpack.c.l.b16 %v8850
    %v10024 = vunpack.c.h.b16 %v8850
    %v10025 = vunpack.c.l.b16 %v8851
    %v10026 = vunpack.c.h.b16 %v8851
    %v10027 = vunpack.c.l.b16 %v8852
    %v10028 = vunpack.c.h.b16 %v8852
    %v10029 = vunpack.c.l.b16 %v8853
    %v10030 = vunpack.c.h.b16 %v8853
    %v10031 = vunpack.c.l.b16 %v8854
    %v10032 = vunpack.c.h.b16 %v8854
    %v10033 = vunpack.c.l.b16 %v8855
    %v10034 = vunpack.c.h.b16 %v8855
    %v10035 = vunpack.c.l.b16 %v8856
    %v10036 = vunpack.c.h.b16 %v8856
    %v10037 = vunpack.c.l.b16 %v8857
    %v10038 = vunpack.c.h.b16 %v8857
    %v10039 = vunpack.c.l.b16 %v8858
    %v10040 = vunpack.c.h.b16 %v8858
    %v10041 = vunpack.c.l.b16 %v8859
    %v10042 = vunpack.c.h.b16 %v8859
    %v10043 = vunpack.c.l.b16 %v8860
    %v10044 = vunpack.c.h.b16 %v8860
    %v10045 = vunpack.c.l.b16 %v8861
    %v10046 = vunpack.c.h.b16 %v8861
    %v10047 = vunpack.c.l.b16 %v8862
    %v10048 = vunpack.c.h.b16 %v8862
    %v10049 = vunpack.c.l.b16 %v8863
    %v10050 = vunpack.c.h.b16 %v8863
    %v10051 = vunpack.c.l.b16 %v8864
    %v10052 = vunpack.c.h.b16 %v8864
    %v10053 = vunpack.c.l.b16 %v8865
    %v10054 = vunpack.c.h.b16 %v8865
    %v10055 = vunpack.c.l.b16 %v8866
    %v10056 = vunpack.c.h.b16 %v8866
    %v10057 = vunpack.c.l.b16 %v8867
    %v10058 = vunpack.c.h.b16 %v8867
    %v10059 = vunpack.c.l.b16 %v8868
    %v10060 = vunpack.c.h.b16 %v8868
    %v10061 = vunpack.c.l.b16 %v8869
    %v10062 = vunpack.c.h.b16 %v8869
    %v10063 = vunpack.c.l.b16 %v8870
    %v10064 = vunpack.c.h.b16 %v8870
    %v10065 = vunpack.c.l.b16 %v8871
    %v10066 = vunpack.c.h.b16 %v8871
    %v10067 = vunpack.c.l.b16 %v8872
    %v10068 = vunpack.c.h.b16 %v8872
    %v10069 = vunpack.c.l.b16 %v8873
    %v10070 = vunpack.c.h.b16 %v8873
    %v10071 = vunpack.c.l.b16 %v8874
    %v10072 = vunpack.c.h.b16 %v8874
    %v10073 = vunpack.c.l.b16 %v8875
    %v10074 = vunpack.c.h.b16 %v8875
    %v10075 = vunpack.c.l.b16 %v8876
    %v10076 = vunpack.c.h.b16 %v8876
    %v10077 = vunpack.c.l.b16 %v8877
    %v10078 = vunpack.c.h.b16 %v8877
    %v10079 = vunpack.c.l.b16 %v8878
    %v10080 = vunpack.c.h.b16 %v8878
    %v10081 = vunpack.c.l.b16 %v8879
    %v10082 = vunpack.c.h.b16 %v8879
    %v10083 = vunpack.c.l.b16 %v8880
    %v10084 = vunpack.c.h.b16 %v8880
    %v10085 = vunpack.c.l.b16 %v8881
    %v10086 = vunpack.c.h.b16 %v8881
    %v10087 = vunpack.c.l.b16 %v8882
    %v10088 = vunpack.c.h.b16 %v8882
    %v10089 = vunpack.c.l.b16 %v8883
    %v10090 = vunpack.c.h.b16 %v8883
    %v10091 = vunpack.c.l.b16 %v8884
    %v10092 = vunpack.c.h.b16 %v8884
    %v10093 = vunpack.c.l.b16 %v8885
    %v10094 = vunpack.c.h.b16 %v8885
    %v10095 = vunpack.c.l.b16 %v8886
    %v10096 = vunpack.c.h.b16 %v8886
    %v10097 = vunpack.c.l.b16 %v8887
    %v10098 = vunpack.c.h.b16 %v8887
    %v10099 = vunpack.c.l.b16 %v8888
    %v10100 = vunpack.c.h.b16 %v8888
    %v10101 = vunpack.c.l.b16 %v8889
    %v10102 = vunpack.c.h.b16 %v8889
    %v10103 = vunpack.c.l.b16 %v8890
    %v10104 = vunpack.c.h.b16 %v8890
    %v10105 = vunpack.c.l.b16 %v8891
    %v10106 = vunpack.c.h.b16 %v8891
    %v10107 = vunpack.c.l.b16 %v8892
    %v10108 = vunpack.c.h.b16 %v8892
    %v10109 = vunpack.c.l.b16 %v8893
    %v10110 = vunpack.c.h.b16 %v8893
    %v10111 = vunpack.c.l.b16 %v8894
    %v10112 = vunpack.c.h.b16 %v8894
    %v10113 = vunpack.c.l.b16 %v8895
    %v10114 = vunpack.c.h.b16 %v8895
    %v10115 = vunpack.c.l.b16 %v8896
    %v10116 = vunpack.c.h.b16 %v8896
    %v10117 = vunpack.c.l.b16 %v8897
    %v10118 = vunpack.c.h.b16 %v8897
    %v10119 = vunpack.c.l.b16 %v8898
    %v10120 = vunpack.c.h.b16 %v8898
    %v10121 = vunpack.c.l.b16 %v8899
    %v10122 = vunpack.c.h.b16 %v8899
    %v10123 = vunpack.c.l.b16 %v8900
    %v10124 = vunpack.c.h.b16 %v8900
    %v10125 = vunpack.c.l.b16 %v8901
    %v10126 = vunpack.c.h.b16 %v8901
    %v10127 = vunpack.c.l.b16 %v8902
    %v10128 = vunpack.c.h.b16 %v8902
    %v10129 = vunpack.c.l.b16 %v8903
    %v10130 = vunpack.c.h.b16 %v8903
    %v10131 = vunpack.c.l.b16 %v8904
    %v10132 = vunpack.c.h.b16 %v8904
    %v10133 = vunpack.c.l.b16 %v8905
    %v10134 = vunpack.c.h.b16 %v8905
    %v10135 = vunpack.c.l.b16 %v8906
    %v10136 = vunpack.c.h.b16 %v8906
    %v10137 = vunpack.c.l.b16 %v8907
    %v10138 = vunpack.c.h.b16 %v8907
    %v10139 = vunpack.c.l.b16 %v8908
    %v10140 = vunpack.c.h.b16 %v8908
    %v10141 = vunpack.c.l.b16 %v8909
    %v10142 = vunpack.c.h.b16 %v8909
    %v10143 = vunpack.c.l.b16 %v8910
    %v10144 = vunpack.c.h.b16 %v8910
    %v10145 = vunpack.c.l.b16 %v8911
    %v10146 = vunpack.c.h.b16 %v8911
    %v10147 = vunpack.c.l.b16 %v8912
    %v10148 = vunpack.c.h.b16 %v8912
    %v10149 = vunpack.c.l.b16 %v8913
    %v10150 = vunpack.c.h.b16 %v8913
    %v10151 = vunpack.c.l.b16 %v8914
    %v10152 = vunpack.c.h.b16 %v8914
    %v10153 = vunpack.c.l.b16 %v8915
    %v10154 = vunpack.c.h.b16 %v8915
    %v10155 = vunpack.c.l.b16 %v8916
    %v10156 = vunpack.c.h.b16 %v8916
    %v10157 = vunpack.c.l.b16 %v8917
    %v10158 = vunpack.c.h.b16 %v8917
    %v10159 = vunpack.c.l.b16 %v8918
    %v10160 = vunpack.c.h.b16 %v8918
    %v10161 = vunpack.c.l.b16 %v8919
    %v10162 = vunpack.c.h.b16 %v8919
    %v10163 = vunpack.c.l.b16 %v8920
    %v10164 = vunpack.c.h.b16 %v8920
    %v10165 = vunpack.c.l.b16 %v8921
    %v10166 = vunpack.c.h.b16 %v8921
    %v10167 = vunpack.c.l.b16 %v8922
    %v10168 = vunpack.c.h.b16 %v8922
    %v10169 = vunpack.c.l.b16 %v8923
    %v10170 = vunpack.c.h.b16 %v8923
    %v10171 = vunpack.c.l.b16 %v8924
    %v10172 = vunpack.c.h.b16 %v8924
    %v10173 = vunpack.c.l.b16 %v8925
    %v10174 = vunpack.c.h.b16 %v8925
    %v10175 = vunpack.c.l.b16 %v8926
    %v10176 = vunpack.c.h.b16 %v8926
    %v10177 = vunpack.c.l.b16 %v8927
    %v10178 = vunpack.c.h.b16 %v8927
    %v10179 = vunpack.c.l.b16 %v8928
    %v10180 = vunpack.c.h.b16 %v8928
    %v10181 = vunpack.c.l.b16 %v8929
    %v10182 = vunpack.c.h.b16 %v8929
    %v10183 = vunpack.c.l.b16 %v8930
    %v10184 = vunpack.c.h.b16 %v8930
    %v10185 = vunpack.c.l.b16 %v8931
    %v10186 = vunpack.c.h.b16 %v8931
    %v10187 = vunpack.c.l.b16 %v8932
    %v10188 = vunpack.c.h.b16 %v8932
    %v10189 = vunpack.c.l.b16 %v8933
    %v10190 = vunpack.c.h.b16 %v8933
    %v10191 = vunpack.c.l.b16 %v8934
    %v10192 = vunpack.c.h.b16 %v8934
    %v10193 = vunpack.c.l.b16 %v8935
    %v10194 = vunpack.c.h.b16 %v8935
    %v10195 = vunpack.c.l.b16 %v8936
    %v10196 = vunpack.c.h.b16 %v8936
    %v10197 = vunpack.c.l.b16 %v8937
    %v10198 = vunpack.c.h.b16 %v8937
    %v10199 = vunpack.c.l.b16 %v8938
    %v10200 = vunpack.c.h.b16 %v8938
    %v10201 = vunpack.c.l.b16 %v8939
    %v10202 = vunpack.c.h.b16 %v8939
    %v10203 = vunpack.c.l.b16 %v8940
    %v10204 = vunpack.c.h.b16 %v8940
    %v10205 = vunpack.c.l.b16 %v8941
    %v10206 = vunpack.c.h.b16 %v8941
    %v10207 = vunpack.c.l.b16 %v8942
    %v10208 = vunpack.c.h.b16 %v8942
    %v10209 = vunpack.c.l.b16 %v8943
    %v10210 = vunpack.c.h.b16 %v8943
    %v10211 = vunpack.c.l.b16 %v8944
    %v10212 = vunpack.c.h.b16 %v8944
    %v10213 = vunpack.c.l.b16 %v8945
    %v10214 = vunpack.c.h.b16 %v8945
    %v10215 = vunpack.c.l.b16 %v8946
    %v10216 = vunpack.c.h.b16 %v8946
    %v10217 = vunpack.c.l.b16 %v8947
    %v10218 = vunpack.c.h.b16 %v8947
    %v10219 = vunpack.c.l.b16 %v8948
    %v10220 = vunpack.c.h.b16 %v8948
    %v10221 = vunpack.c.l.b16 %v8949
    %v10222 = vunpack.c.h.b16 %v8949
    %v10223 = vunpack.c.l.b16 %v8950
    %v10224 = vunpack.c.h.b16 %v8950
    %v10225 = vunpack.c.l.b16 %v8951
    %v10226 = vunpack.c.h.b16 %v8951
    %v10227 = vunpack.c.l.b16 %v8952
    %v10228 = vunpack.c.h.b16 %v8952
    %v10229 = vunpack.c.l.b16 %v8953
    %v10230 = vunpack.c.h.b16 %v8953
    %v10231 = vunpack.c.l.b16 %v8954
    %v10232 = vunpack.c.h.b16 %v8954
    %v10233 = vunpack.c.l.b16 %v8955
    %v10234 = vunpack.c.h.b16 %v8955
    %v10235 = vunpack.c.l.b16 %v8956
    %v10236 = vunpack.c.h.b16 %v8956
    %v10237 = vunpack.c.l.b16 %v8957
    %v10238 = vunpack.c.h.b16 %v8957
    %v10239 = vunpack.c.l.b16 %v8958
    %v10240 = vunpack.c.h.b16 %v8958
    %v10241 = vunpack.c.l.b16 %v8959
    %v10242 = vunpack.c.h.b16 %v8959
    %v10243 = vunpack.c.l.b16 %v8960
    %v10244 = vunpack.c.h.b16 %v8960
    %v10245 = vunpack.c.l.b16 %v8961
    %v10246 = vunpack.c.h.b16 %v8961
    %v10247 = vunpack.c.l.b16 %v8962
    %v10248 = vunpack.c.h.b16 %v8962
    %v10249 = vunpack.c.l.b16 %v8963
    %v10250 = vunpack.c.h.b16 %v8963
    %v10251 = vunpack.c.l.b16 %v8964
    %v10252 = vunpack.c.h.b16 %v8964
    %v10253 = vunpack.c.l.b16 %v8965
    %v10254 = vunpack.c.h.b16 %v8965
    %v10255 = vunpack.c.l.b16 %v8966
    %v10256 = vunpack.c.h.b16 %v8966
    %v10257 = vunpack.c.l.b16 %v8967
    %v10258 = vunpack.c.h.b16 %v8967
    %v10259 = vunpack.c.l.b16 %v8968
    %v10260 = vunpack.c.h.b16 %v8968
    %v10261 = vunpack.c.l.b16 %v8969
    %v10262 = vunpack.c.h.b16 %v8969
    %v10263 = vunpack.c.l.b16 %v8970
    %v10264 = vunpack.c.h.b16 %v8970
    %v10265 = vunpack.c.l.b16 %v8971
    %v10266 = vunpack.c.h.b16 %v8971
    %v10267 = vunpack.c.l.b16 %v8972
    %v10268 = vunpack.c.h.b16 %v8972
    %v10269 = vunpack.c.l.b16 %v8973
    %v10270 = vunpack.c.h.b16 %v8973
    %v10271 = vunpack.c.l.b16 %v8974
    %v10272 = vunpack.c.h.b16 %v8974
    %v10273 = vunpack.c.l.b16 %v8975
    %v10274 = vunpack.c.h.b16 %v8975
    %v10275 = vunpack.c.l.b16 %v8976
    %v10276 = vunpack.c.h.b16 %v8976
    %v10277 = vunpack.c.l.b16 %v8977
    %v10278 = vunpack.c.h.b16 %v8977
    %v10279 = vunpack.c.l.b16 %v8978
    %v10280 = vunpack.c.h.b16 %v8978
    %v10281 = vunpack.c.l.b16 %v8979
    %v10282 = vunpack.c.h.b16 %v8979
    %v10283 = vunpack.c.l.b16 %v8980
    %v10284 = vunpack.c.h.b16 %v8980
    %v10285 = vunpack.c.l.b16 %v8981
    %v10286 = vunpack.c.h.b16 %v8981
    %v10287 = vunpack.c.l.b16 %v8982
    %v10288 = vunpack.c.h.b16 %v8982
    %v10289 = vunpack.c.l.b16 %v8983
    %v10290 = vunpack.c.h.b16 %v8983
    %v10291 = vunpack.c.l.b16 %v8984
    %v10292 = vunpack.c.h.b16 %v8984
    %v10293 = vunpack.c.l.b16 %v8985
    %v10294 = vunpack.c.h.b16 %v8985
    %v10295 = vunpack.c.l.b16 %v8986
    %v10296 = vunpack.c.h.b16 %v8986
    %v10297 = vunpack.c.l.b16 %v8987
    %v10298 = vunpack.c.h.b16 %v8987
    %v10299 = vunpack.c.l.b16 %v8988
    %v10300 = vunpack.c.h.b16 %v8988
    %v10301 = vunpack.c.l.b16 %v8989
    %v10302 = vunpack.c.h.b16 %v8989
    %v10303 = vunpack.c.l.b16 %v8990
    %v10304 = vunpack.c.h.b16 %v8990
    %v10305 = vunpack.c.l.b16 %v8991
    %v10306 = vunpack.c.h.b16 %v8991
    %v10307 = vunpack.c.l.b16 %v8992
    %v10308 = vunpack.c.h.b16 %v8992
    %v10309 = vunpack.c.l.b16 %v8993
    %v10310 = vunpack.c.h.b16 %v8993
    %v10311 = vunpack.c.l.b16 %v8994
    %v10312 = vunpack.c.h.b16 %v8994
    %v10313 = vunpack.c.l.b16 %v8995
    %v10314 = vunpack.c.h.b16 %v8995
    %v10315 = vunpack.c.l.b16 %v8996
    %v10316 = vunpack.c.h.b16 %v8996
    %v10317 = vunpack.c.l.b16 %v8997
    %v10318 = vunpack.c.h.b16 %v8997
    %v10319 = vunpack.c.l.b16 %v8998
    %v10320 = vunpack.c.h.b16 %v8998
    %v10321 = vunpack.c.l.b16 %v8999
    %v10322 = vunpack.c.h.b16 %v8999
    %v10323 = vunpack.c.l.b16 %v9000
    %v10324 = vunpack.c.h.b16 %v9000
    %v10325 = vunpack.c.l.b16 %v9001
    %v10326 = vunpack.c.h.b16 %v9001
    %v10327 = vunpack.c.l.b16 %v9002
    %v10328 = vunpack.c.h.b16 %v9002
    %v10329 = vunpack.c.l.b16 %v9003
    %v10330 = vunpack.c.h.b16 %v9003
    %v10331 = vunpack.c.l.b16 %v9004
    %v10332 = vunpack.c.h.b16 %v9004
    %v10333 = vunpack.c.l.b16 %v9005
    %v10334 = vunpack.c.h.b16 %v9005
    %v10335 = vunpack.c.l.b16 %v9006
    %v10336 = vunpack.c.h.b16 %v9006
    %v10337 = vunpack.c.l.b16 %v9007
    %v10338 = vunpack.c.h.b16 %v9007
    %v10339 = vunpack.c.l.b16 %v9008
    %v10340 = vunpack.c.h.b16 %v9008
    %v10341 = vunpack.c.l.b16 %v9009
    %v10342 = vunpack.c.h.b16 %v9009
    %v10343 = vunpack.c.l.b16 %v9010
    %v10344 = vunpack.c.h.b16 %v9010
    %v10345 = vunpack.c.l.b16 %v9011
    %v10346 = vunpack.c.h.b16 %v9011
    %v10347 = vunpack.c.l.b16 %v9012
    %v10348 = vunpack.c.h.b16 %v9012
    %v10349 = vunpack.c.l.b16 %v9013
    %v10350 = vunpack.c.h.b16 %v9013
    %v10351 = vunpack.c.l.b16 %v9014
    %v10352 = vunpack.c.h.b16 %v9014
    %v10353 = vunpack.c.l.b16 %v9015
    %v10354 = vunpack.c.h.b16 %v9015
    %v10355 = vunpack.c.l.b16 %v9016
    %v10356 = vunpack.c.h.b16 %v9016
    %v10357 = vunpack.c.l.b16 %v9017
    %v10358 = vunpack.c.h.b16 %v9017
    %v10359 = vunpack.c.l.b16 %v9018
    %v10360 = vunpack.c.h.b16 %v9018
    %v10361 = vunpack.c.l.b16 %v9019
    %v10362 = vunpack.c.h.b16 %v9019
    %v10363 = vunpack.c.l.b16 %v9020
    %v10364 = vunpack.c.h.b16 %v9020
    %v10365 = vunpack.c.l.b16 %v9021
    %v10366 = vunpack.c.h.b16 %v9021
    %v10367 = vunpack.c.l.b16 %v9022
    %v10368 = vunpack.c.h.b16 %v9022
    %v10369 = vunpack.c.l.b16 %v9023
    %v10370 = vunpack.c.h.b16 %v9023
    %v10371 = vunpack.c.l.b16 %v9024
    %v10372 = vunpack.c.h.b16 %v9024
    %v10373 = vunpack.c.l.b16 %v9025
    %v10374 = vunpack.c.h.b16 %v9025
    %v10375 = vunpack.c.l.b16 %v9026
    %v10376 = vunpack.c.h.b16 %v9026
    %v10377 = vunpack.c.l.b16 %v9027
    %v10378 = vunpack.c.h.b16 %v9027
    %v10379 = vunpack.c.l.b16 %v9028
    %v10380 = vunpack.c.h.b16 %v9028
    %v10381 = vunpack.c.l.b16 %v9029
    %v10382 = vunpack.c.h.b16 %v9029
    %v10383 = vunpack.c.l.b16 %v9030
    %v10384 = vunpack.c.h.b16 %v9030
    %v10385 = vunpack.c.l.b16 %v9031
    %v10386 = vunpack.c.h.b16 %v9031
    %v10387 = vunpack.c.l.b16 %v9032
    %v10388 = vunpack.c.h.b16 %v9032
    %v10389 = vunpack.c.l.b16 %v9033
    %v10390 = vunpack.c.h.b16 %v9033
    %v10391 = vunpack.c.l.b16 %v9034
    %v10392 = vunpack.c.h.b16 %v9034
    %v10393 = vunpack.c.l.b16 %v9035
    %v10394 = vunpack.c.h.b16 %v9035
    %v10395 = vunpack.c.l.b16 %v9036
    %v10396 = vunpack.c.h.b16 %v9036
    %v10397 = vunpack.c.l.b16 %v9037
    %v10398 = vunpack.c.h.b16 %v9037
    %v10399 = vunpack.c.l.b16 %v9038
    %v10400 = vunpack.c.h.b16 %v9038
    %v10401 = vunpack.c.l.b16 %v9039
    %v10402 = vunpack.c.h.b16 %v9039
    %v10403 = vunpack.c.l.b16 %v9040
    %v10404 = vunpack.c.h.b16 %v9040
    %v10405 = vunpack.c.l.b16 %v9041
    %v10406 = vunpack.c.h.b16 %v9041
    %v10407 = vunpack.c.l.b16 %v9042
    %v10408 = vunpack.c.h.b16 %v9042
    %v10409 = vunpack.c.l.b16 %v9043
    %v10410 = vunpack.c.h.b16 %v9043
    %v10411 = vunpack.c.l.b16 %v9044
    %v10412 = vunpack.c.h.b16 %v9044
    %v10413 = vunpack.c.l.b16 %v9045
    %v10414 = vunpack.c.h.b16 %v9045
    %v10415 = vunpack.c.l.b16 %v9046
    %v10416 = vunpack.c.h.b16 %v9046
    %v10417 = vunpack.c.l.b16 %v9047
    %v10418 = vunpack.c.h.b16 %v9047
    %v10419 = vunpack.c.l.b16 %v9048
    %v10420 = vunpack.c.h.b16 %v9048
    %v10421 = vunpack.c.l.b16 %v9049
    %v10422 = vunpack.c.h.b16 %v9049
    %v10423 = vunpack.c.l.b16 %v9050
    %v10424 = vunpack.c.h.b16 %v9050
    %v10425 = vunpack.c.l.b16 %v9051
    %v10426 = vunpack.c.h.b16 %v9051
    %v10427 = vunpack.c.l.b16 %v9052
    %v10428 = vunpack.c.h.b16 %v9052
    %v10429 = vunpack.c.l.b16 %v9053
    %v10430 = vunpack.c.h.b16 %v9053
    %v10431 = vunpack.c.l.b16 %v9054
    %v10432 = vunpack.c.h.b16 %v9054
    %v10433 = vunpack.c.l.b16 %v9055
    %v10434 = vunpack.c.h.b16 %v9055
    %v10435 = vunpack.c.l.b16 %v9056
    %v10436 = vunpack.c.h.b16 %v9056
    %v10437 = vunpack.c.l.b16 %v9057
    %v10438 = vunpack.c.h.b16 %v9057
    %v10439 = vunpack.c.l.b16 %v9058
    %v10440 = vunpack.c.h.b16 %v9058
    %v10441 = vunpack.c.l.b16 %v9059
    %v10442 = vunpack.c.h.b16 %v9059
    %v10443 = vunpack.c.l.b16 %v9060
    %v10444 = vunpack.c.h.b16 %v9060
    %v10445 = vunpack.c.l.b16 %v9061
    %v10446 = vunpack.c.h.b16 %v9061
    %v10447 = vunpack.c.l.b16 %v9062
    %v10448 = vunpack.c.h.b16 %v9062
    %v10449 = vunpack.c.l.b16 %v9063
    %v10450 = vunpack.c.h.b16 %v9063
    %v10451 = vunpack.c.l.b16 %v9064
    %v10452 = vunpack.c.h.b16 %v9064
    %v10453 = vunpack.c.l.b16 %v9065
    %v10454 = vunpack.c.h.b16 %v9065
    %v10455 = vunpack.c.l.b16 %v9066
    %v10456 = vunpack.c.h.b16 %v9066
    %v10457 = vunpack.c.l.b16 %v9067
    %v10458 = vunpack.c.h.b16 %v9067
    %v10459 = vunpack.c.l.b16 %v9068
    %v10460 = vunpack.c.h.b16 %v9068
    %v10461 = vunpack.c.l.b16 %v9069
    %v10462 = vunpack.c.h.b16 %v9069
    %v10463 = vunpack.c.l.b16 %v9070
    %v10464 = vunpack.c.h.b16 %v9070
    %v10465 = vunpack.c.l.b16 %v9071
    %v10466 = vunpack.c.h.b16 %v9071
    %v10467 = vunpack.c.l.b16 %v9072
    %v10468 = vunpack.c.h.b16 %v9072
    %v10469 = vunpack.c.l.b16 %v9073
    %v10470 = vunpack.c.h.b16 %v9073
    %v10471 = vunpack.c.l.b16 %v9074
    %v10472 = vunpack.c.h.b16 %v9074
    %v10473 = vunpack.c.l.b16 %v9075
    %v10474 = vunpack.c.h.b16 %v9075
    %v10475 = vunpack.c.l.b16 %v9076
    %v10476 = vunpack.c.h.b16 %v9076
    %v10477 = vunpack.c.l.b16 %v9077
    %v10478 = vunpack.c.h.b16 %v9077
    %v10479 = vunpack.c.l.b16 %v9078
    %v10480 = vunpack.c.h.b16 %v9078
    %v10481 = vunpack.c.l.b16 %v9079
    %v10482 = vunpack.c.h.b16 %v9079
    %v10483 = vunpack.c.l.b16 %v9080
    %v10484 = vunpack.c.h.b16 %v9080
    %v10485 = vunpack.c.l.b16 %v9081
    %v10486 = vunpack.c.h.b16 %v9081
    %v10487 = vunpack.c.l.b16 %v9082
    %v10488 = vunpack.c.h.b16 %v9082
    %v10489 = vunpack.c.l.b16 %v9083
    %v10490 = vunpack.c.h.b16 %v9083
    %v10491 = vunpack.c.l.b16 %v9084
    %v10492 = vunpack.c.h.b16 %v9084
    %v10493 = vunpack.c.l.b16 %v9085
    %v10494 = vunpack.c.h.b16 %v9085
    %v10495 = vunpack.c.l.b16 %v9086
    %v10496 = vunpack.c.h.b16 %v9086
    %v10497 = vunpack.c.l.b16 %v9087
    %v10498 = vunpack.c.h.b16 %v9087
    %v10499 = vunpack.c.l.b16 %v9088
    %v10500 = vunpack.c.h.b16 %v9088
    %v10501 = vunpack.c.l.b16 %v9089
    %v10502 = vunpack.c.h.b16 %v9089
    %v10503 = vunpack.c.l.b16 %v9090
    %v10504 = vunpack.c.h.b16 %v9090
    %v10505 = vunpack.c.l.b16 %v9091
    %v10506 = vunpack.c.h.b16 %v9091
    %v10507 = vunpack.c.l.b16 %v9092
    %v10508 = vunpack.c.h.b16 %v9092
    %v10509 = vunpack.c.l.b16 %v9093
    %v10510 = vunpack.c.h.b16 %v9093
    %v10511 = vunpack.c.l.b16 %v9094
    %v10512 = vunpack.c.h.b16 %v9094
    %v10513 = vunpack.c.l.b16 %v9095
    %v10514 = vunpack.c.h.b16 %v9095
    %v10515 = vunpack.c.l.b16 %v9096
    %v10516 = vunpack.c.h.b16 %v9096
    %v10517 = vunpack.c.l.b16 %v9097
    %v10518 = vunpack.c.h.b16 %v9097
    %v10519 = vunpack.c.l.b16 %v9098
    %v10520 = vunpack.c.h.b16 %v9098
    %v10521 = vunpack.c.l.b16 %v9099
    %v10522 = vunpack.c.h.b16 %v9099
    %v10523 = vunpack.c.l.b16 %v9100
    %v10524 = vunpack.c.h.b16 %v9100
    %v10525 = vunpack.c.l.b16 %v9101
    %v10526 = vunpack.c.h.b16 %v9101
    %v10527 = vunpack.c.l.b16 %v9102
    %v10528 = vunpack.c.h.b16 %v9102
    %v10529 = vunpack.c.l.b16 %v9103
    %v10530 = vunpack.c.h.b16 %v9103
    %v10531 = vunpack.c.l.b16 %v9104
    %v10532 = vunpack.c.h.b16 %v9104
    %v10533 = vunpack.c.l.b16 %v9105
    %v10534 = vunpack.c.h.b16 %v9105
    %v10535 = vunpack.c.l.b16 %v9106
    %v10536 = vunpack.c.h.b16 %v9106
    %v10537 = vunpack.c.l.b16 %v9107
    %v10538 = vunpack.c.h.b16 %v9107
    %v10539 = vunpack.c.l.b16 %v9108
    %v10540 = vunpack.c.h.b16 %v9108
    %v10541 = vunpack.c.l.b16 %v9109
    %v10542 = vunpack.c.h.b16 %v9109
    %v10543 = vunpack.c.l.b16 %v9110
    %v10544 = vunpack.c.h.b16 %v9110
    %v10545 = vunpack.c.l.b16 %v9111
    %v10546 = vunpack.c.h.b16 %v9111
    %v10547 = vunpack.c.l.b16 %v9112
    %v10548 = vunpack.c.h.b16 %v9112
    %v10549 = vunpack.c.l.b16 %v9113
    %v10550 = vunpack.c.h.b16 %v9113
    %v10551 = vunpack.c.l.b16 %v9114
    %v10552 = vunpack.c.h.b16 %v9114
    %v10553 = vunpack.c.l.b16 %v9115
    %v10554 = vunpack.c.h.b16 %v9115
    %v10555 = vunpack.c.l.b16 %v9116
    %v10556 = vunpack.c.h.b16 %v9116
    %v10557 = vunpack.c.l.b16 %v9117
    %v10558 = vunpack.c.h.b16 %v9117
    %v10559 = vunpack.c.l.b16 %v9118
    %v10560 = vunpack.c.h.b16 %v9118
    %v10561 = vunpack.c.l.b16 %v9119
    %v10562 = vunpack.c.h.b16 %v9119
    %v10563 = vunpack.c.l.b16 %v9120
    %v10564 = vunpack.c.h.b16 %v9120
    %v10565 = vunpack.c.l.b16 %v9121
    %v10566 = vunpack.c.h.b16 %v9121
    %v10567 = vunpack.c.l.b16 %v9122
    %v10568 = vunpack.c.h.b16 %v9122
    %v10569 = vunpack.c.l.b16 %v9123
    %v10570 = vunpack.c.h.b16 %v9123
    %v10571 = vunpack.c.l.b16 %v9124
    %v10572 = vunpack.c.h.b16 %v9124
    %v10573 = vunpack.c.l.b16 %v9125
    %v10574 = vunpack.c.h.b16 %v9125
    %v10575 = vunpack.c.l.b16 %v9126
    %v10576 = vunpack.c.h.b16 %v9126
    %v10577 = vunpack.c.l.b16 %v9127
    %v10578 = vunpack.c.h.b16 %v9127
    %v10579 = vunpack.c.l.b16 %v9128
    %v10580 = vunpack.c.h.b16 %v9128
    %v10581 = vunpack.c.l.b16 %v9129
    %v10582 = vunpack.c.h.b16 %v9129
    %v10583 = vunpack.c.l.b16 %v9130
    %v10584 = vunpack.c.h.b16 %v9130
    %v10585 = vunpack.c.l.b16 %v9131
    %v10586 = vunpack.c.h.b16 %v9131
    %v10587 = vunpack.c.l.b16 %v9132
    %v10588 = vunpack.c.h.b16 %v9132
    %v10589 = vunpack.c.l.b16 %v9133
    %v10590 = vunpack.c.h.b16 %v9133
    %v10591 = vunpack.c.l.b16 %v9134
    %v10592 = vunpack.c.h.b16 %v9134
    %v10593 = vunpack.c.l.b16 %v9135
    %v10594 = vunpack.c.h.b16 %v9135
    %v10595 = vunpack.c.l.b16 %v9136
    %v10596 = vunpack.c.h.b16 %v9136
    %v10597 = vunpack.c.l.b16 %v9137
    %v10598 = vunpack.c.h.b16 %v9137
    %v10599 = vunpack.c.l.b16 %v9138
    %v10600 = vunpack.c.h.b16 %v9138
    %v10601 = vunpack.c.l.b16 %v9139
    %v10602 = vunpack.c.h.b16 %v9139
    %v10603 = vunpack.c.l.b16 %v9140
    %v10604 = vunpack.c.h.b16 %v9140
    %v10605 = vunpack.c.l.b16 %v9141
    %v10606 = vunpack.c.h.b16 %v9141
    %v10607 = vunpack.c.l.b16 %v9142
    %v10608 = vunpack.c.h.b16 %v9142
    %v10609 = vunpack.c.l.b16 %v9143
    %v10610 = vunpack.c.h.b16 %v9143
    %v10611 = vunpack.c.l.b16 %v9144
    %v10612 = vunpack.c.h.b16 %v9144
    %v10613 = vunpack.c.l.b16 %v9145
    %v10614 = vunpack.c.h.b16 %v9145
    %v10615 = vunpack.c.l.b16 %v9146
    %v10616 = vunpack.c.h.b16 %v9146
    %v10617 = vunpack.c.l.b16 %v9147
    %v10618 = vunpack.c.h.b16 %v9147
    %v10619 = vunpack.c.l.b16 %v9148
    %v10620 = vunpack.c.h.b16 %v9148
    %v10621 = vunpack.c.l.b16 %v9149
    %v10622 = vunpack.c.h.b16 %v9149
    %v10623 = vunpack.c.l.b16 %v9150
    %v10624 = vunpack.c.h.b16 %v9150
    %v10625 = vunpack.c.l.b16 %v9151
    %v10626 = vunpack.c.h.b16 %v9151
    %v10627 = vunpack.c.l.b16 %v9152
    %v10628 = vunpack.c.h.b16 %v9152
    %v10629 = vunpack.c.l.b16 %v9153
    %v10630 = vunpack.c.h.b16 %v9153
    %v10631 = vunpack.c.l.b16 %v9154
    %v10632 = vunpack.c.h.b16 %v9154
    %v10633 = vunpack.c.l.b16 %v9155
    %v10634 = vunpack.c.h.b16 %v9155
    %v10635 = vunpack.c.l.b16 %v9156
    %v10636 = vunpack.c.h.b16 %v9156
    %v10637 = vunpack.c.l.b16 %v9157
    %v10638 = vunpack.c.h.b16 %v9157
    %v10639 = vunpack.c.l.b16 %v9158
    %v10640 = vunpack.c.h.b16 %v9158
    %v10641 = vunpack.c.l.b16 %v9159
    %v10642 = vunpack.c.h.b16 %v9159
    %v10643 = vunpack.c.l.b16 %v9160
    %v10644 = vunpack.c.h.b16 %v9160
    %v10645 = vunpack.c.l.b16 %v9161
    %v10646 = vunpack.c.h.b16 %v9161
    %v10647 = vunpack.c.l.b16 %v9162
    %v10648 = vunpack.c.h.b16 %v9162
    %v10649 = vunpack.c.l.b16 %v9163
    %v10650 = vunpack.c.h.b16 %v9163
    %v10651 = vunpack.c.l.b16 %v9164
    %v10652 = vunpack.c.h.b16 %v9164
    %v10653 = vunpack.c.l.b16 %v9165
    %v10654 = vunpack.c.h.b16 %v9165
    %v10655 = vunpack.c.l.b16 %v9166
    %v10656 = vunpack.c.h.b16 %v9166
    %v10657 = vunpack.c.l.b16 %v9167
    %v10658 = vunpack.c.h.b16 %v9167
    %v10659 = vunpack.c.l.b16 %v9168
    %v10660 = vunpack.c.h.b16 %v9168
    %v10661 = vunpack.c.l.b16 %v9169
    %v10662 = vunpack.c.h.b16 %v9169
    %v10663 = vunpack.c.l.b16 %v9170
    %v10664 = vunpack.c.h.b16 %v9170
    %v10665 = vunpack.c.l.b16 %v9171
    %v10666 = vunpack.c.h.b16 %v9171
    %v10667 = vunpack.c.l.b16 %v9172
    %v10668 = vunpack.c.h.b16 %v9172
    %v10669 = vunpack.c.l.b16 %v9173
    %v10670 = vunpack.c.h.b16 %v9173
    %v10671 = vunpack.c.l.b16 %v9174
    %v10672 = vunpack.c.h.b16 %v9174
    %v10673 = vunpack.c.l.b16 %v9175
    %v10674 = vunpack.c.h.b16 %v9175
    %v10675 = vunpack.c.l.b16 %v9176
    %v10676 = vunpack.c.h.b16 %v9176
    %v10677 = vunpack.c.l.b16 %v9177
    %v10678 = vunpack.c.h.b16 %v9177
    %v10679 = vunpack.c.l.b16 %v9178
    %v10680 = vunpack.c.h.b16 %v9178
    %v10681 = vunpack.c.l.b16 %v9179
    %v10682 = vunpack.c.h.b16 %v9179
    %v10683 = vunpack.c.l.b16 %v9180
    %v10684 = vunpack.c.h.b16 %v9180
    %v10685 = vunpack.c.l.b16 %v9181
    %v10686 = vunpack.c.h.b16 %v9181
    %v10687 = vunpack.c.l.b16 %v9182
    %v10688 = vunpack.c.h.b16 %v9182
    %v10689 = vunpack.c.l.b16 %v9183
    %v10690 = vunpack.c.h.b16 %v9183
    %v10691 = vunpack.c.l.b16 %v9184
    %v10692 = vunpack.c.h.b16 %v9184
    %v10693 = vunpack.c.l.b16 %v9185
    %v10694 = vunpack.c.h.b16 %v9185
    %v10695 = vunpack.c.l.b16 %v9186
    %v10696 = vunpack.c.h.b16 %v9186
    %v10697 = vunpack.c.l.b16 %v9187
    %v10698 = vunpack.c.h.b16 %v9187
    %v10699 = vunpack.c.l.b16 %v9188
    %v10700 = vunpack.c.h.b16 %v9188
    %v10701 = vunpack.c.l.b16 %v9189
    %v10702 = vunpack.c.h.b16 %v9189
    %v10703 = vunpack.c.l.b16 %v9190
    %v10704 = vunpack.c.h.b16 %v9190
    %v10705 = vunpack.c.l.b16 %v9191
    %v10706 = vunpack.c.h.b16 %v9191
    %v10707 = vunpack.c.l.b16 %v9192
    %v10708 = vunpack.c.h.b16 %v9192
    %v10709 = vunpack.c.l.b16 %v9193
    %v10710 = vunpack.c.h.b16 %v9193
    %v10711 = vunpack.c.l.b16 %v9194
    %v10712 = vunpack.c.h.b16 %v9194
    %v10713 = vunpack.c.l.b16 %v9195
    %v10714 = vunpack.c.h.b16 %v9195
    %v10715 = vunpack.c.l.b16 %v9196
    %v10716 = vunpack.c.h.b16 %v9196
    %v10717 = vunpack.c.l.b16 %v9197
    %v10718 = vunpack.c.h.b16 %v9197
    %v10719 = vunpack.c.l.b16 %v9198
    %v10720 = vunpack.c.h.b16 %v9198
    %v10721 = vunpack.c.l.b16 %v9199
    %v10722 = vunpack.c.h.b16 %v9199
    %v10723 = vunpack.c.l.b16 %v9200
    %v10724 = vunpack.c.h.b16 %v9200
    %v10725 = vunpack.c.l.b16 %v9201
    %v10726 = vunpack.c.h.b16 %v9201
    %v10727 = vunpack.c.l.b16 %v9202
    %v10728 = vunpack.c.h.b16 %v9202
    %v10729 = vunpack.c.l.b16 %v9203
    %v10730 = vunpack.c.h.b16 %v9203
    %v10731 = vunpack.c.l.b16 %v9204
    %v10732 = vunpack.c.h.b16 %v9204
    %v10733 = vunpack.c.l.b16 %v9205
    %v10734 = vunpack.c.h.b16 %v9205
    %v10735 = vunpack.c.l.b16 %v9206
    %v10736 = vunpack.c.h.b16 %v9206
    %v10737 = vunpack.c.l.b16 %v9207
    %v10738 = vunpack.c.h.b16 %v9207
    %v10739 = vunpack.c.l.b16 %v9208
    %v10740 = vunpack.c.h.b16 %v9208
    %v10741 = vunpack.c.l.b16 %v9209
    %v10742 = vunpack.c.h.b16 %v9209
    %v10743 = vunpack.c.l.b16 %v9210
    %v10744 = vunpack.c.h.b16 %v9210
    %v10745 = vunpack.c.l.b16 %v9211
    %v10746 = vunpack.c.h.b16 %v9211
    %v10747 = vunpack.c.l.b16 %v9212
    %v10748 = vunpack.c.h.b16 %v9212
    %v10749 = vunpack.c.l.b16 %v9213
    %v10750 = vunpack.c.h.b16 %v9213
    %v10751 = vunpack.c.l.b16 %v9214
    %v10752 = vunpack.c.h.b16 %v9214
    %v10753 = vunpack.c.l.b16 %v9215
    %v10754 = vunpack.c.h.b16 %v9215
    %v10755 = vunpack.c.l.b16 %v9216
    %v10756 = vunpack.c.h.b16 %v9216
    %v10757 = vunpack.c.l.b16 %v9217
    %v10758 = vunpack.c.h.b16 %v9217
    %v10759 = vunpack.c.l.b16 %v9218
    %v10760 = vunpack.c.h.b16 %v9218
    %v10761 = vunpack.c.l.b16 %v9219
    %v10762 = vunpack.c.h.b16 %v9219
    %v10763 = vunpack.c.l.b16 %v9220
    %v10764 = vunpack.c.h.b16 %v9220
    %v10765 = vunpack.c.l.b16 %v9221
    %v10766 = vunpack.c.h.b16 %v9221
    %v10767 = vunpack.c.l.b16 %v9222
    %v10768 = vunpack.c.h.b16 %v9222
    %v10769 = vunpack.c.l.b16 %v9223
    %v10770 = vunpack.c.h.b16 %v9223
    %v10771 = vunpack.c.l.b16 %v9224
    %v10772 = vunpack.c.h.b16 %v9224
    %v10773 = vunpack.c.l.b16 %v9225
    %v10774 = vunpack.c.h.b16 %v9225
    %v10775 = vunpack.c.l.b16 %v9226
    %v10776 = vunpack.c.h.b16 %v9226
    %v10777 = vunpack.c.l.b16 %v9227
    %v10778 = vunpack.c.h.b16 %v9227
    %v10779 = vunpack.c.l.b16 %v9228
    %v10780 = vunpack.c.h.b16 %v9228
    %v10781 = vunpack.c.l.b16 %v9229
    %v10782 = vunpack.c.h.b16 %v9229
    %v10783 = vunpack.c.l.b16 %v9230
    %v10784 = vunpack.c.h.b16 %v9230
    %v10785 = vunpack.c.l.b16 %v9231
    %v10786 = vunpack.c.h.b16 %v9231
    %v10787 = vunpack.c.l.b16 %v9232
    %v10788 = vunpack.c.h.b16 %v9232
    %v10789 = vunpack.c.l.b16 %v9233
    %v10790 = vunpack.c.h.b16 %v9233
    %v10791 = vunpack.c.l.b16 %v9234
    %v10792 = vunpack.c.h.b16 %v9234
    %v10793 = vunpack.c.l.b16 %v9235
    %v10794 = vunpack.c.h.b16 %v9235
    %v10795 = vunpack.c.l.b16 %v9236
    %v10796 = vunpack.c.h.b16 %v9236
    %v10797 = vunpack.c.l.b16 %v9237
    %v10798 = vunpack.c.h.b16 %v9237
    %v10799 = vunpack.c.l.b16 %v9238
    %v10800 = vunpack.c.h.b16 %v9238
    %v10801 = vunpack.c.l.b16 %v9239
    %v10802 = vunpack.c.h.b16 %v9239
    %v10803 = vunpack.c.l.b16 %v9240
    %v10804 = vunpack.c.h.b16 %v9240
    %v10805 = vunpack.c.l.b16 %v9241
    %v10806 = vunpack.c.h.b16 %v9241
    %v10807 = vunpack.c.l.b16 %v9242
    %v10808 = vunpack.c.h.b16 %v9242
    %v10809 = vunpack.c.l.b16 %v9243
    %v10810 = vunpack.c.h.b16 %v9243
    %v10811 = vunpack.c.l.b16 %v9244
    %v10812 = vunpack.c.h.b16 %v9244
    %v10813 = vunpack.c.l.b16 %v9245
    %v10814 = vunpack.c.h.b16 %v9245
    %v10815 = vunpack.c.l.b16 %v9246
    %v10816 = vunpack.c.h.b16 %v9246
    %v10817 = vunpack.c.l.b16 %v9247
    %v10818 = vunpack.c.h.b16 %v9247
    %v10819 = vunpack.c.l.b16 %v9248
    %v10820 = vunpack.c.h.b16 %v9248
    %v10821 = vunpack.c.l.b16 %v9249
    %v10822 = vunpack.c.h.b16 %v9249
    %v10823 = vunpack.c.l.b16 %v9250
    %v10824 = vunpack.c.h.b16 %v9250
    %v10825 = vunpack.c.l.b16 %v9251
    %v10826 = vunpack.c.h.b16 %v9251
    %v10827 = vunpack.c.l.b16 %v9252
    %v10828 = vunpack.c.h.b16 %v9252
    %v10829 = vunpack.c.l.b16 %v9253
    %v10830 = vunpack.c.h.b16 %v9253
    %v10831 = vunpack.c.l.b16 %v9254
    %v10832 = vunpack.c.h.b16 %v9254
    %v10833 = vunpack.c.l.b16 %v9255
    %v10834 = vunpack.c.h.b16 %v9255
    %v10835 = vunpack.c.l.b16 %v9256
    %v10836 = vunpack.c.h.b16 %v9256
    %v10837 = vunpack.c.l.b16 %v9257
    %v10838 = vunpack.c.h.b16 %v9257
    %v10839 = vunpack.c.l.b16 %v9258
    %v10840 = vunpack.c.h.b16 %v9258
    %v10841 = vunpack.c.l.b16 %v9259
    %v10842 = vunpack.c.h.b16 %v9259
    %v10843 = vunpack.c.l.b16 %v9260
    %v10844 = vunpack.c.h.b16 %v9260
    %v10845 = vunpack.c.l.b16 %v9261
    %v10846 = vunpack.c.h.b16 %v9261
    %v10847 = vunpack.c.l.b16 %v9262
    %v10848 = vunpack.c.h.b16 %v9262
    %v10849 = vunpack.c.l.b16 %v9263
    %v10850 = vunpack.c.h.b16 %v9263
    %v10851 = vunpack.c.l.b16 %v9264
    %v10852 = vunpack.c.h.b16 %v9264
    %v10853 = vunpack.c.l.b16 %v9265
    %v10854 = vunpack.c.h.b16 %v9265
    %v10855 = vunpack.c.l.b16 %v9266
    %v10856 = vunpack.c.h.b16 %v9266
    %v10857 = vunpack.c.l.b16 %v9267
    %v10858 = vunpack.c.h.b16 %v9267
    %v10859 = vunpack.c.l.b16 %v9268
    %v10860 = vunpack.c.h.b16 %v9268
    %v10861 = vunpack.c.l.b16 %v9269
    %v10862 = vunpack.c.h.b16 %v9269
    %v10863 = vunpack.c.l.b16 %v9270
    %v10864 = vunpack.c.h.b16 %v9270
    %v10865 = vunpack.c.l.b16 %v9271
    %v10866 = vunpack.c.h.b16 %v9271
    %v10867 = vunpack.c.l.b16 %v9272
    %v10868 = vunpack.c.h.b16 %v9272
    %v10869 = vunpack.c.l.b16 %v9273
    %v10870 = vunpack.c.h.b16 %v9273
    %v10871 = vunpack.c.l.b16 %v9274
    %v10872 = vunpack.c.h.b16 %v9274
    %v10873 = vunpack.c.l.b16 %v9275
    %v10874 = vunpack.c.h.b16 %v9275
    %v10875 = vunpack.c.l.b16 %v9276
    %v10876 = vunpack.c.h.b16 %v9276
    %v10877 = vunpack.c.l.b16 %v9277
    %v10878 = vunpack.c.h.b16 %v9277
    %v10879 = vunpack.c.l.b16 %v9278
    %v10880 = vunpack.c.h.b16 %v9278
    %v10881 = vunpack.c.l.b16 %v9279
    %v10882 = vunpack.c.h.b16 %v9279
    %v10883 = vunpack.c.l.b16 %v9280
    %v10884 = vunpack.c.h.b16 %v9280
    %v10885 = vunpack.c.l.b16 %v9281
    %v10886 = vunpack.c.h.b16 %v9281
    %v10887 = vunpack.c.l.b16 %v9282
    %v10888 = vunpack.c.h.b16 %v9282
    %v10889 = vunpack.c.l.b16 %v9283
    %v10890 = vunpack.c.h.b16 %v9283
    %v10891 = vunpack.c.l.b16 %v9284
    %v10892 = vunpack.c.h.b16 %v9284
    %v10893 = vunpack.c.l.b16 %v9285
    %v10894 = vunpack.c.h.b16 %v9285
    %v10895 = vunpack.c.l.b16 %v9286
    %v10896 = vunpack.c.h.b16 %v9286
    %v10897 = vunpack.c.l.b16 %v9287
    %v10898 = vunpack.c.h.b16 %v9287
    %v10899 = vunpack.c.l.b16 %v9288
    %v10900 = vunpack.c.h.b16 %v9288
    %v10901 = vunpack.c.l.b16 %v9289
    %v10902 = vunpack.c.h.b16 %v9289
    %v10903 = vunpack.c.l.b16 %v9290
    %v10904 = vunpack.c.h.b16 %v9290
    %v10905 = vunpack.c.l.b16 %v9291
    %v10906 = vunpack.c.h.b16 %v9291
    %v10907 = vunpack.c.l.b16 %v9292
    %v10908 = vunpack.c.h.b16 %v9292
    %v10909 = vunpack.c.l.b16 %v9293
    %v10910 = vunpack.c.h.b16 %v9293
    %v10911 = vunpack.c.l.b16 %v9294
    %v10912 = vunpack.c.h.b16 %v9294
    %v10913 = vunpack.c.l.b16 %v9295
    %v10914 = vunpack.c.h.b16 %v9295
    %v10915 = vunpack.c.l.b16 %v9296
    %v10916 = vunpack.c.h.b16 %v9296
    %v10917 = vunpack.c.l.b16 %v9297
    %v10918 = vunpack.c.h.b16 %v9297
    %v10919 = vunpack.c.l.b16 %v9298
    %v10920 = vunpack.c.h.b16 %v9298
    %v10921 = vunpack.c.l.b16 %v9299
    %v10922 = vunpack.c.h.b16 %v9299
    %v10923 = vunpack.c.l.b16 %v9300
    %v10924 = vunpack.c.h.b16 %v9300
    %v10925 = vunpack.c.l.b16 %v9301
    %v10926 = vunpack.c.h.b16 %v9301
    %v10927 = vunpack.c.l.b16 %v9302
    %v10928 = vunpack.c.h.b16 %v9302
    %v10929 = vunpack.c.l.b16 %v9303
    %v10930 = vunpack.c.h.b16 %v9303
    %v10931 = vunpack.c.l.b16 %v9304
    %v10932 = vunpack.c.h.b16 %v9304
    %v10933 = vunpack.c.l.b16 %v9305
    %v10934 = vunpack.c.h.b16 %v9305
    %v10935 = vunpack.c.l.b16 %v9306
    %v10936 = vunpack.c.h.b16 %v9306
    %v10937 = vunpack.c.l.b16 %v9307
    %v10938 = vunpack.c.h.b16 %v9307
    %v10939 = vunpack.c.l.b16 %v9308
    %v10940 = vunpack.c.h.b16 %v9308
    %v10941 = vunpack.c.l.b16 %v9309
    %v10942 = vunpack.c.h.b16 %v9309
    %v10943 = vunpack.c.l.b16 %v9310
    %v10944 = vunpack.c.h.b16 %v9310
    %v10945 = vunpack.c.l.b16 %v9311
    %v10946 = vunpack.c.h.b16 %v9311
    %v10947 = vunpack.c.l.b16 %v9312
    %v10948 = vunpack.c.h.b16 %v9312
    %v10949 = vunpack.c.l.b16 %v9313
    %v10950 = vunpack.c.h.b16 %v9313
    %v10951 = vunpack.c.l.b16 %v9314
    %v10952 = vunpack.c.h.b16 %v9314
    %v10953 = vunpack.c.l.b16 %v9315
    %v10954 = vunpack.c.h.b16 %v9315
    %v10955 = vunpack.c.l.b16 %v9316
    %v10956 = vunpack.c.h.b16 %v9316
    %v10957 = vunpack.c.l.b16 %v9317
    %v10958 = vunpack.c.h.b16 %v9317
    %v10959 = vunpack.c.l.b16 %v9318
    %v10960 = vunpack.c.h.b16 %v9318
    %v10961 = vunpack.c.l.b16 %v9319
    %v10962 = vunpack.c.h.b16 %v9319
    %v10963 = vunpack.c.l.b16 %v9320
    %v10964 = vunpack.c.h.b16 %v9320
    %v10965 = vunpack.c.l.b16 %v9321
    %v10966 = vunpack.c.h.b16 %v9321
    %v10967 = vunpack.c.l.b16 %v9322
    %v10968 = vunpack.c.h.b16 %v9322
    %v10969 = vunpack.c.l.b16 %v9323
    %v10970 = vunpack.c.h.b16 %v9323
    %v10971 = vunpack.c.l.b16 %v9324
    %v10972 = vunpack.c.h.b16 %v9324
    %v10973 = vunpack.c.l.b16 %v9325
    %v10974 = vunpack.c.h.b16 %v9325
    %v10975 = vunpack.c.l.b16 %v9326
    %v10976 = vunpack.c.h.b16 %v9326
    %v10977 = vunpack.c.l.b16 %v9327
    %v10978 = vunpack.c.h.b16 %v9327
    %v10979 = vunpack.c.l.b16 %v9328
    %v10980 = vunpack.c.h.b16 %v9328
    %v10981 = vunpack.c.l.b16 %v9329
    %v10982 = vunpack.c.h.b16 %v9329
    %v10983 = vunpack.c.l.b16 %v9330
    %v10984 = vunpack.c.h.b16 %v9330
    %v10985 = vunpack.c.l.b16 %v9331
    %v10986 = vunpack.c.h.b16 %v9331
    %v10987 = vunpack.c.l.b16 %v9332
    %v10988 = vunpack.c.h.b16 %v9332
    %v10989 = vunpack.c.l.b16 %v9333
    %v10990 = vunpack.c.h.b16 %v9333
    %v10991 = vunpack.c.l.b16 %v9334
    %v10992 = vunpack.c.h.b16 %v9334
    %v10993 = vunpack.c.l.b16 %v9335
    %v10994 = vunpack.c.h.b16 %v9335
    %v10995 = vunpack.c.l.b16 %v9336
    %v10996 = vunpack.c.h.b16 %v9336
    %v10997 = vunpack.c.l.b16 %v9337
    %v10998 = vunpack.c.h.b16 %v9337
    %v10999 = vunpack.c.l.b16 %v9338
    %v11000 = vunpack.c.h.b16 %v9338
    %v11001 = vunpack.c.l.b16 %v9339
    %v11002 = vunpack.c.h.b16 %v9339
    %v11003 = vunpack.c.l.b16 %v9340
    %v11004 = vunpack.c.h.b16 %v9340
    %v11005 = vunpack.c.l.b16 %v9341
    %v11006 = vunpack.c.h.b16 %v9341
    %v11007 = vunpack.c.l.b16 %v9342
    %v11008 = vunpack.c.h.b16 %v9342
    %v11009 = vunpack.c.l.b16 %v9343
    %v11010 = vunpack.c.h.b16 %v9343
    %v11011 = vunpack.c.l.b16 %v9344
    %v11012 = vunpack.c.h.b16 %v9344
    %v11013 = vunpack.c.l.b16 %v9345
    %v11014 = vunpack.c.h.b16 %v9345
    %v11015 = vunpack.c.l.b16 %v9346
    %v11016 = vunpack.c.h.b16 %v9346
    %v11017 = vunpack.c.l.b16 %v9347
    %v11018 = vunpack.c.h.b16 %v9347
    %v11019 = vunpack.c.l.b16 %v9348
    %v11020 = vunpack.c.h.b16 %v9348
    %v11021 = vunpack.c.l.b16 %v9349
    %v11022 = vunpack.c.h.b16 %v9349
    %v11023 = vunpack.c.l.b16 %v9350
    %v11024 = vunpack.c.h.b16 %v9350
    %v11025 = vunpack.c.l.b16 %v9351
    %v11026 = vunpack.c.h.b16 %v9351
    %v11027 = vunpack.c.l.b16 %v9352
    %v11028 = vunpack.c.h.b16 %v9352
    %v11029 = vunpack.c.l.b16 %v9353
    %v11030 = vunpack.c.h.b16 %v9353
    %v11031 = vunpack.c.l.b16 %v9354
    %v11032 = vunpack.c.h.b16 %v9354
    %v11033 = vunpack.c.l.b16 %v9355
    %v11034 = vunpack.c.h.b16 %v9355
    %v11035 = vunpack.c.l.b16 %v9356
    %v11036 = vunpack.c.h.b16 %v9356
    %v11037 = vunpack.c.l.b16 %v9357
    %v11038 = vunpack.c.h.b16 %v9357
    %v11039 = vunpack.c.l.b16 %v9358
    %v11040 = vunpack.c.h.b16 %v9358
    %v11041 = vunpack.c.l.b16 %v9359
    %v11042 = vunpack.c.h.b16 %v9359
    %v11043 = vunpack.c.l.b16 %v9360
    %v11044 = vunpack.c.h.b16 %v9360
    %v11045 = vunpack.c.l.b16 %v9361
    %v11046 = vunpack.c.h.b16 %v9361
    %v11047 = vunpack.c.l.b16 %v9362
    %v11048 = vunpack.c.h.b16 %v9362
    %v11049 = vunpack.c.l.b16 %v9363
    %v11050 = vunpack.c.h.b16 %v9363
    %v11051 = vunpack.c.l.b16 %v9364
    %v11052 = vunpack.c.h.b16 %v9364
    %v11053 = vunpack.c.l.b16 %v9365
    %v11054 = vunpack.c.h.b16 %v9365
    %v11055 = vunpack.c.l.b16 %v9366
    %v11056 = vunpack.c.h.b16 %v9366
    %v11057 = vunpack.c.l.b16 %v9367
    %v11058 = vunpack.c.h.b16 %v9367
    %v11059 = vunpack.c.l.b16 %v9368
    %v11060 = vunpack.c.h.b16 %v9368
    %v11061 = vunpack.c.l.b16 %v9369
    %v11062 = vunpack.c.h.b16 %v9369
    %v11063 = vunpack.c.l.b16 %v9370
    %v11064 = vunpack.c.h.b16 %v9370
    %v11065 = vunpack.c.l.b16 %v9371
    %v11066 = vunpack.c.h.b16 %v9371
    %v11067 = vunpack.c.l.b16 %v9372
    %v11068 = vunpack.c.h.b16 %v9372
    %v11069 = vunpack.c.l.b16 %v9373
    %v11070 = vunpack.c.h.b16 %v9373
    %v11071 = vunpack.c.l.b16 %v9374
    %v11072 = vunpack.c.h.b16 %v9374
    %v11073 = vunpack.c.l.b16 %v9375
    %v11074 = vunpack.c.h.b16 %v9375
    %v11075 = vunpack.c.l.b16 %v9376
    %v11076 = vunpack.c.h.b16 %v9376
    %v11077 = vunpack.c.l.b16 %v9377
    %v11078 = vunpack.c.h.b16 %v9377
    %v11079 = vunpack.c.l.b16 %v9378
    %v11080 = vunpack.c.h.b16 %v9378
    %v11081 = vunpack.c.l.b16 %v9379
    %v11082 = vunpack.c.h.b16 %v9379
    %v11083 = vunpack.c.l.b16 %v9380
    %v11084 = vunpack.c.h.b16 %v9380
    %v11085 = vunpack.c.l.b16 %v9381
    %v11086 = vunpack.c.h.b16 %v9381
    %v11087 = vunpack.c.l.b16 %v9382
    %v11088 = vunpack.c.h.b16 %v9382
    %v11089 = vunpack.c.l.b16 %v9383
    %v11090 = vunpack.c.h.b16 %v9383
    %v11091 = vunpack.c.l.b16 %v9384
    %v11092 = vunpack.c.h.b16 %v9384
    %v11093 = vunpack.c.l.b16 %v9385
    %v11094 = vunpack.c.h.b16 %v9385
    %v11095 = vunpack.c.l.b16 %v9386
    %v11096 = vunpack.c.h.b16 %v9386
    %v11097 = vunpack.c.l.b16 %v9387
    %v11098 = vunpack.c.h.b16 %v9387
    %v11099 = vunpack.c.l.b16 %v9388
    %v11100 = vunpack.c.h.b16 %v9388
    %v11101 = vunpack.c.l.b16 %v9389
    %v11102 = vunpack.c.h.b16 %v9389
    %v11103 = vunpack.c.l.b16 %v9390
    %v11104 = vunpack.c.h.b16 %v9390
    %v11105 = vunpack.c.l.b16 %v9391
    %v11106 = vunpack.c.h.b16 %v9391
    %v11107 = vunpack.c.l.b16 %v9392
    %v11108 = vunpack.c.h.b16 %v9392
    %v11109 = vunpack.c.l.b16 %v9393
    %v11110 = vunpack.c.h.b16 %v9393
    %v11111 = vunpack.c.l.b16 %v9394
    %v11112 = vunpack.c.h.b16 %v9394
    %v11113 = vunpack.c.l.b16 %v9395
    %v11114 = vunpack.c.h.b16 %v9395
    %v11115 = vunpack.c.l.b16 %v9396
    %v11116 = vunpack.c.h.b16 %v9396
    %v11117 = vunpack.c.l.b16 %v9397
    %v11118 = vunpack.c.h.b16 %v9397
    %v11119 = vunpack.c.l.b16 %v9398
    %v11120 = vunpack.c.h.b16 %v9398
    %v11121 = vunpack.c.l.b16 %v9399
    %v11122 = vunpack.c.h.b16 %v9399
    %v11123 = vunpack.c.l.b16 %v9400
    %v11124 = vunpack.c.h.b16 %v9400
    %v11125 = vunpack.c.l.b16 %v9401
    %v11126 = vunpack.c.h.b16 %v9401
    %v11127 = vunpack.c.l.b16 %v9402
    %v11128 = vunpack.c.h.b16 %v9402
    %v11129 = vunpack.c.l.b16 %v9403
    %v11130 = vunpack.c.h.b16 %v9403
    %v11131 = vunpack.c.l.b16 %v9404
    %v11132 = vunpack.c.h.b16 %v9404
    %v11133 = vpack.c.b16 %v9993, %v9981
    %v11134 = vpack.c.b16 %v9994, %v9982
    %v11135 = vpack.c.b16 %v9995, %v9983
    %v11136 = vpack.c.b16 %v9996, %v9984
    %v11137 = vpack.c.b16 %v9997, %v9985
    %v11138 = vpack.c.b16 %v9998, %v9986
    %v11139 = vpack.c.b16 %v9999, %v9987
    %v11140 = vpack.c.b16 %v10000, %v9988
    %v11141 = vpack.c.b16 %v10001, %v9989
    %v11142 = vpack.c.b16 %v10002, %v9990
    %v11143 = vpack.c.b16 %v10003, %v9991
    %v11144 = vpack.c.b16 %v10004, %v9992
    %v11145 = vpack.c.b16 %v10017, %v10005
    %v11146 = vpack.c.b16 %v10018, %v10006
    %v11147 = vpack.c.b16 %v10019, %v10007
    %v11148 = vpack.c.b16 %v10020, %v10008
    %v11149 = vpack.c.b16 %v10021, %v10009
    %v11150 = vpack.c.b16 %v10022, %v10010
    %v11151 = vpack.c.b16 %v10023, %v10011
    %v11152 = vpack.c.b16 %v10024, %v10012
    %v11153 = vpack.c.b16 %v10025, %v10013
    %v11154 = vpack.c.b16 %v10026, %v10014
    %v11155 = vpack.c.b16 %v10027, %v10015
    %v11156 = vpack.c.b16 %v10028, %v10016
    %v11157 = vpack.c.b16 %v10041, %v10029
    %v11158 = vpack.c.b16 %v10042, %v10030
    %v11159 = vpack.c.b16 %v10043, %v10031
    %v11160 = vpack.c.b16 %v10044, %v10032
    %v11161 = vpack.c.b16 %v10045, %v10033
    %v11162 = vpack.c.b16 %v10046, %v10034
    %v11163 = vpack.c.b16 %v10047, %v10035
    %v11164 = vpack.c.b16 %v10048, %v10036
    %v11165 = vpack.c.b16 %v10049, %v10037
    %v11166 = vpack.c.b16 %v10050, %v10038
    %v11167 = vpack.c.b16 %v10051, %v10039
    %v11168 = vpack.c.b16 %v10052, %v10040
    %v11169 = vpack.c.b16 %v10065, %v10053
    %v11170 = vpack.c.b16 %v10066, %v10054
    %v11171 = vpack.c.b16 %v10067, %v10055
    %v11172 = vpack.c.b16 %v10068, %v10056
    %v11173 = vpack.c.b16 %v10069, %v10057
    %v11174 = vpack.c.b16 %v10070, %v10058
    %v11175 = vpack.c.b16 %v10071, %v10059
    %v11176 = vpack.c.b16 %v10072, %v10060
    %v11177 = vpack.c.b16 %v10073, %v10061
    %v11178 = vpack.c.b16 %v10074, %v10062
    %v11179 = vpack.c.b16 %v10075, %v10063
    %v11180 = vpack.c.b16 %v10076, %v10064
    %v11181 = vpack.c.b16 %v10089, %v10077
    %v11182 = vpack.c.b16 %v10090, %v10078
    %v11183 = vpack.c.b16 %v10091, %v10079
    %v11184 = vpack.c.b16 %v10092, %v10080
    %v11185 = vpack.c.b16 %v10093, %v10081
    %v11186 = vpack.c.b16 %v10094, %v10082
    %v11187 = vpack.c.b16 %v10095, %v10083
    %v11188 = vpack.c.b16 %v10096, %v10084
    %v11189 = vpack.c.b16 %v10097, %v10085
    %v11190 = vpack.c.b16 %v10098, %v10086
    %v11191 = vpack.c.b16 %v10099, %v10087
    %v11192 = vpack.c.b16 %v10100, %v10088
    %v11193 = vpack.c.b16 %v10113, %v10101
    %v11194 = vpack.c.b16 %v10114, %v10102
    %v11195 = vpack.c.b16 %v10115, %v10103
    %v11196 = vpack.c.b16 %v10116, %v10104
    %v11197 = vpack.c.b16 %v10117, %v10105
    %v11198 = vpack.c.b16 %v10118, %v10106
    %v11199 = vpack.c.b16 %v10119, %v10107
    %v11200 = vpack.c.b16 %v10120, %v10108
    %v11201 = vpack.c.b16 %v10121, %v10109
    %v11202 = vpack.c.b16 %v10122, %v10110
    %v11203 = vpack.c.b16 %v10123, %v10111
    %v11204 = vpack.c.b16 %v10124, %v10112
    %v11205 = vpack.c.b16 %v10137, %v10125
    %v11206 = vpack.c.b16 %v10138, %v10126
    %v11207 = vpack.c.b16 %v10139, %v10127
    %v11208 = vpack.c.b16 %v10140, %v10128
    %v11209 = vpack.c.b16 %v10141, %v10129
    %v11210 = vpack.c.b16 %v10142, %v10130
    %v11211 = vpack.c.b16 %v10143, %v10131
    %v11212 = vpack.c.b16 %v10144, %v10132
    %v11213 = vpack.c.b16 %v10145, %v10133
    %v11214 = vpack.c.b16 %v10146, %v10134
    %v11215 = vpack.c.b16 %v10147, %v10135
    %v11216 = vpack.c.b16 %v10148, %v10136
    %v11217 = vpack.c.b16 %v10161, %v10149
    %v11218 = vpack.c.b16 %v10162, %v10150
    %v11219 = vpack.c.b16 %v10163, %v10151
    %v11220 = vpack.c.b16 %v10164, %v10152
    %v11221 = vpack.c.b16 %v10165, %v10153
    %v11222 = vpack.c.b16 %v10166, %v10154
    %v11223 = vpack.c.b16 %v10167, %v10155
    %v11224 = vpack.c.b16 %v10168, %v10156
    %v11225 = vpack.c.b16 %v10169, %v10157
    %v11226 = vpack.c.b16 %v10170, %v10158
    %v11227 = vpack.c.b16 %v10171, %v10159
    %v11228 = vpack.c.b16 %v10172, %v10160
    %v11229 = vpack.c.b16 %v10185, %v10173
    %v11230 = vpack.c.b16 %v10186, %v10174
    %v11231 = vpack.c.b16 %v10187, %v10175
    %v11232 = vpack.c.b16 %v10188, %v10176
    %v11233 = vpack.c.b16 %v10189, %v10177
    %v11234 = vpack.c.b16 %v10190, %v10178
    %v11235 = vpack.c.b16 %v10191, %v10179
    %v11236 = vpack.c.b16 %v10192, %v10180
    %v11237 = vpack.c.b16 %v10193, %v10181
    %v11238 = vpack.c.b16 %v10194, %v10182
    %v11239 = vpack.c.b16 %v10195, %v10183
    %v11240 = vpack.c.b16 %v10196, %v10184
    %v11241 = vpack.c.b16 %v10209, %v10197
    %v11242 = vpack.c.b16 %v10210, %v10198
    %v11243 = vpack.c.b16 %v10211, %v10199
    %v11244 = vpack.c.b16 %v10212, %v10200
    %v11245 = vpack.c.b16 %v10213, %v10201
    %v11246 = vpack.c.b16 %v10214, %v10202
    %v11247 = vpack.c.b16 %v10215, %v10203
    %v11248 = vpack.c.b16 %v10216, %v10204
    %v11249 = vpack.c.b16 %v10217, %v10205
    %v11250 = vpack.c.b16 %v10218, %v10206
    %v11251 = vpack.c.b16 %v10219, %v10207
    %v11252 = vpack.c.b16 %v10220, %v10208
    %v11253 = vpack.c.b16 %v10233, %v10221
    %v11254 = vpack.c.b16 %v10234, %v10222
    %v11255 = vpack.c.b16 %v10235, %v10223
    %v11256 = vpack.c.b16 %v10236, %v10224
    %v11257 = vpack.c.b16 %v10237, %v10225
    %v11258 = vpack.c.b16 %v10238, %v10226
    %v11259 = vpack.c.b16 %v10239, %v10227
    %v11260 = vpack.c.b16 %v10240, %v10228
    %v11261 = vpack.c.b16 %v10241, %v10229
    %v11262 = vpack.c.b16 %v10242, %v10230
    %v11263 = vpack.c.b16 %v10243, %v10231
    %v11264 = vpack.c.b16 %v10244, %v10232
    %v11265 = vpack.c.b16 %v10257, %v10245
    %v11266 = vpack.c.b16 %v10258, %v10246
    %v11267 = vpack.c.b16 %v10259, %v10247
    %v11268 = vpack.c.b16 %v10260, %v10248
    %v11269 = vpack.c.b16 %v10261, %v10249
    %v11270 = vpack.c.b16 %v10262, %v10250
    %v11271 = vpack.c.b16 %v10263, %v10251
    %v11272 = vpack.c.b16 %v10264, %v10252
    %v11273 = vpack.c.b16 %v10265, %v10253
    %v11274 = vpack.c.b16 %v10266, %v10254
    %v11275 = vpack.c.b16 %v10267, %v10255
    %v11276 = vpack.c.b16 %v10268, %v10256
    %v11277 = vpack.c.b16 %v10281, %v10269
    %v11278 = vpack.c.b16 %v10282, %v10270
    %v11279 = vpack.c.b16 %v10283, %v10271
    %v11280 = vpack.c.b16 %v10284, %v10272
    %v11281 = vpack.c.b16 %v10285, %v10273
    %v11282 = vpack.c.b16 %v10286, %v10274
    %v11283 = vpack.c.b16 %v10287, %v10275
    %v11284 = vpack.c.b16 %v10288, %v10276
    %v11285 = vpack.c.b16 %v10289, %v10277
    %v11286 = vpack.c.b16 %v10290, %v10278
    %v11287 = vpack.c.b16 %v10291, %v10279
    %v11288 = vpack.c.b16 %v10292, %v10280
    %v11289 = vpack.c.b16 %v10305, %v10293
    %v11290 = vpack.c.b16 %v10306, %v10294
    %v11291 = vpack.c.b16 %v10307, %v10295
    %v11292 = vpack.c.b16 %v10308, %v10296
    %v11293 = vpack.c.b16 %v10309, %v10297
    %v11294 = vpack.c.b16 %v10310, %v10298
    %v11295 = vpack.c.b16 %v10311, %v10299
    %v11296 = vpack.c.b16 %v10312, %v10300
    %v11297 = vpack.c.b16 %v10313, %v10301
    %v11298 = vpack.c.b16 %v10314, %v10302
    %v11299 = vpack.c.b16 %v10315, %v10303
    %v11300 = vpack.c.b16 %v10316, %v10304
    %v11301 = vpack.c.b16 %v10329, %v10317
    %v11302 = vpack.c.b16 %v10330, %v10318
    %v11303 = vpack.c.b16 %v10331, %v10319
    %v11304 = vpack.c.b16 %v10332, %v10320
    %v11305 = vpack.c.b16 %v10333, %v10321
    %v11306 = vpack.c.b16 %v10334, %v10322
    %v11307 = vpack.c.b16 %v10335, %v10323
    %v11308 = vpack.c.b16 %v10336, %v10324
    %v11309 = vpack.c.b16 %v10337, %v10325
    %v11310 = vpack.c.b16 %v10338, %v10326
    %v11311 = vpack.c.b16 %v10339, %v10327
    %v11312 = vpack.c.b16 %v10340, %v10328
    %v11313 = vpack.c.b16 %v10353, %v10341
    %v11314 = vpack.c.b16 %v10354, %v10342
    %v11315 = vpack.c.b16 %v10355, %v10343
    %v11316 = vpack.c.b16 %v10356, %v10344
    %v11317 = vpack.c.b16 %v10357, %v10345
    %v11318 = vpack.c.b16 %v10358, %v10346
    %v11319 = vpack.c.b16 %v10359, %v10347
    %v11320 = vpack.c.b16 %v10360, %v10348
    %v11321 = vpack.c.b16 %v10361, %v10349
    %v11322 = vpack.c.b16 %v10362, %v10350
    %v11323 = vpack.c.b16 %v10363, %v10351
    %v11324 = vpack.c.b16 %v10364, %v10352
    %v11325 = vpack.c.b16 %v10377, %v10365
    %v11326 = vpack.c.b16 %v10378, %v10366
    %v11327 = vpack.c.b16 %v10379, %v10367
    %v11328 = vpack.c.b16 %v10380, %v10368
    %v11329 = vpack.c.b16 %v10381, %v10369
    %v11330 = vpack.c.b16 %v10382, %v10370
    %v11331 = vpack.c.b16 %v10383, %v10371
    %v11332 = vpack.c.b16 %v10384, %v10372
    %v11333 = vpack.c.b16 %v10385, %v10373
    %v11334 = vpack.c.b16 %v10386, %v10374
    %v11335 = vpack.c.b16 %v10387, %v10375
    %v11336 = vpack.c.b16 %v10388, %v10376
    %v11337 = vpack.c.b16 %v10401, %v10389
    %v11338 = vpack.c.b16 %v10402, %v10390
    %v11339 = vpack.c.b16 %v10403, %v10391
    %v11340 = vpack.c.b16 %v10404, %v10392
    %v11341 = vpack.c.b16 %v10405, %v10393
    %v11342 = vpack.c.b16 %v10406, %v10394
    %v11343 = vpack.c.b16 %v10407, %v10395
    %v11344 = vpack.c.b16 %v10408, %v10396
    %v11345 = vpack.c.b16 %v10409, %v10397
    %v11346 = vpack.c.b16 %v10410, %v10398
    %v11347 = vpack.c.b16 %v10411, %v10399
    %v11348 = vpack.c.b16 %v10412, %v10400
    %v11349 = vpack.c.b16 %v10425, %v10413
    %v11350 = vpack.c.b16 %v10426, %v10414
    %v11351 = vpack.c.b16 %v10427, %v10415
    %v11352 = vpack.c.b16 %v10428, %v10416
    %v11353 = vpack.c.b16 %v10429, %v10417
    %v11354 = vpack.c.b16 %v10430, %v10418
    %v11355 = vpack.c.b16 %v10431, %v10419
    %v11356 = vpack.c.b16 %v10432, %v10420
    %v11357 = vpack.c.b16 %v10433, %v10421
    %v11358 = vpack.c.b16 %v10434, %v10422
    %v11359 = vpack.c.b16 %v10435, %v10423
    %v11360 = vpack.c.b16 %v10436, %v10424
    %v11361 = vpack.c.b16 %v10449, %v10437
    %v11362 = vpack.c.b16 %v10450, %v10438
    %v11363 = vpack.c.b16 %v10451, %v10439
    %v11364 = vpack.c.b16 %v10452, %v10440
    %v11365 = vpack.c.b16 %v10453, %v10441
    %v11366 = vpack.c.b16 %v10454, %v10442
    %v11367 = vpack.c.b16 %v10455, %v10443
    %v11368 = vpack.c.b16 %v10456, %v10444
    %v11369 = vpack.c.b16 %v10457, %v10445
    %v11370 = vpack.c.b16 %v10458, %v10446
    %v11371 = vpack.c.b16 %v10459, %v10447
    %v11372 = vpack.c.b16 %v10460, %v10448
    %v11373 = vpack.c.b16 %v10473, %v10461
    %v11374 = vpack.c.b16 %v10474, %v10462
    %v11375 = vpack.c.b16 %v10475, %v10463
    %v11376 = vpack.c.b16 %v10476, %v10464
    %v11377 = vpack.c.b16 %v10477, %v10465
    %v11378 = vpack.c.b16 %v10478, %v10466
    %v11379 = vpack.c.b16 %v10479, %v10467
    %v11380 = vpack.c.b16 %v10480, %v10468
    %v11381 = vpack.c.b16 %v10481, %v10469
    %v11382 = vpack.c.b16 %v10482, %v10470
    %v11383 = vpack.c.b16 %v10483, %v10471
    %v11384 = vpack.c.b16 %v10484, %v10472
    %v11385 = vpack.c.b16 %v10497, %v10485
    %v11386 = vpack.c.b16 %v10498, %v10486
    %v11387 = vpack.c.b16 %v10499, %v10487
    %v11388 = vpack.c.b16 %v10500, %v10488
    %v11389 = vpack.c.b16 %v10501, %v10489
    %v11390 = vpack.c.b16 %v10502, %v10490
    %v11391 = vpack.c.b16 %v10503, %v10491
    %v11392 = vpack.c.b16 %v10504, %v10492
    %v11393 = vpack.c.b16 %v10505, %v10493
    %v11394 = vpack.c.b16 %v10506, %v10494
    %v11395 = vpack.c.b16 %v10507, %v10495
    %v11396 = vpack.c.b16 %v10508, %v10496
    %v11397 = vpack.c.b16 %v10521, %v10509
    %v11398 = vpack.c.b16 %v10522, %v10510
    %v11399 = vpack.c.b16 %v10523, %v10511
    %v11400 = vpack.c.b16 %v10524, %v10512
    %v11401 = vpack.c.b16 %v10525, %v10513
    %v11402 = vpack.c.b16 %v10526, %v10514
    %v11403 = vpack.c.b16 %v10527, %v10515
    %v11404 = vpack.c.b16 %v10528, %v10516
    %v11405 = vpack.c.b16 %v10529, %v10517
    %v11406 = vpack.c.b16 %v10530, %v10518
    %v11407 = vpack.c.b16 %v10531, %v10519
    %v11408 = vpack.c.b16 %v10532, %v10520
    %v11409 = vpack.c.b16 %v10545, %v10533
    %v11410 = vpack.c.b16 %v10546, %v10534
    %v11411 = vpack.c.b16 %v10547, %v10535
    %v11412 = vpack.c.b16 %v10548, %v10536
    %v11413 = vpack.c.b16 %v10549, %v10537
    %v11414 = vpack.c.b16 %v10550, %v10538
    %v11415 = vpack.c.b16 %v10551, %v10539
    %v11416 = vpack.c.b16 %v10552, %v10540
    %v11417 = vpack.c.b16 %v10553, %v10541
    %v11418 = vpack.c.b16 %v10554, %v10542
    %v11419 = vpack.c.b16 %v10555, %v10543
    %v11420 = vpack.c.b16 %v10556, %v10544
    %v11421 = vpack.c.b16 %v10569, %v10557
    %v11422 = vpack.c.b16 %v10570, %v10558
    %v11423 = vpack.c.b16 %v10571, %v10559
    %v11424 = vpack.c.b16 %v10572, %v10560
    %v11425 = vpack.c.b16 %v10573, %v10561
    %v11426 = vpack.c.b16 %v10574, %v10562
    %v11427 = vpack.c.b16 %v10575, %v10563
    %v11428 = vpack.c.b16 %v10576, %v10564
    %v11429 = vpack.c.b16 %v10577, %v10565
    %v11430 = vpack.c.b16 %v10578, %v10566
    %v11431 = vpack.c.b16 %v10579, %v10567
    %v11432 = vpack.c.b16 %v10580, %v10568
    %v11433 = vpack.c.b16 %v10593, %v10581
    %v11434 = vpack.c.b16 %v10594, %v10582
    %v11435 = vpack.c.b16 %v10595, %v10583
    %v11436 = vpack.c.b16 %v10596, %v10584
    %v11437 = vpack.c.b16 %v10597, %v10585
    %v11438 = vpack.c.b16 %v10598, %v10586
    %v11439 = vpack.c.b16 %v10599, %v10587
    %v11440 = vpack.c.b16 %v10600, %v10588
    %v11441 = vpack.c.b16 %v10601, %v10589
    %v11442 = vpack.c.b16 %v10602, %v10590
    %v11443 = vpack.c.b16 %v10603, %v10591
    %v11444 = vpack.c.b16 %v10604, %v10592
    %v11445 = vpack.c.b16 %v10617, %v10605
    %v11446 = vpack.c.b16 %v10618, %v10606
    %v11447 = vpack.c.b16 %v10619, %v10607
    %v11448 = vpack.c.b16 %v10620, %v10608
    %v11449 = vpack.c.b16 %v10621, %v10609
    %v11450 = vpack.c.b16 %v10622, %v10610
    %v11451 = vpack.c.b16 %v10623, %v10611
    %v11452 = vpack.c.b16 %v10624, %v10612
    %v11453 = vpack.c.b16 %v10625, %v10613
    %v11454 = vpack.c.b16 %v10626, %v10614
    %v11455 = vpack.c.b16 %v10627, %v10615
    %v11456 = vpack.c.b16 %v10628, %v10616
    %v11457 = vpack.c.b16 %v10641, %v10629
    %v11458 = vpack.c.b16 %v10642, %v10630
    %v11459 = vpack.c.b16 %v10643, %v10631
    %v11460 = vpack.c.b16 %v10644, %v10632
    %v11461 = vpack.c.b16 %v10645, %v10633
    %v11462 = vpack.c.b16 %v10646, %v10634
    %v11463 = vpack.c.b16 %v10647, %v10635
    %v11464 = vpack.c.b16 %v10648, %v10636
    %v11465 = vpack.c.b16 %v10649, %v10637
    %v11466 = vpack.c.b16 %v10650, %v10638
    %v11467 = vpack.c.b16 %v10651, %v10639
    %v11468 = vpack.c.b16 %v10652, %v10640
    %v11469 = vpack.c.b16 %v10665, %v10653
    %v11470 = vpack.c.b16 %v10666, %v10654
    %v11471 = vpack.c.b16 %v10667, %v10655
    %v11472 = vpack.c.b16 %v10668, %v10656
    %v11473 = vpack.c.b16 %v10669, %v10657
    %v11474 = vpack.c.b16 %v10670, %v10658
    %v11475 = vpack.c.b16 %v10671, %v10659
    %v11476 = vpack.c.b16 %v10672, %v10660
    %v11477 = vpack.c.b16 %v10673, %v10661
    %v11478 = vpack.c.b16 %v10674, %v10662
    %v11479 = vpack.c.b16 %v10675, %v10663
    %v11480 = vpack.c.b16 %v10676, %v10664
    %v11481 = vpack.c.b16 %v10689, %v10677
    %v11482 = vpack.c.b16 %v10690, %v10678
    %v11483 = vpack.c.b16 %v10691, %v10679
    %v11484 = vpack.c.b16 %v10692, %v10680
    %v11485 = vpack.c.b16 %v10693, %v10681
    %v11486 = vpack.c.b16 %v10694, %v10682
    %v11487 = vpack.c.b16 %v10695, %v10683
    %v11488 = vpack.c.b16 %v10696, %v10684
    %v11489 = vpack.c.b16 %v10697, %v10685
    %v11490 = vpack.c.b16 %v10698, %v10686
    %v11491 = vpack.c.b16 %v10699, %v10687
    %v11492 = vpack.c.b16 %v10700, %v10688
    %v11493 = vpack.c.b16 %v10713, %v10701
    %v11494 = vpack.c.b16 %v10714, %v10702
    %v11495 = vpack.c.b16 %v10715, %v10703
    %v11496 = vpack.c.b16 %v10716, %v10704
    %v11497 = vpack.c.b16 %v10717, %v10705
    %v11498 = vpack.c.b16 %v10718, %v10706
    %v11499 = vpack.c.b16 %v10719, %v10707
    %v11500 = vpack.c.b16 %v10720, %v10708
    %v11501 = vpack.c.b16 %v10721, %v10709
    %v11502 = vpack.c.b16 %v10722, %v10710
    %v11503 = vpack.c.b16 %v10723, %v10711
    %v11504 = vpack.c.b16 %v10724, %v10712
    %v11505 = vpack.c.b16 %v10737, %v10725
    %v11506 = vpack.c.b16 %v10738, %v10726
    %v11507 = vpack.c.b16 %v10739, %v10727
    %v11508 = vpack.c.b16 %v10740, %v10728
    %v11509 = vpack.c.b16 %v10741, %v10729
    %v11510 = vpack.c.b16 %v10742, %v10730
    %v11511 = vpack.c.b16 %v10743, %v10731
    %v11512 = vpack.c.b16 %v10744, %v10732
    %v11513 = vpack.c.b16 %v10745, %v10733
    %v11514 = vpack.c.b16 %v10746, %v10734
    %v11515 = vpack.c.b16 %v10747, %v10735
    %v11516 = vpack.c.b16 %v10748, %v10736
    %v11517 = vpack.c.b16 %v10761, %v10749
    %v11518 = vpack.c.b16 %v10762, %v10750
    %v11519 = vpack.c.b16 %v10763, %v10751
    %v11520 = vpack.c.b16 %v10764, %v10752
    %v11521 = vpack.c.b16 %v10765, %v10753
    %v11522 = vpack.c.b16 %v10766, %v10754
    %v11523 = vpack.c.b16 %v10767, %v10755
    %v11524 = vpack.c.b16 %v10768, %v10756
    %v11525 = vpack.c.b16 %v10769, %v10757
    %v11526 = vpack.c.b16 %v10770, %v10758
    %v11527 = vpack.c.b16 %v10771, %v10759
    %v11528 = vpack.c.b16 %v10772, %v10760
    %v11529 = vpack.c.b16 %v10785, %v10773
    %v11530 = vpack.c.b16 %v10786, %v10774
    %v11531 = vpack.c.b16 %v10787, %v10775
    %v11532 = vpack.c.b16 %v10788, %v10776
    %v11533 = vpack.c.b16 %v10789, %v10777
    %v11534 = vpack.c.b16 %v10790, %v10778
    %v11535 = vpack.c.b16 %v10791, %v10779
    %v11536 = vpack.c.b16 %v10792, %v10780
    %v11537 = vpack.c.b16 %v10793, %v10781
    %v11538 = vpack.c.b16 %v10794, %v10782
    %v11539 = vpack.c.b16 %v10795, %v10783
    %v11540 = vpack.c.b16 %v10796, %v10784
    %v11541 = vpack.c.b16 %v10809, %v10797
    %v11542 = vpack.c.b16 %v10810, %v10798
    %v11543 = vpack.c.b16 %v10811, %v10799
    %v11544 = vpack.c.b16 %v10812, %v10800
    %v11545 = vpack.c.b16 %v10813, %v10801
    %v11546 = vpack.c.b16 %v10814, %v10802
    %v11547 = vpack.c.b16 %v10815, %v10803
    %v11548 = vpack.c.b16 %v10816, %v10804
    %v11549 = vpack.c.b16 %v10817, %v10805
    %v11550 = vpack.c.b16 %v10818, %v10806
    %v11551 = vpack.c.b16 %v10819, %v10807
    %v11552 = vpack.c.b16 %v10820, %v10808
    %v11553 = vpack.c.b16 %v10833, %v10821
    %v11554 = vpack.c.b16 %v10834, %v10822
    %v11555 = vpack.c.b16 %v10835, %v10823
    %v11556 = vpack.c.b16 %v10836, %v10824
    %v11557 = vpack.c.b16 %v10837, %v10825
    %v11558 = vpack.c.b16 %v10838, %v10826
    %v11559 = vpack.c.b16 %v10839, %v10827
    %v11560 = vpack.c.b16 %v10840, %v10828
    %v11561 = vpack.c.b16 %v10841, %v10829
    %v11562 = vpack.c.b16 %v10842, %v10830
    %v11563 = vpack.c.b16 %v10843, %v10831
    %v11564 = vpack.c.b16 %v10844, %v10832
    %v11565 = vpack.c.b16 %v10857, %v10845
    %v11566 = vpack.c.b16 %v10858, %v10846
    %v11567 = vpack.c.b16 %v10859, %v10847
    %v11568 = vpack.c.b16 %v10860, %v10848
    %v11569 = vpack.c.b16 %v10861, %v10849
    %v11570 = vpack.c.b16 %v10862, %v10850
    %v11571 = vpack.c.b16 %v10863, %v10851
    %v11572 = vpack.c.b16 %v10864, %v10852
    %v11573 = vpack.c.b16 %v10865, %v10853
    %v11574 = vpack.c.b16 %v10866, %v10854
    %v11575 = vpack.c.b16 %v10867, %v10855
    %v11576 = vpack.c.b16 %v10868, %v10856
    %v11577 = vpack.c.b16 %v10881, %v10869
    %v11578 = vpack.c.b16 %v10882, %v10870
    %v11579 = vpack.c.b16 %v10883, %v10871
    %v11580 = vpack.c.b16 %v10884, %v10872
    %v11581 = vpack.c.b16 %v10885, %v10873
    %v11582 = vpack.c.b16 %v10886, %v10874
    %v11583 = vpack.c.b16 %v10887, %v10875
    %v11584 = vpack.c.b16 %v10888, %v10876
    %v11585 = vpack.c.b16 %v10889, %v10877
    %v11586 = vpack.c.b16 %v10890, %v10878
    %v11587 = vpack.c.b16 %v10891, %v10879
    %v11588 = vpack.c.b16 %v10892, %v10880
    %v11589 = vpack.c.b16 %v10905, %v10893
    %v11590 = vpack.c.b16 %v10906, %v10894
    %v11591 = vpack.c.b16 %v10907, %v10895
    %v11592 = vpack.c.b16 %v10908, %v10896
    %v11593 = vpack.c.b16 %v10909, %v10897
    %v11594 = vpack.c.b16 %v10910, %v10898
    %v11595 = vpack.c.b16 %v10911, %v10899
    %v11596 = vpack.c.b16 %v10912, %v10900
    %v11597 = vpack.c.b16 %v10913, %v10901
    %v11598 = vpack.c.b16 %v10914, %v10902
    %v11599 = vpack.c.b16 %v10915, %v10903
    %v11600 = vpack.c.b16 %v10916, %v10904
    %v11601 = vpack.c.b16 %v10929, %v10917
    %v11602 = vpack.c.b16 %v10930, %v10918
    %v11603 = vpack.c.b16 %v10931, %v10919
    %v11604 = vpack.c.b16 %v10932, %v10920
    %v11605 = vpack.c.b16 %v10933, %v10921
    %v11606 = vpack.c.b16 %v10934, %v10922
    %v11607 = vpack.c.b16 %v10935, %v10923
    %v11608 = vpack.c.b16 %v10936, %v10924
    %v11609 = vpack.c.b16 %v10937, %v10925
    %v11610 = vpack.c.b16 %v10938, %v10926
    %v11611 = vpack.c.b16 %v10939, %v10927
    %v11612 = vpack.c.b16 %v10940, %v10928
    %v11613 = vpack.c.b16 %v10953, %v10941
    %v11614 = vpack.c.b16 %v10954, %v10942
    %v11615 = vpack.c.b16 %v10955, %v10943
    %v11616 = vpack.c.b16 %v10956, %v10944
    %v11617 = vpack.c.b16 %v10957, %v10945
    %v11618 = vpack.c.b16 %v10958, %v10946
    %v11619 = vpack.c.b16 %v10959, %v10947
    %v11620 = vpack.c.b16 %v10960, %v10948
    %v11621 = vpack.c.b16 %v10961, %v10949
    %v11622 = vpack.c.b16 %v10962, %v10950
    %v11623 = vpack.c.b16 %v10963, %v10951
    %v11624 = vpack.c.b16 %v10964, %v10952
    %v11625 = vpack.c.b16 %v10977, %v10965
    %v11626 = vpack.c.b16 %v10978, %v10966
    %v11627 = vpack.c.b16 %v10979, %v10967
    %v11628 = vpack.c.b16 %v10980, %v10968
    %v11629 = vpack.c.b16 %v10981, %v10969
    %v11630 = vpack.c.b16 %v10982, %v10970
    %v11631 = vpack.c.b16 %v10983, %v10971
    %v11632 = vpack.c.b16 %v10984, %v10972
    %v11633 = vpack.c.b16 %v10985, %v10973
    %v11634 = vpack.c.b16 %v10986, %v10974
    %v11635 = vpack.c.b16 %v10987, %v10975
    %v11636 = vpack.c.b16 %v10988, %v10976
    %v11637 = vpack.c.b16 %v11001, %v10989
    %v11638 = vpack.c.b16 %v11002, %v10990
    %v11639 = vpack.c.b16 %v11003, %v10991
    %v11640 = vpack.c.b16 %v11004, %v10992
    %v11641 = vpack.c.b16 %v11005, %v10993
    %v11642 = vpack.c.b16 %v11006, %v10994
    %v11643 = vpack.c.b16 %v11007, %v10995
    %v11644 = vpack.c.b16 %v11008, %v10996
    %v11645 = vpack.c.b16 %v11009, %v10997
    %v11646 = vpack.c.b16 %v11010, %v10998
    %v11647 = vpack.c.b16 %v11011, %v10999
    %v11648 = vpack.c.b16 %v11012, %v11000
    %v11649 = vpack.c.b16 %v11025, %v11013
    %v11650 = vpack.c.b16 %v11026, %v11014
    %v11651 = vpack.c.b16 %v11027, %v11015
    %v11652 = vpack.c.b16 %v11028, %v11016
    %v11653 = vpack.c.b16 %v11029, %v11017
    %v11654 = vpack.c.b16 %v11030, %v11018
    %v11655 = vpack.c.b16 %v11031, %v11019
    %v11656 = vpack.c.b16 %v11032, %v11020
    %v11657 = vpack.c.b16 %v11033, %v11021
    %v11658 = vpack.c.b16 %v11034, %v11022
    %v11659 = vpack.c.b16 %v11035, %v11023
    %v11660 = vpack.c.b16 %v11036, %v11024
    %v11661 = vpack.c.b16 %v11049, %v11037
    %v11662 = vpack.c.b16 %v11050, %v11038
    %v11663 = vpack.c.b16 %v11051, %v11039
    %v11664 = vpack.c.b16 %v11052, %v11040
    %v11665 = vpack.c.b16 %v11053, %v11041
    %v11666 = vpack.c.b16 %v11054, %v11042
    %v11667 = vpack.c.b16 %v11055, %v11043
    %v11668 = vpack.c.b16 %v11056, %v11044
    %v11669 = vpack.c.b16 %v11057, %v11045
    %v11670 = vpack.c.b16 %v11058, %v11046
    %v11671 = vpack.c.b16 %v11059, %v11047
    %v11672 = vpack.c.b16 %v11060, %v11048
    %v11673 = vpack.c.b16 %v11073, %v11061
    %v11674 = vpack.c.b16 %v11074, %v11062
    %v11675 = vpack.c.b16 %v11075, %v11063
    %v11676 = vpack.c.b16 %v11076, %v11064
    %v11677 = vpack.c.b16 %v11077, %v11065
    %v11678 = vpack.c.b16 %v11078, %v11066
    %v11679 = vpack.c.b16 %v11079, %v11067
    %v11680 = vpack.c.b16 %v11080, %v11068
    %v11681 = vpack.c.b16 %v11081, %v11069
    %v11682 = vpack.c.b16 %v11082, %v11070
    %v11683 = vpack.c.b16 %v11083, %v11071
    %v11684 = vpack.c.b16 %v11084, %v11072
    %v11685 = vpack.c.b16 %v11097, %v11085
    %v11686 = vpack.c.b16 %v11098, %v11086
    %v11687 = vpack.c.b16 %v11099, %v11087
    %v11688 = vpack.c.b16 %v11100, %v11088
    %v11689 = vpack.c.b16 %v11101, %v11089
    %v11690 = vpack.c.b16 %v11102, %v11090
    %v11691 = vpack.c.b16 %v11103, %v11091
    %v11692 = vpack.c.b16 %v11104, %v11092
    %v11693 = vpack.c.b16 %v11105, %v11093
    %v11694 = vpack.c.b16 %v11106, %v11094
    %v11695 = vpack.c.b16 %v11107, %v11095
    %v11696 = vpack.c.b16 %v11108, %v11096
    %v11697 = vpack.c.b16 %v11121, %v11109
    %v11698 = vpack.c.b16 %v11122, %v11110
    %v11699 = vpack.c.b16 %v11123, %v11111
    %v11700 = vpack.c.b16 %v11124, %v11112
    %v11701 = vpack.c.b16 %v11125, %v11113
    %v11702 = vpack.c.b16 %v11126, %v11114
    %v11703 = vpack.c.b16 %v11127, %v11115
    %v11704 = vpack.c.b16 %v11128, %v11116
    %v11705 = vpack.c.b16 %v11129, %v11117
    %v11706 = vpack.c.b16 %v11130, %v11118
    %v11707 = vpack.c.b16 %v11131, %v11119
    %v11708 = vpack.c.b16 %v11132, %v11120
    %12285 = vmatprep.subr.bf16.mxu0 %v11134
    %12286 = vmatpush1.bf16.msra.mxu0 %v11133
    %12287 = vmatprep.subr.bf16.mxu0 %v11146
    %12288 = vmatpush1.bf16.msra.mxu0 %v11145
    %12289 = vmatprep.subr.bf16.mxu0 %v11158
    %12290 = vmatpush1.bf16.msra.mxu0 %v11157
    %12291 = vmatprep.subr.bf16.mxu0 %v11170
    %12292 = vmatpush1.bf16.msra.mxu0 %v11169
    %12293 = vmatprep.subr.bf16.mxu0 %v11182
    %12294 = vmatpush1.bf16.msra.mxu0 %v11181
    %12295 = vmatprep.subr.bf16.mxu0 %v11194
    %12296 = vmatpush1.bf16.msra.mxu0 %v11193
    %12297 = vmatprep.subr.bf16.mxu0 %v11206
    %12298 = vmatpush1.bf16.msra.mxu0 %v11205
    %12299 = vmatprep.subr.bf16.mxu0 %v11218
    %12300 = vmatpush1.bf16.msra.mxu0 %v11217
    %12301 = vmatprep.subr.bf16.mxu0 %v11230
    %12302 = vmatpush1.bf16.msra.mxu0 %v11229
    %12303 = vmatprep.subr.bf16.mxu0 %v11242
    %12304 = vmatpush1.bf16.msra.mxu0 %v11241
    %12305 = vmatprep.subr.bf16.mxu0 %v11254
    %12306 = vmatpush1.bf16.msra.mxu0 %v11253
    %12307 = vmatprep.subr.bf16.mxu0 %v11266
    %12308 = vmatpush1.bf16.msra.mxu0 %v11265
    %12309 = vmatprep.subr.bf16.mxu0 %v11278
    %12310 = vmatpush1.bf16.msra.mxu0 %v11277
    %12311 = vmatprep.subr.bf16.mxu0 %v11290
    %12312 = vmatpush1.bf16.msra.mxu0 %v11289
    %12313 = vmatprep.subr.bf16.mxu0 %v11302
    %12314 = vmatpush1.bf16.msra.mxu0 %v11301
    %12315 = vmatprep.subr.bf16.mxu0 %v11314
    %12316 = vmatpush1.bf16.msra.mxu0 %v11313
    %12317 = vmatprep.mubr.bf16.mxu0 %v8824
    %12318 = vmatmul.mubr.bf16.gmra.mrb[0].mxu0 %v8823
    %v12319 = vpop.f32.mrb[0].mxu0
    %v12320 = vadd.f32 0.0, %v12319
    %v12321 = vpop.f32.mrb[0].mxu0
    %v12322 = vadd.f32 0.0, %v12321
    %v12323 = vpop.f32.mrb[0].mxu0
    %v12324 = vpop.f32.mrb[0].mxu0
    %12325 = vdwg.mxu0
    %12326 = vmatprep.subr.bf16.mxu0 %v11326
    %12327 = vmatpush1.bf16.msra.mxu0 %v11325
    %12328 = vmatprep.subr.bf16.mxu0 %v11338
    %12329 = vmatpush1.bf16.msra.mxu0 %v11337
    %12330 = vmatprep.subr.bf16.mxu0 %v11350
    %12331 = vmatpush1.bf16.msra.mxu0 %v11349
    %12332 = vmatprep.subr.bf16.mxu0 %v11362
    %12333 = vmatpush1.bf16.msra.mxu0 %v11361
    %12334 = vmatprep.subr.bf16.mxu0 %v11374
    %12335 = vmatpush1.bf16.msra.mxu0 %v11373
    %12336 = vmatprep.subr.bf16.mxu0 %v11386
    %12337 = vmatpush1.bf16.msra.mxu0 %v11385
    %12338 = vmatprep.subr.bf16.mxu0 %v11398
    %12339 = vmatpush1.bf16.msra.mxu0 %v11397
    %12340 = vmatprep.subr.bf16.mxu0 %v11410
    %12341 = vmatpush1.bf16.msra.mxu0 %v11409
    %12342 = vmatprep.subr.bf16.mxu0 %v11422
    %12343 = vmatpush1.bf16.msra.mxu0 %v11421
    %12344 = vmatprep.subr.bf16.mxu0 %v11434
    %12345 = vmatpush1.bf16.msra.mxu0 %v11433
    %12346 = vmatprep.subr.bf16.mxu0 %v11446
    %12347 = vmatpush1.bf16.msra.mxu0 %v11445
    %12348 = vmatprep.subr.bf16.mxu0 %v11458
    %12349 = vmatpush1.bf16.msra.mxu0 %v11457
    %12350 = vmatprep.subr.bf16.mxu0 %v11470
    %12351 = vmatpush1.bf16.msra.mxu0 %v11469
    %12352 = vmatprep.subr.bf16.mxu0 %v11482
    %12353 = vmatpush1.bf16.msra.mxu0 %v11481
    %12354 = vmatprep.subr.bf16.mxu0 %v11494
    %12355 = vmatpush1.bf16.msra.mxu0 %v11493
    %12356 = vmatprep.subr.bf16.mxu0 %v11506
    %12357 = vmatpush1.bf16.msra.mxu0 %v11505
    %12358 = vmatprep.mubr.bf16.mxu0 %v8826
    %12359 = vmatmul.mubr.bf16.gmra.mrb[0].mxu0 %v8825
    %v12360 = vpop.f32.mrb[0].mxu0
    %v12361 = vadd.f32 %v12320, %v12360
    %v12362 = vpop.f32.mrb[0].mxu0
    %v12363 = vadd.f32 %v12322, %v12362
    %v12364 = vpop.f32.mrb[0].mxu0
    %v12365 = vpop.f32.mrb[0].mxu0
    %12366 = vdwg.mxu0
    %12367 = vmatprep.subr.bf16.mxu0 %v11518
    %12368 = vmatpush1.bf16.msra.mxu0 %v11517
    %12369 = vmatprep.subr.bf16.mxu0 %v11530
    %12370 = vmatpush1.bf16.msra.mxu0 %v11529
    %12371 = vmatprep.subr.bf16.mxu0 %v11542
    %12372 = vmatpush1.bf16.msra.mxu0 %v11541
    %12373 = vmatprep.subr.bf16.mxu0 %v11554
    %12374 = vmatpush1.bf16.msra.mxu0 %v11553
    %12375 = vmatprep.subr.bf16.mxu0 %v11566
    %12376 = vmatpush1.bf16.msra.mxu0 %v11565
    %12377 = vmatprep.subr.bf16.mxu0 %v11578
    %12378 = vmatpush1.bf16.msra.mxu0 %v11577
    %12379 = vmatprep.subr.bf16.mxu0 %v11590
    %12380 = vmatpush1.bf16.msra.mxu0 %v11589
    %12381 = vmatprep.subr.bf16.mxu0 %v11602
    %12382 = vmatpush1.bf16.msra.mxu0 %v11601
    %12383 = vmatprep.subr.bf16.mxu0 %v11614
    %12384 = vmatpush1.bf16.msra.mxu0 %v11613
    %12385 = vmatprep.subr.bf16.mxu0 %v11626
    %12386 = vmatpush1.bf16.msra.mxu0 %v11625
    %12387 = vmatprep.subr.bf16.mxu0 %v11638
    %12388 = vmatpush1.bf16.msra.mxu0 %v11637
    %12389 = vmatprep.subr.bf16.mxu0 %v11650
    %12390 = vmatpush1.bf16.msra.mxu0 %v11649
    %12391 = vmatprep.subr.bf16.mxu0 %v11662
    %12392 = vmatpush1.bf16.msra.mxu0 %v11661
    %12393 = vmatprep.subr.bf16.mxu0 %v11674
    %12394 = vmatpush1.bf16.msra.mxu0 %v11673
    %12395 = vmatprep.subr.bf16.mxu0 %v11686
    %12396 = vmatpush1.bf16.msra.mxu0 %v11685
    %12397 = vmatprep.subr.bf16.mxu0 %v11698
    %12398 = vmatpush1.bf16.msra.mxu0 %v11697
    %12399 = vmatprep.mubr.bf16.mxu0 %v8828
    %12400 = vmatmul.mubr.bf16.gmra.mrb[0].mxu0 %v8827
    %v12401 = vpop.f32.mrb[0].mxu0
    %v12402 = vadd.f32 %v12361, %v12401
    %v12403 = vpop.f32.mrb[0].mxu0
    %v12404 = vadd.f32 %v12363, %v12403
    %v12405 = vpop.f32.mrb[0].mxu0
    %v12406 = vpop.f32.mrb[0].mxu0
    %12407 = vdwg.mxu0
    %12408 = vmatprep.subr.bf16.mxu0 %v11136
    %12409 = vmatpush1.bf16.msra.mxu0 %v11135
    %12410 = vmatprep.subr.bf16.mxu0 %v11148
    %12411 = vmatpush1.bf16.msra.mxu0 %v11147
    %12412 = vmatprep.subr.bf16.mxu0 %v11160
    %12413 = vmatpush1.bf16.msra.mxu0 %v11159
    %12414 = vmatprep.subr.bf16.mxu0 %v11172
    %12415 = vmatpush1.bf16.msra.mxu0 %v11171
    %12416 = vmatprep.subr.bf16.mxu0 %v11184
    %12417 = vmatpush1.bf16.msra.mxu0 %v11183
    %12418 = vmatprep.subr.bf16.mxu0 %v11196
    %12419 = vmatpush1.bf16.msra.mxu0 %v11195
    %12420 = vmatprep.subr.bf16.mxu0 %v11208
    %12421 = vmatpush1.bf16.msra.mxu0 %v11207
    %12422 = vmatprep.subr.bf16.mxu0 %v11220
    %12423 = vmatpush1.bf16.msra.mxu0 %v11219
    %12424 = vmatprep.subr.bf16.mxu0 %v11232
    %12425 = vmatpush1.bf16.msra.mxu0 %v11231
    %12426 = vmatprep.subr.bf16.mxu0 %v11244
    %12427 = vmatpush1.bf16.msra.mxu0 %v11243
    %12428 = vmatprep.subr.bf16.mxu0 %v11256
    %12429 = vmatpush1.bf16.msra.mxu0 %v11255
    %12430 = vmatprep.subr.bf16.mxu0 %v11268
    %12431 = vmatpush1.bf16.msra.mxu0 %v11267
    %12432 = vmatprep.subr.bf16.mxu0 %v11280
    %12433 = vmatpush1.bf16.msra.mxu0 %v11279
    %12434 = vmatprep.subr.bf16.mxu0 %v11292
    %12435 = vmatpush1.bf16.msra.mxu0 %v11291
    %12436 = vmatprep.subr.bf16.mxu0 %v11304
    %12437 = vmatpush1.bf16.msra.mxu0 %v11303
    %12438 = vmatprep.subr.bf16.mxu0 %v11316
    %12439 = vmatpush1.bf16.msra.mxu0 %v11315
    %12440 = vmatprep.mubr.bf16.mxu0 %v8824
    %12441 = vmatmul.mubr.bf16.gmra.mrb[0].mxu0 %v8823
    %v12442 = vpop.f32.mrb[0].mxu0
    %v12443 = vadd.f32 0.0, %v12442
    %v12444 = vpop.f32.mrb[0].mxu0
    %v12445 = vadd.f32 0.0, %v12444
    %v12446 = vpop.f32.mrb[0].mxu0
    %v12447 = vpop.f32.mrb[0].mxu0
    %12448 = vdwg.mxu0
    %12449 = vmatprep.subr.bf16.mxu0 %v11328
    %12450 = vmatpush1.bf16.msra.mxu0 %v11327
    %12451 = vmatprep.subr.bf16.mxu0 %v11340
    %12452 = vmatpush1.bf16.msra.mxu0 %v11339
    %12453 = vmatprep.subr.bf16.mxu0 %v11352
    %12454 = vmatpush1.bf16.msra.mxu0 %v11351
    %12455 = vmatprep.subr.bf16.mxu0 %v11364
    %12456 = vmatpush1.bf16.msra.mxu0 %v11363
    %12457 = vmatprep.subr.bf16.mxu0 %v11376
    %12458 = vmatpush1.bf16.msra.mxu0 %v11375
    %12459 = vmatprep.subr.bf16.mxu0 %v11388
    %12460 = vmatpush1.bf16.msra.mxu0 %v11387
    %12461 = vmatprep.subr.bf16.mxu0 %v11400
    %12462 = vmatpush1.bf16.msra.mxu0 %v11399
    %12463 = vmatprep.subr.bf16.mxu0 %v11412
    %12464 = vmatpush1.bf16.msra.mxu0 %v11411
    %12465 = vmatprep.subr.bf16.mxu0 %v11424
    %12466 = vmatpush1.bf16.msra.mxu0 %v11423
    %12467 = vmatprep.subr.bf16.mxu0 %v11436
    %12468 = vmatpush1.bf16.msra.mxu0 %v11435
    %12469 = vmatprep.subr.bf16.mxu0 %v11448
    %12470 = vmatpush1.bf16.msra.mxu0 %v11447
    %12471 = vmatprep.subr.bf16.mxu0 %v11460
    %12472 = vmatpush1.bf16.msra.mxu0 %v11459
    %12473 = vmatprep.subr.bf16.mxu0 %v11472
    %12474 = vmatpush1.bf16.msra.mxu0 %v11471
    %12475 = vmatprep.subr.bf16.mxu0 %v11484
    %12476 = vmatpush1.bf16.msra.mxu0 %v11483
    %12477 = vmatprep.subr.bf16.mxu0 %v11496
    %12478 = vmatpush1.bf16.msra.mxu0 %v11495
    %12479 = vmatprep.subr.bf16.mxu0 %v11508
    %12480 = vmatpush1.bf16.msra.mxu0 %v11507
    %12481 = vmatprep.mubr.bf16.mxu0 %v8826
    %12482 = vmatmul.mubr.bf16.gmra.mrb[0].mxu0 %v8825
    %v12483 = vpop.f32.mrb[0].mxu0
    %v12484 = vadd.f32 %v12443, %v12483
    %v12485 = vpop.f32.mrb[0].mxu0
    %v12486 = vadd.f32 %v12445, %v12485
    %v12487 = vpop.f32.mrb[0].mxu0
    %v12488 = vpop.f32.mrb[0].mxu0
    %12489 = vdwg.mxu0
    %12490 = vmatprep.subr.bf16.mxu0 %v11520
    %12491 = vmatpush1.bf16.msra.mxu0 %v11519
    %12492 = vmatprep.subr.bf16.mxu0 %v11532
    %12493 = vmatpush1.bf16.msra.mxu0 %v11531
    %12494 = vmatprep.subr.bf16.mxu0 %v11544
    %12495 = vmatpush1.bf16.msra.mxu0 %v11543
    %12496 = vmatprep.subr.bf16.mxu0 %v11556
    %12497 = vmatpush1.bf16.msra.mxu0 %v11555
    %12498 = vmatprep.subr.bf16.mxu0 %v11568
    %12499 = vmatpush1.bf16.msra.mxu0 %v11567
    %12500 = vmatprep.subr.bf16.mxu0 %v11580
    %12501 = vmatpush1.bf16.msra.mxu0 %v11579
    %12502 = vmatprep.subr.bf16.mxu0 %v11592
    %12503 = vmatpush1.bf16.msra.mxu0 %v11591
    %12504 = vmatprep.subr.bf16.mxu0 %v11604
    %12505 = vmatpush1.bf16.msra.mxu0 %v11603
    %12506 = vmatprep.subr.bf16.mxu0 %v11616
    %12507 = vmatpush1.bf16.msra.mxu0 %v11615
    %12508 = vmatprep.subr.bf16.mxu0 %v11628
    %12509 = vmatpush1.bf16.msra.mxu0 %v11627
    %12510 = vmatprep.subr.bf16.mxu0 %v11640
    %12511 = vmatpush1.bf16.msra.mxu0 %v11639
    %12512 = vmatprep.subr.bf16.mxu0 %v11652
    %12513 = vmatpush1.bf16.msra.mxu0 %v11651
    %12514 = vmatprep.subr.bf16.mxu0 %v11664
    %12515 = vmatpush1.bf16.msra.mxu0 %v11663
    %12516 = vmatprep.subr.bf16.mxu0 %v11676
    %12517 = vmatpush1.bf16.msra.mxu0 %v11675
    %12518 = vmatprep.subr.bf16.mxu0 %v11688
    %12519 = vmatpush1.bf16.msra.mxu0 %v11687
    %12520 = vmatprep.subr.bf16.mxu0 %v11700
    %12521 = vmatpush1.bf16.msra.mxu0 %v11699
    %12522 = vmatprep.mubr.bf16.mxu0 %v8828
    %12523 = vmatmul.mubr.bf16.gmra.mrb[0].mxu0 %v8827
    %v12524 = vpop.f32.mrb[0].mxu0
    %v12525 = vadd.f32 %v12484, %v12524
    %v12526 = vpop.f32.mrb[0].mxu0
    %v12527 = vadd.f32 %v12486, %v12526
    %v12528 = vpop.f32.mrb[0].mxu0
    %v12529 = vpop.f32.mrb[0].mxu0
    %12530 = vdwg.mxu0
    %12531 = vmatprep.subr.bf16.mxu0 %v11138
    %12532 = vmatpush1.bf16.msra.mxu0 %v11137
    %12533 = vmatprep.subr.bf16.mxu0 %v11150
    %12534 = vmatpush1.bf16.msra.mxu0 %v11149
    %12535 = vmatprep.subr.bf16.mxu0 %v11162
    %12536 = vmatpush1.bf16.msra.mxu0 %v11161
    %12537 = vmatprep.subr.bf16.mxu0 %v11174
    %12538 = vmatpush1.bf16.msra.mxu0 %v11173
    %12539 = vmatprep.subr.bf16.mxu0 %v11186
    %12540 = vmatpush1.bf16.msra.mxu0 %v11185
    %12541 = vmatprep.subr.bf16.mxu0 %v11198
    %12542 = vmatpush1.bf16.msra.mxu0 %v11197
    %12543 = vmatprep.subr.bf16.mxu0 %v11210
    %12544 = vmatpush1.bf16.msra.mxu0 %v11209
    %12545 = vmatprep.subr.bf16.mxu0 %v11222
    %12546 = vmatpush1.bf16.msra.mxu0 %v11221
    %12547 = vmatprep.subr.bf16.mxu0 %v11234
    %12548 = vmatpush1.bf16.msra.mxu0 %v11233
    %12549 = vmatprep.subr.bf16.mxu0 %v11246
    %12550 = vmatpush1.bf16.msra.mxu0 %v11245
    %12551 = vmatprep.subr.bf16.mxu0 %v11258
    %12552 = vmatpush1.bf16.msra.mxu0 %v11257
    %12553 = vmatprep.subr.bf16.mxu0 %v11270
    %12554 = vmatpush1.bf16.msra.mxu0 %v11269
    %12555 = vmatprep.subr.bf16.mxu0 %v11282
    %12556 = vmatpush1.bf16.msra.mxu0 %v11281
    %12557 = vmatprep.subr.bf16.mxu0 %v11294
    %12558 = vmatpush1.bf16.msra.mxu0 %v11293
    %12559 = vmatprep.subr.bf16.mxu0 %v11306
    %12560 = vmatpush1.bf16.msra.mxu0 %v11305
    %12561 = vmatprep.subr.bf16.mxu0 %v11318
    %12562 = vmatpush1.bf16.msra.mxu0 %v11317
    %12563 = vmatprep.mubr.bf16.mxu0 %v8824
    %12564 = vmatmul.mubr.bf16.gmra.mrb[0].mxu0 %v8823
    %v12565 = vpop.f32.mrb[0].mxu0
    %v12566 = vadd.f32 0.0, %v12565
    %v12567 = vpop.f32.mrb[0].mxu0
    %v12568 = vadd.f32 0.0, %v12567
    %v12569 = vpop.f32.mrb[0].mxu0
    %v12570 = vpop.f32.mrb[0].mxu0
    %12571 = vdwg.mxu0
    %12572 = vmatprep.subr.bf16.mxu0 %v11330
    %12573 = vmatpush1.bf16.msra.mxu0 %v11329
    %12574 = vmatprep.subr.bf16.mxu0 %v11342
    %12575 = vmatpush1.bf16.msra.mxu0 %v11341
    %12576 = vmatprep.subr.bf16.mxu0 %v11354
    %12577 = vmatpush1.bf16.msra.mxu0 %v11353
    %12578 = vmatprep.subr.bf16.mxu0 %v11366
    %12579 = vmatpush1.bf16.msra.mxu0 %v11365
    %12580 = vmatprep.subr.bf16.mxu0 %v11378
    %12581 = vmatpush1.bf16.msra.mxu0 %v11377
    %12582 = vmatprep.subr.bf16.mxu0 %v11390
    %12583 = vmatpush1.bf16.msra.mxu0 %v11389
    %12584 = vmatprep.subr.bf16.mxu0 %v11402
    %12585 = vmatpush1.bf16.msra.mxu0 %v11401
    %12586 = vmatprep.subr.bf16.mxu0 %v11414
    %12587 = vmatpush1.bf16.msra.mxu0 %v11413
    %12588 = vmatprep.subr.bf16.mxu0 %v11426
    %12589 = vmatpush1.bf16.msra.mxu0 %v11425
    %12590 = vmatprep.subr.bf16.mxu0 %v11438
    %12591 = vmatpush1.bf16.msra.mxu0 %v11437
    %12592 = vmatprep.subr.bf16.mxu0 %v11450
    %12593 = vmatpush1.bf16.msra.mxu0 %v11449
    %12594 = vmatprep.subr.bf16.mxu0 %v11462
    %12595 = vmatpush1.bf16.msra.mxu0 %v11461
    %12596 = vmatprep.subr.bf16.mxu0 %v11474
    %12597 = vmatpush1.bf16.msra.mxu0 %v11473
    %12598 = vmatprep.subr.bf16.mxu0 %v11486
    %12599 = vmatpush1.bf16.msra.mxu0 %v11485
    %12600 = vmatprep.subr.bf16.mxu0 %v11498
    %12601 = vmatpush1.bf16.msra.mxu0 %v11497
    %12602 = vmatprep.subr.bf16.mxu0 %v11510
    %12603 = vmatpush1.bf16.msra.mxu0 %v11509
    %12604 = vmatprep.mubr.bf16.mxu0 %v8826
    %12605 = vmatmul.mubr.bf16.gmra.mrb[0].mxu0 %v8825
    %v12606 = vpop.f32.mrb[0].mxu0
    %v12607 = vadd.f32 %v12566, %v12606
    %v12608 = vpop.f32.mrb[0].mxu0
    %v12609 = vadd.f32 %v12568, %v12608
    %v12610 = vpop.f32.mrb[0].mxu0
    %v12611 = vpop.f32.mrb[0].mxu0
    %12612 = vdwg.mxu0
    %12613 = vmatprep.subr.bf16.mxu0 %v11522
    %12614 = vmatpush1.bf16.msra.mxu0 %v11521
    %12615 = vmatprep.subr.bf16.mxu0 %v11534
    %12616 = vmatpush1.bf16.msra.mxu0 %v11533
    %12617 = vmatprep.subr.bf16.mxu0 %v11546
    %12618 = vmatpush1.bf16.msra.mxu0 %v11545
    %12619 = vmatprep.subr.bf16.mxu0 %v11558
    %12620 = vmatpush1.bf16.msra.mxu0 %v11557
    %12621 = vmatprep.subr.bf16.mxu0 %v11570
    %12622 = vmatpush1.bf16.msra.mxu0 %v11569
    %12623 = vmatprep.subr.bf16.mxu0 %v11582
    %12624 = vmatpush1.bf16.msra.mxu0 %v11581
    %12625 = vmatprep.subr.bf16.mxu0 %v11594
    %12626 = vmatpush1.bf16.msra.mxu0 %v11593
    %12627 = vmatprep.subr.bf16.mxu0 %v11606
    %12628 = vmatpush1.bf16.msra.mxu0 %v11605
    %12629 = vmatprep.subr.bf16.mxu0 %v11618
    %12630 = vmatpush1.bf16.msra.mxu0 %v11617
    %12631 = vmatprep.subr.bf16.mxu0 %v11630
    %12632 = vmatpush1.bf16.msra.mxu0 %v11629
    %12633 = vmatprep.subr.bf16.mxu0 %v11642
    %12634 = vmatpush1.bf16.msra.mxu0 %v11641
    %12635 = vmatprep.subr.bf16.mxu0 %v11654
    %12636 = vmatpush1.bf16.msra.mxu0 %v11653
    %12637 = vmatprep.subr.bf16.mxu0 %v11666
    %12638 = vmatpush1.bf16.msra.mxu0 %v11665
    %12639 = vmatprep.subr.bf16.mxu0 %v11678
    %12640 = vmatpush1.bf16.msra.mxu0 %v11677
    %12641 = vmatprep.subr.bf16.mxu0 %v11690
    %12642 = vmatpush1.bf16.msra.mxu0 %v11689
    %12643 = vmatprep.subr.bf16.mxu0 %v11702
    %12644 = vmatpush1.bf16.msra.mxu0 %v11701
    %12645 = vmatprep.mubr.bf16.mxu0 %v8828
    %12646 = vmatmul.mubr.bf16.gmra.mrb[0].mxu0 %v8827
    %v12647 = vpop.f32.mrb[0].mxu0
    %v12648 = vadd.f32 %v12607, %v12647
    %v12649 = vpop.f32.mrb[0].mxu0
    %v12650 = vadd.f32 %v12609, %v12649
    %v12651 = vpop.f32.mrb[0].mxu0
    %v12652 = vpop.f32.mrb[0].mxu0
    %12653 = vdwg.mxu0
    %12654 = vmatprep.subr.bf16.mxu0 %v11140
    %12655 = vmatpush1.bf16.msra.mxu0 %v11139
    %12656 = vmatprep.subr.bf16.mxu0 %v11152
    %12657 = vmatpush1.bf16.msra.mxu0 %v11151
    %12658 = vmatprep.subr.bf16.mxu0 %v11164
    %12659 = vmatpush1.bf16.msra.mxu0 %v11163
    %12660 = vmatprep.subr.bf16.mxu0 %v11176
    %12661 = vmatpush1.bf16.msra.mxu0 %v11175
    %12662 = vmatprep.subr.bf16.mxu0 %v11188
    %12663 = vmatpush1.bf16.msra.mxu0 %v11187
    %12664 = vmatprep.subr.bf16.mxu0 %v11200
    %12665 = vmatpush1.bf16.msra.mxu0 %v11199
    %12666 = vmatprep.subr.bf16.mxu0 %v11212
    %12667 = vmatpush1.bf16.msra.mxu0 %v11211
    %12668 = vmatprep.subr.bf16.mxu0 %v11224
    %12669 = vmatpush1.bf16.msra.mxu0 %v11223
    %12670 = vmatprep.subr.bf16.mxu0 %v11236
    %12671 = vmatpush1.bf16.msra.mxu0 %v11235
    %12672 = vmatprep.subr.bf16.mxu0 %v11248
    %12673 = vmatpush1.bf16.msra.mxu0 %v11247
    %12674 = vmatprep.subr.bf16.mxu0 %v11260
    %12675 = vmatpush1.bf16.msra.mxu0 %v11259
    %12676 = vmatprep.subr.bf16.mxu0 %v11272
    %12677 = vmatpush1.bf16.msra.mxu0 %v11271
    %12678 = vmatprep.subr.bf16.mxu0 %v11284
    %12679 = vmatpush1.bf16.msra.mxu0 %v11283
    %12680 = vmatprep.subr.bf16.mxu0 %v11296
    %12681 = vmatpush1.bf16.msra.mxu0 %v11295
    %12682 = vmatprep.subr.bf16.mxu0 %v11308
    %12683 = vmatpush1.bf16.msra.mxu0 %v11307
    %12684 = vmatprep.subr.bf16.mxu0 %v11320
    %12685 = vmatpush1.bf16.msra.mxu0 %v11319
    %12686 = vmatprep.mubr.bf16.mxu0 %v8824
    %12687 = vmatmul.mubr.bf16.gmra.mrb[0].mxu0 %v8823
    %v12688 = vpop.f32.mrb[0].mxu0
    %v12689 = vadd.f32 0.0, %v12688
    %v12690 = vpop.f32.mrb[0].mxu0
    %v12691 = vadd.f32 0.0, %v12690
    %v12692 = vpop.f32.mrb[0].mxu0
    %v12693 = vpop.f32.mrb[0].mxu0
    %12694 = vdwg.mxu0
    %12695 = vmatprep.subr.bf16.mxu0 %v11332
    %12696 = vmatpush1.bf16.msra.mxu0 %v11331
    %12697 = vmatprep.subr.bf16.mxu0 %v11344
    %12698 = vmatpush1.bf16.msra.mxu0 %v11343
    %12699 = vmatprep.subr.bf16.mxu0 %v11356
    %12700 = vmatpush1.bf16.msra.mxu0 %v11355
    %12701 = vmatprep.subr.bf16.mxu0 %v11368
    %12702 = vmatpush1.bf16.msra.mxu0 %v11367
    %12703 = vmatprep.subr.bf16.mxu0 %v11380
    %12704 = vmatpush1.bf16.msra.mxu0 %v11379
    %12705 = vmatprep.subr.bf16.mxu0 %v11392
    %12706 = vmatpush1.bf16.msra.mxu0 %v11391
    %12707 = vmatprep.subr.bf16.mxu0 %v11404
    %12708 = vmatpush1.bf16.msra.mxu0 %v11403
    %12709 = vmatprep.subr.bf16.mxu0 %v11416
    %12710 = vmatpush1.bf16.msra.mxu0 %v11415
    %12711 = vmatprep.subr.bf16.mxu0 %v11428
    %12712 = vmatpush1.bf16.msra.mxu0 %v11427
    %12713 = vmatprep.subr.bf16.mxu0 %v11440
    %12714 = vmatpush1.bf16.msra.mxu0 %v11439
    %12715 = vmatprep.subr.bf16.mxu0 %v11452
    %12716 = vmatpush1.bf16.msra.mxu0 %v11451
    %12717 = vmatprep.subr.bf16.mxu0 %v11464
    %12718 = vmatpush1.bf16.msra.mxu0 %v11463
    %12719 = vmatprep.subr.bf16.mxu0 %v11476
    %12720 = vmatpush1.bf16.msra.mxu0 %v11475
    %12721 = vmatprep.subr.bf16.mxu0 %v11488
    %12722 = vmatpush1.bf16.msra.mxu0 %v11487
    %12723 = vmatprep.subr.bf16.mxu0 %v11500
    %12724 = vmatpush1.bf16.msra.mxu0 %v11499
    %12725 = vmatprep.subr.bf16.mxu0 %v11512
    %12726 = vmatpush1.bf16.msra.mxu0 %v11511
    %12727 = vmatprep.mubr.bf16.mxu0 %v8826
    %12728 = vmatmul.mubr.bf16.gmra.mrb[0].mxu0 %v8825
    %v12729 = vpop.f32.mrb[0].mxu0
    %v12730 = vadd.f32 %v12689, %v12729
    %v12731 = vpop.f32.mrb[0].mxu0
    %v12732 = vadd.f32 %v12691, %v12731
    %v12733 = vpop.f32.mrb[0].mxu0
    %v12734 = vpop.f32.mrb[0].mxu0
    %12735 = vdwg.mxu0
    %12736 = vmatprep.subr.bf16.mxu0 %v11524
    %12737 = vmatpush1.bf16.msra.mxu0 %v11523
    %12738 = vmatprep.subr.bf16.mxu0 %v11536
    %12739 = vmatpush1.bf16.msra.mxu0 %v11535
    %12740 = vmatprep.subr.bf16.mxu0 %v11548
    %12741 = vmatpush1.bf16.msra.mxu0 %v11547
    %12742 = vmatprep.subr.bf16.mxu0 %v11560
    %12743 = vmatpush1.bf16.msra.mxu0 %v11559
    %12744 = vmatprep.subr.bf16.mxu0 %v11572
    %12745 = vmatpush1.bf16.msra.mxu0 %v11571
    %12746 = vmatprep.subr.bf16.mxu0 %v11584
    %12747 = vmatpush1.bf16.msra.mxu0 %v11583
    %12748 = vmatprep.subr.bf16.mxu0 %v11596
    %12749 = vmatpush1.bf16.msra.mxu0 %v11595
    %12750 = vmatprep.subr.bf16.mxu0 %v11608
    %12751 = vmatpush1.bf16.msra.mxu0 %v11607
    %12752 = vmatprep.subr.bf16.mxu0 %v11620
    %12753 = vmatpush1.bf16.msra.mxu0 %v11619
    %12754 = vmatprep.subr.bf16.mxu0 %v11632
    %12755 = vmatpush1.bf16.msra.mxu0 %v11631
    %12756 = vmatprep.subr.bf16.mxu0 %v11644
    %12757 = vmatpush1.bf16.msra.mxu0 %v11643
    %12758 = vmatprep.subr.bf16.mxu0 %v11656
    %12759 = vmatpush1.bf16.msra.mxu0 %v11655
    %12760 = vmatprep.subr.bf16.mxu0 %v11668
    %12761 = vmatpush1.bf16.msra.mxu0 %v11667
    %12762 = vmatprep.subr.bf16.mxu0 %v11680
    %12763 = vmatpush1.bf16.msra.mxu0 %v11679
    %12764 = vmatprep.subr.bf16.mxu0 %v11692
    %12765 = vmatpush1.bf16.msra.mxu0 %v11691
    %12766 = vmatprep.subr.bf16.mxu0 %v11704
    %12767 = vmatpush1.bf16.msra.mxu0 %v11703
    %12768 = vmatprep.mubr.bf16.mxu0 %v8828
    %12769 = vmatmul.mubr.bf16.gmra.mrb[0].mxu0 %v8827
    %v12770 = vpop.f32.mrb[0].mxu0
    %v12771 = vadd.f32 %v12730, %v12770
    %v12772 = vpop.f32.mrb[0].mxu0
    %v12773 = vadd.f32 %v12732, %v12772
    %v12774 = vpop.f32.mrb[0].mxu0
    %v12775 = vpop.f32.mrb[0].mxu0
    %12776 = vdwg.mxu0
    %12777 = vmatprep.subr.bf16.mxu0 %v11142
    %12778 = vmatpush1.bf16.msra.mxu0 %v11141
    %12779 = vmatprep.subr.bf16.mxu0 %v11154
    %12780 = vmatpush1.bf16.msra.mxu0 %v11153
    %12781 = vmatprep.subr.bf16.mxu0 %v11166
    %12782 = vmatpush1.bf16.msra.mxu0 %v11165
    %12783 = vmatprep.subr.bf16.mxu0 %v11178
    %12784 = vmatpush1.bf16.msra.mxu0 %v11177
    %12785 = vmatprep.subr.bf16.mxu0 %v11190
    %12786 = vmatpush1.bf16.msra.mxu0 %v11189
    %12787 = vmatprep.subr.bf16.mxu0 %v11202
    %12788 = vmatpush1.bf16.msra.mxu0 %v11201
    %12789 = vmatprep.subr.bf16.mxu0 %v11214
    %12790 = vmatpush1.bf16.msra.mxu0 %v11213
    %12791 = vmatprep.subr.bf16.mxu0 %v11226
    %12792 = vmatpush1.bf16.msra.mxu0 %v11225
    %12793 = vmatprep.subr.bf16.mxu0 %v11238
    %12794 = vmatpush1.bf16.msra.mxu0 %v11237
    %12795 = vmatprep.subr.bf16.mxu0 %v11250
    %12796 = vmatpush1.bf16.msra.mxu0 %v11249
    %12797 = vmatprep.subr.bf16.mxu0 %v11262
    %12798 = vmatpush1.bf16.msra.mxu0 %v11261
    %12799 = vmatprep.subr.bf16.mxu0 %v11274
    %12800 = vmatpush1.bf16.msra.mxu0 %v11273
    %12801 = vmatprep.subr.bf16.mxu0 %v11286
    %12802 = vmatpush1.bf16.msra.mxu0 %v11285
    %12803 = vmatprep.subr.bf16.mxu0 %v11298
    %12804 = vmatpush1.bf16.msra.mxu0 %v11297
    %12805 = vmatprep.subr.bf16.mxu0 %v11310
    %12806 = vmatpush1.bf16.msra.mxu0 %v11309
    %12807 = vmatprep.subr.bf16.mxu0 %v11322
    %12808 = vmatpush1.bf16.msra.mxu0 %v11321
    %12809 = vmatprep.mubr.bf16.mxu0 %v8824
    %12810 = vmatmul.mubr.bf16.gmra.mrb[0].mxu0 %v8823
    %v12811 = vpop.f32.mrb[0].mxu0
    %v12812 = vadd.f32 0.0, %v12811
    %v12813 = vpop.f32.mrb[0].mxu0
    %v12814 = vadd.f32 0.0, %v12813
    %v12815 = vpop.f32.mrb[0].mxu0
    %v12816 = vpop.f32.mrb[0].mxu0
    %12817 = vdwg.mxu0
    %12818 = vmatprep.subr.bf16.mxu0 %v11334
    %12819 = vmatpush1.bf16.msra.mxu0 %v11333
    %12820 = vmatprep.subr.bf16.mxu0 %v11346
    %12821 = vmatpush1.bf16.msra.mxu0 %v11345
    %12822 = vmatprep.subr.bf16.mxu0 %v11358
    %12823 = vmatpush1.bf16.msra.mxu0 %v11357
    %12824 = vmatprep.subr.bf16.mxu0 %v11370
    %12825 = vmatpush1.bf16.msra.mxu0 %v11369
    %12826 = vmatprep.subr.bf16.mxu0 %v11382
    %12827 = vmatpush1.bf16.msra.mxu0 %v11381
    %12828 = vmatprep.subr.bf16.mxu0 %v11394
    %12829 = vmatpush1.bf16.msra.mxu0 %v11393
    %12830 = vmatprep.subr.bf16.mxu0 %v11406
    %12831 = vmatpush1.bf16.msra.mxu0 %v11405
    %12832 = vmatprep.subr.bf16.mxu0 %v11418
    %12833 = vmatpush1.bf16.msra.mxu0 %v11417
    %12834 = vmatprep.subr.bf16.mxu0 %v11430
    %12835 = vmatpush1.bf16.msra.mxu0 %v11429
    %12836 = vmatprep.subr.bf16.mxu0 %v11442
    %12837 = vmatpush1.bf16.msra.mxu0 %v11441
    %12838 = vmatprep.subr.bf16.mxu0 %v11454
    %12839 = vmatpush1.bf16.msra.mxu0 %v11453
    %12840 = vmatprep.subr.bf16.mxu0 %v11466
    %12841 = vmatpush1.bf16.msra.mxu0 %v11465
    %12842 = vmatprep.subr.bf16.mxu0 %v11478
    %12843 = vmatpush1.bf16.msra.mxu0 %v11477
    %12844 = vmatprep.subr.bf16.mxu0 %v11490
    %12845 = vmatpush1.bf16.msra.mxu0 %v11489
    %12846 = vmatprep.subr.bf16.mxu0 %v11502
    %12847 = vmatpush1.bf16.msra.mxu0 %v11501
    %12848 = vmatprep.subr.bf16.mxu0 %v11514
    %12849 = vmatpush1.bf16.msra.mxu0 %v11513
    %12850 = vmatprep.mubr.bf16.mxu0 %v8826
    %12851 = vmatmul.mubr.bf16.gmra.mrb[0].mxu0 %v8825
    %v12852 = vpop.f32.mrb[0].mxu0
    %v12853 = vadd.f32 %v12812, %v12852
    %v12854 = vpop.f32.mrb[0].mxu0
    %v12855 = vadd.f32 %v12814, %v12854
    %v12856 = vpop.f32.mrb[0].mxu0
    %v12857 = vpop.f32.mrb[0].mxu0
    %12858 = vdwg.mxu0
    %12859 = vmatprep.subr.bf16.mxu0 %v11526
    %12860 = vmatpush1.bf16.msra.mxu0 %v11525
    %12861 = vmatprep.subr.bf16.mxu0 %v11538
    %12862 = vmatpush1.bf16.msra.mxu0 %v11537
    %12863 = vmatprep.subr.bf16.mxu0 %v11550
    %12864 = vmatpush1.bf16.msra.mxu0 %v11549
    %12865 = vmatprep.subr.bf16.mxu0 %v11562
    %12866 = vmatpush1.bf16.msra.mxu0 %v11561
    %12867 = vmatprep.subr.bf16.mxu0 %v11574
    %12868 = vmatpush1.bf16.msra.mxu0 %v11573
    %12869 = vmatprep.subr.bf16.mxu0 %v11586
    %12870 = vmatpush1.bf16.msra.mxu0 %v11585
    %12871 = vmatprep.subr.bf16.mxu0 %v11598
    %12872 = vmatpush1.bf16.msra.mxu0 %v11597
    %12873 = vmatprep.subr.bf16.mxu0 %v11610
    %12874 = vmatpush1.bf16.msra.mxu0 %v11609
    %12875 = vmatprep.subr.bf16.mxu0 %v11622
    %12876 = vmatpush1.bf16.msra.mxu0 %v11621
    %12877 = vmatprep.subr.bf16.mxu0 %v11634
    %12878 = vmatpush1.bf16.msra.mxu0 %v11633
    %12879 = vmatprep.subr.bf16.mxu0 %v11646
    %12880 = vmatpush1.bf16.msra.mxu0 %v11645
    %12881 = vmatprep.subr.bf16.mxu0 %v11658
    %12882 = vmatpush1.bf16.msra.mxu0 %v11657
    %12883 = vmatprep.subr.bf16.mxu0 %v11670
    %12884 = vmatpush1.bf16.msra.mxu0 %v11669
    %12885 = vmatprep.subr.bf16.mxu0 %v11682
    %12886 = vmatpush1.bf16.msra.mxu0 %v11681
    %12887 = vmatprep.subr.bf16.mxu0 %v11694
    %12888 = vmatpush1.bf16.msra.mxu0 %v11693
    %12889 = vmatprep.subr.bf16.mxu0 %v11706
    %12890 = vmatpush1.bf16.msra.mxu0 %v11705
    %12891 = vmatprep.mubr.bf16.mxu0 %v8828
    %12892 = vmatmul.mubr.bf16.gmra.mrb[0].mxu0 %v8827
    %v12893 = vpop.f32.mrb[0].mxu0
    %v12894 = vadd.f32 %v12853, %v12893
    %v12895 = vpop.f32.mrb[0].mxu0
    %v12896 = vadd.f32 %v12855, %v12895
    %v12897 = vpop.f32.mrb[0].mxu0
    %v12898 = vpop.f32.mrb[0].mxu0
    %12899 = vdwg.mxu0
    %12900 = vmatprep.subr.bf16.mxu0 %v11144
    %12901 = vmatpush1.bf16.msra.mxu0 %v11143
    %12902 = vmatprep.subr.bf16.mxu0 %v11156
    %12903 = vmatpush1.bf16.msra.mxu0 %v11155
    %12904 = vmatprep.subr.bf16.mxu0 %v11168
    %12905 = vmatpush1.bf16.msra.mxu0 %v11167
    %12906 = vmatprep.subr.bf16.mxu0 %v11180
    %12907 = vmatpush1.bf16.msra.mxu0 %v11179
    %12908 = vmatprep.subr.bf16.mxu0 %v11192
    %12909 = vmatpush1.bf16.msra.mxu0 %v11191
    %12910 = vmatprep.subr.bf16.mxu0 %v11204
    %12911 = vmatpush1.bf16.msra.mxu0 %v11203
    %12912 = vmatprep.subr.bf16.mxu0 %v11216
    %12913 = vmatpush1.bf16.msra.mxu0 %v11215
    %12914 = vmatprep.subr.bf16.mxu0 %v11228
    %12915 = vmatpush1.bf16.msra.mxu0 %v11227
    %12916 = vmatprep.subr.bf16.mxu0 %v11240
    %12917 = vmatpush1.bf16.msra.mxu0 %v11239
    %12918 = vmatprep.subr.bf16.mxu0 %v11252
    %12919 = vmatpush1.bf16.msra.mxu0 %v11251
    %12920 = vmatprep.subr.bf16.mxu0 %v11264
    %12921 = vmatpush1.bf16.msra.mxu0 %v11263
    %12922 = vmatprep.subr.bf16.mxu0 %v11276
    %12923 = vmatpush1.bf16.msra.mxu0 %v11275
    %12924 = vmatprep.subr.bf16.mxu0 %v11288
    %12925 = vmatpush1.bf16.msra.mxu0 %v11287
    %12926 = vmatprep.subr.bf16.mxu0 %v11300
    %12927 = vmatpush1.bf16.msra.mxu0 %v11299
    %12928 = vmatprep.subr.bf16.mxu0 %v11312
    %12929 = vmatpush1.bf16.msra.mxu0 %v11311
    %12930 = vmatprep.subr.bf16.mxu0 %v11324
    %12931 = vmatpush1.bf16.msra.mxu0 %v11323
    %12932 = vmatprep.mubr.bf16.mxu0 %v8824
    %12933 = vmatmul.mubr.bf16.gmra.mrb[0].mxu0 %v8823
    %v12934 = vpop.f32.mrb[0].mxu0
    %v12935 = vadd.f32 0.0, %v12934
    %v12936 = vpop.f32.mrb[0].mxu0
    %v12937 = vadd.f32 0.0, %v12936
    %v12938 = vpop.f32.mrb[0].mxu0
    %v12939 = vpop.f32.mrb[0].mxu0
    %12940 = vdwg.mxu0
    %12941 = vmatprep.subr.bf16.mxu0 %v11336
    %12942 = vmatpush1.bf16.msra.mxu0 %v11335
    %12943 = vmatprep.subr.bf16.mxu0 %v11348
    %12944 = vmatpush1.bf16.msra.mxu0 %v11347
    %12945 = vmatprep.subr.bf16.mxu0 %v11360
    %12946 = vmatpush1.bf16.msra.mxu0 %v11359
    %12947 = vmatprep.subr.bf16.mxu0 %v11372
    %12948 = vmatpush1.bf16.msra.mxu0 %v11371
    %12949 = vmatprep.subr.bf16.mxu0 %v11384
    %12950 = vmatpush1.bf16.msra.mxu0 %v11383
    %12951 = vmatprep.subr.bf16.mxu0 %v11396
    %12952 = vmatpush1.bf16.msra.mxu0 %v11395
    %12953 = vmatprep.subr.bf16.mxu0 %v11408
    %12954 = vmatpush1.bf16.msra.mxu0 %v11407
    %12955 = vmatprep.subr.bf16.mxu0 %v11420
    %12956 = vmatpush1.bf16.msra.mxu0 %v11419
    %12957 = vmatprep.subr.bf16.mxu0 %v11432
    %12958 = vmatpush1.bf16.msra.mxu0 %v11431
    %12959 = vmatprep.subr.bf16.mxu0 %v11444
    %12960 = vmatpush1.bf16.msra.mxu0 %v11443
    %12961 = vmatprep.subr.bf16.mxu0 %v11456
    %12962 = vmatpush1.bf16.msra.mxu0 %v11455
    %12963 = vmatprep.subr.bf16.mxu0 %v11468
    %12964 = vmatpush1.bf16.msra.mxu0 %v11467
    %12965 = vmatprep.subr.bf16.mxu0 %v11480
    %12966 = vmatpush1.bf16.msra.mxu0 %v11479
    %12967 = vmatprep.subr.bf16.mxu0 %v11492
    %12968 = vmatpush1.bf16.msra.mxu0 %v11491
    %12969 = vmatprep.subr.bf16.mxu0 %v11504
    %12970 = vmatpush1.bf16.msra.mxu0 %v11503
    %12971 = vmatprep.subr.bf16.mxu0 %v11516
    %12972 = vmatpush1.bf16.msra.mxu0 %v11515
    %12973 = vmatprep.mubr.bf16.mxu0 %v8826
    %12974 = vmatmul.mubr.bf16.gmra.mrb[0].mxu0 %v8825
    %v12975 = vpop.f32.mrb[0].mxu0
    %v12976 = vadd.f32 %v12935, %v12975
    %v12977 = vpop.f32.mrb[0].mxu0
    %v12978 = vadd.f32 %v12937, %v12977
    %v12979 = vpop.f32.mrb[0].mxu0
    %v12980 = vpop.f32.mrb[0].mxu0
    %12981 = vdwg.mxu0
    %12982 = vmatprep.subr.bf16.mxu0 %v11528
    %12983 = vmatpush1.bf16.msra.mxu0 %v11527
    %12984 = vmatprep.subr.bf16.mxu0 %v11540
    %12985 = vmatpush1.bf16.msra.mxu0 %v11539
    %12986 = vmatprep.subr.bf16.mxu0 %v11552
    %12987 = vmatpush1.bf16.msra.mxu0 %v11551
    %12988 = vmatprep.subr.bf16.mxu0 %v11564
    %12989 = vmatpush1.bf16.msra.mxu0 %v11563
    %12990 = vmatprep.subr.bf16.mxu0 %v11576
    %12991 = vmatpush1.bf16.msra.mxu0 %v11575
    %12992 = vmatprep.subr.bf16.mxu0 %v11588
    %12993 = vmatpush1.bf16.msra.mxu0 %v11587
    %12994 = vmatprep.subr.bf16.mxu0 %v11600
    %12995 = vmatpush1.bf16.msra.mxu0 %v11599
    %12996 = vmatprep.subr.bf16.mxu0 %v11612
    %12997 = vmatpush1.bf16.msra.mxu0 %v11611
    %12998 = vmatprep.subr.bf16.mxu0 %v11624
    %12999 = vmatpush1.bf16.msra.mxu0 %v11623
    %13000 = vmatprep.subr.bf16.mxu0 %v11636
    %13001 = vmatpush1.bf16.msra.mxu0 %v11635
    %13002 = vmatprep.subr.bf16.mxu0 %v11648
    %13003 = vmatpush1.bf16.msra.mxu0 %v11647
    %13004 = vmatprep.subr.bf16.mxu0 %v11660
    %13005 = vmatpush1.bf16.msra.mxu0 %v11659
    %13006 = vmatprep.subr.bf16.mxu0 %v11672
    %13007 = vmatpush1.bf16.msra.mxu0 %v11671
    %13008 = vmatprep.subr.bf16.mxu0 %v11684
    %13009 = vmatpush1.bf16.msra.mxu0 %v11683
    %13010 = vmatprep.subr.bf16.mxu0 %v11696
    %13011 = vmatpush1.bf16.msra.mxu0 %v11695
    %13012 = vmatprep.subr.bf16.mxu0 %v11708
    %13013 = vmatpush1.bf16.msra.mxu0 %v11707
    %13014 = vmatprep.mubr.bf16.mxu0 %v8828
    %13015 = vmatmul.mubr.bf16.gmra.mrb[0].mxu0 %v8827
    %v13016 = vpop.f32.mrb[0].mxu0
    %v13017 = vadd.f32 %v12976, %v13016
    %v13018 = vpop.f32.mrb[0].mxu0
    %v13019 = vadd.f32 %v12978, %v13018
    %v13020 = vpop.f32.mrb[0].mxu0
    %v13021 = vpop.f32.mrb[0].mxu0
    %13022 = vdwg.mxu0
    %v13023 = vld [vmem:[#allocation14] sm:$0x3f]
    %v13025 = vlaneseq
    %v13026 = vshrl.u32 %v13025, 7
    %v13027 = vsub.s32 0, %v13026
    %v13028 = vrot.slane %v13023, %v13027
    %v13029 = vlaneseq
    %v13030 = vshrl.u32 %v13029, 7
    %v13031 = vsub.s32 1, %v13030
    %v13032 = vrot.slane %v13023, %v13031
    %v13033 = vlaneseq
    %v13034 = vshrl.u32 %v13033, 7
    %v13035 = vsub.s32 2, %v13034
    %v13036 = vrot.slane %v13023, %v13035
    %v13037 = vlaneseq
    %v13038 = vshrl.u32 %v13037, 7
    %v13039 = vsub.s32 3, %v13038
    %v13040 = vrot.slane %v13023, %v13039
    %v13041 = vlaneseq
    %v13042 = vshrl.u32 %v13041, 7
    %v13043 = vsub.s32 4, %v13042
    %v13044 = vrot.slane %v13023, %v13043
    %v13045 = vlaneseq
    %v13046 = vshrl.u32 %v13045, 7
    %v13047 = vsub.s32 5, %v13046
    %v13048 = vrot.slane %v13023, %v13047
    %v13055 = vadd.f32 %v8202, %v13028
    %v13056 = vadd.f32 %v8204, %v13032
    %v13057 = vadd.f32 %v8325, %v13036
    %v13058 = vadd.f32 %v8327, %v13040
    %v13059 = vadd.f32 %v8448, %v13044
    %v13060 = vadd.f32 %v8450, %v13048
    %v13067 = vcombine.low %v13055, %v13056
    %v13068 = vcombine.low %v13057, %v13058
    %v13070 = vunpack.c.l.s4 1983009808
    %v13071 = vunpack.c.0.s8 %v13070
    %v13072 = vlaneseq
    %v13073 = vshrl.u32 %v13072, 7
    %v13074 = vsub.s32 %v13071, %v13073
    %v13075 = vrot.slane %v13067, %v13074
    %v13077 = vunpack.c.l.s4 1983009808
    %v13078 = vunpack.c.0.s8 %v13077
    %v13079 = vlaneseq
    %v13080 = vshrl.u32 %v13079, 7
    %v13081 = vsub.s32 %v13078, %v13080
    %v13082 = vrot.slane %v13068, %v13081
    %v13083 = vcombine.low %v13075, %v13082
    %v13084 = vcombine.low %v13059, %v13060
    %v13086 = vunpack.c.l.s4 1983009808
    %v13087 = vunpack.c.0.s8 %v13086
    %v13088 = vlaneseq
    %v13089 = vshrl.u32 %v13088, 7
    %v13090 = vsub.s32 %v13087, %v13089
    %v13091 = vrot.slane %v13084, %v13090
    %13094 = vst [vmem:[#allocation23] sm:$0xff] %v13083
    %13095 = vst [vmem:[#allocation23 + $0x8] sm:$0xf] %v13091
    %v13096 = vld [vmem:[#allocation17] sm:$0x3f]
    %v13098 = vlaneseq
    %v13099 = vshrl.u32 %v13098, 7
    %v13100 = vsub.s32 0, %v13099
    %v13101 = vrot.slane %v13096, %v13100
    %v13102 = vlaneseq
    %v13103 = vshrl.u32 %v13102, 7
    %v13104 = vsub.s32 1, %v13103
    %v13105 = vrot.slane %v13096, %v13104
    %v13106 = vlaneseq
    %v13107 = vshrl.u32 %v13106, 7
    %v13108 = vsub.s32 2, %v13107
    %v13109 = vrot.slane %v13096, %v13108
    %v13110 = vlaneseq
    %v13111 = vshrl.u32 %v13110, 7
    %v13112 = vsub.s32 3, %v13111
    %v13113 = vrot.slane %v13096, %v13112
    %v13114 = vlaneseq
    %v13115 = vshrl.u32 %v13114, 7
    %v13116 = vsub.s32 4, %v13115
    %v13117 = vrot.slane %v13096, %v13116
    %v13118 = vlaneseq
    %v13119 = vshrl.u32 %v13118, 7
    %v13120 = vsub.s32 5, %v13119
    %v13121 = vrot.slane %v13096, %v13120
    %v13128 = vadd.f32 %v12402, %v13101
    %v13129 = vadd.f32 %v12404, %v13105
    %v13130 = vadd.f32 %v12525, %v13109
    %v13131 = vadd.f32 %v12527, %v13113
    %v13132 = vadd.f32 %v12648, %v13117
    %v13133 = vadd.f32 %v12650, %v13121
    %v13140 = vcombine.low %v13128, %v13129
    %v13141 = vcombine.low %v13130, %v13131
    %v13143 = vunpack.c.l.s4 1983009808
    %v13144 = vunpack.c.0.s8 %v13143
    %v13145 = vlaneseq
    %v13146 = vshrl.u32 %v13145, 7
    %v13147 = vsub.s32 %v13144, %v13146
    %v13148 = vrot.slane %v13140, %v13147
    %v13150 = vunpack.c.l.s4 1983009808
    %v13151 = vunpack.c.0.s8 %v13150
    %v13152 = vlaneseq
    %v13153 = vshrl.u32 %v13152, 7
    %v13154 = vsub.s32 %v13151, %v13153
    %v13155 = vrot.slane %v13141, %v13154
    %v13156 = vcombine.low %v13148, %v13155
    %v13157 = vcombine.low %v13132, %v13133
    %v13159 = vunpack.c.l.s4 1983009808
    %v13160 = vunpack.c.0.s8 %v13159
    %v13161 = vlaneseq
    %v13162 = vshrl.u32 %v13161, 7
    %v13163 = vsub.s32 %v13160, %v13162
    %v13164 = vrot.slane %v13157, %v13163
    %13167 = vst [vmem:[#allocation24] sm:$0xff] %v13156
    %13168 = vst [vmem:[#allocation24 + $0x8] sm:$0xf] %v13164
    %v13169 = vadd.f32 %v8571, %v12771
    %v13170 = vadd.f32 %v8573, %v12773
    %v13171 = vadd.f32 %v8694, %v12894
    %v13172 = vadd.f32 %v8696, %v12896
    %v13173 = vadd.f32 %v8817, %v13017
    %v13174 = vadd.f32 %v8819, %v13019
    %v13175 = vld [vmem:[#allocation19] sm:$0x3f]
    %v13177 = vlaneseq
    %v13178 = vshrl.u32 %v13177, 7
    %v13179 = vsub.s32 0, %v13178
    %v13180 = vrot.slane %v13175, %v13179
    %v13181 = vlaneseq
    %v13182 = vshrl.u32 %v13181, 7
    %v13183 = vsub.s32 1, %v13182
    %v13184 = vrot.slane %v13175, %v13183
    %v13185 = vlaneseq
    %v13186 = vshrl.u32 %v13185, 7
    %v13187 = vsub.s32 2, %v13186
    %v13188 = vrot.slane %v13175, %v13187
    %v13189 = vlaneseq
    %v13190 = vshrl.u32 %v13189, 7
    %v13191 = vsub.s32 3, %v13190
    %v13192 = vrot.slane %v13175, %v13191
    %v13193 = vlaneseq
    %v13194 = vshrl.u32 %v13193, 7
    %v13195 = vsub.s32 4, %v13194
    %v13196 = vrot.slane %v13175, %v13195
    %v13197 = vlaneseq
    %v13198 = vshrl.u32 %v13197, 7
    %v13199 = vsub.s32 5, %v13198
    %v13200 = vrot.slane %v13175, %v13199
    %v13207 = vadd.f32 %v13169, %v13180
    %v13208 = vadd.f32 %v13170, %v13184
    %v13209 = vadd.f32 %v13171, %v13188
    %v13210 = vadd.f32 %v13172, %v13192
    %v13211 = vadd.f32 %v13173, %v13196
    %v13212 = vadd.f32 %v13174, %v13200
    %v13213 = vmax.f32 %v13207, 0.0
    %v13214 = vmax.f32 %v13208, 0.0
    %v13215 = vmax.f32 %v13209, 0.0
    %v13216 = vmax.f32 %v13210, 0.0
    %v13217 = vmax.f32 %v13211, 0.0
    %v13218 = vmax.f32 %v13212, 0.0
    %v13219 = vpack.c.bf16 %v13213, %v13213
    %v13220 = vpack.c.bf16 %v13214, %v13214
    %v13221 = vpack.c.bf16 %v13215, %v13215
    %v13222 = vpack.c.bf16 %v13216, %v13216
    %v13223 = vpack.c.bf16 %v13217, %v13217
    %v13224 = vpack.c.bf16 %v13218, %v13218
    %v13225 = vld [vmem:[#allocation20] sm:$0xf]
    %v13226 = vld [vmem:[#allocation20 + $0x4] sm:$0xf]
    %v13227 = vld [vmem:[#allocation20 + $0x8] sm:$0xf]
    %v13228 = vld [vmem:[#allocation20 + $0xc] sm:$0xf]
    %v13229 = vld [vmem:[#allocation20 + $0x10] sm:$0xf]
    %v13230 = vld [vmem:[#allocation20 + $0x14] sm:$0xf]
    %v13231 = vld [vmem:[#allocation20 + $0x18] sm:$0xf]
    %v13232 = vld [vmem:[#allocation20 + $0x1c] sm:$0xf]
    %v13233 = vld [vmem:[#allocation20 + $0x20] sm:$0xf]
    %v13234 = vld [vmem:[#allocation20 + $0x24] sm:$0xf]
    %v13235 = vld [vmem:[#allocation20 + $0x28] sm:$0xf]
    %v13236 = vld [vmem:[#allocation20 + $0x2c] sm:$0xf]
    %v13237 = vld [vmem:[#allocation20 + $0x30] sm:$0xf]
    %v13238 = vld [vmem:[#allocation20 + $0x34] sm:$0xf]
    %v13239 = vld [vmem:[#allocation20 + $0x38] sm:$0xf]
    %v13240 = vld [vmem:[#allocation20 + $0x3c] sm:$0xf]
    %v13241 = vld [vmem:[#allocation20 + $0x40] sm:$0xf]
    %v13242 = vld [vmem:[#allocation20 + $0x44] sm:$0xf]
    %v13243 = vld [vmem:[#allocation20 + $0x48] sm:$0xf]
    %v13244 = vld [vmem:[#allocation20 + $0x4c] sm:$0xf]
    %v13245 = vld [vmem:[#allocation20 + $0x50] sm:$0xf]
    %v13246 = vld [vmem:[#allocation20 + $0x54] sm:$0xf]
    %v13247 = vld [vmem:[#allocation20 + $0x58] sm:$0xf]
    %v13248 = vld [vmem:[#allocation20 + $0x5c] sm:$0xf]
    %v13249 = vld [vmem:[#allocation20 + $0x60] sm:$0xf]
    %v13250 = vld [vmem:[#allocation20 + $0x64] sm:$0xf]
    %v13251 = vld [vmem:[#allocation20 + $0x68] sm:$0xf]
    %v13252 = vld [vmem:[#allocation20 + $0x6c] sm:$0xf]
    %v13253 = vld [vmem:[#allocation20 + $0x70] sm:$0xf]
    %v13254 = vld [vmem:[#allocation20 + $0x74] sm:$0xf]
    %v13255 = vld [vmem:[#allocation20 + $0x78] sm:$0xf]
    %v13256 = vld [vmem:[#allocation20 + $0x7c] sm:$0xf]
    %v13257 = vld [vmem:[#allocation20 + $0x80] sm:$0xf]
    %v13258 = vld [vmem:[#allocation20 + $0x84] sm:$0xf]
    %v13259 = vld [vmem:[#allocation20 + $0x88] sm:$0xf]
    %v13260 = vld [vmem:[#allocation20 + $0x8c] sm:$0xf]
    %v13261 = vld [vmem:[#allocation20 + $0x90] sm:$0xf]
    %v13262 = vld [vmem:[#allocation20 + $0x94] sm:$0xf]
    %v13263 = vld [vmem:[#allocation20 + $0x98] sm:$0xf]
    %v13264 = vld [vmem:[#allocation20 + $0x9c] sm:$0xf]
    %v13265 = vld [vmem:[#allocation20 + $0xa0] sm:$0xf]
    %v13266 = vld [vmem:[#allocation20 + $0xa4] sm:$0xf]
    %v13267 = vld [vmem:[#allocation20 + $0xa8] sm:$0xf]
    %v13268 = vld [vmem:[#allocation20 + $0xac] sm:$0xf]
    %v13269 = vld [vmem:[#allocation20 + $0xb0] sm:$0xf]
    %v13270 = vld [vmem:[#allocation20 + $0xb4] sm:$0xf]
    %v13271 = vld [vmem:[#allocation20 + $0xb8] sm:$0xf]
    %v13272 = vld [vmem:[#allocation20 + $0xbc] sm:$0xf]
    %v13273 = vld [vmem:[#allocation20 + $0xc0] sm:$0xf]
    %v13274 = vld [vmem:[#allocation20 + $0xc4] sm:$0xf]
    %v13275 = vld [vmem:[#allocation20 + $0xc8] sm:$0xf]
    %v13276 = vld [vmem:[#allocation20 + $0xcc] sm:$0xf]
    %v13277 = vld [vmem:[#allocation20 + $0xd0] sm:$0xf]
    %v13278 = vld [vmem:[#allocation20 + $0xd4] sm:$0xf]
    %v13279 = vld [vmem:[#allocation20 + $0xd8] sm:$0xf]
    %v13280 = vld [vmem:[#allocation20 + $0xdc] sm:$0xf]
    %v13281 = vld [vmem:[#allocation20 + $0xe0] sm:$0xf]
    %v13282 = vld [vmem:[#allocation20 + $0xe4] sm:$0xf]
    %v13283 = vld [vmem:[#allocation20 + $0xe8] sm:$0xf]
    %v13284 = vld [vmem:[#allocation20 + $0xec] sm:$0xf]
    %v13285 = vld [vmem:[#allocation20 + $0xf0] sm:$0xf]
    %v13286 = vld [vmem:[#allocation20 + $0xf4] sm:$0xf]
    %v13287 = vld [vmem:[#allocation20 + $0xf8] sm:$0xf]
    %v13288 = vld [vmem:[#allocation20 + $0xfc] sm:$0xf]
    %v13289 = vld [vmem:[#allocation20 + $0x100] sm:$0xf]
    %v13290 = vld [vmem:[#allocation20 + $0x104] sm:$0xf]
    %v13291 = vld [vmem:[#allocation20 + $0x108] sm:$0xf]
    %v13292 = vld [vmem:[#allocation20 + $0x10c] sm:$0xf]
    %v13293 = vld [vmem:[#allocation20 + $0x110] sm:$0xf]
    %v13294 = vld [vmem:[#allocation20 + $0x114] sm:$0xf]
    %v13295 = vld [vmem:[#allocation20 + $0x118] sm:$0xf]
    %v13296 = vld [vmem:[#allocation20 + $0x11c] sm:$0xf]
    %v13297 = vld [vmem:[#allocation20 + $0x120] sm:$0xf]
    %v13298 = vld [vmem:[#allocation20 + $0x124] sm:$0xf]
    %v13299 = vld [vmem:[#allocation20 + $0x128] sm:$0xf]
    %v13300 = vld [vmem:[#allocation20 + $0x12c] sm:$0xf]
    %v13301 = vld [vmem:[#allocation20 + $0x130] sm:$0xf]
    %v13302 = vld [vmem:[#allocation20 + $0x134] sm:$0xf]
    %v13303 = vld [vmem:[#allocation20 + $0x138] sm:$0xf]
    %v13304 = vld [vmem:[#allocation20 + $0x13c] sm:$0xf]
    %v13305 = vld [vmem:[#allocation20 + $0x140] sm:$0xf]
    %v13306 = vld [vmem:[#allocation20 + $0x144] sm:$0xf]
    %v13307 = vld [vmem:[#allocation20 + $0x148] sm:$0xf]
    %v13308 = vld [vmem:[#allocation20 + $0x14c] sm:$0xf]
    %v13309 = vld [vmem:[#allocation20 + $0x150] sm:$0xf]
    %v13310 = vld [vmem:[#allocation20 + $0x154] sm:$0xf]
    %v13311 = vld [vmem:[#allocation20 + $0x158] sm:$0xf]
    %v13312 = vld [vmem:[#allocation20 + $0x15c] sm:$0xf]
    %v13313 = vld [vmem:[#allocation20 + $0x160] sm:$0xf]
    %v13314 = vld [vmem:[#allocation20 + $0x164] sm:$0xf]
    %v13315 = vld [vmem:[#allocation20 + $0x168] sm:$0xf]
    %v13316 = vld [vmem:[#allocation20 + $0x16c] sm:$0xf]
    %v13317 = vld [vmem:[#allocation20 + $0x170] sm:$0xf]
    %v13318 = vld [vmem:[#allocation20 + $0x174] sm:$0xf]
    %v13319 = vld [vmem:[#allocation20 + $0x178] sm:$0xf]
    %v13320 = vld [vmem:[#allocation20 + $0x17c] sm:$0xf]
    %v13321 = vld [vmem:[#allocation22] sm:$0x1]
    %v13323 = vlaneseq
    %v13324 = vshrl.u32 %v13323, 7
    %v13325 = vsub.s32 0, %v13324
    %v13326 = vrot.slane %v13321, %v13325
    %v13424 = vunpack.c.l.b16 %v13225
    %v13425 = vunpack.c.l.b16 %v13226
    %v13426 = vunpack.c.l.b16 %v13227
    %v13427 = vunpack.c.l.b16 %v13228
    %v13428 = vunpack.c.l.b16 %v13229
    %v13429 = vunpack.c.l.b16 %v13230
    %v13430 = vunpack.c.l.b16 %v13231
    %v13431 = vunpack.c.l.b16 %v13232
    %v13432 = vunpack.c.l.b16 %v13233
    %v13433 = vunpack.c.l.b16 %v13234
    %v13434 = vunpack.c.l.b16 %v13235
    %v13435 = vunpack.c.l.b16 %v13236
    %v13436 = vunpack.c.l.b16 %v13237
    %v13437 = vunpack.c.l.b16 %v13238
    %v13438 = vunpack.c.l.b16 %v13239
    %v13439 = vunpack.c.l.b16 %v13240
    %v13440 = vunpack.c.l.b16 %v13241
    %v13441 = vunpack.c.l.b16 %v13242
    %v13442 = vunpack.c.l.b16 %v13243
    %v13443 = vunpack.c.l.b16 %v13244
    %v13444 = vunpack.c.l.b16 %v13245
    %v13445 = vunpack.c.l.b16 %v13246
    %v13446 = vunpack.c.l.b16 %v13247
    %v13447 = vunpack.c.l.b16 %v13248
    %v13448 = vunpack.c.l.b16 %v13249
    %v13449 = vunpack.c.l.b16 %v13250
    %v13450 = vunpack.c.l.b16 %v13251
    %v13451 = vunpack.c.l.b16 %v13252
    %v13452 = vunpack.c.l.b16 %v13253
    %v13453 = vunpack.c.l.b16 %v13254
    %v13454 = vunpack.c.l.b16 %v13255
    %v13455 = vunpack.c.l.b16 %v13256
    %v13456 = vunpack.c.l.b16 %v13257
    %v13457 = vunpack.c.l.b16 %v13258
    %v13458 = vunpack.c.l.b16 %v13259
    %v13459 = vunpack.c.l.b16 %v13260
    %v13460 = vunpack.c.l.b16 %v13261
    %v13461 = vunpack.c.l.b16 %v13262
    %v13462 = vunpack.c.l.b16 %v13263
    %v13463 = vunpack.c.l.b16 %v13264
    %v13464 = vunpack.c.l.b16 %v13265
    %v13465 = vunpack.c.l.b16 %v13266
    %v13466 = vunpack.c.l.b16 %v13267
    %v13467 = vunpack.c.l.b16 %v13268
    %v13468 = vunpack.c.l.b16 %v13269
    %v13469 = vunpack.c.l.b16 %v13270
    %v13470 = vunpack.c.l.b16 %v13271
    %v13471 = vunpack.c.l.b16 %v13272
    %v13472 = vunpack.c.l.b16 %v13273
    %v13473 = vunpack.c.l.b16 %v13274
    %v13474 = vunpack.c.l.b16 %v13275
    %v13475 = vunpack.c.l.b16 %v13276
    %v13476 = vunpack.c.l.b16 %v13277
    %v13477 = vunpack.c.l.b16 %v13278
    %v13478 = vunpack.c.l.b16 %v13279
    %v13479 = vunpack.c.l.b16 %v13280
    %v13480 = vunpack.c.l.b16 %v13281
    %v13481 = vunpack.c.l.b16 %v13282
    %v13482 = vunpack.c.l.b16 %v13283
    %v13483 = vunpack.c.l.b16 %v13284
    %v13484 = vunpack.c.l.b16 %v13285
    %v13485 = vunpack.c.l.b16 %v13286
    %v13486 = vunpack.c.l.b16 %v13287
    %v13487 = vunpack.c.l.b16 %v13288
    %v13488 = vunpack.c.l.b16 %v13289
    %v13489 = vunpack.c.l.b16 %v13290
    %v13490 = vunpack.c.l.b16 %v13291
    %v13491 = vunpack.c.l.b16 %v13292
    %v13492 = vunpack.c.l.b16 %v13293
    %v13493 = vunpack.c.l.b16 %v13294
    %v13494 = vunpack.c.l.b16 %v13295
    %v13495 = vunpack.c.l.b16 %v13296
    %v13496 = vunpack.c.l.b16 %v13297
    %v13497 = vunpack.c.l.b16 %v13298
    %v13498 = vunpack.c.l.b16 %v13299
    %v13499 = vunpack.c.l.b16 %v13300
    %v13500 = vunpack.c.l.b16 %v13301
    %v13501 = vunpack.c.l.b16 %v13302
    %v13502 = vunpack.c.l.b16 %v13303
    %v13503 = vunpack.c.l.b16 %v13304
    %v13504 = vunpack.c.l.b16 %v13305
    %v13505 = vunpack.c.l.b16 %v13306
    %v13506 = vunpack.c.l.b16 %v13307
    %v13507 = vunpack.c.l.b16 %v13308
    %v13508 = vunpack.c.l.b16 %v13309
    %v13509 = vunpack.c.l.b16 %v13310
    %v13510 = vunpack.c.l.b16 %v13311
    %v13511 = vunpack.c.l.b16 %v13312
    %v13512 = vunpack.c.l.b16 %v13313
    %v13513 = vunpack.c.l.b16 %v13314
    %v13514 = vunpack.c.l.b16 %v13315
    %v13515 = vunpack.c.l.b16 %v13316
    %v13516 = vunpack.c.l.b16 %v13317
    %v13517 = vunpack.c.l.b16 %v13318
    %v13518 = vunpack.c.l.b16 %v13319
    %v13519 = vunpack.c.l.b16 %v13320
    %v13520 = vpack.c.b16 %v13425, %v13424
    %v13521 = vpack.c.b16 %v13427, %v13426
    %v13522 = vpack.c.b16 %v13429, %v13428
    %v13523 = vpack.c.b16 %v13431, %v13430
    %v13524 = vpack.c.b16 %v13433, %v13432
    %v13525 = vpack.c.b16 %v13435, %v13434
    %v13526 = vpack.c.b16 %v13437, %v13436
    %v13527 = vpack.c.b16 %v13439, %v13438
    %v13528 = vpack.c.b16 %v13441, %v13440
    %v13529 = vpack.c.b16 %v13443, %v13442
    %v13530 = vpack.c.b16 %v13445, %v13444
    %v13531 = vpack.c.b16 %v13447, %v13446
    %v13532 = vpack.c.b16 %v13449, %v13448
    %v13533 = vpack.c.b16 %v13451, %v13450
    %v13534 = vpack.c.b16 %v13453, %v13452
    %v13535 = vpack.c.b16 %v13455, %v13454
    %v13536 = vpack.c.b16 %v13457, %v13456
    %v13537 = vpack.c.b16 %v13459, %v13458
    %v13538 = vpack.c.b16 %v13461, %v13460
    %v13539 = vpack.c.b16 %v13463, %v13462
    %v13540 = vpack.c.b16 %v13465, %v13464
    %v13541 = vpack.c.b16 %v13467, %v13466
    %v13542 = vpack.c.b16 %v13469, %v13468
    %v13543 = vpack.c.b16 %v13471, %v13470
    %v13544 = vpack.c.b16 %v13473, %v13472
    %v13545 = vpack.c.b16 %v13475, %v13474
    %v13546 = vpack.c.b16 %v13477, %v13476
    %v13547 = vpack.c.b16 %v13479, %v13478
    %v13548 = vpack.c.b16 %v13481, %v13480
    %v13549 = vpack.c.b16 %v13483, %v13482
    %v13550 = vpack.c.b16 %v13485, %v13484
    %v13551 = vpack.c.b16 %v13487, %v13486
    %v13552 = vpack.c.b16 %v13489, %v13488
    %v13553 = vpack.c.b16 %v13491, %v13490
    %v13554 = vpack.c.b16 %v13493, %v13492
    %v13555 = vpack.c.b16 %v13495, %v13494
    %v13556 = vpack.c.b16 %v13497, %v13496
    %v13557 = vpack.c.b16 %v13499, %v13498
    %v13558 = vpack.c.b16 %v13501, %v13500
    %v13559 = vpack.c.b16 %v13503, %v13502
    %v13560 = vpack.c.b16 %v13505, %v13504
    %v13561 = vpack.c.b16 %v13507, %v13506
    %v13562 = vpack.c.b16 %v13509, %v13508
    %v13563 = vpack.c.b16 %v13511, %v13510
    %v13564 = vpack.c.b16 %v13513, %v13512
    %v13565 = vpack.c.b16 %v13515, %v13514
    %v13566 = vpack.c.b16 %v13517, %v13516
    %v13567 = vpack.c.b16 %v13519, %v13518
    %13616 = vmatprep.subr.bf16.mxu0 0
    %13617 = vmatpush1.bf16.msra.mxu0 %v13520
    %13618 = vmatprep.subr.bf16.mxu0 0
    %13619 = vmatpush1.bf16.msra.mxu0 %v13521
    %13620 = vmatprep.subr.bf16.mxu0 0
    %13621 = vmatpush1.bf16.msra.mxu0 %v13522
    %13622 = vmatprep.subr.bf16.mxu0 0
    %13623 = vmatpush1.bf16.msra.mxu0 %v13523
    %13624 = vmatprep.subr.bf16.mxu0 0
    %13625 = vmatpush1.bf16.msra.mxu0 %v13524
    %13626 = vmatprep.subr.bf16.mxu0 0
    %13627 = vmatpush1.bf16.msra.mxu0 %v13525
    %13628 = vmatprep.subr.bf16.mxu0 0
    %13629 = vmatpush1.bf16.msra.mxu0 %v13526
    %13630 = vmatprep.subr.bf16.mxu0 0
    %13631 = vmatpush1.bf16.msra.mxu0 %v13527
    %13632 = vmatprep.subr.bf16.mxu0 0
    %13633 = vmatpush1.bf16.msra.mxu0 %v13528
    %13634 = vmatprep.subr.bf16.mxu0 0
    %13635 = vmatpush1.bf16.msra.mxu0 %v13529
    %13636 = vmatprep.subr.bf16.mxu0 0
    %13637 = vmatpush1.bf16.msra.mxu0 %v13530
    %13638 = vmatprep.subr.bf16.mxu0 0
    %13639 = vmatpush1.bf16.msra.mxu0 %v13531
    %13640 = vmatprep.subr.bf16.mxu0 0
    %13641 = vmatpush1.bf16.msra.mxu0 %v13532
    %13642 = vmatprep.subr.bf16.mxu0 0
    %13643 = vmatpush1.bf16.msra.mxu0 %v13533
    %13644 = vmatprep.subr.bf16.mxu0 0
    %13645 = vmatpush1.bf16.msra.mxu0 %v13534
    %13646 = vmatprep.subr.bf16.mxu0 0
    %13647 = vmatpush1.bf16.msra.mxu0 %v13535
    %13648 = vmatprep.mubr.bf16.mxu0 %v13220
    %13649 = vmatmul.mubr.bf16.gmra.mrb[0].mxu0 %v13219
    %v13650 = vpop.f32.mrb[0].mxu0
    %v13651 = vadd.f32 %v13326, %v13650
    %v13652 = vpop.f32.mrb[0].mxu0
    %v13653 = vpop.f32.mrb[0].mxu0
    %v13654 = vpop.f32.mrb[0].mxu0
    %13655 = vdwg.mxu0
    %13656 = vmatprep.subr.bf16.mxu0 0
    %13657 = vmatpush1.bf16.msra.mxu0 %v13536
    %13658 = vmatprep.subr.bf16.mxu0 0
    %13659 = vmatpush1.bf16.msra.mxu0 %v13537
    %13660 = vmatprep.subr.bf16.mxu0 0
    %13661 = vmatpush1.bf16.msra.mxu0 %v13538
    %13662 = vmatprep.subr.bf16.mxu0 0
    %13663 = vmatpush1.bf16.msra.mxu0 %v13539
    %13664 = vmatprep.subr.bf16.mxu0 0
    %13665 = vmatpush1.bf16.msra.mxu0 %v13540
    %13666 = vmatprep.subr.bf16.mxu0 0
    %13667 = vmatpush1.bf16.msra.mxu0 %v13541
    %13668 = vmatprep.subr.bf16.mxu0 0
    %13669 = vmatpush1.bf16.msra.mxu0 %v13542
    %13670 = vmatprep.subr.bf16.mxu0 0
    %13671 = vmatpush1.bf16.msra.mxu0 %v13543
    %13672 = vmatprep.subr.bf16.mxu0 0
    %13673 = vmatpush1.bf16.msra.mxu0 %v13544
    %13674 = vmatprep.subr.bf16.mxu0 0
    %13675 = vmatpush1.bf16.msra.mxu0 %v13545
    %13676 = vmatprep.subr.bf16.mxu0 0
    %13677 = vmatpush1.bf16.msra.mxu0 %v13546
    %13678 = vmatprep.subr.bf16.mxu0 0
    %13679 = vmatpush1.bf16.msra.mxu0 %v13547
    %13680 = vmatprep.subr.bf16.mxu0 0
    %13681 = vmatpush1.bf16.msra.mxu0 %v13548
    %13682 = vmatprep.subr.bf16.mxu0 0
    %13683 = vmatpush1.bf16.msra.mxu0 %v13549
    %13684 = vmatprep.subr.bf16.mxu0 0
    %13685 = vmatpush1.bf16.msra.mxu0 %v13550
    %13686 = vmatprep.subr.bf16.mxu0 0
    %13687 = vmatpush1.bf16.msra.mxu0 %v13551
    %13688 = vmatprep.mubr.bf16.mxu0 %v13222
    %13689 = vmatmul.mubr.bf16.gmra.mrb[0].mxu0 %v13221
    %v13690 = vpop.f32.mrb[0].mxu0
    %v13691 = vadd.f32 %v13651, %v13690
    %v13692 = vpop.f32.mrb[0].mxu0
    %v13693 = vpop.f32.mrb[0].mxu0
    %v13694 = vpop.f32.mrb[0].mxu0
    %13695 = vdwg.mxu0
    %13696 = vmatprep.subr.bf16.mxu0 0
    %13697 = vmatpush1.bf16.msra.mxu0 %v13552
    %13698 = vmatprep.subr.bf16.mxu0 0
    %13699 = vmatpush1.bf16.msra.mxu0 %v13553
    %13700 = vmatprep.subr.bf16.mxu0 0
    %13701 = vmatpush1.bf16.msra.mxu0 %v13554
    %13702 = vmatprep.subr.bf16.mxu0 0
    %13703 = vmatpush1.bf16.msra.mxu0 %v13555
    %13704 = vmatprep.subr.bf16.mxu0 0
    %13705 = vmatpush1.bf16.msra.mxu0 %v13556
    %13706 = vmatprep.subr.bf16.mxu0 0
    %13707 = vmatpush1.bf16.msra.mxu0 %v13557
    %13708 = vmatprep.subr.bf16.mxu0 0
    %13709 = vmatpush1.bf16.msra.mxu0 %v13558
    %13710 = vmatprep.subr.bf16.mxu0 0
    %13711 = vmatpush1.bf16.msra.mxu0 %v13559
    %13712 = vmatprep.subr.bf16.mxu0 0
    %13713 = vmatpush1.bf16.msra.mxu0 %v13560
    %13714 = vmatprep.subr.bf16.mxu0 0
    %13715 = vmatpush1.bf16.msra.mxu0 %v13561
    %13716 = vmatprep.subr.bf16.mxu0 0
    %13717 = vmatpush1.bf16.msra.mxu0 %v13562
    %13718 = vmatprep.subr.bf16.mxu0 0
    %13719 = vmatpush1.bf16.msra.mxu0 %v13563
    %13720 = vmatprep.subr.bf16.mxu0 0
    %13721 = vmatpush1.bf16.msra.mxu0 %v13564
    %13722 = vmatprep.subr.bf16.mxu0 0
    %13723 = vmatpush1.bf16.msra.mxu0 %v13565
    %13724 = vmatprep.subr.bf16.mxu0 0
    %13725 = vmatpush1.bf16.msra.mxu0 %v13566
    %13726 = vmatprep.subr.bf16.mxu0 0
    %13727 = vmatpush1.bf16.msra.mxu0 %v13567
    %13728 = vmatprep.mubr.bf16.mxu0 %v13224
    %13729 = vmatmul.mubr.bf16.gmra.mrb[0].mxu0 %v13223
    %v13730 = vpop.f32.mrb[0].mxu0
    %v13731 = vadd.f32 %v13691, %v13730
    %v13732 = vpop.f32.mrb[0].mxu0
    %v13733 = vpop.f32.mrb[0].mxu0
    %v13734 = vpop.f32.mrb[0].mxu0
    %13735 = vdwg.mxu0
    %13736 = vst [vmem:[#allocation26] sm:$0x3] %v13731
    // Predicated region
    $region106: #{tpu_custom_call.1} parent=1 // pred_check
      _
    $region107: #{tpu_custom_call.1} parent=1 // pred_check_branch
      %13738 = sbr.rel (0) target = $region109
    $region108: #{tpu_custom_call.1} parent=1 // pred_region
      %s13740 = ssub.s32 192, 192
      %13741 = vsyncadd [#allocation4], %s13740
      %s13743 = sshll.u32 [#allocation23], 4
      %s13744 = int_to_ptr.vmem [resolvable:$true] %s13743
      %13746 = dma.vmem_to_hbm [thread:$0]  %s13744, 192, %s13, [#allocation4]
    $region109: #{tpu_custom_call.1} parent=1 // pred_fallthru
      _
    // Predicated region
    $region110: #{tpu_custom_call.1} parent=1 // pred_check
      _
    $region111: #{tpu_custom_call.1} parent=1 // pred_check_branch
      %13748 = sbr.rel (0) target = $region113
    $region112: #{tpu_custom_call.1} parent=1 // pred_region
      %s13750 = ssub.s32 192, 192
      %13751 = vsyncadd [#allocation25], %s13750
      %s13753 = sshll.u32 [#allocation24], 4
      %s13754 = int_to_ptr.vmem [resolvable:$true] %s13753
      %13756 = dma.vmem_to_hbm [thread:$0]  %s13754, 192, %s14, [#allocation25]
    $region113: #{tpu_custom_call.1} parent=1 // pred_fallthru
      _
    // Predicated region
    $region114: #{tpu_custom_call.1} parent=1 // pred_check
      _
    $region115: #{tpu_custom_call.1} parent=1 // pred_check_branch
      %13758 = sbr.rel (0) target = $region117
    $region116: #{tpu_custom_call.1} parent=1 // pred_region
      %s13760 = ssub.s32 32, 32
      %13761 = vsyncadd [#allocation25], %s13760
      %s13763 = sshll.u32 [#allocation26], 4
      %s13764 = int_to_ptr.vmem [resolvable:$true] %s13763
      %13766 = dma.vmem_to_hbm [thread:$0]  %s13764, 32, %s15, [#allocation25]
    $region117: #{tpu_custom_call.1} parent=1 // pred_fallthru
      _
    // Predicated region
    $region118: #{tpu_custom_call.1} parent=1 // pred_check
      _
    $region119: #{tpu_custom_call.1} parent=1 // pred_check_branch
      %13768 = sbr.rel (0) target = $region121
    $region120: #{tpu_custom_call.1} parent=1 // pred_region
      %s13770 = ssub.s32 192, 192
      %13771 = vsyncadd [#allocation28], %s13770
      %s13773 = sshll.u32 [#allocation27], 4
      %s13774 = int_to_ptr.vmem [resolvable:$true] %s13773
      %13776 = dma.vmem_to_hbm [thread:$0]  %s13774, 192, %s16, [#allocation28]
    $region121: #{tpu_custom_call.1} parent=1 // pred_fallthru
      _
    // Predicated region
    $region122: #{tpu_custom_call.1} parent=1 // pred_check
      _
    $region123: #{tpu_custom_call.1} parent=1 // pred_check_branch
      %13778 = sbr.rel (0) target = $region125
    $region124: #{tpu_custom_call.1} parent=1 // pred_region
      %s13780 = ssub.s32 192, 192
      %13781 = vsyncadd [#allocation28], %s13780
      %s13783 = sshll.u32 [#allocation29], 4
      %s13784 = int_to_ptr.vmem [resolvable:$true] %s13783
      %13786 = dma.vmem_to_hbm [thread:$0]  %s13784, 192, %s17, [#allocation28]
    $region125: #{tpu_custom_call.1} parent=1 // pred_fallthru
      _
    // Predicated region
    $region126: #{tpu_custom_call.1} parent=1 // pred_check
      _
    $region127: #{tpu_custom_call.1} parent=1 // pred_check_branch
      %13788 = sbr.rel (0) target = $region129
    $region128: #{tpu_custom_call.1} parent=1 // pred_region
      %13789 = dma.done [#allocation4], 192
    $region129: #{tpu_custom_call.1} parent=1 // pred_fallthru
      _
    // Predicated region
    $region130: #{tpu_custom_call.1} parent=1 // pred_check
      _
    $region131: #{tpu_custom_call.1} parent=1 // pred_check_branch
      %13791 = sbr.rel (0) target = $region133
    $region132: #{tpu_custom_call.1} parent=1 // pred_region
      %13792 = dma.done [#allocation25], 192
    $region133: #{tpu_custom_call.1} parent=1 // pred_fallthru
      _
    // Predicated region
    $region134: #{tpu_custom_call.1} parent=1 // pred_check
      _
    $region135: #{tpu_custom_call.1} parent=1 // pred_check_branch
      %13794 = sbr.rel (0) target = $region137
    $region136: #{tpu_custom_call.1} parent=1 // pred_region
      %13795 = dma.done [#allocation25], 32
    $region137: #{tpu_custom_call.1} parent=1 // pred_fallthru
      _
    // Predicated region
    $region138: #{tpu_custom_call.1} parent=1 // pred_check
      _
    $region139: #{tpu_custom_call.1} parent=1 // pred_check_branch
      %13797 = sbr.rel (0) target = $region141
    $region140: #{tpu_custom_call.1} parent=1 // pred_region
      %13798 = dma.done [#allocation28], 192
    $region141: #{tpu_custom_call.1} parent=1 // pred_fallthru
      _
    // Predicated region
    $region142: #{tpu_custom_call.1} parent=1 // pred_check
      _
    $region143: #{tpu_custom_call.1} parent=1 // pred_check_branch
      %13800 = sbr.rel (0) target = $region145
    $region144: #{tpu_custom_call.1} parent=1 // pred_region
      %13801 = dma.done [#allocation28], 192
    $region145: #{tpu_custom_call.1} parent=1 // pred_fallthru
      _
    %13802 = vsyncpa [#allocation3], 1
    %13803 = vsyncpa [#allocation6], 1
    %13804 = vsyncpa [#allocation9], 1
    %13805 = vsyncpa [#allocation12], 1
    %13806 = vsyncpa [#allocation15], 1
    %13807 = vsyncpa [#allocation18], 1
    %13808 = vsyncpa [#allocation21], 1
    %13809 = vsyncpa [#allocation4], 1
    %13810 = vsyncpa [#allocation25], 1
    %13811 = vsyncpa [#allocation28], 1

</llo_original>
